<compile_context>
chip_gen: v7x
topology: tpu7x:2x2x1
jax: 0.10.0
libtpu: 0.0.40
codegen_flags: <defaults>
</compile_context>

<pallas_src>
import functools
import math

import jax
import jax.numpy as jnp
from jax import lax
from jax.experimental import pallas as pl
from jax.experimental.pallas import tpu as pltpu

NUM_HEADS = 4
ORDER = 2
LN_EPS = 1e-5

_PARALLEL_1D = pltpu.CompilerParams(dimension_semantics=("parallel",))


def _layer_norm(y, gamma, beta, eps):
    mu = jnp.mean(y, axis=-1, keepdims=True)
    var = jnp.mean((y - mu) * (y - mu), axis=-1, keepdims=True)
    return (y - mu) * lax.rsqrt(var + eps) * gamma + beta


# ----------------------------------------------------------------------------
# Kernel 1: plain channel-wise linear (start_linear / final projection)
# ----------------------------------------------------------------------------
def _linear_block_kernel(x_ref, w_ref, b_ref, o_ref, *, pre_relu):
    _, N, T, Din = x_ref.shape
    Dout = w_ref.shape[1]
    xf = x_ref[...].reshape(N * T, Din)
    if pre_relu:
        xf = jnp.maximum(xf, 0.0)
    y = jnp.dot(xf, w_ref[...], preferred_element_type=jnp.float32) + b_ref[...]
    o_ref[...] = y.reshape(1, N, T, Dout)


def pallas_linear_block(x, w, b=None, pre_relu=False):
    """x: [B, N, T, Din] (node-major), w: [Din, Dout] -> [B, N, T, Dout]."""
    B, N, T, Din = x.shape
    Dout = w.shape[1]
    if b is None:
        b = jnp.zeros((Dout,), jnp.float32)
    return pl.pallas_call(
        functools.partial(_linear_block_kernel, pre_relu=pre_relu),
        out_shape=jax.ShapeDtypeStruct((B, N, T, Dout), jnp.float32),
        grid=(B,),
        in_specs=[
            pl.BlockSpec((1, N, T, Din), lambda i: (i, 0, 0, 0)),
            pl.BlockSpec((Din, Dout), lambda i: (0, 0)),
            pl.BlockSpec((1, Dout), lambda i: (0, 0)),
        ],
        out_specs=pl.BlockSpec((1, N, T, Dout), lambda i: (i, 0, 0, 0)),
        compiler_params=_PARALLEL_1D,
    )(x.astype(jnp.float32), w.astype(jnp.float32),
      b.reshape(1, Dout).astype(jnp.float32))


# ----------------------------------------------------------------------------
# Kernel 2: fused attention block
#   LN(xq + Wo @ MHA(xq, xkv))  with Q proj, fused KV proj, per-head attention
#   (static lane slices), output proj, residual and LayerNorm in one kernel.
# ----------------------------------------------------------------------------
def _attn_block_kernel(xq_ref, xkv_ref, wq_ref, bq_ref, wkv_ref, bkv_ref,
                       wo_ref, bo_ref, g_ref, bb_ref, o_ref, *, heads, eps):
    _, N, Tq, H = xq_ref.shape
    Tk = xkv_ref.shape[2]
    hd = H // heads
    scale = 1.0 / math.sqrt(hd)

    xq_rows = xq_ref[...].reshape(N * Tq, H)       # rows = (node, time)
    xkv_rows = xkv_ref[...].reshape(N * Tk, H)

    q = (jnp.dot(xq_rows, wq_ref[...], preferred_element_type=jnp.float32)
         + bq_ref[...]).reshape(N, Tq, H)
    kv = (jnp.dot(xkv_rows, wkv_ref[...], preferred_element_type=jnp.float32)
          + bkv_ref[...])
    k = kv[:, :H].reshape(N, Tk, H)
    v = kv[:, H:].reshape(N, Tk, H)

    heads_out = []
    for h in range(heads):                          # static unroll, static slices
        sl = slice(h * hd, (h + 1) * hd)
        s = jnp.einsum("ntd,nsd->nts", q[:, :, sl], k[:, :, sl],
                       preferred_element_type=jnp.float32) * scale
        m = jnp.max(s, axis=-1, keepdims=True)
        p = jnp.exp(s - m)
        p = p / jnp.sum(p, axis=-1, keepdims=True)  # f32 softmax
        heads_out.append(jnp.einsum("nts,nsd->ntd", p, v[:, :, sl],
                                    preferred_element_type=jnp.float32))
    o = jnp.concatenate(heads_out, axis=-1).reshape(N * Tq, H)   # lane-dense [.., H]

    # Output projection + residual (skip == the query input) + LayerNorm.
    y = (jnp.dot(o, wo_ref[...], preferred_element_type=jnp.float32)
         + bo_ref[...] + xq_rows)
    y = _layer_norm(y, g_ref[...], bb_ref[...], eps)
    o_ref[...] = y.reshape(1, N, Tq, H)
    # TODO(synk): attention / residual dropout omitted (eval mode -> identity).


def attention_block(xq, xkv, p, norm):
    """xq/xkv: [B, N, T, H] node-major -> LN(xq + Wo MHA(xq, xkv))."""
    B, N, Tq, H = xq.shape
    Tk = xkv.shape[2]
    g, bb = norm
    return pl.pallas_call(
        functools.partial(_attn_block_kernel, heads=NUM_HEADS, eps=LN_EPS),
        out_shape=jax.ShapeDtypeStruct((B, N, Tq, H), jnp.float32),
        grid=(B,),
        in_specs=[
            pl.BlockSpec((1, N, Tq, H), lambda i: (i, 0, 0, 0)),
            pl.BlockSpec((1, N, Tk, H), lambda i: (i, 0, 0, 0)),
            pl.BlockSpec((H, H), lambda i: (0, 0)),
            pl.BlockSpec((1, H), lambda i: (0, 0)),
            pl.BlockSpec((H, 2 * H), lambda i: (0, 0)),
            pl.BlockSpec((1, 2 * H), lambda i: (0, 0)),
            pl.BlockSpec((H, H), lambda i: (0, 0)),
            pl.BlockSpec((1, H), lambda i: (0, 0)),
            pl.BlockSpec((1, H), lambda i: (0, 0)),
            pl.BlockSpec((1, H), lambda i: (0, 0)),
        ],
        out_specs=pl.BlockSpec((1, N, Tq, H), lambda i: (i, 0, 0, 0)),
        compiler_params=_PARALLEL_1D,
    )(xq, xkv,
      p["w_q"], p["b_q"].reshape(1, H),
      p["w_kv"], p["b_kv"].reshape(1, 2 * H),
      p["w_o"], p["b_o"].reshape(1, H),
      g.reshape(1, H), bb.reshape(1, H))


# ----------------------------------------------------------------------------
# Kernel 3: fused DCN block
#   LN(x + 1x1(concat[x, A1 x, A1^2 x, A2 x, A2^2 x])) with a single deep
#   K=(2S+1)*H matmul; supports pre-transposed so propagation is A^T @ X.
# ----------------------------------------------------------------------------
def _dcn_block_kernel(x_ref, at_ref, w_ref, b_ref, g_ref, bb_ref, o_ref,
                      *, order, supports_len, eps):
    _, N, T, H = x_ref.shape
    xflat = x_ref[...].reshape(N, T * H)           # node-major: [N, T*H]
    xrows = xflat.reshape(N * T, H)

    pieces = [xflat]
    for s in range(supports_len):
        At = at_ref[s]                             # A^T, so out[w] = sum_v A[v,w] x[v]
        xk = xflat
        for _ in range(order):
            xk = jnp.dot(At, xk, preferred_element_type=jnp.float32)
            pieces.append(xk)
    # Channel-concat every diffusion piece -> one deep 1x1 matmul (K = P*H).
    cat = jnp.concatenate([piece.reshape(N, T, H) for piece in pieces], axis=-1)
    cat = cat.reshape(N * T, (order * supports_len + 1) * H)

    y = (jnp.dot(cat, w_ref[...], preferred_element_type=jnp.float32)
         + b_ref[...] + xrows)                     # residual: skip == DCN input
    y = _layer_norm(y, g_ref[...], bb_ref[...], eps)
    o_ref[...] = y.reshape(1, N, T, H)
    # TODO(synk): dropout after the 1x1 conv omitted (eval mode -> identity).


def dcn_block(x, a_t, p, norm):
    """x: [B, N, T, H], a_t: [S, N, N] (pre-transposed supports)."""
    B, N, T, H = x.shape
    S = a_t.shape[0]
    P = ORDER * S + 1
    g, bb = norm
    return pl.pallas_call(
        functools.partial(_dcn_block_kernel, order=ORDER, supports_len=S, eps=LN_EPS),
        out_shape=jax.ShapeDtypeStruct((B, N, T, H), jnp.float32),
        grid=(B,),
        in_specs=[
            pl.BlockSpec((1, N, T, H), lambda i: (i, 0, 0, 0)),
            pl.BlockSpec((S, N, N), lambda i: (0, 0, 0)),
            pl.BlockSpec((P * H, H), lambda i: (0, 0)),
            pl.BlockSpec((1, H), lambda i: (0, 0)),
            pl.BlockSpec((1, H), lambda i: (0, 0)),
            pl.BlockSpec((1, H), lambda i: (0, 0)),
        ],
        out_specs=pl.BlockSpec((1, N, T, H), lambda i: (i, 0, 0, 0)),
        compiler_params=_PARALLEL_1D,
    )(x, a_t, p["w"], p["b"].reshape(1, H), g.reshape(1, H), bb.reshape(1, H))


# ----------------------------------------------------------------------------
# Kernel 4: fused position-wise feed-forward block
#   LN(x + relu(x @ W1 + b1) @ W2 + b2); [rows, 4H] intermediate stays in VMEM.
# ----------------------------------------------------------------------------
def _ff_block_kernel(x_ref, w1_ref, b1_ref, w2_ref, b2_ref, g_ref, bb_ref, o_ref,
                     *, eps):
    _, N, T, H = x_ref.shape
    xf = x_ref[...].reshape(N * T, H)
    h = jnp.maximum(
        jnp.dot(xf, w1_ref[...], preferred_element_type=jnp.float32) + b1_ref[...],
        0.0)
    y = (jnp.dot(h, w2_ref[...], preferred_element_type=jnp.float32)
         + b2_ref[...] + xf)
    y = _layer_norm(y, g_ref[...], bb_ref[...], eps)
    o_ref[...] = y.reshape(1, N, T, H)


def ff_block(x, p, norm):
    B, N, T, H = x.shape
    g, bb = norm
    return pl.pallas_call(
        functools.partial(_ff_block_kernel, eps=LN_EPS),
        out_shape=jax.ShapeDtypeStruct((B, N, T, H), jnp.float32),
        grid=(B,),
        in_specs=[
            pl.BlockSpec((1, N, T, H), lambda i: (i, 0, 0, 0)),
            pl.BlockSpec((H, 4 * H), lambda i: (0, 0)),
            pl.BlockSpec((1, 4 * H), lambda i: (0, 0)),
            pl.BlockSpec((4 * H, H), lambda i: (0, 0)),
            pl.BlockSpec((1, H), lambda i: (0, 0)),
            pl.BlockSpec((1, H), lambda i: (0, 0)),
            pl.BlockSpec((1, H), lambda i: (0, 0)),
        ],
        out_specs=pl.BlockSpec((1, N, T, H), lambda i: (i, 0, 0, 0)),
        compiler_params=_PARALLEL_1D,
    )(x, p["w1"], p["b1"].reshape(1, 4 * H), p["w2"], p["b2"].reshape(1, H),
      g.reshape(1, H), bb.reshape(1, H))


# ----------------------------------------------------------------------------
# Forward pass (thin JAX glue: only boundary transposes + support stacking)
# ----------------------------------------------------------------------------
def st_model_forward(params, x, prev_hidden, supports, *, TS=True):
    """x: [B, T, N, in_dim], prev_hidden: [B, T, N, H] or None."""
    norms = params["norms"]
    # Pre-transpose supports once so in-kernel diffusion is a plain LHS matmul.
    a_t = jnp.stack([jnp.transpose(a) for a in supports]).astype(jnp.float32)

    # Node-major [B, N, T, C] internal layout: attention over time and graph
    # diffusion over nodes are both clean (batched) matmuls, no in-kernel
    # transposes; 4 cheap XLA transposes total at the model boundary.
    x = jnp.transpose(x, (0, 2, 1, 3)).astype(jnp.float32)
    if prev_hidden is not None:
        prev_hidden = jnp.transpose(prev_hidden, (0, 2, 1, 3)).astype(jnp.float32)

    # start_linear has no bias in the reference (plain matmul with a Parameter).
    x = pallas_linear_block(x, params["start_w"])

    hiddens = []
    for i, lp in enumerate(params["layers"]):
        # NOTE: norm indexing (i, i+3, i+6, i+9) mirrors the PyTorch reference,
        # which hard-codes a stride of 3 (valid for layers == 3, as used here).
        if TS:
            x1 = attention_block(x, x, lp["temporal"], norms[i])
            x_attn = dcn_block(x1, a_t, lp["dcn"], norms[i + 3])
        else:
            x1 = dcn_block(x, a_t, lp["dcn"], norms[i])
            x_attn = attention_block(x1, x1, lp["temporal"], norms[i + 3])
        if prev_hidden is not None:
            x_attn = attention_block(x_attn, prev_hidden, lp["ed"], norms[i + 6])
        x = ff_block(x_attn, lp["ff"], norms[i + 9])
        hiddens.append(x)

    # out = proj(ReLU(x))  (ReLU fused into the projection kernel)
    out = pallas_linear_block(x, params["proj_w"], params["proj_b"], pre_relu=True)

    out = jnp.transpose(out, (0, 2, 1, 3))              # back to [B, T, N, out_dim]
    last_hidden = jnp.transpose(hiddens[-1], (0, 2, 1, 3))
    return out, last_hidden


# ----------------------------------------------------------------------------
# Deterministic parameter init (synthetic, matches module shapes)
# ----------------------------------------------------------------------------
def init_params(key, in_dim, hidden, layers, supports_len, out_dim):
    keys = iter(jax.random.split(key, 1024))

    def nrm(shape, scale=0.1):
        return scale * jax.random.normal(next(keys), shape, jnp.float32)

    def attn_params():
        return dict(
            w_q=nrm((hidden, hidden)), b_q=nrm((hidden,), 0.01),
            # Fused K/V projection: one [H, 2H] matmul inside the kernel.
            w_kv=nrm((hidden, 2 * hidden)), b_kv=nrm((2 * hidden,), 0.01),
            w_o=nrm((hidden, hidden)), b_o=nrm((hidden,), 0.01),
        )

    params = {}
    params["start_w"] = jax.random.normal(next(keys), (in_dim, hidden), jnp.float32)
    dcn_cin = (ORDER * supports_len + 1) * hidden
    params["layers"] = [
        dict(
            temporal=attn_params(),
            ed=attn_params(),
            dcn=dict(w=nrm((dcn_cin, hidden)), b=nrm((hidden,), 0.01)),
            ff=dict(w1=nrm((hidden, 4 * hidden)), b1=nrm((4 * hidden,), 0.01),
                    w2=nrm((4 * hidden, hidden)), b2=nrm((hidden,), 0.01)),
        )
        for _ in range(layers)
    ]
    # nn.LayerNorm default init: weight = 1, bias = 0
    params["norms"] = [
        (jnp.ones((hidden,), jnp.float32), jnp.zeros((hidden,), jnp.float32))
        for _ in range(4 * layers)
    ]
    proj_out = out_dim if out_dim == 1 else hidden + out_dim
    params["proj_w"] = nrm((hidden, proj_out))
    params["proj_b"] = nrm((proj_out,), 0.01)
    return params


# ----------------------------------------------------------------------------
# Demo
# ----------------------------------------------------------------------------
if __name__ == "__main__":
    B, T, N = 2, 8, 8
    IN_DIM, HIDDEN, LAYERS, SUPPORTS_LEN, OUT_DIM = 2, 32, 3, 2, 1

    key = jax.random.PRNGKey(0)
    kp, kx, kh, ka = jax.random.split(key, 4)

    params = init_params(kp, IN_DIM, HIDDEN, LAYERS, SUPPORTS_LEN, OUT_DIM)

    x = jax.random.normal(kx, (B, T, N, IN_DIM), jnp.float32)
    prev_hidden = jax.random.normal(kh, (B, T, N, HIDDEN), jnp.float32)

    # Row-normalized random adjacency matrices as diffusion supports.
    supports = []
    for k in jax.random.split(ka, SUPPORTS_LEN):
        a = jax.random.uniform(k, (N, N), jnp.float32)
        supports.append(a / jnp.sum(a, axis=1, keepdims=True))

    forward = jax.jit(functools.partial(st_model_forward, TS=True))
    out, last_hidden = forward(params, x, prev_hidden, supports)
    jax.block_until_ready((out, last_hidden))

    assert out.shape == (B, T, N, OUT_DIM)
    assert last_hidden.shape == (B, T, N, HIDDEN)
    assert bool(jnp.all(jnp.isfinite(out)))
    print("KERNEL_OK")
</pallas_src>

<mosaic_0001>
module attributes {stable_mosaic.version = 11 : i64} {
  func.func @_linear_block_kernel(%arg0: i32, %arg1: memref<1x8x8x2xf32, #tpu.memory_space<vmem>>, %arg2: memref<2x32xf32, #tpu.memory_space<vmem>>, %arg3: memref<1x32xf32, #tpu.memory_space<vmem>>, %arg4: memref<1x8x8x32xf32, #tpu.memory_space<vmem>>) attributes {dimension_semantics = [#tpu.dimension_semantics<parallel>], iteration_bounds = array<i64: 2>, scalar_prefetch = 0 : i64, scratch_operands = 0 : i64, tpu.core_type = #tpu.core_type<tc>, window_params = [{transform_indices = @transform_0, window_bounds = array<i64: 1, 8, 8, 2>}, {pipeline_mode = #tpu.pipeline_mode<synchronous>, transform_indices = @transform_1, window_bounds = array<i64: 2, 32>}, {pipeline_mode = #tpu.pipeline_mode<synchronous>, transform_indices = @transform_2, window_bounds = array<i64: 1, 32>}, {transform_indices = @transform_3, window_bounds = array<i64: 1, 8, 8, 32>}]} {
    %c0 = arith.constant 0 : index
    %c0_0 = arith.constant 0 : index
    %c0_1 = arith.constant 0 : index
    %c0_2 = arith.constant 0 : index
    %0 = vector.load %arg1[%c0, %c0_0, %c0_1, %c0_2] : memref<1x8x8x2xf32, #tpu.memory_space<vmem>>, vector<1x8x8x2xf32>
    %1 = vector.shape_cast %0 : vector<1x8x8x2xf32> to vector<64x2xf32>
    %c0_3 = arith.constant 0 : index
    %c0_4 = arith.constant 0 : index
    %2 = vector.load %arg2[%c0_3, %c0_4] : memref<2x32xf32, #tpu.memory_space<vmem>>, vector<2x32xf32>
    %cst = arith.constant dense<0.000000e+00> : vector<64x32xf32>
    %3 = tpu.matmul %1, %2, %cst {dimension_numbers = #tpu.dot_dimension_numbers<[1], [0], [0], [1], [0, 0, 1, 1], [], []>} : vector<64x2xf32>, vector<2x32xf32>, vector<64x32xf32> -> vector<64x32xf32>
    %c0_5 = arith.constant 0 : index
    %c0_6 = arith.constant 0 : index
    %4 = vector.load %arg3[%c0_5, %c0_6] : memref<1x32xf32, #tpu.memory_space<vmem>>, vector<1x32xf32>
    %5 = vector.broadcast %4 : vector<1x32xf32> to vector<64x32xf32>
    %6 = arith.addf %3, %5 : vector<64x32xf32>
    %7 = vector.shape_cast %6 : vector<64x32xf32> to vector<1x8x8x32xf32>
    %c0_7 = arith.constant 0 : index
    %c0_8 = arith.constant 0 : index
    %c0_9 = arith.constant 0 : index
    %c0_10 = arith.constant 0 : index
    %8 = vector.load %arg4[%c0_7, %c0_8, %c0_9, %c0_10] : memref<1x8x8x32xf32, #tpu.memory_space<vmem>>, vector<1x8x8x32xf32>
    tpu.vector_store %arg4[%c0_7, %c0_8, %c0_9, %c0_10], %7 {strides = array<i32>} : memref<1x8x8x32xf32, #tpu.memory_space<vmem>>, vector<1x8x8x32xf32>,
    return
  }
  func.func @transform_0(%arg0: i32) -> (i32, i32, i32, i32) {
    %c0_i32 = arith.constant 0 : i32
    %c0_i32_0 = arith.constant 0 : i32
    %c0_i32_1 = arith.constant 0 : i32
    %c0_i32_2 = arith.constant 0 : i32
    return %arg0, %c0_i32, %c0_i32_0, %c0_i32_1 : i32, i32, i32, i32
  }
  func.func @transform_1(%arg0: i32) -> (i32, i32) {
    %c0_i32 = arith.constant 0 : i32
    %c0_i32_0 = arith.constant 0 : i32
    %c0_i32_1 = arith.constant 0 : i32
    return %c0_i32, %c0_i32_0 : i32, i32
  }
  func.func @transform_2(%arg0: i32) -> (i32, i32) {
    %c0_i32 = arith.constant 0 : i32
    %c0_i32_0 = arith.constant 0 : i32
    %c0_i32_1 = arith.constant 0 : i32
    return %c0_i32, %c0_i32_0 : i32, i32
  }
  func.func @transform_3(%arg0: i32) -> (i32, i32, i32, i32) {
    %c0_i32 = arith.constant 0 : i32
    %c0_i32_0 = arith.constant 0 : i32
    %c0_i32_1 = arith.constant 0 : i32
    %c0_i32_2 = arith.constant 0 : i32
    return %arg0, %c0_i32, %c0_i32_0, %c0_i32_1 : i32, i32, i32, i32
  }
}

module attributes {stable_mosaic.version = 11 : i64} {
  func.func @_attn_block_kernel(%arg0: i32, %arg1: memref<1x8x8x32xf32, #tpu.memory_space<vmem>>, %arg2: memref<1x8x8x32xf32, #tpu.memory_space<vmem>>, %arg3: memref<32x32xf32, #tpu.memory_space<vmem>>, %arg4: memref<1x32xf32, #tpu.memory_space<vmem>>, %arg5: memref<32x64xf32, #tpu.memory_space<vmem>>, %arg6: memref<1x64xf32, #tpu.memory_space<vmem>>, %arg7: memref<32x32xf32, #tpu.memory_space<vmem>>, %arg8: memref<1x32xf32, #tpu.memory_space<vmem>>, %arg9: memref<1x32xf32, #tpu.memory_space<vmem>>, %arg10: memref<1x32xf32, #tpu.memory_space<vmem>>, %arg11: memref<1x8x8x32xf32, #tpu.memory_space<vmem>>) attributes {dimension_semantics = [#tpu.dimension_semantics<parallel>], iteration_bounds = array<i64: 2>, scalar_prefetch = 0 : i64, scratch_operands = 0 : i64, tpu.core_type = #tpu.core_type<tc>, window_params = [{transform_indices = @transform_0, window_bounds = array<i64: 1, 8, 8, 32>}, {transform_indices = @transform_1, window_bounds = array<i64: 1, 8, 8, 32>}, {pipeline_mode = #tpu.pipeline_mode<synchronous>, transform_indices = @transform_2, window_bounds = array<i64: 32, 32>}, {pipeline_mode = #tpu.pipeline_mode<synchronous>, transform_indices = @transform_3, window_bounds = array<i64: 1, 32>}, {pipeline_mode = #tpu.pipeline_mode<synchronous>, transform_indices = @transform_4, window_bounds = array<i64: 32, 64>}, {pipeline_mode = #tpu.pipeline_mode<synchronous>, transform_indices = @transform_5, window_bounds = array<i64: 1, 64>}, {pipeline_mode = #tpu.pipeline_mode<synchronous>, transform_indices = @transform_6, window_bounds = array<i64: 32, 32>}, {pipeline_mode = #tpu.pipeline_mode<synchronous>, transform_indices = @transform_7, window_bounds = array<i64: 1, 32>}, {pipeline_mode = #tpu.pipeline_mode<synchronous>, transform_indices = @transform_8, window_bounds = array<i64: 1, 32>}, {pipeline_mode = #tpu.pipeline_mode<synchronous>, transform_indices = @transform_9, window_bounds = array<i64: 1, 32>}, {transform_indices = @transform_10, window_bounds = array<i64: 1, 8, 8, 32>}]} {
    %c0 = arith.constant 0 : index
    %c0_0 = arith.constant 0 : index
    %c0_1 = arith.constant 0 : index
    %c0_2 = arith.constant 0 : index
    %0 = vector.load %arg1[%c0, %c0_0, %c0_1, %c0_2] : memref<1x8x8x32xf32, #tpu.memory_space<vmem>>, vector<1x8x8x32xf32>
    %1 = vector.shape_cast %0 : vector<1x8x8x32xf32> to vector<64x32xf32>
    %c0_3 = arith.constant 0 : index
    %c0_4 = arith.constant 0 : index
    %c0_5 = arith.constant 0 : index
    %c0_6 = arith.constant 0 : index
    %2 = vector.load %arg2[%c0_3, %c0_4, %c0_5, %c0_6] : memref<1x8x8x32xf32, #tpu.memory_space<vmem>>, vector<1x8x8x32xf32>
    %3 = vector.shape_cast %2 : vector<1x8x8x32xf32> to vector<64x32xf32>
    %c0_7 = arith.constant 0 : index
    %c0_8 = arith.constant 0 : index
    %4 = vector.load %arg3[%c0_7, %c0_8] : memref<32x32xf32, #tpu.memory_space<vmem>>, vector<32x32xf32>
    %cst = arith.constant dense<0.000000e+00> : vector<64x32xf32>
    %5 = tpu.matmul %1, %4, %cst {dimension_numbers = #tpu.dot_dimension_numbers<[1], [0], [0], [1], [0, 0, 1, 1], [], []>} : vector<64x32xf32>, vector<32x32xf32>, vector<64x32xf32> -> vector<64x32xf32>
    %c0_9 = arith.constant 0 : index
    %c0_10 = arith.constant 0 : index
    %6 = vector.load %arg4[%c0_9, %c0_10] : memref<1x32xf32, #tpu.memory_space<vmem>>, vector<1x32xf32>
    %7 = vector.broadcast %6 : vector<1x32xf32> to vector<64x32xf32>
    %8 = arith.addf %5, %7 : vector<64x32xf32>
    %9 = vector.shape_cast %8 : vector<64x32xf32> to vector<8x8x32xf32>
    %c0_11 = arith.constant 0 : index
    %c0_12 = arith.constant 0 : index
    %10 = vector.load %arg5[%c0_11, %c0_12] : memref<32x64xf32, #tpu.memory_space<vmem>>, vector<32x64xf32>
    %cst_13 = arith.constant dense<0.000000e+00> : vector<64x64xf32>
    %11 = tpu.matmul %3, %10, %cst_13 {dimension_numbers = #tpu.dot_dimension_numbers<[1], [0], [0], [1], [0, 0, 1, 1], [], []>} : vector<64x32xf32>, vector<32x64xf32>, vector<64x64xf32> -> vector<64x64xf32>
    %c0_14 = arith.constant 0 : index
    %c0_15 = arith.constant 0 : index
    %12 = vector.load %arg6[%c0_14, %c0_15] : memref<1x64xf32, #tpu.memory_space<vmem>>, vector<1x64xf32>
    %13 = vector.broadcast %12 : vector<1x64xf32> to vector<64x64xf32>
    %14 = arith.addf %11, %13 : vector<64x64xf32>
    %15 = vector.extract_strided_slice %14 {offsets = [0, 0], sizes = [64, 32], strides = [1, 1]} : vector<64x64xf32> to vector<64x32xf32>
    %16 = vector.shape_cast %15 : vector<64x32xf32> to vector<8x8x32xf32>
    %17 = vector.extract_strided_slice %14 {offsets = [0, 32], sizes = [64, 32], strides = [1, 1]} : vector<64x64xf32> to vector<64x32xf32>
    %18 = vector.shape_cast %17 : vector<64x32xf32> to vector<8x8x32xf32>
    %19 = vector.extract_strided_slice %9 {offsets = [0, 0, 0], sizes = [8, 8, 8], strides = [1, 1, 1]} : vector<8x8x32xf32> to vector<8x8x8xf32>
    %20 = vector.extract_strided_slice %16 {offsets = [0, 0, 0], sizes = [8, 8, 8], strides = [1, 1, 1]} : vector<8x8x32xf32> to vector<8x8x8xf32>
    "tpu.trace_start"() <{level = 10 : i32, message = "ntd,nsd->nts"}> : () -> ()
    %cst_16 = arith.constant dense<0.000000e+00> : vector<8x8x8xf32>
    %21 = tpu.matmul %19, %20, %cst_16 {dimension_numbers = #tpu.dot_dimension_numbers<[2], [2], [1], [1], [0, 0, 0, 1, 1, 1], [0], [0]>} : vector<8x8x8xf32>, vector<8x8x8xf32>, vector<8x8x8xf32> -> vector<8x8x8xf32>
    "tpu.trace_stop"() : () -> ()
    %cst_17 = arith.constant 0.353553385 : f32
    %22 = vector.broadcast %cst_17 : f32 to vector<8x8x8xf32>
    %23 = arith.mulf %21, %22 : vector<8x8x8xf32>
    %cst_18 = arith.constant dense<0xFF800000> : vector<8x8xf32>
    %24 = vector.multi_reduction <maximumf>, %23, %cst_18 [2] : vector<8x8x8xf32> to vector<8x8xf32>
    %25 = vector.shape_cast %24 : vector<8x8xf32> to vector<8x8x1xf32>
    %26 = vector.broadcast %25 : vector<8x8x1xf32> to vector<8x8x8xf32>
    %27 = arith.subf %23, %26 : vector<8x8x8xf32>
    %28 = math.exp %27 : vector<8x8x8xf32>
    %cst_19 = arith.constant dense<0.000000e+00> : vector<8x8xf32>
    %29 = vector.multi_reduction <add>, %28, %cst_19 [2] : vector<8x8x8xf32> to vector<8x8xf32>
    %30 = vector.shape_cast %29 : vector<8x8xf32> to vector<8x8x1xf32>
    %31 = vector.broadcast %30 : vector<8x8x1xf32> to vector<8x8x8xf32>
    %32 = arith.divf %28, %31 : vector<8x8x8xf32>
    %33 = vector.extract_strided_slice %18 {offsets = [0, 0, 0], sizes = [8, 8, 8], strides = [1, 1, 1]} : vector<8x8x32xf32> to vector<8x8x8xf32>
    "tpu.trace_start"() <{level = 10 : i32, message = "nts,nsd->ntd"}> : () -> ()
    %cst_20 = arith.constant dense<0.000000e+00> : vector<8x8x8xf32>
    %34 = tpu.matmul %32, %33, %cst_20 {dimension_numbers = #tpu.dot_dimension_numbers<[2], [1], [1], [2], [0, 0, 0, 1, 1, 2], [0], [0]>} : vector<8x8x8xf32>, vector<8x8x8xf32>, vector<8x8x8xf32> -> vector<8x8x8xf32>
    "tpu.trace_stop"() : () -> ()
    %35 = vector.extract_strided_slice %9 {offsets = [0, 0, 8], sizes = [8, 8, 8], strides = [1, 1, 1]} : vector<8x8x32xf32> to vector<8x8x8xf32>
    %36 = vector.extract_strided_slice %16 {offsets = [0, 0, 8], sizes = [8, 8, 8], strides = [1, 1, 1]} : vector<8x8x32xf32> to vector<8x8x8xf32>
    "tpu.trace_start"() <{level = 10 : i32, message = "ntd,nsd->nts"}> : () -> ()
    %cst_21 = arith.constant dense<0.000000e+00> : vector<8x8x8xf32>
    %37 = tpu.matmul %35, %36, %cst_21 {dimension_numbers = #tpu.dot_dimension_numbers<[2], [2], [1], [1], [0, 0, 0, 1, 1, 1], [0], [0]>} : vector<8x8x8xf32>, vector<8x8x8xf32>, vector<8x8x8xf32> -> vector<8x8x8xf32>
    "tpu.trace_stop"() : () -> ()
    %cst_22 = arith.constant 0.353553385 : f32
    %38 = vector.broadcast %cst_22 : f32 to vector<8x8x8xf32>
    %39 = arith.mulf %37, %38 : vector<8x8x8xf32>
    %cst_23 = arith.constant dense<0xFF800000> : vector<8x8xf32>
    %40 = vector.multi_reduction <maximumf>, %39, %cst_23 [2] : vector<8x8x8xf32> to vector<8x8xf32>
    %41 = vector.shape_cast %40 : vector<8x8xf32> to vector<8x8x1xf32>
    %42 = vector.broadcast %41 : vector<8x8x1xf32> to vector<8x8x8xf32>
    %43 = arith.subf %39, %42 : vector<8x8x8xf32>
    %44 = math.exp %43 : vector<8x8x8xf32>
    %cst_24 = arith.constant dense<0.000000e+00> : vector<8x8xf32>
    %45 = vector.multi_reduction <add>, %44, %cst_24 [2] : vector<8x8x8xf32> to vector<8x8xf32>
    %46 = vector.shape_cast %45 : vector<8x8xf32> to vector<8x8x1xf32>
    %47 = vector.broadcast %46 : vector<8x8x1xf32> to vector<8x8x8xf32>
    %48 = arith.divf %44, %47 : vector<8x8x8xf32>
    %49 = vector.extract_strided_slice %18 {offsets = [0, 0, 8], sizes = [8, 8, 8], strides = [1, 1, 1]} : vector<8x8x32xf32> to vector<8x8x8xf32>
    "tpu.trace_start"() <{level = 10 : i32, message = "nts,nsd->ntd"}> : () -> ()
    %cst_25 = arith.constant dense<0.000000e+00> : vector<8x8x8xf32>
    %50 = tpu.matmul %48, %49, %cst_25 {dimension_numbers = #tpu.dot_dimension_numbers<[2], [1], [1], [2], [0, 0, 0, 1, 1, 2], [0], [0]>} : vector<8x8x8xf32>, vector<8x8x8xf32>, vector<8x8x8xf32> -> vector<8x8x8xf32>
    "tpu.trace_stop"() : () -> ()
    %51 = vector.extract_strided_slice %9 {offsets = [0, 0, 16], sizes = [8, 8, 8], strides = [1, 1, 1]} : vector<8x8x32xf32> to vector<8x8x8xf32>
    %52 = vector.extract_strided_slice %16 {offsets = [0, 0, 16], sizes = [8, 8, 8], strides = [1, 1, 1]} : vector<8x8x32xf32> to vector<8x8x8xf32>
    "tpu.trace_start"() <{level = 10 : i32, message = "ntd,nsd->nts"}> : () -> ()
    %cst_26 = arith.constant dense<0.000000e+00> : vector<8x8x8xf32>
    %53 = tpu.matmul %51, %52, %cst_26 {dimension_numbers = #tpu.dot_dimension_numbers<[2], [2], [1], [1], [0, 0, 0, 1, 1, 1], [0], [0]>} : vector<8x8x8xf32>, vector<8x8x8xf32>, vector<8x8x8xf32> -> vector<8x8x8xf32>
    "tpu.trace_stop"() : () -> ()
    %cst_27 = arith.constant 0.353553385 : f32
    %54 = vector.broadcast %cst_27 : f32 to vector<8x8x8xf32>
    %55 = arith.mulf %53, %54 : vector<8x8x8xf32>
    %cst_28 = arith.constant dense<0xFF800000> : vector<8x8xf32>
    %56 = vector.multi_reduction <maximumf>, %55, %cst_28 [2] : vector<8x8x8xf32> to vector<8x8xf32>
    %57 = vector.shape_cast %56 : vector<8x8xf32> to vector<8x8x1xf32>
    %58 = vector.broadcast %57 : vector<8x8x1xf32> to vector<8x8x8xf32>
    %59 = arith.subf %55, %58 : vector<8x8x8xf32>
    %60 = math.exp %59 : vector<8x8x8xf32>
    %cst_29 = arith.constant dense<0.000000e+00> : vector<8x8xf32>
    %61 = vector.multi_reduction <add>, %60, %cst_29 [2] : vector<8x8x8xf32> to vector<8x8xf32>
    %62 = vector.shape_cast %61 : vector<8x8xf32> to vector<8x8x1xf32>
    %63 = vector.broadcast %62 : vector<8x8x1xf32> to vector<8x8x8xf32>
    %64 = arith.divf %60, %63 : vector<8x8x8xf32>
    %65 = vector.extract_strided_slice %18 {offsets = [0, 0, 16], sizes = [8, 8, 8], strides = [1, 1, 1]} : vector<8x8x32xf32> to vector<8x8x8xf32>
    "tpu.trace_start"() <{level = 10 : i32, message = "nts,nsd->ntd"}> : () -> ()
    %cst_30 = arith.constant dense<0.000000e+00> : vector<8x8x8xf32>
    %66 = tpu.matmul %64, %65, %cst_30 {dimension_numbers = #tpu.dot_dimension_numbers<[2], [1], [1], [2], [0, 0, 0, 1, 1, 2], [0], [0]>} : vector<8x8x8xf32>, vector<8x8x8xf32>, vector<8x8x8xf32> -> vector<8x8x8xf32>
    "tpu.trace_stop"() : () -> ()
    %67 = vector.extract_strided_slice %9 {offsets = [0, 0, 24], sizes = [8, 8, 8], strides = [1, 1, 1]} : vector<8x8x32xf32> to vector<8x8x8xf32>
    %68 = vector.extract_strided_slice %16 {offsets = [0, 0, 24], sizes = [8, 8, 8], strides = [1, 1, 1]} : vector<8x8x32xf32> to vector<8x8x8xf32>
    "tpu.trace_start"() <{level = 10 : i32, message = "ntd,nsd->nts"}> : () -> ()
    %cst_31 = arith.constant dense<0.000000e+00> : vector<8x8x8xf32>
    %69 = tpu.matmul %67, %68, %cst_31 {dimension_numbers = #tpu.dot_dimension_numbers<[2], [2], [1], [1], [0, 0, 0, 1, 1, 1], [0], [0]>} : vector<8x8x8xf32>, vector<8x8x8xf32>, vector<8x8x8xf32> -> vector<8x8x8xf32>
    "tpu.trace_stop"() : () -> ()
    %cst_32 = arith.constant 0.353553385 : f32
    %70 = vector.broadcast %cst_32 : f32 to vector<8x8x8xf32>
    %71 = arith.mulf %69, %70 : vector<8x8x8xf32>
    %cst_33 = arith.constant dense<0xFF800000> : vector<8x8xf32>
    %72 = vector.multi_reduction <maximumf>, %71, %cst_33 [2] : vector<8x8x8xf32> to vector<8x8xf32>
    %73 = vector.shape_cast %72 : vector<8x8xf32> to vector<8x8x1xf32>
    %74 = vector.broadcast %73 : vector<8x8x1xf32> to vector<8x8x8xf32>
    %75 = arith.subf %71, %74 : vector<8x8x8xf32>
    %76 = math.exp %75 : vector<8x8x8xf32>
    %cst_34 = arith.constant dense<0.000000e+00> : vector<8x8xf32>
    %77 = vector.multi_reduction <add>, %76, %cst_34 [2] : vector<8x8x8xf32> to vector<8x8xf32>
    %78 = vector.shape_cast %77 : vector<8x8xf32> to vector<8x8x1xf32>
    %79 = vector.broadcast %78 : vector<8x8x1xf32> to vector<8x8x8xf32>
    %80 = arith.divf %76, %79 : vector<8x8x8xf32>
    %81 = vector.extract_strided_slice %18 {offsets = [0, 0, 24], sizes = [8, 8, 8], strides = [1, 1, 1]} : vector<8x8x32xf32> to vector<8x8x8xf32>
    "tpu.trace_start"() <{level = 10 : i32, message = "nts,nsd->ntd"}> : () -> ()
    %cst_35 = arith.constant dense<0.000000e+00> : vector<8x8x8xf32>
    %82 = tpu.matmul %80, %81, %cst_35 {dimension_numbers = #tpu.dot_dimension_numbers<[2], [1], [1], [2], [0, 0, 0, 1, 1, 2], [0], [0]>} : vector<8x8x8xf32>, vector<8x8x8xf32>, vector<8x8x8xf32> -> vector<8x8x8xf32>
    "tpu.trace_stop"() : () -> ()
    %83 = tpu.concatenate %34, %50, %66, %82 in 2 : vector<8x8x8xf32>, vector<8x8x8xf32>, vector<8x8x8xf32>, vector<8x8x8xf32> -> vector<8x8x32xf32>
    %84 = vector.shape_cast %83 : vector<8x8x32xf32> to vector<64x32xf32>
    %c0_36 = arith.constant 0 : index
    %c0_37 = arith.constant 0 : index
    %85 = vector.load %arg7[%c0_36, %c0_37] : memref<32x32xf32, #tpu.memory_space<vmem>>, vector<32x32xf32>
    %cst_38 = arith.constant dense<0.000000e+00> : vector<64x32xf32>
    %86 = tpu.matmul %84, %85, %cst_38 {dimension_numbers = #tpu.dot_dimension_numbers<[1], [0], [0], [1], [0, 0, 1, 1], [], []>} : vector<64x32xf32>, vector<32x32xf32>, vector<64x32xf32> -> vector<64x32xf32>
    %c0_39 = arith.constant 0 : index
    %c0_40 = arith.constant 0 : index
    %87 = vector.load %arg8[%c0_39, %c0_40] : memref<1x32xf32, #tpu.memory_space<vmem>>, vector<1x32xf32>
    %88 = vector.broadcast %87 : vector<1x32xf32> to vector<64x32xf32>
    %89 = arith.addf %86, %88 : vector<64x32xf32>
    %90 = arith.addf %89, %1 : vector<64x32xf32>
    %c0_41 = arith.constant 0 : index
    %c0_42 = arith.constant 0 : index
    %91 = vector.load %arg9[%c0_41, %c0_42] : memref<1x32xf32, #tpu.memory_space<vmem>>, vector<1x32xf32>
    %c0_43 = arith.constant 0 : index
    %c0_44 = arith.constant 0 : index
    %92 = vector.load %arg10[%c0_43, %c0_44] : memref<1x32xf32, #tpu.memory_space<vmem>>, vector<1x32xf32>
    %cst_45 = arith.constant dense<0.000000e+00> : vector<64xf32>
    %93 = vector.multi_reduction <add>, %90, %cst_45 [1] : vector<64x32xf32> to vector<64xf32>
    %94 = vector.shape_cast %93 : vector<64xf32> to vector<64x1xf32>
    %cst_46 = arith.constant 3.200000e+01 : f32
    %95 = vector.broadcast %cst_46 : f32 to vector<64x1xf32>
    %96 = arith.divf %94, %95 : vector<64x1xf32>
    %97 = vector.broadcast %96 : vector<64x1xf32> to vector<64x32xf32>
    %98 = arith.subf %90, %97 : vector<64x32xf32>
    %99 = vector.broadcast %96 : vector<64x1xf32> to vector<64x32xf32>
    %100 = arith.subf %90, %99 : vector<64x32xf32>
    %101 = arith.mulf %98, %100 : vector<64x32xf32>
    %cst_47 = arith.constant dense<0.000000e+00> : vector<64xf32>
    %102 = vector.multi_reduction <add>, %101, %cst_47 [1] : vector<64x32xf32> to vector<64xf32>
    %103 = vector.shape_cast %102 : vector<64xf32> to vector<64x1xf32>
    %cst_48 = arith.constant 3.200000e+01 : f32
    %104 = vector.broadcast %cst_48 : f32 to vector<64x1xf32>
    %105 = arith.divf %103, %104 : vector<64x1xf32>
    %106 = vector.broadcast %96 : vector<64x1xf32> to vector<64x32xf32>
    %107 = arith.subf %90, %106 : vector<64x32xf32>
    %cst_49 = arith.constant 9.99999974E-6 : f32
    %108 = vector.broadcast %cst_49 : f32 to vector<64x1xf32>
    %109 = arith.addf %105, %108 : vector<64x1xf32>
    %110 = math.rsqrt %109 : vector<64x1xf32>
    %111 = vector.broadcast %110 : vector<64x1xf32> to vector<64x32xf32>
    %112 = arith.mulf %107, %111 : vector<64x32xf32>
    %113 = vector.broadcast %91 : vector<1x32xf32> to vector<64x32xf32>
    %114 = arith.mulf %112, %113 : vector<64x32xf32>
    %115 = vector.broadcast %92 : vector<1x32xf32> to vector<64x32xf32>
    %116 = arith.addf %114, %115 : vector<64x32xf32>
    %117 = vector.shape_cast %116 : vector<64x32xf32> to vector<1x8x8x32xf32>
    %c0_50 = arith.constant 0 : index
    %c0_51 = arith.constant 0 : index
    %c0_52 = arith.constant 0 : index
    %c0_53 = arith.constant 0 : index
    %118 = vector.load %arg11[%c0_50, %c0_51, %c0_52, %c0_53] : memref<1x8x8x32xf32, #tpu.memory_space<vmem>>, vector<1x8x8x32xf32>
    tpu.vector_store %arg11[%c0_50, %c0_51, %c0_52, %c0_53], %117 {strides = array<i32>} : memref<1x8x8x32xf32, #tpu.memory_space<vmem>>, vector<1x8x8x32xf32>,
    return
  }
  func.func @transform_0(%arg0: i32) -> (i32, i32, i32, i32) {
    %c0_i32 = arith.constant 0 : i32
    %c0_i32_0 = arith.constant 0 : i32
    %c0_i32_1 = arith.constant 0 : i32
    %c0_i32_2 = arith.constant 0 : i32
    return %arg0, %c0_i32, %c0_i32_0, %c0_i32_1 : i32, i32, i32, i32
  }
  func.func @transform_1(%arg0: i32) -> (i32, i32, i32, i32) {
    %c0_i32 = arith.constant 0 : i32
    %c0_i32_0 = arith.constant 0 : i32
    %c0_i32_1 = arith.constant 0 : i32
    %c0_i32_2 = arith.constant 0 : i32
    return %arg0, %c0_i32, %c0_i32_0, %c0_i32_1 : i32, i32, i32, i32
  }
  func.func @transform_2(%arg0: i32) -> (i32, i32) {
    %c0_i32 = arith.constant 0 : i32
    %c0_i32_0 = arith.constant 0 : i32
    %c0_i32_1 = arith.constant 0 : i32
    return %c0_i32, %c0_i32_0 : i32, i32
  }
  func.func @transform_3(%arg0: i32) -> (i32, i32) {
    %c0_i32 = arith.constant 0 : i32
    %c0_i32_0 = arith.constant 0 : i32
    %c0_i32_1 = arith.constant 0 : i32
    return %c0_i32, %c0_i32_0 : i32, i32
  }
  func.func @transform_4(%arg0: i32) -> (i32, i32) {
    %c0_i32 = arith.constant 0 : i32
    %c0_i32_0 = arith.constant 0 : i32
    %c0_i32_1 = arith.constant 0 : i32
    return %c0_i32, %c0_i32_0 : i32, i32
  }
  func.func @transform_5(%arg0: i32) -> (i32, i32) {
    %c0_i32 = arith.constant 0 : i32
    %c0_i32_0 = arith.constant 0 : i32
    %c0_i32_1 = arith.constant 0 : i32
    return %c0_i32, %c0_i32_0 : i32, i32
  }
  func.func @transform_6(%arg0: i32) -> (i32, i32) {
    %c0_i32 = arith.constant 0 : i32
    %c0_i32_0 = arith.constant 0 : i32
    %c0_i32_1 = arith.constant 0 : i32
    return %c0_i32, %c0_i32_0 : i32, i32
  }
  func.func @transform_7(%arg0: i32) -> (i32, i32) {
    %c0_i32 = arith.constant 0 : i32
    %c0_i32_0 = arith.constant 0 : i32
    %c0_i32_1 = arith.constant 0 : i32
    return %c0_i32, %c0_i32_0 : i32, i32
  }
  func.func @transform_8(%arg0: i32) -> (i32, i32) {
    %c0_i32 = arith.constant 0 : i32
    %c0_i32_0 = arith.constant 0 : i32
    %c0_i32_1 = arith.constant 0 : i32
    return %c0_i32, %c0_i32_0 : i32, i32
  }
  func.func @transform_9(%arg0: i32) -> (i32, i32) {
    %c0_i32 = arith.constant 0 : i32
    %c0_i32_0 = arith.constant 0 : i32
    %c0_i32_1 = arith.constant 0 : i32
    return %c0_i32, %c0_i32_0 : i32, i32
  }
  func.func @transform_10(%arg0: i32) -> (i32, i32, i32, i32) {
    %c0_i32 = arith.constant 0 : i32
    %c0_i32_0 = arith.constant 0 : i32
    %c0_i32_1 = arith.constant 0 : i32
    %c0_i32_2 = arith.constant 0 : i32
    return %arg0, %c0_i32, %c0_i32_0, %c0_i32_1 : i32, i32, i32, i32
  }
}

module attributes {stable_mosaic.version = 11 : i64} {
  func.func @_dcn_block_kernel(%arg0: i32, %arg1: memref<1x8x8x32xf32, #tpu.memory_space<vmem>>, %arg2: memref<2x8x8xf32, #tpu.memory_space<vmem>>, %arg3: memref<160x32xf32, #tpu.memory_space<vmem>>, %arg4: memref<1x32xf32, #tpu.memory_space<vmem>>, %arg5: memref<1x32xf32, #tpu.memory_space<vmem>>, %arg6: memref<1x32xf32, #tpu.memory_space<vmem>>, %arg7: memref<1x8x8x32xf32, #tpu.memory_space<vmem>>) attributes {dimension_semantics = [#tpu.dimension_semantics<parallel>], iteration_bounds = array<i64: 2>, scalar_prefetch = 0 : i64, scratch_operands = 0 : i64, tpu.core_type = #tpu.core_type<tc>, window_params = [{transform_indices = @transform_0, window_bounds = array<i64: 1, 8, 8, 32>}, {pipeline_mode = #tpu.pipeline_mode<synchronous>, transform_indices = @transform_1, window_bounds = array<i64: 2, 8, 8>}, {pipeline_mode = #tpu.pipeline_mode<synchronous>, transform_indices = @transform_2, window_bounds = array<i64: 160, 32>}, {pipeline_mode = #tpu.pipeline_mode<synchronous>, transform_indices = @transform_3, window_bounds = array<i64: 1, 32>}, {pipeline_mode = #tpu.pipeline_mode<synchronous>, transform_indices = @transform_4, window_bounds = array<i64: 1, 32>}, {pipeline_mode = #tpu.pipeline_mode<synchronous>, transform_indices = @transform_5, window_bounds = array<i64: 1, 32>}, {transform_indices = @transform_6, window_bounds = array<i64: 1, 8, 8, 32>}]} {
    %c0 = arith.constant 0 : index
    %c0_0 = arith.constant 0 : index
    %c0_1 = arith.constant 0 : index
    %c0_2 = arith.constant 0 : index
    %0 = vector.load %arg1[%c0, %c0_0, %c0_1, %c0_2] : memref<1x8x8x32xf32, #tpu.memory_space<vmem>>, vector<1x8x8x32xf32>
    %1 = vector.shape_cast %0 : vector<1x8x8x32xf32> to vector<8x256xf32>
    %2 = vector.shape_cast %1 : vector<8x256xf32> to vector<64x32xf32>
    %c0_3 = arith.constant 0 : index
    %c0_4 = arith.constant 0 : index
    %c0_5 = arith.constant 0 : index
    %3 = vector.load %arg2[%c0_3, %c0_4, %c0_5] : memref<2x8x8xf32, #tpu.memory_space<vmem>>, vector<1x8x8xf32>
    %4 = vector.shape_cast %3 : vector<1x8x8xf32> to vector<8x8xf32>
    %cst = arith.constant dense<0.000000e+00> : vector<8x256xf32>
    %5 = tpu.matmul %4, %1, %cst {dimension_numbers = #tpu.dot_dimension_numbers<[1], [0], [0], [1], [0, 0, 1, 1], [], []>} : vector<8x8xf32>, vector<8x256xf32>, vector<8x256xf32> -> vector<8x256xf32>
    %cst_6 = arith.constant dense<0.000000e+00> : vector<8x256xf32>
    %6 = tpu.matmul %4, %5, %cst_6 {dimension_numbers = #tpu.dot_dimension_numbers<[1], [0], [0], [1], [0, 0, 1, 1], [], []>} : vector<8x8xf32>, vector<8x256xf32>, vector<8x256xf32> -> vector<8x256xf32>
    %c1 = arith.constant 1 : index
    %c0_7 = arith.constant 0 : index
    %c0_8 = arith.constant 0 : index
    %7 = vector.load %arg2[%c1, %c0_7, %c0_8] : memref<2x8x8xf32, #tpu.memory_space<vmem>>, vector<1x8x8xf32>
    %8 = vector.shape_cast %7 : vector<1x8x8xf32> to vector<8x8xf32>
    %cst_9 = arith.constant dense<0.000000e+00> : vector<8x256xf32>
    %9 = tpu.matmul %8, %1, %cst_9 {dimension_numbers = #tpu.dot_dimension_numbers<[1], [0], [0], [1], [0, 0, 1, 1], [], []>} : vector<8x8xf32>, vector<8x256xf32>, vector<8x256xf32> -> vector<8x256xf32>
    %cst_10 = arith.constant dense<0.000000e+00> : vector<8x256xf32>
    %10 = tpu.matmul %8, %9, %cst_10 {dimension_numbers = #tpu.dot_dimension_numbers<[1], [0], [0], [1], [0, 0, 1, 1], [], []>} : vector<8x8xf32>, vector<8x256xf32>, vector<8x256xf32> -> vector<8x256xf32>
    %11 = vector.shape_cast %1 : vector<8x256xf32> to vector<8x8x32xf32>
    %12 = vector.shape_cast %5 : vector<8x256xf32> to vector<8x8x32xf32>
    %13 = vector.shape_cast %6 : vector<8x256xf32> to vector<8x8x32xf32>
    %14 = vector.shape_cast %9 : vector<8x256xf32> to vector<8x8x32xf32>
    %15 = vector.shape_cast %10 : vector<8x256xf32> to vector<8x8x32xf32>
    %16 = tpu.concatenate %11, %12, %13, %14, %15 in 2 : vector<8x8x32xf32>, vector<8x8x32xf32>, vector<8x8x32xf32>, vector<8x8x32xf32>, vector<8x8x32xf32> -> vector<8x8x160xf32>
    %17 = vector.shape_cast %16 : vector<8x8x160xf32> to vector<64x160xf32>
    %c0_11 = arith.constant 0 : index
    %c0_12 = arith.constant 0 : index
    %18 = vector.load %arg3[%c0_11, %c0_12] : memref<160x32xf32, #tpu.memory_space<vmem>>, vector<160x32xf32>
    %cst_13 = arith.constant dense<0.000000e+00> : vector<64x32xf32>
    %19 = tpu.matmul %17, %18, %cst_13 {dimension_numbers = #tpu.dot_dimension_numbers<[1], [0], [0], [1], [0, 0, 1, 1], [], []>} : vector<64x160xf32>, vector<160x32xf32>, vector<64x32xf32> -> vector<64x32xf32>
    %c0_14 = arith.constant 0 : index
    %c0_15 = arith.constant 0 : index
    %20 = vector.load %arg4[%c0_14, %c0_15] : memref<1x32xf32, #tpu.memory_space<vmem>>, vector<1x32xf32>
    %21 = vector.broadcast %20 : vector<1x32xf32> to vector<64x32xf32>
    %22 = arith.addf %19, %21 : vector<64x32xf32>
    %23 = arith.addf %22, %2 : vector<64x32xf32>
    %c0_16 = arith.constant 0 : index
    %c0_17 = arith.constant 0 : index
    %24 = vector.load %arg5[%c0_16, %c0_17] : memref<1x32xf32, #tpu.memory_space<vmem>>, vector<1x32xf32>
    %c0_18 = arith.constant 0 : index
    %c0_19 = arith.constant 0 : index
    %25 = vector.load %arg6[%c0_18, %c0_19] : memref<1x32xf32, #tpu.memory_space<vmem>>, vector<1x32xf32>
    %cst_20 = arith.constant dense<0.000000e+00> : vector<64xf32>
    %26 = vector.multi_reduction <add>, %23, %cst_20 [1] : vector<64x32xf32> to vector<64xf32>
    %27 = vector.shape_cast %26 : vector<64xf32> to vector<64x1xf32>
    %cst_21 = arith.constant 3.200000e+01 : f32
    %28 = vector.broadcast %cst_21 : f32 to vector<64x1xf32>
    %29 = arith.divf %27, %28 : vector<64x1xf32>
    %30 = vector.broadcast %29 : vector<64x1xf32> to vector<64x32xf32>
    %31 = arith.subf %23, %30 : vector<64x32xf32>
    %32 = vector.broadcast %29 : vector<64x1xf32> to vector<64x32xf32>
    %33 = arith.subf %23, %32 : vector<64x32xf32>
    %34 = arith.mulf %31, %33 : vector<64x32xf32>
    %cst_22 = arith.constant dense<0.000000e+00> : vector<64xf32>
    %35 = vector.multi_reduction <add>, %34, %cst_22 [1] : vector<64x32xf32> to vector<64xf32>
    %36 = vector.shape_cast %35 : vector<64xf32> to vector<64x1xf32>
    %cst_23 = arith.constant 3.200000e+01 : f32
    %37 = vector.broadcast %cst_23 : f32 to vector<64x1xf32>
    %38 = arith.divf %36, %37 : vector<64x1xf32>
    %39 = vector.broadcast %29 : vector<64x1xf32> to vector<64x32xf32>
    %40 = arith.subf %23, %39 : vector<64x32xf32>
    %cst_24 = arith.constant 9.99999974E-6 : f32
    %41 = vector.broadcast %cst_24 : f32 to vector<64x1xf32>
    %42 = arith.addf %38, %41 : vector<64x1xf32>
    %43 = math.rsqrt %42 : vector<64x1xf32>
    %44 = vector.broadcast %43 : vector<64x1xf32> to vector<64x32xf32>
    %45 = arith.mulf %40, %44 : vector<64x32xf32>
    %46 = vector.broadcast %24 : vector<1x32xf32> to vector<64x32xf32>
    %47 = arith.mulf %45, %46 : vector<64x32xf32>
    %48 = vector.broadcast %25 : vector<1x32xf32> to vector<64x32xf32>
    %49 = arith.addf %47, %48 : vector<64x32xf32>
    %50 = vector.shape_cast %49 : vector<64x32xf32> to vector<1x8x8x32xf32>
    %c0_25 = arith.constant 0 : index
    %c0_26 = arith.constant 0 : index
    %c0_27 = arith.constant 0 : index
    %c0_28 = arith.constant 0 : index
    %51 = vector.load %arg7[%c0_25, %c0_26, %c0_27, %c0_28] : memref<1x8x8x32xf32, #tpu.memory_space<vmem>>, vector<1x8x8x32xf32>
    tpu.vector_store %arg7[%c0_25, %c0_26, %c0_27, %c0_28], %50 {strides = array<i32>} : memref<1x8x8x32xf32, #tpu.memory_space<vmem>>, vector<1x8x8x32xf32>,
    return
  }
  func.func @transform_0(%arg0: i32) -> (i32, i32, i32, i32) {
    %c0_i32 = arith.constant 0 : i32
    %c0_i32_0 = arith.constant 0 : i32
    %c0_i32_1 = arith.constant 0 : i32
    %c0_i32_2 = arith.constant 0 : i32
    return %arg0, %c0_i32, %c0_i32_0, %c0_i32_1 : i32, i32, i32, i32
  }
  func.func @transform_1(%arg0: i32) -> (i32, i32, i32) {
    %c0_i32 = arith.constant 0 : i32
    %c0_i32_0 = arith.constant 0 : i32
    %c0_i32_1 = arith.constant 0 : i32
    %c0_i32_2 = arith.constant 0 : i32
    return %c0_i32, %c0_i32_0, %c0_i32_1 : i32, i32, i32
  }
  func.func @transform_2(%arg0: i32) -> (i32, i32) {
    %c0_i32 = arith.constant 0 : i32
    %c0_i32_0 = arith.constant 0 : i32
    %c0_i32_1 = arith.constant 0 : i32
    return %c0_i32, %c0_i32_0 : i32, i32
  }
  func.func @transform_3(%arg0: i32) -> (i32, i32) {
    %c0_i32 = arith.constant 0 : i32
    %c0_i32_0 = arith.constant 0 : i32
    %c0_i32_1 = arith.constant 0 : i32
    return %c0_i32, %c0_i32_0 : i32, i32
  }
  func.func @transform_4(%arg0: i32) -> (i32, i32) {
    %c0_i32 = arith.constant 0 : i32
    %c0_i32_0 = arith.constant 0 : i32
    %c0_i32_1 = arith.constant 0 : i32
    return %c0_i32, %c0_i32_0 : i32, i32
  }
  func.func @transform_5(%arg0: i32) -> (i32, i32) {
    %c0_i32 = arith.constant 0 : i32
    %c0_i32_0 = arith.constant 0 : i32
    %c0_i32_1 = arith.constant 0 : i32
    return %c0_i32, %c0_i32_0 : i32, i32
  }
  func.func @transform_6(%arg0: i32) -> (i32, i32, i32, i32) {
    %c0_i32 = arith.constant 0 : i32
    %c0_i32_0 = arith.constant 0 : i32
    %c0_i32_1 = arith.constant 0 : i32
    %c0_i32_2 = arith.constant 0 : i32
    return %arg0, %c0_i32, %c0_i32_0, %c0_i32_1 : i32, i32, i32, i32
  }
}

module attributes {stable_mosaic.version = 11 : i64} {
  func.func @_ff_block_kernel(%arg0: i32, %arg1: memref<1x8x8x32xf32, #tpu.memory_space<vmem>>, %arg2: memref<32x128xf32, #tpu.memory_space<vmem>>, %arg3: memref<1x128xf32, #tpu.memory_space<vmem>>, %arg4: memref<128x32xf32, #tpu.memory_space<vmem>>, %arg5: memref<1x32xf32, #tpu.memory_space<vmem>>, %arg6: memref<1x32xf32, #tpu.memory_space<vmem>>, %arg7: memref<1x32xf32, #tpu.memory_space<vmem>>, %arg8: memref<1x8x8x32xf32, #tpu.memory_space<vmem>>) attributes {dimension_semantics = [#tpu.dimension_semantics<parallel>], iteration_bounds = array<i64: 2>, scalar_prefetch = 0 : i64, scratch_operands = 0 : i64, tpu.core_type = #tpu.core_type<tc>, window_params = [{transform_indices = @transform_0, window_bounds = array<i64: 1, 8, 8, 32>}, {pipeline_mode = #tpu.pipeline_mode<synchronous>, transform_indices = @transform_1, window_bounds = array<i64: 32, 128>}, {pipeline_mode = #tpu.pipeline_mode<synchronous>, transform_indices = @transform_2, window_bounds = array<i64: 1, 128>}, {pipeline_mode = #tpu.pipeline_mode<synchronous>, transform_indices = @transform_3, window_bounds = array<i64: 128, 32>}, {pipeline_mode = #tpu.pipeline_mode<synchronous>, transform_indices = @transform_4, window_bounds = array<i64: 1, 32>}, {pipeline_mode = #tpu.pipeline_mode<synchronous>, transform_indices = @transform_5, window_bounds = array<i64: 1, 32>}, {pipeline_mode = #tpu.pipeline_mode<synchronous>, transform_indices = @transform_6, window_bounds = array<i64: 1, 32>}, {transform_indices = @transform_7, window_bounds = array<i64: 1, 8, 8, 32>}]} {
    %c0 = arith.constant 0 : index
    %c0_0 = arith.constant 0 : index
    %c0_1 = arith.constant 0 : index
    %c0_2 = arith.constant 0 : index
    %0 = vector.load %arg1[%c0, %c0_0, %c0_1, %c0_2] : memref<1x8x8x32xf32, #tpu.memory_space<vmem>>, vector<1x8x8x32xf32>
    %1 = vector.shape_cast %0 : vector<1x8x8x32xf32> to vector<64x32xf32>
    %c0_3 = arith.constant 0 : index
    %c0_4 = arith.constant 0 : index
    %2 = vector.load %arg2[%c0_3, %c0_4] : memref<32x128xf32, #tpu.memory_space<vmem>>, vector<32x128xf32>
    %cst = arith.constant dense<0.000000e+00> : vector<64x128xf32>
    %3 = tpu.matmul %1, %2, %cst {dimension_numbers = #tpu.dot_dimension_numbers<[1], [0], [0], [1], [0, 0, 1, 1], [], []>} : vector<64x32xf32>, vector<32x128xf32>, vector<64x128xf32> -> vector<64x128xf32>
    %c0_5 = arith.constant 0 : index
    %c0_6 = arith.constant 0 : index
    %4 = vector.load %arg3[%c0_5, %c0_6] : memref<1x128xf32, #tpu.memory_space<vmem>>, vector<1x128xf32>
    %5 = vector.broadcast %4 : vector<1x128xf32> to vector<64x128xf32>
    %6 = arith.addf %3, %5 : vector<64x128xf32>
    %cst_7 = arith.constant 0.000000e+00 : f32
    %7 = vector.broadcast %cst_7 : f32 to vector<64x128xf32>
    %8 = arith.maximumf %6, %7 : vector<64x128xf32>
    %c0_8 = arith.constant 0 : index
    %c0_9 = arith.constant 0 : index
    %9 = vector.load %arg4[%c0_8, %c0_9] : memref<128x32xf32, #tpu.memory_space<vmem>>, vector<128x32xf32>
    %cst_10 = arith.constant dense<0.000000e+00> : vector<64x32xf32>
    %10 = tpu.matmul %8, %9, %cst_10 {dimension_numbers = #tpu.dot_dimension_numbers<[1], [0], [0], [1], [0, 0, 1, 1], [], []>} : vector<64x128xf32>, vector<128x32xf32>, vector<64x32xf32> -> vector<64x32xf32>
    %c0_11 = arith.constant 0 : index
    %c0_12 = arith.constant 0 : index
    %11 = vector.load %arg5[%c0_11, %c0_12] : memref<1x32xf32, #tpu.memory_space<vmem>>, vector<1x32xf32>
    %12 = vector.broadcast %11 : vector<1x32xf32> to vector<64x32xf32>
    %13 = arith.addf %10, %12 : vector<64x32xf32>
    %14 = arith.addf %13, %1 : vector<64x32xf32>
    %c0_13 = arith.constant 0 : index
    %c0_14 = arith.constant 0 : index
    %15 = vector.load %arg6[%c0_13, %c0_14] : memref<1x32xf32, #tpu.memory_space<vmem>>, vector<1x32xf32>
    %c0_15 = arith.constant 0 : index
    %c0_16 = arith.constant 0 : index
    %16 = vector.load %arg7[%c0_15, %c0_16] : memref<1x32xf32, #tpu.memory_space<vmem>>, vector<1x32xf32>
    %cst_17 = arith.constant dense<0.000000e+00> : vector<64xf32>
    %17 = vector.multi_reduction <add>, %14, %cst_17 [1] : vector<64x32xf32> to vector<64xf32>
    %18 = vector.shape_cast %17 : vector<64xf32> to vector<64x1xf32>
    %cst_18 = arith.constant 3.200000e+01 : f32
    %19 = vector.broadcast %cst_18 : f32 to vector<64x1xf32>
    %20 = arith.divf %18, %19 : vector<64x1xf32>
    %21 = vector.broadcast %20 : vector<64x1xf32> to vector<64x32xf32>
    %22 = arith.subf %14, %21 : vector<64x32xf32>
    %23 = vector.broadcast %20 : vector<64x1xf32> to vector<64x32xf32>
    %24 = arith.subf %14, %23 : vector<64x32xf32>
    %25 = arith.mulf %22, %24 : vector<64x32xf32>
    %cst_19 = arith.constant dense<0.000000e+00> : vector<64xf32>
    %26 = vector.multi_reduction <add>, %25, %cst_19 [1] : vector<64x32xf32> to vector<64xf32>
    %27 = vector.shape_cast %26 : vector<64xf32> to vector<64x1xf32>
    %cst_20 = arith.constant 3.200000e+01 : f32
    %28 = vector.broadcast %cst_20 : f32 to vector<64x1xf32>
    %29 = arith.divf %27, %28 : vector<64x1xf32>
    %30 = vector.broadcast %20 : vector<64x1xf32> to vector<64x32xf32>
    %31 = arith.subf %14, %30 : vector<64x32xf32>
    %cst_21 = arith.constant 9.99999974E-6 : f32
    %32 = vector.broadcast %cst_21 : f32 to vector<64x1xf32>
    %33 = arith.addf %29, %32 : vector<64x1xf32>
    %34 = math.rsqrt %33 : vector<64x1xf32>
    %35 = vector.broadcast %34 : vector<64x1xf32> to vector<64x32xf32>
    %36 = arith.mulf %31, %35 : vector<64x32xf32>
    %37 = vector.broadcast %15 : vector<1x32xf32> to vector<64x32xf32>
    %38 = arith.mulf %36, %37 : vector<64x32xf32>
    %39 = vector.broadcast %16 : vector<1x32xf32> to vector<64x32xf32>
    %40 = arith.addf %38, %39 : vector<64x32xf32>
    %41 = vector.shape_cast %40 : vector<64x32xf32> to vector<1x8x8x32xf32>
    %c0_22 = arith.constant 0 : index
    %c0_23 = arith.constant 0 : index
    %c0_24 = arith.constant 0 : index
    %c0_25 = arith.constant 0 : index
    %42 = vector.load %arg8[%c0_22, %c0_23, %c0_24, %c0_25] : memref<1x8x8x32xf32, #tpu.memory_space<vmem>>, vector<1x8x8x32xf32>
    tpu.vector_store %arg8[%c0_22, %c0_23, %c0_24, %c0_25], %41 {strides = array<i32>} : memref<1x8x8x32xf32, #tpu.memory_space<vmem>>, vector<1x8x8x32xf32>,
    return
  }
  func.func @transform_0(%arg0: i32) -> (i32, i32, i32, i32) {
    %c0_i32 = arith.constant 0 : i32
    %c0_i32_0 = arith.constant 0 : i32
    %c0_i32_1 = arith.constant 0 : i32
    %c0_i32_2 = arith.constant 0 : i32
    return %arg0, %c0_i32, %c0_i32_0, %c0_i32_1 : i32, i32, i32, i32
  }
  func.func @transform_1(%arg0: i32) -> (i32, i32) {
    %c0_i32 = arith.constant 0 : i32
    %c0_i32_0 = arith.constant 0 : i32
    %c0_i32_1 = arith.constant 0 : i32
    return %c0_i32, %c0_i32_0 : i32, i32
  }
  func.func @transform_2(%arg0: i32) -> (i32, i32) {
    %c0_i32 = arith.constant 0 : i32
    %c0_i32_0 = arith.constant 0 : i32
    %c0_i32_1 = arith.constant 0 : i32
    return %c0_i32, %c0_i32_0 : i32, i32
  }
  func.func @transform_3(%arg0: i32) -> (i32, i32) {
    %c0_i32 = arith.constant 0 : i32
    %c0_i32_0 = arith.constant 0 : i32
    %c0_i32_1 = arith.constant 0 : i32
    return %c0_i32, %c0_i32_0 : i32, i32
  }
  func.func @transform_4(%arg0: i32) -> (i32, i32) {
    %c0_i32 = arith.constant 0 : i32
    %c0_i32_0 = arith.constant 0 : i32
    %c0_i32_1 = arith.constant 0 : i32
    return %c0_i32, %c0_i32_0 : i32, i32
  }
  func.func @transform_5(%arg0: i32) -> (i32, i32) {
    %c0_i32 = arith.constant 0 : i32
    %c0_i32_0 = arith.constant 0 : i32
    %c0_i32_1 = arith.constant 0 : i32
    return %c0_i32, %c0_i32_0 : i32, i32
  }
  func.func @transform_6(%arg0: i32) -> (i32, i32) {
    %c0_i32 = arith.constant 0 : i32
    %c0_i32_0 = arith.constant 0 : i32
    %c0_i32_1 = arith.constant 0 : i32
    return %c0_i32, %c0_i32_0 : i32, i32
  }
  func.func @transform_7(%arg0: i32) -> (i32, i32, i32, i32) {
    %c0_i32 = arith.constant 0 : i32
    %c0_i32_0 = arith.constant 0 : i32
    %c0_i32_1 = arith.constant 0 : i32
    %c0_i32_2 = arith.constant 0 : i32
    return %arg0, %c0_i32, %c0_i32_0, %c0_i32_1 : i32, i32, i32, i32
  }
}

module attributes {stable_mosaic.version = 11 : i64} {
  func.func @_linear_block_kernel(%arg0: i32, %arg1: memref<1x8x8x32xf32, #tpu.memory_space<vmem>>, %arg2: memref<32x1xf32, #tpu.memory_space<vmem>>, %arg3: memref<1x1xf32, #tpu.memory_space<vmem>>, %arg4: memref<1x8x8x1xf32, #tpu.memory_space<vmem>>) attributes {dimension_semantics = [#tpu.dimension_semantics<parallel>], iteration_bounds = array<i64: 2>, scalar_prefetch = 0 : i64, scratch_operands = 0 : i64, tpu.core_type = #tpu.core_type<tc>, window_params = [{transform_indices = @transform_0, window_bounds = array<i64: 1, 8, 8, 32>}, {pipeline_mode = #tpu.pipeline_mode<synchronous>, transform_indices = @transform_1, window_bounds = array<i64: 32, 1>}, {pipeline_mode = #tpu.pipeline_mode<synchronous>, transform_indices = @transform_2, window_bounds = array<i64: 1, 1>}, {transform_indices = @transform_3, window_bounds = array<i64: 1, 8, 8, 1>}]} {
    %c0 = arith.constant 0 : index
    %c0_0 = arith.constant 0 : index
    %c0_1 = arith.constant 0 : index
    %c0_2 = arith.constant 0 : index
    %0 = vector.load %arg1[%c0, %c0_0, %c0_1, %c0_2] : memref<1x8x8x32xf32, #tpu.memory_space<vmem>>, vector<1x8x8x32xf32>
    %1 = vector.shape_cast %0 : vector<1x8x8x32xf32> to vector<64x32xf32>
    %cst = arith.constant 0.000000e+00 : f32
    %2 = vector.broadcast %cst : f32 to vector<64x32xf32>
    %3 = arith.maximumf %1, %2 : vector<64x32xf32>
    %c0_3 = arith.constant 0 : index
    %c0_4 = arith.constant 0 : index
    %4 = vector.load %arg2[%c0_3, %c0_4] : memref<32x1xf32, #tpu.memory_space<vmem>>, vector<32x1xf32>
    %cst_5 = arith.constant dense<0.000000e+00> : vector<64x1xf32>
    %5 = tpu.matmul %3, %4, %cst_5 {dimension_numbers = #tpu.dot_dimension_numbers<[1], [0], [0], [1], [0, 0, 1, 1], [], []>} : vector<64x32xf32>, vector<32x1xf32>, vector<64x1xf32> -> vector<64x1xf32>
    %c0_6 = arith.constant 0 : index
    %c0_7 = arith.constant 0 : index
    %6 = vector.load %arg3[%c0_6, %c0_7] : memref<1x1xf32, #tpu.memory_space<vmem>>, vector<1x1xf32>
    %7 = vector.broadcast %6 : vector<1x1xf32> to vector<64x1xf32>
    %8 = arith.addf %5, %7 : vector<64x1xf32>
    %9 = vector.shape_cast %8 : vector<64x1xf32> to vector<1x8x8x1xf32>
    %c0_8 = arith.constant 0 : index
    %c0_9 = arith.constant 0 : index
    %c0_10 = arith.constant 0 : index
    %c0_11 = arith.constant 0 : index
    %10 = vector.load %arg4[%c0_8, %c0_9, %c0_10, %c0_11] : memref<1x8x8x1xf32, #tpu.memory_space<vmem>>, vector<1x8x8x1xf32>
    tpu.vector_store %arg4[%c0_8, %c0_9, %c0_10, %c0_11], %9 {strides = array<i32>} : memref<1x8x8x1xf32, #tpu.memory_space<vmem>>, vector<1x8x8x1xf32>,
    return
  }
  func.func @transform_0(%arg0: i32) -> (i32, i32, i32, i32) {
    %c0_i32 = arith.constant 0 : i32
    %c0_i32_0 = arith.constant 0 : i32
    %c0_i32_1 = arith.constant 0 : i32
    %c0_i32_2 = arith.constant 0 : i32
    return %arg0, %c0_i32, %c0_i32_0, %c0_i32_1 : i32, i32, i32, i32
  }
  func.func @transform_1(%arg0: i32) -> (i32, i32) {
    %c0_i32 = arith.constant 0 : i32
    %c0_i32_0 = arith.constant 0 : i32
    %c0_i32_1 = arith.constant 0 : i32
    return %c0_i32, %c0_i32_0 : i32, i32
  }
  func.func @transform_2(%arg0: i32) -> (i32, i32) {
    %c0_i32 = arith.constant 0 : i32
    %c0_i32_0 = arith.constant 0 : i32
    %c0_i32_1 = arith.constant 0 : i32
    return %c0_i32, %c0_i32_0 : i32, i32
  }
  func.func @transform_3(%arg0: i32) -> (i32, i32, i32, i32) {
    %c0_i32 = arith.constant 0 : i32
    %c0_i32_0 = arith.constant 0 : i32
    %c0_i32_1 = arith.constant 0 : i32
    %c0_i32_2 = arith.constant 0 : i32
    return %arg0, %c0_i32, %c0_i32_0, %c0_i32_1 : i32, i32, i32, i32
  }
}

</mosaic_0001>

<llo_original>
// kernel: st_model_forward.14
$region0: #{st_model_forward.14}
  #allocation0 [shape = 'u32[]', space=smem, size = 0x4, offset = 0x4, fixed_abs, tag = 'smem constant byte address 0x4 - core index']
  #allocation1 [shape = 'u32[144,128]{1,0:T(1,128)}', space=vmem, size = 0x12000, scoped, tag = 'internal scratch']
  %s0 = inlined_call_operand.vmem [shape: f32[2,8,8,2], index: 0, kind: input, shape index: {}]
  %s1 = inlined_call_operand.vmem [shape: f32[2,32], index: 1, kind: input, shape index: {}]
  %s2 = inlined_call_operand.vmem [shape: f32[1,32], index: 2, kind: input, shape index: {}]
  %s3 = inlined_call_operand.vmem [shape: f32[2,8,8,32], index: 3, kind: output, shape index: {}]
  %s4 = sld [smem:[#allocation0]]
  $region45: #{st_model_forward.14} parent=0
    _
  %s6 = ssub.s32 1, %s4
  %s7 = scalar_select 0, %s6, %s4
  loop: start=0, step=1, limit=4
  $region2: #{st_model_forward.14} parent=0 // loop_pre_header
    _
  $region3: #{st_model_forward.14} parent=0 // loop_header
    %s9 = sphi 0, %s13
    %p10 = scmp.ge.s32.totalorder %s9, 4
    %s19 = sphi 0, %s21
    %s22 = sphi 0, %s19
    %s23 = sphi 0, %s22
    %s39 = sphi 0, %s23
    %s43 = sphi 0, %s43
    %s45 = sphi 0, %s43
    %s46 = sphi 0, %s45
    %s60 = sphi 0, %s46
    %s64 = sphi 0, %s64
    %s66 = sphi 0, %s64
    %s67 = sphi 0, %s66
    %s81 = sphi 0, %s67
    %s87 = sphi 0, %s89
    %s90 = sphi 0, %s87
    %s91 = sphi 0, %s90
    %s107 = sphi 0, %s91
  $region4: #{st_model_forward.14} parent=0 // loop_header_branch
    %12 = sbr.rel (%p10) target = $region8
  $region5: #{st_model_forward.14} parent=0 // loop_body
    %s14 = ssub.s32 %s9, 1
    %s15 = ssub.s32 %s9, 2
    %s16 = sadd.s32 %s9, 1
    %s17 = ssub.s32 %s9, %s16
    %p18 = scmp.eq.s32.totalorder %s17, 0
    %s20 = sadd.s32 %s19, 1
    %s21 = scalar_select %p18, %s19, %s20
    %p24 = pneg %p18
    %p25 = scmp.eq.s32.totalorder %s9, 1
    %p26 = por %p24, %p25
    %p27 = scmp.ne.s32.totalorder %s19, %s22
    %p28 = scmp.eq.s32.totalorder %s9, 0
    %p29 = por %p27, %p28
    %p30 = scmp.ne.s32.totalorder %s19, %s22
    %p31 = scmp.eq.s32.totalorder %s14, 1
    %p32 = por %p30, %p31
    %p33 = scmp.ne.s32.totalorder %s22, %s23
    %p34 = scmp.eq.s32.totalorder %s14, 0
    %p35 = por %p33, %p34
    %p36 = scmp.ne.s32.totalorder %s22, %s23
    %p37 = scmp.eq.s32.totalorder %s15, 1
    %p38 = por %p36, %p37
    %p40 = scmp.ne.s32.totalorder %s23, %s39
    %p41 = scmp.eq.s32.totalorder %s15, 0
    %p42 = por %p40, %p41
    %s44 = sadd.s32 %s43, 1
    %p47 = scmp.eq.s32.totalorder %s9, 1
    %p48 = scmp.ne.s32.totalorder %s43, %s45
    %p49 = scmp.eq.s32.totalorder %s9, 0
    %p50 = por %p48, %p49
    %p51 = scmp.ne.s32.totalorder %s43, %s45
    %p52 = scmp.eq.s32.totalorder %s14, 1
    %p53 = por %p51, %p52
    %p54 = scmp.ne.s32.totalorder %s45, %s46
    %p55 = scmp.eq.s32.totalorder %s14, 0
    %p56 = por %p54, %p55
    %p57 = scmp.ne.s32.totalorder %s45, %s46
    %p58 = scmp.eq.s32.totalorder %s15, 1
    %p59 = por %p57, %p58
    %p61 = scmp.ne.s32.totalorder %s46, %s60
    %p62 = scmp.eq.s32.totalorder %s15, 0
    %p63 = por %p61, %p62
    %s65 = sadd.s32 %s64, 1
    %p68 = scmp.eq.s32.totalorder %s9, 1
    %p69 = scmp.ne.s32.totalorder %s64, %s66
    %p70 = scmp.eq.s32.totalorder %s9, 0
    %p71 = por %p69, %p70
    %p72 = scmp.ne.s32.totalorder %s64, %s66
    %p73 = scmp.eq.s32.totalorder %s14, 1
    %p74 = por %p72, %p73
    %p75 = scmp.ne.s32.totalorder %s66, %s67
    %p76 = scmp.eq.s32.totalorder %s14, 0
    %p77 = por %p75, %p76
    %p78 = scmp.ne.s32.totalorder %s66, %s67
    %p79 = scmp.eq.s32.totalorder %s15, 1
    %p80 = por %p78, %p79
    %p82 = scmp.ne.s32.totalorder %s67, %s81
    %p83 = scmp.eq.s32.totalorder %s15, 0
    %p84 = por %p82, %p83
    %s85 = ssub.s32 %s9, %s16
    %p86 = scmp.eq.s32.totalorder %s85, 0
    %s88 = sadd.s32 %s87, 1
    %s89 = scalar_select %p86, %s87, %s88
    %p92 = pneg %p86
    %p93 = scmp.eq.s32.totalorder %s9, 1
    %p94 = por %p92, %p93
    %p95 = scmp.ne.s32.totalorder %s87, %s90
    %p96 = scmp.eq.s32.totalorder %s9, 0
    %p97 = por %p95, %p96
    %p98 = scmp.ne.s32.totalorder %s87, %s90
    %p99 = scmp.eq.s32.totalorder %s14, 1
    %p100 = por %p98, %p99
    %p101 = scmp.ne.s32.totalorder %s90, %s91
    %p102 = scmp.eq.s32.totalorder %s14, 0
    %p103 = por %p101, %p102
    %p104 = scmp.ne.s32.totalorder %s90, %s91
    %p105 = scmp.eq.s32.totalorder %s15, 1
    %p106 = por %p104, %p105
    %p108 = scmp.ne.s32.totalorder %s91, %s107
    %p109 = scmp.eq.s32.totalorder %s15, 0
    %p110 = por %p108, %p109
    %p111 = scmp.le.s32.totalorder 1, %s9
    %p112 = scmp.lt.s32.totalorder %s9, 3
    %p113 = pnand %p111, %p112
    %p114 = pneg %p113
    // Predicated region
    $region9: #{st_model_forward.14} parent=5 // pred_check
      _
    $region10: #{st_model_forward.14} parent=5 // pred_check_branch
      %116 = sbr.rel (%p113) target = $region12
    $region11: #{st_model_forward.14} parent=5 // pred_region
      %s117 = ssub.s32 %s9, 1
      // Predicated region
      $region13: #{st_model_forward.14} parent=11 // pred_check
        %p118 = pneg %p56
      $region14: #{st_model_forward.14} parent=11 // pred_check_branch
        %120 = sbr.rel (%p118) target = $region16
      $region15: #{st_model_forward.14} parent=11 // pred_region
        _
      $region16: #{st_model_forward.14} parent=11 // pred_fallthru
        _
      // Predicated region
      $region17: #{st_model_forward.14} parent=11 // pred_check
        %p121 = pneg %p77
      $region18: #{st_model_forward.14} parent=11 // pred_check_branch
        %123 = sbr.rel (%p121) target = $region20
      $region19: #{st_model_forward.14} parent=11 // pred_region
        _
      $region20: #{st_model_forward.14} parent=11 // pred_fallthru
        _
    $region12: #{st_model_forward.14} parent=5 // pred_fallthru
      _
    %p124 = scmp.lt.s32.totalorder %s9, 2
    // Predicated region
    $region21: #{st_model_forward.14} parent=5 // pred_check
      %p125 = pneg %p124
    $region22: #{st_model_forward.14} parent=5 // pred_check_branch
      %127 = sbr.rel (%p125) target = $region24
    $region23: #{st_model_forward.14} parent=5 // pred_region
      // Predicated region
      $region25: #{st_model_forward.14} parent=23 // pred_check
        %p128 = pneg %p29
      $region26: #{st_model_forward.14} parent=23 // pred_check_branch
        %130 = sbr.rel (%p128) target = $region28
      $region27: #{st_model_forward.14} parent=23 // pred_region
        %p131 = scmp.lt.s32.totalorder %s9, 1
        %s132 = scalar_select %p131, %s9, 1
        %s133 = smul.addr %s132, 8
        %s134 = smul.addr %s133, 8
        %s135 = scalar_lea.vmem %s0, %s134
      $region28: #{st_model_forward.14} parent=23 // pred_fallthru
        _
    $region24: #{st_model_forward.14} parent=5 // pred_fallthru
      _
    %p136 = scmp.le.s32.totalorder 1, %s9
    %p137 = scmp.lt.s32.totalorder %s9, 3
    %p138 = pnand %p136, %p137
    %p139 = pneg %p138
    // Predicated region
    $region29: #{st_model_forward.14} parent=5 // pred_check
      _
    $region30: #{st_model_forward.14} parent=5 // pred_check_branch
      %141 = sbr.rel (%p138) target = $region32
    $region31: #{st_model_forward.14} parent=5 // pred_region
      %s142 = ssub.s32 %s9, 1
      %p143 = scmp.lt.s32.totalorder %s14, 1
      %s144 = scalar_select %p143, %s14, 1
      %s145 = smul.addr %s144, 8
      %s146 = smul.addr %s145, 8
      %s147 = scalar_lea.vmem %s0, %s146
      %p148 = pneg %p35
      %p149 = pneg %p32
      %p150 = pneg %p56
      %p151 = pneg %p53
      %p152 = pneg %p77
      %p153 = pneg %p74
      %p154 = pneg %p103
      %p155 = pneg %p100
      %p156 = scmp.lt.s32.totalorder %s14, 1
      %s157 = scalar_select %p156, %s14, 1
      %s158 = smul.addr %s157, 8
      %s159 = smul.addr %s158, 8
      %s160 = scalar_lea.vmem %s3, %s159
      %p161 = scmp.lt.s32.totalorder %s14, 1
      %s162 = scalar_select %p161, %s14, 1
      %s163 = smul.addr %s162, 8
      %s164 = smul.addr %s163, 8
      %s165 = scalar_lea.vmem %s0, %s164
      %p166 = scmp.lt.s32.totalorder %s14, 1
      %s167 = scalar_select %p166, %s14, 1
      %s168 = smul.addr %s167, 8
      %s169 = smul.addr %s168, 8
      %s170 = scalar_lea.vmem %s3, %s169
      %v171 = vld [vmem:[%s165] sm:$0xff]
      %v172 = vld [vmem:[%s165 + $0x8] sm:$0xff]
      %v173 = vld [vmem:[%s165 + $0x10] sm:$0xff]
      %v174 = vld [vmem:[%s165 + $0x18] sm:$0xff]
      %v175 = vld [vmem:[%s165 + $0x20] sm:$0xff]
      %v176 = vld [vmem:[%s165 + $0x28] sm:$0xff]
      %v177 = vld [vmem:[%s165 + $0x30] sm:$0xff]
      %v178 = vld [vmem:[%s165 + $0x38] sm:$0xff]
      %v179 = vld [vmem:[%s1] sm:$0x3]
      %v180 = vld [vmem:[%s2] sm:$0x1]
      %v182 = vlaneseq
      %v183 = vshrl.u32 %v182, 7
      %v184 = vsub.s32 0, %v183
      %v185 = vrot.slane %v180, %v184
      %vm187 = vcmask 15360
      %v189 = vsel %vm187, %v171, 0
      %v192 = vsel %vm187, %v172, 0
      %v195 = vsel %vm187, %v173, 0
      %v198 = vsel %vm187, %v174, 0
      %v201 = vsel %vm187, %v175, 0
      %v204 = vsel %vm187, %v176, 0
      %v207 = vsel %vm187, %v177, 0
      %v210 = vsel %vm187, %v178, 0
      %vm212 = vcmask 1041408
      %v214 = vsel %vm212, %v179, 0
      %216 = vmatprep.subr.mxu0 0.0
      %217 = vmatpush1.msra.mxu0 %v214
      %218 = vmatprep.subr.mxu0 0.0
      %219 = vmatpush1.msra.mxu0 0.0
      %220 = vmatprep.subr.mxu0 0.0
      %221 = vmatpush1.msra.mxu0 0.0
      %222 = vmatprep.subr.mxu0 0.0
      %223 = vmatpush1.msra.mxu0 0.0
      %224 = vmatprep.subr.mxu0 0.0
      %225 = vmatpush1.msra.mxu0 0.0
      %226 = vmatprep.subr.mxu0 0.0
      %227 = vmatpush1.msra.mxu0 0.0
      %228 = vmatprep.subr.mxu0 0.0
      %229 = vmatpush1.msra.mxu0 0.0
      %230 = vmatprep.subr.mxu0 0.0
      %231 = vmatpush1.msra.mxu0 0.0
      %232 = vmatprep.subr.mxu0 0.0
      %233 = vmatpush1.msra.mxu0 0.0
      %234 = vmatprep.subr.mxu0 0.0
      %235 = vmatpush1.msra.mxu0 0.0
      %236 = vmatprep.subr.mxu0 0.0
      %237 = vmatpush1.msra.mxu0 0.0
      %238 = vmatprep.subr.mxu0 0.0
      %239 = vmatpush1.msra.mxu0 0.0
      %240 = vmatprep.subr.mxu0 0.0
      %241 = vmatpush1.msra.mxu0 0.0
      %242 = vmatprep.subr.mxu0 0.0
      %243 = vmatpush1.msra.mxu0 0.0
      %244 = vmatprep.subr.mxu0 0.0
      %245 = vmatpush1.msra.mxu0 0.0
      %246 = vmatprep.subr.mxu0 0.0
      %247 = vmatpush1.msra.mxu0 0.0
      %248 = vmatprep.subr.mxu0 0.0
      %249 = vmatpush1.msra.mxu0 0.0
      %250 = vmatprep.subr.mxu0 0.0
      %251 = vmatpush1.msra.mxu0 0.0
      %252 = vmatprep.subr.mxu0 0.0
      %253 = vmatpush1.msra.mxu0 0.0
      %254 = vmatprep.subr.mxu0 0.0
      %255 = vmatpush1.msra.mxu0 0.0
      %256 = vmatprep.subr.mxu0 0.0
      %257 = vmatpush1.msra.mxu0 0.0
      %258 = vmatprep.subr.mxu0 0.0
      %259 = vmatpush1.msra.mxu0 0.0
      %260 = vmatprep.subr.mxu0 0.0
      %261 = vmatpush1.msra.mxu0 0.0
      %262 = vmatprep.subr.mxu0 0.0
      %263 = vmatpush1.msra.mxu0 0.0
      %264 = vmatprep.subr.mxu0 0.0
      %265 = vmatpush1.msra.mxu0 0.0
      %266 = vmatprep.subr.mxu0 0.0
      %267 = vmatpush1.msra.mxu0 0.0
      %268 = vmatprep.subr.mxu0 0.0
      %269 = vmatpush1.msra.mxu0 0.0
      %270 = vmatprep.subr.mxu0 0.0
      %271 = vmatpush1.msra.mxu0 0.0
      %272 = vmatprep.subr.mxu0 0.0
      %273 = vmatpush1.msra.mxu0 0.0
      %274 = vmatprep.subr.mxu0 0.0
      %275 = vmatpush1.msra.mxu0 0.0
      %276 = vmatprep.subr.mxu0 0.0
      %277 = vmatpush1.msra.mxu0 0.0
      %278 = vmatprep.subr.mxu0 0.0
      %279 = vmatpush1.msra.mxu0 0.0
      %280 = vmatprep.mubr.f32.mxu0 0.0
      %281 = vmatmul.mubr.f32.gmra.mrb[0].mxu0 %v189
      %v282 = vpop.f32.mrb[0].mxu0
      %v283 = vadd.f32 %v185, %v282
      %v284 = vpop.f32.mrb[0].mxu0
      %285 = vmatprep.mubr.f32.mxu0 0.0
      %286 = vmatmul.mubr.f32.gmra.mrb[0].mxu0 %v192
      %v287 = vpop.f32.mrb[0].mxu0
      %v288 = vadd.f32 %v185, %v287
      %v289 = vpop.f32.mrb[0].mxu0
      %290 = vmatprep.mubr.f32.mxu0 0.0
      %291 = vmatmul.mubr.f32.gmra.mrb[0].mxu0 %v195
      %v292 = vpop.f32.mrb[0].mxu0
      %v293 = vadd.f32 %v185, %v292
      %v294 = vpop.f32.mrb[0].mxu0
      %295 = vmatprep.mubr.f32.mxu0 0.0
      %296 = vmatmul.mubr.f32.gmra.mrb[0].mxu0 %v198
      %v297 = vpop.f32.mrb[0].mxu0
      %v298 = vadd.f32 %v185, %v297
      %v299 = vpop.f32.mrb[0].mxu0
      %300 = vmatprep.mubr.f32.mxu0 0.0
      %301 = vmatmul.mubr.f32.gmra.mrb[0].mxu0 %v201
      %v302 = vpop.f32.mrb[0].mxu0
      %v303 = vadd.f32 %v185, %v302
      %v304 = vpop.f32.mrb[0].mxu0
      %305 = vmatprep.mubr.f32.mxu0 0.0
      %306 = vmatmul.mubr.f32.gmra.mrb[0].mxu0 %v204
      %v307 = vpop.f32.mrb[0].mxu0
      %v308 = vadd.f32 %v185, %v307
      %v309 = vpop.f32.mrb[0].mxu0
      %310 = vmatprep.mubr.f32.mxu0 0.0
      %311 = vmatmul.mubr.f32.gmra.mrb[0].mxu0 %v207
      %v312 = vpop.f32.mrb[0].mxu0
      %v313 = vadd.f32 %v185, %v312
      %v314 = vpop.f32.mrb[0].mxu0
      %315 = vmatprep.mubr.f32.mxu0 0.0
      %316 = vmatmul.mubr.f32.gmra.mrb[0].mxu0 %v210
      %v317 = vpop.f32.mrb[0].mxu0
      %v318 = vadd.f32 %v185, %v317
      %v319 = vpop.f32.mrb[0].mxu0
      %320 = vdwg.mxu0
      %vm321 = vcmask 261120
      %322 = vst.msk [vmem:[%s170] sm:$0xff] %vm321, %v283
      %323 = vst.msk [vmem:[%s170 + $0x8] sm:$0xff] %vm321, %v288
      %324 = vst.msk [vmem:[%s170 + $0x10] sm:$0xff] %vm321, %v293
      %325 = vst.msk [vmem:[%s170 + $0x18] sm:$0xff] %vm321, %v298
      %326 = vst.msk [vmem:[%s170 + $0x20] sm:$0xff] %vm321, %v303
      %327 = vst.msk [vmem:[%s170 + $0x28] sm:$0xff] %vm321, %v308
      %328 = vst.msk [vmem:[%s170 + $0x30] sm:$0xff] %vm321, %v313
      %329 = vst.msk [vmem:[%s170 + $0x38] sm:$0xff] %vm321, %v318
      %p330 = scmp.lt.s32.totalorder %s14, 1
      %s331 = scalar_select %p330, %s14, 1
      %s332 = smul.addr %s331, 8
      %s333 = smul.addr %s332, 8
      %s334 = scalar_lea.vmem %s3, %s333
      // Predicated region
      $region33: #{st_model_forward.14} parent=31 // pred_check
        %p335 = pneg %p100
      $region34: #{st_model_forward.14} parent=31 // pred_check_branch
        %337 = sbr.rel (%p335) target = $region36
      $region35: #{st_model_forward.14} parent=31 // pred_region
        _
      $region36: #{st_model_forward.14} parent=31 // pred_fallthru
        _
    $region32: #{st_model_forward.14} parent=5 // pred_fallthru
      _
    %p338 = scmp.le.s32.totalorder 2, %s9
    // Predicated region
    $region37: #{st_model_forward.14} parent=5 // pred_check
      %p339 = pneg %p338
    $region38: #{st_model_forward.14} parent=5 // pred_check_branch
      %341 = sbr.rel (%p339) target = $region40
    $region39: #{st_model_forward.14} parent=5 // pred_region
      %s342 = ssub.s32 %s9, 2
      // Predicated region
      $region41: #{st_model_forward.14} parent=39 // pred_check
        %p343 = pneg %p106
      $region42: #{st_model_forward.14} parent=39 // pred_check_branch
        %345 = sbr.rel (%p343) target = $region44
      $region43: #{st_model_forward.14} parent=39 // pred_region
        %p346 = scmp.lt.s32.totalorder %s15, 1
        %s347 = scalar_select %p346, %s15, 1
        %s348 = smul.addr %s347, 8
        %s349 = smul.addr %s348, 8
        %s350 = scalar_lea.vmem %s3, %s349
      $region44: #{st_model_forward.14} parent=39 // pred_fallthru
        _
    $region40: #{st_model_forward.14} parent=5 // pred_fallthru
      _
  $region6: #{st_model_forward.14} parent=0 // loop_footer
    %s13 = sadd.s32 1, %s9
  $region7: #{st_model_forward.14} parent=0 // loop_footer_branch
    %8 = sbr.rel target = $region3
  $region8: #{st_model_forward.14} parent=0 // loop_exit
    _

// kernel: st_model_forward.18
$region0: #{st_model_forward.18}
  #allocation0 [shape = 'u32[]', space=smem, size = 0x4, offset = 0x4, fixed_abs, tag = 'smem constant byte address 0x4 - core index']
  #allocation1 [shape = 'u32[144,128]{1,0:T(1,128)}', space=vmem, size = 0x12000, scoped, tag = 'internal scratch']
  %s0 = inlined_call_operand.vmem [shape: f32[2,8,8,32], index: 0, kind: input, shape index: {}]
  %s1 = inlined_call_operand.vmem [shape: f32[32,128], index: 1, kind: input, shape index: {}]
  %s2 = inlined_call_operand.vmem [shape: f32[1,128], index: 2, kind: input, shape index: {}]
  %s3 = inlined_call_operand.vmem [shape: f32[128,32], index: 3, kind: input, shape index: {}]
  %s4 = inlined_call_operand.vmem [shape: f32[1,32], index: 4, kind: input, shape index: {}]
  %s5 = inlined_call_operand.vmem [shape: f32[1,32], index: 5, kind: input, shape index: {}]
  %s6 = inlined_call_operand.vmem [shape: f32[1,32], index: 6, kind: input, shape index: {}]
  %s7 = inlined_call_operand.vmem [shape: f32[2,8,8,32], index: 7, kind: output, shape index: {}]
  %s8 = sld [smem:[#allocation0]]
  $region61: #{st_model_forward.18} parent=0
    _
  %s10 = ssub.s32 1, %s8
  %s11 = scalar_select 0, %s10, %s8
  loop: start=0, step=1, limit=4
  $region2: #{st_model_forward.18} parent=0 // loop_pre_header
    _
  $region3: #{st_model_forward.18} parent=0 // loop_header
    %s13 = sphi 0, %s17
    %p14 = scmp.ge.s32.totalorder %s13, 4
    %s23 = sphi 0, %s25
    %s26 = sphi 0, %s23
    %s27 = sphi 0, %s26
    %s43 = sphi 0, %s27
    %s47 = sphi 0, %s47
    %s49 = sphi 0, %s47
    %s50 = sphi 0, %s49
    %s64 = sphi 0, %s50
    %s68 = sphi 0, %s68
    %s70 = sphi 0, %s68
    %s71 = sphi 0, %s70
    %s85 = sphi 0, %s71
    %s89 = sphi 0, %s89
    %s91 = sphi 0, %s89
    %s92 = sphi 0, %s91
    %s106 = sphi 0, %s92
    %s110 = sphi 0, %s110
    %s112 = sphi 0, %s110
    %s113 = sphi 0, %s112
    %s127 = sphi 0, %s113
    %s131 = sphi 0, %s131
    %s133 = sphi 0, %s131
    %s134 = sphi 0, %s133
    %s148 = sphi 0, %s134
    %s152 = sphi 0, %s152
    %s154 = sphi 0, %s152
    %s155 = sphi 0, %s154
    %s169 = sphi 0, %s155
    %s175 = sphi 0, %s177
    %s178 = sphi 0, %s175
    %s179 = sphi 0, %s178
    %s195 = sphi 0, %s179
  $region4: #{st_model_forward.18} parent=0 // loop_header_branch
    %16 = sbr.rel (%p14) target = $region8
  $region5: #{st_model_forward.18} parent=0 // loop_body
    %s18 = ssub.s32 %s13, 1
    %s19 = ssub.s32 %s13, 2
    %s20 = sadd.s32 %s13, 1
    %s21 = ssub.s32 %s13, %s20
    %p22 = scmp.eq.s32.totalorder %s21, 0
    %s24 = sadd.s32 %s23, 1
    %s25 = scalar_select %p22, %s23, %s24
    %p28 = pneg %p22
    %p29 = scmp.eq.s32.totalorder %s13, 1
    %p30 = por %p28, %p29
    %p31 = scmp.ne.s32.totalorder %s23, %s26
    %p32 = scmp.eq.s32.totalorder %s13, 0
    %p33 = por %p31, %p32
    %p34 = scmp.ne.s32.totalorder %s23, %s26
    %p35 = scmp.eq.s32.totalorder %s18, 1
    %p36 = por %p34, %p35
    %p37 = scmp.ne.s32.totalorder %s26, %s27
    %p38 = scmp.eq.s32.totalorder %s18, 0
    %p39 = por %p37, %p38
    %p40 = scmp.ne.s32.totalorder %s26, %s27
    %p41 = scmp.eq.s32.totalorder %s19, 1
    %p42 = por %p40, %p41
    %p44 = scmp.ne.s32.totalorder %s27, %s43
    %p45 = scmp.eq.s32.totalorder %s19, 0
    %p46 = por %p44, %p45
    %s48 = sadd.s32 %s47, 1
    %p51 = scmp.eq.s32.totalorder %s13, 1
    %p52 = scmp.ne.s32.totalorder %s47, %s49
    %p53 = scmp.eq.s32.totalorder %s13, 0
    %p54 = por %p52, %p53
    %p55 = scmp.ne.s32.totalorder %s47, %s49
    %p56 = scmp.eq.s32.totalorder %s18, 1
    %p57 = por %p55, %p56
    %p58 = scmp.ne.s32.totalorder %s49, %s50
    %p59 = scmp.eq.s32.totalorder %s18, 0
    %p60 = por %p58, %p59
    %p61 = scmp.ne.s32.totalorder %s49, %s50
    %p62 = scmp.eq.s32.totalorder %s19, 1
    %p63 = por %p61, %p62
    %p65 = scmp.ne.s32.totalorder %s50, %s64
    %p66 = scmp.eq.s32.totalorder %s19, 0
    %p67 = por %p65, %p66
    %s69 = sadd.s32 %s68, 1
    %p72 = scmp.eq.s32.totalorder %s13, 1
    %p73 = scmp.ne.s32.totalorder %s68, %s70
    %p74 = scmp.eq.s32.totalorder %s13, 0
    %p75 = por %p73, %p74
    %p76 = scmp.ne.s32.totalorder %s68, %s70
    %p77 = scmp.eq.s32.totalorder %s18, 1
    %p78 = por %p76, %p77
    %p79 = scmp.ne.s32.totalorder %s70, %s71
    %p80 = scmp.eq.s32.totalorder %s18, 0
    %p81 = por %p79, %p80
    %p82 = scmp.ne.s32.totalorder %s70, %s71
    %p83 = scmp.eq.s32.totalorder %s19, 1
    %p84 = por %p82, %p83
    %p86 = scmp.ne.s32.totalorder %s71, %s85
    %p87 = scmp.eq.s32.totalorder %s19, 0
    %p88 = por %p86, %p87
    %s90 = sadd.s32 %s89, 1
    %p93 = scmp.eq.s32.totalorder %s13, 1
    %p94 = scmp.ne.s32.totalorder %s89, %s91
    %p95 = scmp.eq.s32.totalorder %s13, 0
    %p96 = por %p94, %p95
    %p97 = scmp.ne.s32.totalorder %s89, %s91
    %p98 = scmp.eq.s32.totalorder %s18, 1
    %p99 = por %p97, %p98
    %p100 = scmp.ne.s32.totalorder %s91, %s92
    %p101 = scmp.eq.s32.totalorder %s18, 0
    %p102 = por %p100, %p101
    %p103 = scmp.ne.s32.totalorder %s91, %s92
    %p104 = scmp.eq.s32.totalorder %s19, 1
    %p105 = por %p103, %p104
    %p107 = scmp.ne.s32.totalorder %s92, %s106
    %p108 = scmp.eq.s32.totalorder %s19, 0
    %p109 = por %p107, %p108
    %s111 = sadd.s32 %s110, 1
    %p114 = scmp.eq.s32.totalorder %s13, 1
    %p115 = scmp.ne.s32.totalorder %s110, %s112
    %p116 = scmp.eq.s32.totalorder %s13, 0
    %p117 = por %p115, %p116
    %p118 = scmp.ne.s32.totalorder %s110, %s112
    %p119 = scmp.eq.s32.totalorder %s18, 1
    %p120 = por %p118, %p119
    %p121 = scmp.ne.s32.totalorder %s112, %s113
    %p122 = scmp.eq.s32.totalorder %s18, 0
    %p123 = por %p121, %p122
    %p124 = scmp.ne.s32.totalorder %s112, %s113
    %p125 = scmp.eq.s32.totalorder %s19, 1
    %p126 = por %p124, %p125
    %p128 = scmp.ne.s32.totalorder %s113, %s127
    %p129 = scmp.eq.s32.totalorder %s19, 0
    %p130 = por %p128, %p129
    %s132 = sadd.s32 %s131, 1
    %p135 = scmp.eq.s32.totalorder %s13, 1
    %p136 = scmp.ne.s32.totalorder %s131, %s133
    %p137 = scmp.eq.s32.totalorder %s13, 0
    %p138 = por %p136, %p137
    %p139 = scmp.ne.s32.totalorder %s131, %s133
    %p140 = scmp.eq.s32.totalorder %s18, 1
    %p141 = por %p139, %p140
    %p142 = scmp.ne.s32.totalorder %s133, %s134
    %p143 = scmp.eq.s32.totalorder %s18, 0
    %p144 = por %p142, %p143
    %p145 = scmp.ne.s32.totalorder %s133, %s134
    %p146 = scmp.eq.s32.totalorder %s19, 1
    %p147 = por %p145, %p146
    %p149 = scmp.ne.s32.totalorder %s134, %s148
    %p150 = scmp.eq.s32.totalorder %s19, 0
    %p151 = por %p149, %p150
    %s153 = sadd.s32 %s152, 1
    %p156 = scmp.eq.s32.totalorder %s13, 1
    %p157 = scmp.ne.s32.totalorder %s152, %s154
    %p158 = scmp.eq.s32.totalorder %s13, 0
    %p159 = por %p157, %p158
    %p160 = scmp.ne.s32.totalorder %s152, %s154
    %p161 = scmp.eq.s32.totalorder %s18, 1
    %p162 = por %p160, %p161
    %p163 = scmp.ne.s32.totalorder %s154, %s155
    %p164 = scmp.eq.s32.totalorder %s18, 0
    %p165 = por %p163, %p164
    %p166 = scmp.ne.s32.totalorder %s154, %s155
    %p167 = scmp.eq.s32.totalorder %s19, 1
    %p168 = por %p166, %p167
    %p170 = scmp.ne.s32.totalorder %s155, %s169
    %p171 = scmp.eq.s32.totalorder %s19, 0
    %p172 = por %p170, %p171
    %s173 = ssub.s32 %s13, %s20
    %p174 = scmp.eq.s32.totalorder %s173, 0
    %s176 = sadd.s32 %s175, 1
    %s177 = scalar_select %p174, %s175, %s176
    %p180 = pneg %p174
    %p181 = scmp.eq.s32.totalorder %s13, 1
    %p182 = por %p180, %p181
    %p183 = scmp.ne.s32.totalorder %s175, %s178
    %p184 = scmp.eq.s32.totalorder %s13, 0
    %p185 = por %p183, %p184
    %p186 = scmp.ne.s32.totalorder %s175, %s178
    %p187 = scmp.eq.s32.totalorder %s18, 1
    %p188 = por %p186, %p187
    %p189 = scmp.ne.s32.totalorder %s178, %s179
    %p190 = scmp.eq.s32.totalorder %s18, 0
    %p191 = por %p189, %p190
    %p192 = scmp.ne.s32.totalorder %s178, %s179
    %p193 = scmp.eq.s32.totalorder %s19, 1
    %p194 = por %p192, %p193
    %p196 = scmp.ne.s32.totalorder %s179, %s195
    %p197 = scmp.eq.s32.totalorder %s19, 0
    %p198 = por %p196, %p197
    %p199 = scmp.le.s32.totalorder 1, %s13
    %p200 = scmp.lt.s32.totalorder %s13, 3
    %p201 = pnand %p199, %p200
    %p202 = pneg %p201
    // Predicated region
    $region9: #{st_model_forward.18} parent=5 // pred_check
      _
    $region10: #{st_model_forward.18} parent=5 // pred_check_branch
      %204 = sbr.rel (%p201) target = $region12
    $region11: #{st_model_forward.18} parent=5 // pred_region
      %s205 = ssub.s32 %s13, 1
      // Predicated region
      $region13: #{st_model_forward.18} parent=11 // pred_check
        %p206 = pneg %p60
      $region14: #{st_model_forward.18} parent=11 // pred_check_branch
        %208 = sbr.rel (%p206) target = $region16
      $region15: #{st_model_forward.18} parent=11 // pred_region
        _
      $region16: #{st_model_forward.18} parent=11 // pred_fallthru
        _
      // Predicated region
      $region17: #{st_model_forward.18} parent=11 // pred_check
        %p209 = pneg %p81
      $region18: #{st_model_forward.18} parent=11 // pred_check_branch
        %211 = sbr.rel (%p209) target = $region20
      $region19: #{st_model_forward.18} parent=11 // pred_region
        _
      $region20: #{st_model_forward.18} parent=11 // pred_fallthru
        _
      // Predicated region
      $region21: #{st_model_forward.18} parent=11 // pred_check
        %p212 = pneg %p102
      $region22: #{st_model_forward.18} parent=11 // pred_check_branch
        %214 = sbr.rel (%p212) target = $region24
      $region23: #{st_model_forward.18} parent=11 // pred_region
        _
      $region24: #{st_model_forward.18} parent=11 // pred_fallthru
        _
      // Predicated region
      $region25: #{st_model_forward.18} parent=11 // pred_check
        %p215 = pneg %p123
      $region26: #{st_model_forward.18} parent=11 // pred_check_branch
        %217 = sbr.rel (%p215) target = $region28
      $region27: #{st_model_forward.18} parent=11 // pred_region
        _
      $region28: #{st_model_forward.18} parent=11 // pred_fallthru
        _
      // Predicated region
      $region29: #{st_model_forward.18} parent=11 // pred_check
        %p218 = pneg %p144
      $region30: #{st_model_forward.18} parent=11 // pred_check_branch
        %220 = sbr.rel (%p218) target = $region32
      $region31: #{st_model_forward.18} parent=11 // pred_region
        _
      $region32: #{st_model_forward.18} parent=11 // pred_fallthru
        _
      // Predicated region
      $region33: #{st_model_forward.18} parent=11 // pred_check
        %p221 = pneg %p165
      $region34: #{st_model_forward.18} parent=11 // pred_check_branch
        %223 = sbr.rel (%p221) target = $region36
      $region35: #{st_model_forward.18} parent=11 // pred_region
        _
      $region36: #{st_model_forward.18} parent=11 // pred_fallthru
        _
    $region12: #{st_model_forward.18} parent=5 // pred_fallthru
      _
    %p224 = scmp.lt.s32.totalorder %s13, 2
    // Predicated region
    $region37: #{st_model_forward.18} parent=5 // pred_check
      %p225 = pneg %p224
    $region38: #{st_model_forward.18} parent=5 // pred_check_branch
      %227 = sbr.rel (%p225) target = $region40
    $region39: #{st_model_forward.18} parent=5 // pred_region
      // Predicated region
      $region41: #{st_model_forward.18} parent=39 // pred_check
        %p228 = pneg %p33
      $region42: #{st_model_forward.18} parent=39 // pred_check_branch
        %230 = sbr.rel (%p228) target = $region44
      $region43: #{st_model_forward.18} parent=39 // pred_region
        %p231 = scmp.lt.s32.totalorder %s13, 1
        %s232 = scalar_select %p231, %s13, 1
        %s233 = smul.addr %s232, 8
        %s234 = smul.addr %s233, 8
        %s235 = scalar_lea.vmem %s0, %s234
      $region44: #{st_model_forward.18} parent=39 // pred_fallthru
        _
    $region40: #{st_model_forward.18} parent=5 // pred_fallthru
      _
    %p236 = scmp.le.s32.totalorder 1, %s13
    %p237 = scmp.lt.s32.totalorder %s13, 3
    %p238 = pnand %p236, %p237
    %p239 = pneg %p238
    // Predicated region
    $region45: #{st_model_forward.18} parent=5 // pred_check
      _
    $region46: #{st_model_forward.18} parent=5 // pred_check_branch
      %241 = sbr.rel (%p238) target = $region48
    $region47: #{st_model_forward.18} parent=5 // pred_region
      %s242 = ssub.s32 %s13, 1
      %p243 = scmp.lt.s32.totalorder %s18, 1
      %s244 = scalar_select %p243, %s18, 1
      %s245 = smul.addr %s244, 8
      %s246 = smul.addr %s245, 8
      %s247 = scalar_lea.vmem %s0, %s246
      %p248 = pneg %p39
      %p249 = pneg %p36
      %p250 = pneg %p60
      %p251 = pneg %p57
      %p252 = pneg %p81
      %p253 = pneg %p78
      %p254 = pneg %p102
      %p255 = pneg %p99
      %p256 = pneg %p123
      %p257 = pneg %p120
      %p258 = pneg %p144
      %p259 = pneg %p141
      %p260 = pneg %p165
      %p261 = pneg %p162
      %p262 = pneg %p191
      %p263 = pneg %p188
      %p264 = scmp.lt.s32.totalorder %s18, 1
      %s265 = scalar_select %p264, %s18, 1
      %s266 = smul.addr %s265, 8
      %s267 = smul.addr %s266, 8
      %s268 = scalar_lea.vmem %s7, %s267
      %p269 = scmp.lt.s32.totalorder %s18, 1
      %s270 = scalar_select %p269, %s18, 1
      %s271 = smul.addr %s270, 8
      %s272 = smul.addr %s271, 8
      %s273 = scalar_lea.vmem %s0, %s272
      %p274 = scmp.lt.s32.totalorder %s18, 1
      %s275 = scalar_select %p274, %s18, 1
      %s276 = smul.addr %s275, 8
      %s277 = smul.addr %s276, 8
      %s278 = scalar_lea.vmem %s7, %s277
      %v279 = vld [vmem:[%s273] sm:$0xff]
      %v280 = vld [vmem:[%s273 + $0x8] sm:$0xff]
      %v281 = vld [vmem:[%s273 + $0x10] sm:$0xff]
      %v282 = vld [vmem:[%s273 + $0x18] sm:$0xff]
      %v283 = vld [vmem:[%s273 + $0x20] sm:$0xff]
      %v284 = vld [vmem:[%s273 + $0x28] sm:$0xff]
      %v285 = vld [vmem:[%s273 + $0x30] sm:$0xff]
      %v286 = vld [vmem:[%s273 + $0x38] sm:$0xff]
      %v287 = vld [vmem:[%s1] sm:$0xff]
      %v288 = vld [vmem:[%s1 + $0x8] sm:$0xff]
      %v289 = vld [vmem:[%s1 + $0x10] sm:$0xff]
      %v290 = vld [vmem:[%s1 + $0x18] sm:$0xff]
      %v291 = vld [vmem:[%s2] sm:$0x1]
      %v293 = vlaneseq
      %v294 = vshrl.u32 %v293, 7
      %v295 = vsub.s32 0, %v294
      %v296 = vrot.slane %v291, %v295
      %vm298 = vcmask 261120
      %v300 = vsel %vm298, %v279, 0
      %v303 = vsel %vm298, %v280, 0
      %v306 = vsel %vm298, %v281, 0
      %v309 = vsel %vm298, %v282, 0
      %v312 = vsel %vm298, %v283, 0
      %v315 = vsel %vm298, %v284, 0
      %v318 = vsel %vm298, %v285, 0
      %v321 = vsel %vm298, %v286, 0
      %323 = vmatprep.subr.mxu0 0.0
      %324 = vmatpush1.msra.mxu0 %v287
      %325 = vmatprep.subr.mxu0 0.0
      %326 = vmatpush1.msra.mxu0 %v288
      %327 = vmatprep.subr.mxu0 0.0
      %328 = vmatpush1.msra.mxu0 %v289
      %329 = vmatprep.subr.mxu0 0.0
      %330 = vmatpush1.msra.mxu0 %v290
      %331 = vmatprep.subr.mxu0 0.0
      %332 = vmatpush1.msra.mxu0 0.0
      %333 = vmatprep.subr.mxu0 0.0
      %334 = vmatpush1.msra.mxu0 0.0
      %335 = vmatprep.subr.mxu0 0.0
      %336 = vmatpush1.msra.mxu0 0.0
      %337 = vmatprep.subr.mxu0 0.0
      %338 = vmatpush1.msra.mxu0 0.0
      %339 = vmatprep.subr.mxu0 0.0
      %340 = vmatpush1.msra.mxu0 0.0
      %341 = vmatprep.subr.mxu0 0.0
      %342 = vmatpush1.msra.mxu0 0.0
      %343 = vmatprep.subr.mxu0 0.0
      %344 = vmatpush1.msra.mxu0 0.0
      %345 = vmatprep.subr.mxu0 0.0
      %346 = vmatpush1.msra.mxu0 0.0
      %347 = vmatprep.subr.mxu0 0.0
      %348 = vmatpush1.msra.mxu0 0.0
      %349 = vmatprep.subr.mxu0 0.0
      %350 = vmatpush1.msra.mxu0 0.0
      %351 = vmatprep.subr.mxu0 0.0
      %352 = vmatpush1.msra.mxu0 0.0
      %353 = vmatprep.subr.mxu0 0.0
      %354 = vmatpush1.msra.mxu0 0.0
      %355 = vmatprep.subr.mxu0 0.0
      %356 = vmatpush1.msra.mxu0 0.0
      %357 = vmatprep.subr.mxu0 0.0
      %358 = vmatpush1.msra.mxu0 0.0
      %359 = vmatprep.subr.mxu0 0.0
      %360 = vmatpush1.msra.mxu0 0.0
      %361 = vmatprep.subr.mxu0 0.0
      %362 = vmatpush1.msra.mxu0 0.0
      %363 = vmatprep.subr.mxu0 0.0
      %364 = vmatpush1.msra.mxu0 0.0
      %365 = vmatprep.subr.mxu0 0.0
      %366 = vmatpush1.msra.mxu0 0.0
      %367 = vmatprep.subr.mxu0 0.0
      %368 = vmatpush1.msra.mxu0 0.0
      %369 = vmatprep.subr.mxu0 0.0
      %370 = vmatpush1.msra.mxu0 0.0
      %371 = vmatprep.subr.mxu0 0.0
      %372 = vmatpush1.msra.mxu0 0.0
      %373 = vmatprep.subr.mxu0 0.0
      %374 = vmatpush1.msra.mxu0 0.0
      %375 = vmatprep.subr.mxu0 0.0
      %376 = vmatpush1.msra.mxu0 0.0
      %377 = vmatprep.subr.mxu0 0.0
      %378 = vmatpush1.msra.mxu0 0.0
      %379 = vmatprep.subr.mxu0 0.0
      %380 = vmatpush1.msra.mxu0 0.0
      %381 = vmatprep.subr.mxu0 0.0
      %382 = vmatpush1.msra.mxu0 0.0
      %383 = vmatprep.subr.mxu0 0.0
      %384 = vmatpush1.msra.mxu0 0.0
      %385 = vmatprep.subr.mxu0 0.0
      %386 = vmatpush1.msra.mxu0 0.0
      %387 = vmatprep.mubr.f32.mxu0 0.0
      %388 = vmatmul.mubr.f32.gmra.mrb[0].mxu0 %v300
      %v389 = vpop.f32.mrb[0].mxu0
      %v390 = vadd.f32 %v296, %v389
      %v391 = vpop.f32.mrb[0].mxu0
      %392 = vmatprep.mubr.f32.mxu0 0.0
      %393 = vmatmul.mubr.f32.gmra.mrb[0].mxu0 %v303
      %v394 = vpop.f32.mrb[0].mxu0
      %v395 = vadd.f32 %v296, %v394
      %v396 = vpop.f32.mrb[0].mxu0
      %397 = vmatprep.mubr.f32.mxu0 0.0
      %398 = vmatmul.mubr.f32.gmra.mrb[0].mxu0 %v306
      %v399 = vpop.f32.mrb[0].mxu0
      %v400 = vadd.f32 %v296, %v399
      %v401 = vpop.f32.mrb[0].mxu0
      %402 = vmatprep.mubr.f32.mxu0 0.0
      %403 = vmatmul.mubr.f32.gmra.mrb[0].mxu0 %v309
      %v404 = vpop.f32.mrb[0].mxu0
      %v405 = vadd.f32 %v296, %v404
      %v406 = vpop.f32.mrb[0].mxu0
      %407 = vmatprep.mubr.f32.mxu0 0.0
      %408 = vmatmul.mubr.f32.gmra.mrb[0].mxu0 %v312
      %v409 = vpop.f32.mrb[0].mxu0
      %v410 = vadd.f32 %v296, %v409
      %v411 = vpop.f32.mrb[0].mxu0
      %412 = vmatprep.mubr.f32.mxu0 0.0
      %413 = vmatmul.mubr.f32.gmra.mrb[0].mxu0 %v315
      %v414 = vpop.f32.mrb[0].mxu0
      %v415 = vadd.f32 %v296, %v414
      %v416 = vpop.f32.mrb[0].mxu0
      %417 = vmatprep.mubr.f32.mxu0 0.0
      %418 = vmatmul.mubr.f32.gmra.mrb[0].mxu0 %v318
      %v419 = vpop.f32.mrb[0].mxu0
      %v420 = vadd.f32 %v296, %v419
      %v421 = vpop.f32.mrb[0].mxu0
      %422 = vmatprep.mubr.f32.mxu0 0.0
      %423 = vmatmul.mubr.f32.gmra.mrb[0].mxu0 %v321
      %v424 = vpop.f32.mrb[0].mxu0
      %v425 = vadd.f32 %v296, %v424
      %v426 = vpop.f32.mrb[0].mxu0
      %427 = vdwg.mxu0
      %v428 = vmax.f32 %v390, 0.0
      %v429 = vmax.f32 %v395, 0.0
      %v430 = vmax.f32 %v400, 0.0
      %v431 = vmax.f32 %v405, 0.0
      %v432 = vmax.f32 %v410, 0.0
      %v433 = vmax.f32 %v415, 0.0
      %v434 = vmax.f32 %v420, 0.0
      %v435 = vmax.f32 %v425, 0.0
      %v436 = vld [vmem:[%s3] sm:$0xff]
      %v437 = vld [vmem:[%s3 + $0x8] sm:$0xff]
      %v438 = vld [vmem:[%s3 + $0x10] sm:$0xff]
      %v439 = vld [vmem:[%s3 + $0x18] sm:$0xff]
      %v440 = vld [vmem:[%s3 + $0x20] sm:$0xff]
      %v441 = vld [vmem:[%s3 + $0x28] sm:$0xff]
      %v442 = vld [vmem:[%s3 + $0x30] sm:$0xff]
      %v443 = vld [vmem:[%s3 + $0x38] sm:$0xff]
      %v444 = vld [vmem:[%s3 + $0x40] sm:$0xff]
      %v445 = vld [vmem:[%s3 + $0x48] sm:$0xff]
      %v446 = vld [vmem:[%s3 + $0x50] sm:$0xff]
      %v447 = vld [vmem:[%s3 + $0x58] sm:$0xff]
      %v448 = vld [vmem:[%s3 + $0x60] sm:$0xff]
      %v449 = vld [vmem:[%s3 + $0x68] sm:$0xff]
      %v450 = vld [vmem:[%s3 + $0x70] sm:$0xff]
      %v451 = vld [vmem:[%s3 + $0x78] sm:$0xff]
      %v452 = vld [vmem:[%s4] sm:$0x1]
      %v454 = vlaneseq
      %v455 = vshrl.u32 %v454, 7
      %v456 = vsub.s32 0, %v455
      %v457 = vrot.slane %v452, %v456
      %459 = vmatprep.subr.mxu0 0.0
      %460 = vmatpush1.msra.mxu0 %v436
      %461 = vmatprep.subr.mxu0 0.0
      %462 = vmatpush1.msra.mxu0 %v437
      %463 = vmatprep.subr.mxu0 0.0
      %464 = vmatpush1.msra.mxu0 %v438
      %465 = vmatprep.subr.mxu0 0.0
      %466 = vmatpush1.msra.mxu0 %v439
      %467 = vmatprep.subr.mxu0 0.0
      %468 = vmatpush1.msra.mxu0 %v440
      %469 = vmatprep.subr.mxu0 0.0
      %470 = vmatpush1.msra.mxu0 %v441
      %471 = vmatprep.subr.mxu0 0.0
      %472 = vmatpush1.msra.mxu0 %v442
      %473 = vmatprep.subr.mxu0 0.0
      %474 = vmatpush1.msra.mxu0 %v443
      %475 = vmatprep.subr.mxu0 0.0
      %476 = vmatpush1.msra.mxu0 %v444
      %477 = vmatprep.subr.mxu0 0.0
      %478 = vmatpush1.msra.mxu0 %v445
      %479 = vmatprep.subr.mxu0 0.0
      %480 = vmatpush1.msra.mxu0 %v446
      %481 = vmatprep.subr.mxu0 0.0
      %482 = vmatpush1.msra.mxu0 %v447
      %483 = vmatprep.subr.mxu0 0.0
      %484 = vmatpush1.msra.mxu0 %v448
      %485 = vmatprep.subr.mxu0 0.0
      %486 = vmatpush1.msra.mxu0 %v449
      %487 = vmatprep.subr.mxu0 0.0
      %488 = vmatpush1.msra.mxu0 %v450
      %489 = vmatprep.subr.mxu0 0.0
      %490 = vmatpush1.msra.mxu0 %v451
      %491 = vmatprep.subr.mxu0 0.0
      %492 = vmatpush1.msra.mxu0 0.0
      %493 = vmatprep.subr.mxu0 0.0
      %494 = vmatpush1.msra.mxu0 0.0
      %495 = vmatprep.subr.mxu0 0.0
      %496 = vmatpush1.msra.mxu0 0.0
      %497 = vmatprep.subr.mxu0 0.0
      %498 = vmatpush1.msra.mxu0 0.0
      %499 = vmatprep.subr.mxu0 0.0
      %500 = vmatpush1.msra.mxu0 0.0
      %501 = vmatprep.subr.mxu0 0.0
      %502 = vmatpush1.msra.mxu0 0.0
      %503 = vmatprep.subr.mxu0 0.0
      %504 = vmatpush1.msra.mxu0 0.0
      %505 = vmatprep.subr.mxu0 0.0
      %506 = vmatpush1.msra.mxu0 0.0
      %507 = vmatprep.subr.mxu0 0.0
      %508 = vmatpush1.msra.mxu0 0.0
      %509 = vmatprep.subr.mxu0 0.0
      %510 = vmatpush1.msra.mxu0 0.0
      %511 = vmatprep.subr.mxu0 0.0
      %512 = vmatpush1.msra.mxu0 0.0
      %513 = vmatprep.subr.mxu0 0.0
      %514 = vmatpush1.msra.mxu0 0.0
      %515 = vmatprep.subr.mxu0 0.0
      %516 = vmatpush1.msra.mxu0 0.0
      %517 = vmatprep.subr.mxu0 0.0
      %518 = vmatpush1.msra.mxu0 0.0
      %519 = vmatprep.subr.mxu0 0.0
      %520 = vmatpush1.msra.mxu0 0.0
      %521 = vmatprep.subr.mxu0 0.0
      %522 = vmatpush1.msra.mxu0 0.0
      %523 = vmatprep.mubr.f32.mxu0 0.0
      %524 = vmatmul.mubr.f32.gmra.mrb[0].mxu0 %v428
      %v525 = vpop.f32.mrb[0].mxu0
      %v526 = vadd.f32 %v457, %v525
      %v527 = vpop.f32.mrb[0].mxu0
      %528 = vmatprep.mubr.f32.mxu0 0.0
      %529 = vmatmul.mubr.f32.gmra.mrb[0].mxu0 %v429
      %v530 = vpop.f32.mrb[0].mxu0
      %v531 = vadd.f32 %v457, %v530
      %v532 = vpop.f32.mrb[0].mxu0
      %533 = vmatprep.mubr.f32.mxu0 0.0
      %534 = vmatmul.mubr.f32.gmra.mrb[0].mxu0 %v430
      %v535 = vpop.f32.mrb[0].mxu0
      %v536 = vadd.f32 %v457, %v535
      %v537 = vpop.f32.mrb[0].mxu0
      %538 = vmatprep.mubr.f32.mxu0 0.0
      %539 = vmatmul.mubr.f32.gmra.mrb[0].mxu0 %v431
      %v540 = vpop.f32.mrb[0].mxu0
      %v541 = vadd.f32 %v457, %v540
      %v542 = vpop.f32.mrb[0].mxu0
      %543 = vmatprep.mubr.f32.mxu0 0.0
      %544 = vmatmul.mubr.f32.gmra.mrb[0].mxu0 %v432
      %v545 = vpop.f32.mrb[0].mxu0
      %v546 = vadd.f32 %v457, %v545
      %v547 = vpop.f32.mrb[0].mxu0
      %548 = vmatprep.mubr.f32.mxu0 0.0
      %549 = vmatmul.mubr.f32.gmra.mrb[0].mxu0 %v433
      %v550 = vpop.f32.mrb[0].mxu0
      %v551 = vadd.f32 %v457, %v550
      %v552 = vpop.f32.mrb[0].mxu0
      %553 = vmatprep.mubr.f32.mxu0 0.0
      %554 = vmatmul.mubr.f32.gmra.mrb[0].mxu0 %v434
      %v555 = vpop.f32.mrb[0].mxu0
      %v556 = vadd.f32 %v457, %v555
      %v557 = vpop.f32.mrb[0].mxu0
      %558 = vmatprep.mubr.f32.mxu0 0.0
      %559 = vmatmul.mubr.f32.gmra.mrb[0].mxu0 %v435
      %v560 = vpop.f32.mrb[0].mxu0
      %v561 = vadd.f32 %v457, %v560
      %v562 = vpop.f32.mrb[0].mxu0
      %563 = vdwg.mxu0
      %v564 = vadd.f32 %v526, %v279
      %v565 = vadd.f32 %v531, %v280
      %v566 = vadd.f32 %v536, %v281
      %v567 = vadd.f32 %v541, %v282
      %v568 = vadd.f32 %v546, %v283
      %v569 = vadd.f32 %v551, %v284
      %v570 = vadd.f32 %v556, %v285
      %v571 = vadd.f32 %v561, %v286
      %v572 = vld [vmem:[%s5] sm:$0x1]
      %v573 = vld [vmem:[%s6] sm:$0x1]
      %v574 = vsel %vm298, %v564, 0.0
      %575 = vadd.xlane.f32.xlu0 %v574
      %v576 = vpop.xlane.xlu0 %575
      %v577 = vsel %vm298, %v565, 0.0
      %578 = vadd.xlane.f32.xlu0 %v577
      %v579 = vpop.xlane.xlu0 %578
      %v580 = vsel %vm298, %v566, 0.0
      %581 = vadd.xlane.f32.xlu0 %v580
      %v582 = vpop.xlane.xlu0 %581
      %v583 = vsel %vm298, %v567, 0.0
      %584 = vadd.xlane.f32.xlu0 %v583
      %v585 = vpop.xlane.xlu0 %584
      %v586 = vsel %vm298, %v568, 0.0
      %587 = vadd.xlane.f32.xlu0 %v586
      %v588 = vpop.xlane.xlu0 %587
      %v589 = vsel %vm298, %v569, 0.0
      %590 = vadd.xlane.f32.xlu0 %v589
      %v591 = vpop.xlane.xlu0 %590
      %v592 = vsel %vm298, %v570, 0.0
      %593 = vadd.xlane.f32.xlu0 %v592
      %v594 = vpop.xlane.xlu0 %593
      %v595 = vsel %vm298, %v571, 0.0
      %596 = vadd.xlane.f32.xlu0 %v595
      %v597 = vpop.xlane.xlu0 %596
      %v598 = vrcp.pop 32.0
      %v599 = vmul.f32 %v576, %v598
      %v600 = vmul.f32 %v579, %v598
      %v601 = vmul.f32 %v582, %v598
      %v602 = vmul.f32 %v585, %v598
      %v603 = vmul.f32 %v588, %v598
      %v604 = vmul.f32 %v591, %v598
      %v605 = vmul.f32 %v594, %v598
      %v606 = vmul.f32 %v597, %v598
      %v607 = vsub.f32 %v564, %v599
      %v608 = vsub.f32 %v565, %v600
      %v609 = vsub.f32 %v566, %v601
      %v610 = vsub.f32 %v567, %v602
      %v611 = vsub.f32 %v568, %v603
      %v612 = vsub.f32 %v569, %v604
      %v613 = vsub.f32 %v570, %v605
      %v614 = vsub.f32 %v571, %v606
      %v615 = vmul.f32 %v607, %v607
      %v616 = vmul.f32 %v608, %v608
      %v617 = vmul.f32 %v609, %v609
      %v618 = vmul.f32 %v610, %v610
      %v619 = vmul.f32 %v611, %v611
      %v620 = vmul.f32 %v612, %v612
      %v621 = vmul.f32 %v613, %v613
      %v622 = vmul.f32 %v614, %v614
      %v623 = vsel %vm298, %v615, 0.0
      %624 = vadd.xlane.f32.xlu0 %v623
      %v625 = vpop.xlane.xlu0 %624
      %v626 = vsel %vm298, %v616, 0.0
      %627 = vadd.xlane.f32.xlu0 %v626
      %v628 = vpop.xlane.xlu0 %627
      %v629 = vsel %vm298, %v617, 0.0
      %630 = vadd.xlane.f32.xlu0 %v629
      %v631 = vpop.xlane.xlu0 %630
      %v632 = vsel %vm298, %v618, 0.0
      %633 = vadd.xlane.f32.xlu0 %v632
      %v634 = vpop.xlane.xlu0 %633
      %v635 = vsel %vm298, %v619, 0.0
      %636 = vadd.xlane.f32.xlu0 %v635
      %v637 = vpop.xlane.xlu0 %636
      %v638 = vsel %vm298, %v620, 0.0
      %639 = vadd.xlane.f32.xlu0 %v638
      %v640 = vpop.xlane.xlu0 %639
      %v641 = vsel %vm298, %v621, 0.0
      %642 = vadd.xlane.f32.xlu0 %v641
      %v643 = vpop.xlane.xlu0 %642
      %v644 = vsel %vm298, %v622, 0.0
      %645 = vadd.xlane.f32.xlu0 %v644
      %v646 = vpop.xlane.xlu0 %645
      %v647 = vmul.f32 %v625, %v598
      %v648 = vmul.f32 %v628, %v598
      %v649 = vmul.f32 %v631, %v598
      %v650 = vmul.f32 %v634, %v598
      %v651 = vmul.f32 %v637, %v598
      %v652 = vmul.f32 %v640, %v598
      %v653 = vmul.f32 %v643, %v598
      %v654 = vmul.f32 %v646, %v598
      %v655 = vadd.f32 %v647, 1e-05
      %v656 = vadd.f32 %v648, 1e-05
      %v657 = vadd.f32 %v649, 1e-05
      %v658 = vadd.f32 %v650, 1e-05
      %v659 = vadd.f32 %v651, 1e-05
      %v660 = vadd.f32 %v652, 1e-05
      %v661 = vadd.f32 %v653, 1e-05
      %v662 = vadd.f32 %v654, 1e-05
      %v663 = vrsqrt.pop %v655
      %v664 = vrsqrt.pop %v656
      %v665 = vrsqrt.pop %v657
      %v666 = vrsqrt.pop %v658
      %v667 = vrsqrt.pop %v659
      %v668 = vrsqrt.pop %v660
      %v669 = vrsqrt.pop %v661
      %v670 = vrsqrt.pop %v662
      %v671 = vmul.f32 %v607, %v663
      %v672 = vmul.f32 %v608, %v664
      %v673 = vmul.f32 %v609, %v665
      %v674 = vmul.f32 %v610, %v666
      %v675 = vmul.f32 %v611, %v667
      %v676 = vmul.f32 %v612, %v668
      %v677 = vmul.f32 %v613, %v669
      %v678 = vmul.f32 %v614, %v670
      %v680 = vlaneseq
      %v681 = vshrl.u32 %v680, 7
      %v682 = vsub.s32 0, %v681
      %v683 = vrot.slane %v572, %v682
      %v685 = vmul.f32 %v671, %v683
      %v686 = vmul.f32 %v672, %v683
      %v687 = vmul.f32 %v673, %v683
      %v688 = vmul.f32 %v674, %v683
      %v689 = vmul.f32 %v675, %v683
      %v690 = vmul.f32 %v676, %v683
      %v691 = vmul.f32 %v677, %v683
      %v692 = vmul.f32 %v678, %v683
      %v694 = vlaneseq
      %v695 = vshrl.u32 %v694, 7
      %v696 = vsub.s32 0, %v695
      %v697 = vrot.slane %v573, %v696
      %v699 = vadd.f32 %v685, %v697
      %v700 = vadd.f32 %v686, %v697
      %v701 = vadd.f32 %v687, %v697
      %v702 = vadd.f32 %v688, %v697
      %v703 = vadd.f32 %v689, %v697
      %v704 = vadd.f32 %v690, %v697
      %v705 = vadd.f32 %v691, %v697
      %v706 = vadd.f32 %v692, %v697
      %707 = vst.msk [vmem:[%s278] sm:$0xff] %vm298, %v699
      %708 = vst.msk [vmem:[%s278 + $0x8] sm:$0xff] %vm298, %v700
      %709 = vst.msk [vmem:[%s278 + $0x10] sm:$0xff] %vm298, %v701
      %710 = vst.msk [vmem:[%s278 + $0x18] sm:$0xff] %vm298, %v702
      %711 = vst.msk [vmem:[%s278 + $0x20] sm:$0xff] %vm298, %v703
      %712 = vst.msk [vmem:[%s278 + $0x28] sm:$0xff] %vm298, %v704
      %713 = vst.msk [vmem:[%s278 + $0x30] sm:$0xff] %vm298, %v705
      %714 = vst.msk [vmem:[%s278 + $0x38] sm:$0xff] %vm298, %v706
      %p715 = scmp.lt.s32.totalorder %s18, 1
      %s716 = scalar_select %p715, %s18, 1
      %s717 = smul.addr %s716, 8
      %s718 = smul.addr %s717, 8
      %s719 = scalar_lea.vmem %s7, %s718
      // Predicated region
      $region49: #{st_model_forward.18} parent=47 // pred_check
        %p720 = pneg %p188
      $region50: #{st_model_forward.18} parent=47 // pred_check_branch
        %722 = sbr.rel (%p720) target = $region52
      $region51: #{st_model_forward.18} parent=47 // pred_region
        _
      $region52: #{st_model_forward.18} parent=47 // pred_fallthru
        _
    $region48: #{st_model_forward.18} parent=5 // pred_fallthru
      _
    %p723 = scmp.le.s32.totalorder 2, %s13
    // Predicated region
    $region53: #{st_model_forward.18} parent=5 // pred_check
      %p724 = pneg %p723
    $region54: #{st_model_forward.18} parent=5 // pred_check_branch
      %726 = sbr.rel (%p724) target = $region56
    $region55: #{st_model_forward.18} parent=5 // pred_region
      %s727 = ssub.s32 %s13, 2
      // Predicated region
      $region57: #{st_model_forward.18} parent=55 // pred_check
        %p728 = pneg %p194
      $region58: #{st_model_forward.18} parent=55 // pred_check_branch
        %730 = sbr.rel (%p728) target = $region60
      $region59: #{st_model_forward.18} parent=55 // pred_region
        %p731 = scmp.lt.s32.totalorder %s19, 1
        %s732 = scalar_select %p731, %s19, 1
        %s733 = smul.addr %s732, 8
        %s734 = smul.addr %s733, 8
        %s735 = scalar_lea.vmem %s7, %s734
      $region60: #{st_model_forward.18} parent=55 // pred_fallthru
        _
    $region56: #{st_model_forward.18} parent=5 // pred_fallthru
      _
  $region6: #{st_model_forward.18} parent=0 // loop_footer
    %s17 = sadd.s32 1, %s13
  $region7: #{st_model_forward.18} parent=0 // loop_footer_branch
    %12 = sbr.rel target = $region3
  $region8: #{st_model_forward.18} parent=0 // loop_exit
    _

// kernel: st_model_forward.27
$region0: #{st_model_forward.27}
  #allocation0 [shape = 'u32[]', space=smem, size = 0x4, offset = 0x4, fixed_abs, tag = 'smem constant byte address 0x4 - core index']
  #allocation1 [shape = 'u32[144,128]{1,0:T(1,128)}', space=vmem, size = 0x12000, scoped, tag = 'internal scratch']
  #allocation2 [shape = 'f32[1,1]{1,0:T(1,128)S(1)}', space=vmem, size = 0x200, scoped, tag = 'scoped memory for st_model_forward.27']
  %s0 = inlined_call_operand.vmem [shape: f32[2,8,8,32], index: 0, kind: input, shape index: {}]
  %s1 = inlined_call_operand.vmem [shape: f32[32,1], index: 1, kind: input, shape index: {}]
  %s2 = inlined_call_operand.<no memory space> [shape: f32[1,1], index: 2, kind: input, shape index: {}]
  %s3 = inlined_call_operand.vmem [shape: f32[2,8,8,1], index: 3, kind: output, shape index: {}]
  %s4 = sld [smem:[#allocation0]]
  $region45: #{st_model_forward.27} parent=0
    _
  %s6 = ssub.s32 1, %s4
  %s7 = scalar_select 0, %s6, %s4
  %v8 = vstv %s2
  %9 = vst [vmem:[#allocation2] sm:$0x1] %v8
  loop: start=0, step=1, limit=4
  $region2: #{st_model_forward.27} parent=0 // loop_pre_header
    _
  $region3: #{st_model_forward.27} parent=0 // loop_header
    %s11 = sphi 0, %s15
    %p12 = scmp.ge.s32.totalorder %s11, 4
    %s21 = sphi 0, %s23
    %s24 = sphi 0, %s21
    %s25 = sphi 0, %s24
    %s41 = sphi 0, %s25
    %s45 = sphi 0, %s45
    %s47 = sphi 0, %s45
    %s48 = sphi 0, %s47
    %s62 = sphi 0, %s48
    %s66 = sphi 0, %s66
    %s68 = sphi 0, %s66
    %s69 = sphi 0, %s68
    %s83 = sphi 0, %s69
    %s89 = sphi 0, %s91
    %s92 = sphi 0, %s89
    %s93 = sphi 0, %s92
    %s109 = sphi 0, %s93
  $region4: #{st_model_forward.27} parent=0 // loop_header_branch
    %14 = sbr.rel (%p12) target = $region8
  $region5: #{st_model_forward.27} parent=0 // loop_body
    %s16 = ssub.s32 %s11, 1
    %s17 = ssub.s32 %s11, 2
    %s18 = sadd.s32 %s11, 1
    %s19 = ssub.s32 %s11, %s18
    %p20 = scmp.eq.s32.totalorder %s19, 0
    %s22 = sadd.s32 %s21, 1
    %s23 = scalar_select %p20, %s21, %s22
    %p26 = pneg %p20
    %p27 = scmp.eq.s32.totalorder %s11, 1
    %p28 = por %p26, %p27
    %p29 = scmp.ne.s32.totalorder %s21, %s24
    %p30 = scmp.eq.s32.totalorder %s11, 0
    %p31 = por %p29, %p30
    %p32 = scmp.ne.s32.totalorder %s21, %s24
    %p33 = scmp.eq.s32.totalorder %s16, 1
    %p34 = por %p32, %p33
    %p35 = scmp.ne.s32.totalorder %s24, %s25
    %p36 = scmp.eq.s32.totalorder %s16, 0
    %p37 = por %p35, %p36
    %p38 = scmp.ne.s32.totalorder %s24, %s25
    %p39 = scmp.eq.s32.totalorder %s17, 1
    %p40 = por %p38, %p39
    %p42 = scmp.ne.s32.totalorder %s25, %s41
    %p43 = scmp.eq.s32.totalorder %s17, 0
    %p44 = por %p42, %p43
    %s46 = sadd.s32 %s45, 1
    %p49 = scmp.eq.s32.totalorder %s11, 1
    %p50 = scmp.ne.s32.totalorder %s45, %s47
    %p51 = scmp.eq.s32.totalorder %s11, 0
    %p52 = por %p50, %p51
    %p53 = scmp.ne.s32.totalorder %s45, %s47
    %p54 = scmp.eq.s32.totalorder %s16, 1
    %p55 = por %p53, %p54
    %p56 = scmp.ne.s32.totalorder %s47, %s48
    %p57 = scmp.eq.s32.totalorder %s16, 0
    %p58 = por %p56, %p57
    %p59 = scmp.ne.s32.totalorder %s47, %s48
    %p60 = scmp.eq.s32.totalorder %s17, 1
    %p61 = por %p59, %p60
    %p63 = scmp.ne.s32.totalorder %s48, %s62
    %p64 = scmp.eq.s32.totalorder %s17, 0
    %p65 = por %p63, %p64
    %s67 = sadd.s32 %s66, 1
    %p70 = scmp.eq.s32.totalorder %s11, 1
    %p71 = scmp.ne.s32.totalorder %s66, %s68
    %p72 = scmp.eq.s32.totalorder %s11, 0
    %p73 = por %p71, %p72
    %p74 = scmp.ne.s32.totalorder %s66, %s68
    %p75 = scmp.eq.s32.totalorder %s16, 1
    %p76 = por %p74, %p75
    %p77 = scmp.ne.s32.totalorder %s68, %s69
    %p78 = scmp.eq.s32.totalorder %s16, 0
    %p79 = por %p77, %p78
    %p80 = scmp.ne.s32.totalorder %s68, %s69
    %p81 = scmp.eq.s32.totalorder %s17, 1
    %p82 = por %p80, %p81
    %p84 = scmp.ne.s32.totalorder %s69, %s83
    %p85 = scmp.eq.s32.totalorder %s17, 0
    %p86 = por %p84, %p85
    %s87 = ssub.s32 %s11, %s18
    %p88 = scmp.eq.s32.totalorder %s87, 0
    %s90 = sadd.s32 %s89, 1
    %s91 = scalar_select %p88, %s89, %s90
    %p94 = pneg %p88
    %p95 = scmp.eq.s32.totalorder %s11, 1
    %p96 = por %p94, %p95
    %p97 = scmp.ne.s32.totalorder %s89, %s92
    %p98 = scmp.eq.s32.totalorder %s11, 0
    %p99 = por %p97, %p98
    %p100 = scmp.ne.s32.totalorder %s89, %s92
    %p101 = scmp.eq.s32.totalorder %s16, 1
    %p102 = por %p100, %p101
    %p103 = scmp.ne.s32.totalorder %s92, %s93
    %p104 = scmp.eq.s32.totalorder %s16, 0
    %p105 = por %p103, %p104
    %p106 = scmp.ne.s32.totalorder %s92, %s93
    %p107 = scmp.eq.s32.totalorder %s17, 1
    %p108 = por %p106, %p107
    %p110 = scmp.ne.s32.totalorder %s93, %s109
    %p111 = scmp.eq.s32.totalorder %s17, 0
    %p112 = por %p110, %p111
    %p113 = scmp.le.s32.totalorder 1, %s11
    %p114 = scmp.lt.s32.totalorder %s11, 3
    %p115 = pnand %p113, %p114
    %p116 = pneg %p115
    // Predicated region
    $region9: #{st_model_forward.27} parent=5 // pred_check
      _
    $region10: #{st_model_forward.27} parent=5 // pred_check_branch
      %118 = sbr.rel (%p115) target = $region12
    $region11: #{st_model_forward.27} parent=5 // pred_region
      %s119 = ssub.s32 %s11, 1
      // Predicated region
      $region13: #{st_model_forward.27} parent=11 // pred_check
        %p120 = pneg %p58
      $region14: #{st_model_forward.27} parent=11 // pred_check_branch
        %122 = sbr.rel (%p120) target = $region16
      $region15: #{st_model_forward.27} parent=11 // pred_region
        _
      $region16: #{st_model_forward.27} parent=11 // pred_fallthru
        _
      // Predicated region
      $region17: #{st_model_forward.27} parent=11 // pred_check
        %p123 = pneg %p79
      $region18: #{st_model_forward.27} parent=11 // pred_check_branch
        %125 = sbr.rel (%p123) target = $region20
      $region19: #{st_model_forward.27} parent=11 // pred_region
        _
      $region20: #{st_model_forward.27} parent=11 // pred_fallthru
        _
    $region12: #{st_model_forward.27} parent=5 // pred_fallthru
      _
    %p126 = scmp.lt.s32.totalorder %s11, 2
    // Predicated region
    $region21: #{st_model_forward.27} parent=5 // pred_check
      %p127 = pneg %p126
    $region22: #{st_model_forward.27} parent=5 // pred_check_branch
      %129 = sbr.rel (%p127) target = $region24
    $region23: #{st_model_forward.27} parent=5 // pred_region
      // Predicated region
      $region25: #{st_model_forward.27} parent=23 // pred_check
        %p130 = pneg %p31
      $region26: #{st_model_forward.27} parent=23 // pred_check_branch
        %132 = sbr.rel (%p130) target = $region28
      $region27: #{st_model_forward.27} parent=23 // pred_region
        %p133 = scmp.lt.s32.totalorder %s11, 1
        %s134 = scalar_select %p133, %s11, 1
        %s135 = smul.addr %s134, 8
        %s136 = smul.addr %s135, 8
        %s137 = scalar_lea.vmem %s0, %s136
      $region28: #{st_model_forward.27} parent=23 // pred_fallthru
        _
    $region24: #{st_model_forward.27} parent=5 // pred_fallthru
      _
    %p138 = scmp.le.s32.totalorder 1, %s11
    %p139 = scmp.lt.s32.totalorder %s11, 3
    %p140 = pnand %p138, %p139
    %p141 = pneg %p140
    // Predicated region
    $region29: #{st_model_forward.27} parent=5 // pred_check
      _
    $region30: #{st_model_forward.27} parent=5 // pred_check_branch
      %143 = sbr.rel (%p140) target = $region32
    $region31: #{st_model_forward.27} parent=5 // pred_region
      %s144 = ssub.s32 %s11, 1
      %p145 = scmp.lt.s32.totalorder %s16, 1
      %s146 = scalar_select %p145, %s16, 1
      %s147 = smul.addr %s146, 8
      %s148 = smul.addr %s147, 8
      %s149 = scalar_lea.vmem %s0, %s148
      %p150 = pneg %p37
      %p151 = pneg %p34
      %p152 = pneg %p58
      %p153 = pneg %p55
      %p154 = pneg %p79
      %p155 = pneg %p76
      %p156 = pneg %p105
      %p157 = pneg %p102
      %p158 = scmp.lt.s32.totalorder %s16, 1
      %s159 = scalar_select %p158, %s16, 1
      %s160 = smul.addr %s159, 8
      %s161 = smul.addr %s160, 8
      %s162 = scalar_lea.vmem %s3, %s161
      %p163 = scmp.lt.s32.totalorder %s16, 1
      %s164 = scalar_select %p163, %s16, 1
      %s165 = smul.addr %s164, 8
      %s166 = smul.addr %s165, 8
      %s167 = scalar_lea.vmem %s0, %s166
      %p168 = scmp.lt.s32.totalorder %s16, 1
      %s169 = scalar_select %p168, %s16, 1
      %s170 = smul.addr %s169, 8
      %s171 = smul.addr %s170, 8
      %s172 = scalar_lea.vmem %s3, %s171
      %v173 = vld [vmem:[%s167] sm:$0xff]
      %v174 = vld [vmem:[%s167 + $0x8] sm:$0xff]
      %v175 = vld [vmem:[%s167 + $0x10] sm:$0xff]
      %v176 = vld [vmem:[%s167 + $0x18] sm:$0xff]
      %v177 = vld [vmem:[%s167 + $0x20] sm:$0xff]
      %v178 = vld [vmem:[%s167 + $0x28] sm:$0xff]
      %v179 = vld [vmem:[%s167 + $0x30] sm:$0xff]
      %v180 = vld [vmem:[%s167 + $0x38] sm:$0xff]
      %v181 = vmax.f32 %v173, 0.0
      %v182 = vmax.f32 %v174, 0.0
      %v183 = vmax.f32 %v175, 0.0
      %v184 = vmax.f32 %v176, 0.0
      %v185 = vmax.f32 %v177, 0.0
      %v186 = vmax.f32 %v178, 0.0
      %v187 = vmax.f32 %v179, 0.0
      %v188 = vmax.f32 %v180, 0.0
      %v189 = vld [vmem:[%s1] sm:$0xff]
      %v190 = vld [vmem:[%s1 + $0x8] sm:$0xff]
      %v191 = vld [vmem:[%s1 + $0x10] sm:$0xff]
      %v192 = vld [vmem:[%s1 + $0x18] sm:$0xff]
      %v193 = vld [vmem:[#allocation2] sm:$0x1]
      %v195 = vlaneseq
      %v196 = vshrl.u32 %v195, 7
      %v197 = vsub.s32 0, %v196
      %v198 = vrot.slane %v193, %v197
      %vm200 = vcmask 261120
      %v202 = vsel %vm200, %v181, 0
      %v205 = vsel %vm200, %v182, 0
      %v208 = vsel %vm200, %v183, 0
      %v211 = vsel %vm200, %v184, 0
      %v214 = vsel %vm200, %v185, 0
      %v217 = vsel %vm200, %v186, 0
      %v220 = vsel %vm200, %v187, 0
      %v223 = vsel %vm200, %v188, 0
      %225 = vmatprep.subr.mxu0 0.0
      %226 = vmatpush1.msra.mxu0 %v189
      %227 = vmatprep.subr.mxu0 0.0
      %228 = vmatpush1.msra.mxu0 %v190
      %229 = vmatprep.subr.mxu0 0.0
      %230 = vmatpush1.msra.mxu0 %v191
      %231 = vmatprep.subr.mxu0 0.0
      %232 = vmatpush1.msra.mxu0 %v192
      %233 = vmatprep.subr.mxu0 0.0
      %234 = vmatpush1.msra.mxu0 0.0
      %235 = vmatprep.subr.mxu0 0.0
      %236 = vmatpush1.msra.mxu0 0.0
      %237 = vmatprep.subr.mxu0 0.0
      %238 = vmatpush1.msra.mxu0 0.0
      %239 = vmatprep.subr.mxu0 0.0
      %240 = vmatpush1.msra.mxu0 0.0
      %241 = vmatprep.subr.mxu0 0.0
      %242 = vmatpush1.msra.mxu0 0.0
      %243 = vmatprep.subr.mxu0 0.0
      %244 = vmatpush1.msra.mxu0 0.0
      %245 = vmatprep.subr.mxu0 0.0
      %246 = vmatpush1.msra.mxu0 0.0
      %247 = vmatprep.subr.mxu0 0.0
      %248 = vmatpush1.msra.mxu0 0.0
      %249 = vmatprep.subr.mxu0 0.0
      %250 = vmatpush1.msra.mxu0 0.0
      %251 = vmatprep.subr.mxu0 0.0
      %252 = vmatpush1.msra.mxu0 0.0
      %253 = vmatprep.subr.mxu0 0.0
      %254 = vmatpush1.msra.mxu0 0.0
      %255 = vmatprep.subr.mxu0 0.0
      %256 = vmatpush1.msra.mxu0 0.0
      %257 = vmatprep.subr.mxu0 0.0
      %258 = vmatpush1.msra.mxu0 0.0
      %259 = vmatprep.subr.mxu0 0.0
      %260 = vmatpush1.msra.mxu0 0.0
      %261 = vmatprep.subr.mxu0 0.0
      %262 = vmatpush1.msra.mxu0 0.0
      %263 = vmatprep.subr.mxu0 0.0
      %264 = vmatpush1.msra.mxu0 0.0
      %265 = vmatprep.subr.mxu0 0.0
      %266 = vmatpush1.msra.mxu0 0.0
      %267 = vmatprep.subr.mxu0 0.0
      %268 = vmatpush1.msra.mxu0 0.0
      %269 = vmatprep.subr.mxu0 0.0
      %270 = vmatpush1.msra.mxu0 0.0
      %271 = vmatprep.subr.mxu0 0.0
      %272 = vmatpush1.msra.mxu0 0.0
      %273 = vmatprep.subr.mxu0 0.0
      %274 = vmatpush1.msra.mxu0 0.0
      %275 = vmatprep.subr.mxu0 0.0
      %276 = vmatpush1.msra.mxu0 0.0
      %277 = vmatprep.subr.mxu0 0.0
      %278 = vmatpush1.msra.mxu0 0.0
      %279 = vmatprep.subr.mxu0 0.0
      %280 = vmatpush1.msra.mxu0 0.0
      %281 = vmatprep.subr.mxu0 0.0
      %282 = vmatpush1.msra.mxu0 0.0
      %283 = vmatprep.subr.mxu0 0.0
      %284 = vmatpush1.msra.mxu0 0.0
      %285 = vmatprep.subr.mxu0 0.0
      %286 = vmatpush1.msra.mxu0 0.0
      %287 = vmatprep.subr.mxu0 0.0
      %288 = vmatpush1.msra.mxu0 0.0
      %289 = vmatprep.mubr.f32.mxu0 0.0
      %290 = vmatmul.mubr.f32.gmra.mrb[0].mxu0 %v202
      %v291 = vpop.f32.mrb[0].mxu0
      %v292 = vadd.f32 %v198, %v291
      %v293 = vpop.f32.mrb[0].mxu0
      %294 = vmatprep.mubr.f32.mxu0 0.0
      %295 = vmatmul.mubr.f32.gmra.mrb[0].mxu0 %v205
      %v296 = vpop.f32.mrb[0].mxu0
      %v297 = vadd.f32 %v198, %v296
      %v298 = vpop.f32.mrb[0].mxu0
      %299 = vmatprep.mubr.f32.mxu0 0.0
      %300 = vmatmul.mubr.f32.gmra.mrb[0].mxu0 %v208
      %v301 = vpop.f32.mrb[0].mxu0
      %v302 = vadd.f32 %v198, %v301
      %v303 = vpop.f32.mrb[0].mxu0
      %304 = vmatprep.mubr.f32.mxu0 0.0
      %305 = vmatmul.mubr.f32.gmra.mrb[0].mxu0 %v211
      %v306 = vpop.f32.mrb[0].mxu0
      %v307 = vadd.f32 %v198, %v306
      %v308 = vpop.f32.mrb[0].mxu0
      %309 = vmatprep.mubr.f32.mxu0 0.0
      %310 = vmatmul.mubr.f32.gmra.mrb[0].mxu0 %v214
      %v311 = vpop.f32.mrb[0].mxu0
      %v312 = vadd.f32 %v198, %v311
      %v313 = vpop.f32.mrb[0].mxu0
      %314 = vmatprep.mubr.f32.mxu0 0.0
      %315 = vmatmul.mubr.f32.gmra.mrb[0].mxu0 %v217
      %v316 = vpop.f32.mrb[0].mxu0
      %v317 = vadd.f32 %v198, %v316
      %v318 = vpop.f32.mrb[0].mxu0
      %319 = vmatprep.mubr.f32.mxu0 0.0
      %320 = vmatmul.mubr.f32.gmra.mrb[0].mxu0 %v220
      %v321 = vpop.f32.mrb[0].mxu0
      %v322 = vadd.f32 %v198, %v321
      %v323 = vpop.f32.mrb[0].mxu0
      %324 = vmatprep.mubr.f32.mxu0 0.0
      %325 = vmatmul.mubr.f32.gmra.mrb[0].mxu0 %v223
      %v326 = vpop.f32.mrb[0].mxu0
      %v327 = vadd.f32 %v198, %v326
      %v328 = vpop.f32.mrb[0].mxu0
      %329 = vdwg.mxu0
      %vm330 = vcmask 7168
      %331 = vst.msk [vmem:[%s172] sm:$0xff] %vm330, %v292
      %332 = vst.msk [vmem:[%s172 + $0x8] sm:$0xff] %vm330, %v297
      %333 = vst.msk [vmem:[%s172 + $0x10] sm:$0xff] %vm330, %v302
      %334 = vst.msk [vmem:[%s172 + $0x18] sm:$0xff] %vm330, %v307
      %335 = vst.msk [vmem:[%s172 + $0x20] sm:$0xff] %vm330, %v312
      %336 = vst.msk [vmem:[%s172 + $0x28] sm:$0xff] %vm330, %v317
      %337 = vst.msk [vmem:[%s172 + $0x30] sm:$0xff] %vm330, %v322
      %338 = vst.msk [vmem:[%s172 + $0x38] sm:$0xff] %vm330, %v327
      %p339 = scmp.lt.s32.totalorder %s16, 1
      %s340 = scalar_select %p339, %s16, 1
      %s341 = smul.addr %s340, 8
      %s342 = smul.addr %s341, 8
      %s343 = scalar_lea.vmem %s3, %s342
      // Predicated region
      $region33: #{st_model_forward.27} parent=31 // pred_check
        %p344 = pneg %p102
      $region34: #{st_model_forward.27} parent=31 // pred_check_branch
        %346 = sbr.rel (%p344) target = $region36
      $region35: #{st_model_forward.27} parent=31 // pred_region
        _
      $region36: #{st_model_forward.27} parent=31 // pred_fallthru
        _
    $region32: #{st_model_forward.27} parent=5 // pred_fallthru
      _
    %p347 = scmp.le.s32.totalorder 2, %s11
    // Predicated region
    $region37: #{st_model_forward.27} parent=5 // pred_check
      %p348 = pneg %p347
    $region38: #{st_model_forward.27} parent=5 // pred_check_branch
      %350 = sbr.rel (%p348) target = $region40
    $region39: #{st_model_forward.27} parent=5 // pred_region
      %s351 = ssub.s32 %s11, 2
      // Predicated region
      $region41: #{st_model_forward.27} parent=39 // pred_check
        %p352 = pneg %p108
      $region42: #{st_model_forward.27} parent=39 // pred_check_branch
        %354 = sbr.rel (%p352) target = $region44
      $region43: #{st_model_forward.27} parent=39 // pred_region
        %p355 = scmp.lt.s32.totalorder %s17, 1
        %s356 = scalar_select %p355, %s17, 1
        %s357 = smul.addr %s356, 8
        %s358 = smul.addr %s357, 8
        %s359 = scalar_lea.vmem %s3, %s358
      $region44: #{st_model_forward.27} parent=39 // pred_fallthru
        _
    $region40: #{st_model_forward.27} parent=5 // pred_fallthru
      _
  $region6: #{st_model_forward.27} parent=0 // loop_footer
    %s15 = sadd.s32 1, %s11
  $region7: #{st_model_forward.27} parent=0 // loop_footer_branch
    %10 = sbr.rel target = $region3
  $region8: #{st_model_forward.27} parent=0 // loop_exit
    _

// kernel: st_model_forward.16
$region0: #{st_model_forward.16}
  #allocation0 [shape = 'u32[]', space=smem, size = 0x4, offset = 0x4, fixed_abs, tag = 'smem constant byte address 0x4 - core index']
  #allocation1 [shape = 'u32[144,128]{1,0:T(1,128)}', space=vmem, size = 0x12000, scoped, tag = 'internal scratch']
  %s0 = inlined_call_operand.vmem [shape: f32[2,8,8,32], index: 0, kind: input, shape index: {}]
  %s1 = inlined_call_operand.vmem [shape: f32[2,8,8], index: 1, kind: input, shape index: {}]
  %s2 = inlined_call_operand.vmem [shape: f32[160,32], index: 2, kind: input, shape index: {}]
  %s3 = inlined_call_operand.vmem [shape: f32[1,32], index: 3, kind: input, shape index: {}]
  %s4 = inlined_call_operand.vmem [shape: f32[1,32], index: 4, kind: input, shape index: {}]
  %s5 = inlined_call_operand.vmem [shape: f32[1,32], index: 5, kind: input, shape index: {}]
  %s6 = inlined_call_operand.vmem [shape: f32[2,8,8,32], index: 6, kind: output, shape index: {}]
  %s7 = sld [smem:[#allocation0]]
  $region57: #{st_model_forward.16} parent=0
    _
  %s9 = ssub.s32 1, %s7
  %s10 = scalar_select 0, %s9, %s7
  loop: start=0, step=1, limit=4
  $region2: #{st_model_forward.16} parent=0 // loop_pre_header
    _
  $region3: #{st_model_forward.16} parent=0 // loop_header
    %s12 = sphi 0, %s16
    %p13 = scmp.ge.s32.totalorder %s12, 4
    %s22 = sphi 0, %s24
    %s25 = sphi 0, %s22
    %s26 = sphi 0, %s25
    %s42 = sphi 0, %s26
    %s46 = sphi 0, %s46
    %s48 = sphi 0, %s46
    %s49 = sphi 0, %s48
    %s63 = sphi 0, %s49
    %s67 = sphi 0, %s67
    %s69 = sphi 0, %s67
    %s70 = sphi 0, %s69
    %s84 = sphi 0, %s70
    %s88 = sphi 0, %s88
    %s90 = sphi 0, %s88
    %s91 = sphi 0, %s90
    %s105 = sphi 0, %s91
    %s109 = sphi 0, %s109
    %s111 = sphi 0, %s109
    %s112 = sphi 0, %s111
    %s126 = sphi 0, %s112
    %s130 = sphi 0, %s130
    %s132 = sphi 0, %s130
    %s133 = sphi 0, %s132
    %s147 = sphi 0, %s133
    %s153 = sphi 0, %s155
    %s156 = sphi 0, %s153
    %s157 = sphi 0, %s156
    %s173 = sphi 0, %s157
  $region4: #{st_model_forward.16} parent=0 // loop_header_branch
    %15 = sbr.rel (%p13) target = $region8
  $region5: #{st_model_forward.16} parent=0 // loop_body
    %s17 = ssub.s32 %s12, 1
    %s18 = ssub.s32 %s12, 2
    %s19 = sadd.s32 %s12, 1
    %s20 = ssub.s32 %s12, %s19
    %p21 = scmp.eq.s32.totalorder %s20, 0
    %s23 = sadd.s32 %s22, 1
    %s24 = scalar_select %p21, %s22, %s23
    %p27 = pneg %p21
    %p28 = scmp.eq.s32.totalorder %s12, 1
    %p29 = por %p27, %p28
    %p30 = scmp.ne.s32.totalorder %s22, %s25
    %p31 = scmp.eq.s32.totalorder %s12, 0
    %p32 = por %p30, %p31
    %p33 = scmp.ne.s32.totalorder %s22, %s25
    %p34 = scmp.eq.s32.totalorder %s17, 1
    %p35 = por %p33, %p34
    %p36 = scmp.ne.s32.totalorder %s25, %s26
    %p37 = scmp.eq.s32.totalorder %s17, 0
    %p38 = por %p36, %p37
    %p39 = scmp.ne.s32.totalorder %s25, %s26
    %p40 = scmp.eq.s32.totalorder %s18, 1
    %p41 = por %p39, %p40
    %p43 = scmp.ne.s32.totalorder %s26, %s42
    %p44 = scmp.eq.s32.totalorder %s18, 0
    %p45 = por %p43, %p44
    %s47 = sadd.s32 %s46, 1
    %p50 = scmp.eq.s32.totalorder %s12, 1
    %p51 = scmp.ne.s32.totalorder %s46, %s48
    %p52 = scmp.eq.s32.totalorder %s12, 0
    %p53 = por %p51, %p52
    %p54 = scmp.ne.s32.totalorder %s46, %s48
    %p55 = scmp.eq.s32.totalorder %s17, 1
    %p56 = por %p54, %p55
    %p57 = scmp.ne.s32.totalorder %s48, %s49
    %p58 = scmp.eq.s32.totalorder %s17, 0
    %p59 = por %p57, %p58
    %p60 = scmp.ne.s32.totalorder %s48, %s49
    %p61 = scmp.eq.s32.totalorder %s18, 1
    %p62 = por %p60, %p61
    %p64 = scmp.ne.s32.totalorder %s49, %s63
    %p65 = scmp.eq.s32.totalorder %s18, 0
    %p66 = por %p64, %p65
    %s68 = sadd.s32 %s67, 1
    %p71 = scmp.eq.s32.totalorder %s12, 1
    %p72 = scmp.ne.s32.totalorder %s67, %s69
    %p73 = scmp.eq.s32.totalorder %s12, 0
    %p74 = por %p72, %p73
    %p75 = scmp.ne.s32.totalorder %s67, %s69
    %p76 = scmp.eq.s32.totalorder %s17, 1
    %p77 = por %p75, %p76
    %p78 = scmp.ne.s32.totalorder %s69, %s70
    %p79 = scmp.eq.s32.totalorder %s17, 0
    %p80 = por %p78, %p79
    %p81 = scmp.ne.s32.totalorder %s69, %s70
    %p82 = scmp.eq.s32.totalorder %s18, 1
    %p83 = por %p81, %p82
    %p85 = scmp.ne.s32.totalorder %s70, %s84
    %p86 = scmp.eq.s32.totalorder %s18, 0
    %p87 = por %p85, %p86
    %s89 = sadd.s32 %s88, 1
    %p92 = scmp.eq.s32.totalorder %s12, 1
    %p93 = scmp.ne.s32.totalorder %s88, %s90
    %p94 = scmp.eq.s32.totalorder %s12, 0
    %p95 = por %p93, %p94
    %p96 = scmp.ne.s32.totalorder %s88, %s90
    %p97 = scmp.eq.s32.totalorder %s17, 1
    %p98 = por %p96, %p97
    %p99 = scmp.ne.s32.totalorder %s90, %s91
    %p100 = scmp.eq.s32.totalorder %s17, 0
    %p101 = por %p99, %p100
    %p102 = scmp.ne.s32.totalorder %s90, %s91
    %p103 = scmp.eq.s32.totalorder %s18, 1
    %p104 = por %p102, %p103
    %p106 = scmp.ne.s32.totalorder %s91, %s105
    %p107 = scmp.eq.s32.totalorder %s18, 0
    %p108 = por %p106, %p107
    %s110 = sadd.s32 %s109, 1
    %p113 = scmp.eq.s32.totalorder %s12, 1
    %p114 = scmp.ne.s32.totalorder %s109, %s111
    %p115 = scmp.eq.s32.totalorder %s12, 0
    %p116 = por %p114, %p115
    %p117 = scmp.ne.s32.totalorder %s109, %s111
    %p118 = scmp.eq.s32.totalorder %s17, 1
    %p119 = por %p117, %p118
    %p120 = scmp.ne.s32.totalorder %s111, %s112
    %p121 = scmp.eq.s32.totalorder %s17, 0
    %p122 = por %p120, %p121
    %p123 = scmp.ne.s32.totalorder %s111, %s112
    %p124 = scmp.eq.s32.totalorder %s18, 1
    %p125 = por %p123, %p124
    %p127 = scmp.ne.s32.totalorder %s112, %s126
    %p128 = scmp.eq.s32.totalorder %s18, 0
    %p129 = por %p127, %p128
    %s131 = sadd.s32 %s130, 1
    %p134 = scmp.eq.s32.totalorder %s12, 1
    %p135 = scmp.ne.s32.totalorder %s130, %s132
    %p136 = scmp.eq.s32.totalorder %s12, 0
    %p137 = por %p135, %p136
    %p138 = scmp.ne.s32.totalorder %s130, %s132
    %p139 = scmp.eq.s32.totalorder %s17, 1
    %p140 = por %p138, %p139
    %p141 = scmp.ne.s32.totalorder %s132, %s133
    %p142 = scmp.eq.s32.totalorder %s17, 0
    %p143 = por %p141, %p142
    %p144 = scmp.ne.s32.totalorder %s132, %s133
    %p145 = scmp.eq.s32.totalorder %s18, 1
    %p146 = por %p144, %p145
    %p148 = scmp.ne.s32.totalorder %s133, %s147
    %p149 = scmp.eq.s32.totalorder %s18, 0
    %p150 = por %p148, %p149
    %s151 = ssub.s32 %s12, %s19
    %p152 = scmp.eq.s32.totalorder %s151, 0
    %s154 = sadd.s32 %s153, 1
    %s155 = scalar_select %p152, %s153, %s154
    %p158 = pneg %p152
    %p159 = scmp.eq.s32.totalorder %s12, 1
    %p160 = por %p158, %p159
    %p161 = scmp.ne.s32.totalorder %s153, %s156
    %p162 = scmp.eq.s32.totalorder %s12, 0
    %p163 = por %p161, %p162
    %p164 = scmp.ne.s32.totalorder %s153, %s156
    %p165 = scmp.eq.s32.totalorder %s17, 1
    %p166 = por %p164, %p165
    %p167 = scmp.ne.s32.totalorder %s156, %s157
    %p168 = scmp.eq.s32.totalorder %s17, 0
    %p169 = por %p167, %p168
    %p170 = scmp.ne.s32.totalorder %s156, %s157
    %p171 = scmp.eq.s32.totalorder %s18, 1
    %p172 = por %p170, %p171
    %p174 = scmp.ne.s32.totalorder %s157, %s173
    %p175 = scmp.eq.s32.totalorder %s18, 0
    %p176 = por %p174, %p175
    %p177 = scmp.le.s32.totalorder 1, %s12
    %p178 = scmp.lt.s32.totalorder %s12, 3
    %p179 = pnand %p177, %p178
    %p180 = pneg %p179
    // Predicated region
    $region9: #{st_model_forward.16} parent=5 // pred_check
      _
    $region10: #{st_model_forward.16} parent=5 // pred_check_branch
      %182 = sbr.rel (%p179) target = $region12
    $region11: #{st_model_forward.16} parent=5 // pred_region
      %s183 = ssub.s32 %s12, 1
      // Predicated region
      $region13: #{st_model_forward.16} parent=11 // pred_check
        %p184 = pneg %p59
      $region14: #{st_model_forward.16} parent=11 // pred_check_branch
        %186 = sbr.rel (%p184) target = $region16
      $region15: #{st_model_forward.16} parent=11 // pred_region
        _
      $region16: #{st_model_forward.16} parent=11 // pred_fallthru
        _
      // Predicated region
      $region17: #{st_model_forward.16} parent=11 // pred_check
        %p187 = pneg %p80
      $region18: #{st_model_forward.16} parent=11 // pred_check_branch
        %189 = sbr.rel (%p187) target = $region20
      $region19: #{st_model_forward.16} parent=11 // pred_region
        _
      $region20: #{st_model_forward.16} parent=11 // pred_fallthru
        _
      // Predicated region
      $region21: #{st_model_forward.16} parent=11 // pred_check
        %p190 = pneg %p101
      $region22: #{st_model_forward.16} parent=11 // pred_check_branch
        %192 = sbr.rel (%p190) target = $region24
      $region23: #{st_model_forward.16} parent=11 // pred_region
        _
      $region24: #{st_model_forward.16} parent=11 // pred_fallthru
        _
      // Predicated region
      $region25: #{st_model_forward.16} parent=11 // pred_check
        %p193 = pneg %p122
      $region26: #{st_model_forward.16} parent=11 // pred_check_branch
        %195 = sbr.rel (%p193) target = $region28
      $region27: #{st_model_forward.16} parent=11 // pred_region
        _
      $region28: #{st_model_forward.16} parent=11 // pred_fallthru
        _
      // Predicated region
      $region29: #{st_model_forward.16} parent=11 // pred_check
        %p196 = pneg %p143
      $region30: #{st_model_forward.16} parent=11 // pred_check_branch
        %198 = sbr.rel (%p196) target = $region32
      $region31: #{st_model_forward.16} parent=11 // pred_region
        _
      $region32: #{st_model_forward.16} parent=11 // pred_fallthru
        _
    $region12: #{st_model_forward.16} parent=5 // pred_fallthru
      _
    %p199 = scmp.lt.s32.totalorder %s12, 2
    // Predicated region
    $region33: #{st_model_forward.16} parent=5 // pred_check
      %p200 = pneg %p199
    $region34: #{st_model_forward.16} parent=5 // pred_check_branch
      %202 = sbr.rel (%p200) target = $region36
    $region35: #{st_model_forward.16} parent=5 // pred_region
      // Predicated region
      $region37: #{st_model_forward.16} parent=35 // pred_check
        %p203 = pneg %p32
      $region38: #{st_model_forward.16} parent=35 // pred_check_branch
        %205 = sbr.rel (%p203) target = $region40
      $region39: #{st_model_forward.16} parent=35 // pred_region
        %p206 = scmp.lt.s32.totalorder %s12, 1
        %s207 = scalar_select %p206, %s12, 1
        %s208 = smul.addr %s207, 8
        %s209 = smul.addr %s208, 8
        %s210 = scalar_lea.vmem %s0, %s209
      $region40: #{st_model_forward.16} parent=35 // pred_fallthru
        _
    $region36: #{st_model_forward.16} parent=5 // pred_fallthru
      _
    %p211 = scmp.le.s32.totalorder 1, %s12
    %p212 = scmp.lt.s32.totalorder %s12, 3
    %p213 = pnand %p211, %p212
    %p214 = pneg %p213
    // Predicated region
    $region41: #{st_model_forward.16} parent=5 // pred_check
      _
    $region42: #{st_model_forward.16} parent=5 // pred_check_branch
      %216 = sbr.rel (%p213) target = $region44
    $region43: #{st_model_forward.16} parent=5 // pred_region
      %s217 = ssub.s32 %s12, 1
      %p218 = scmp.lt.s32.totalorder %s17, 1
      %s219 = scalar_select %p218, %s17, 1
      %s220 = smul.addr %s219, 8
      %s221 = smul.addr %s220, 8
      %s222 = scalar_lea.vmem %s0, %s221
      %p223 = pneg %p38
      %p224 = pneg %p35
      %p225 = pneg %p59
      %p226 = pneg %p56
      %p227 = pneg %p80
      %p228 = pneg %p77
      %p229 = pneg %p101
      %p230 = pneg %p98
      %p231 = pneg %p122
      %p232 = pneg %p119
      %p233 = pneg %p143
      %p234 = pneg %p140
      %p235 = pneg %p169
      %p236 = pneg %p166
      %p237 = scmp.lt.s32.totalorder %s17, 1
      %s238 = scalar_select %p237, %s17, 1
      %s239 = smul.addr %s238, 8
      %s240 = smul.addr %s239, 8
      %s241 = scalar_lea.vmem %s6, %s240
      %p242 = scmp.lt.s32.totalorder %s17, 1
      %s243 = scalar_select %p242, %s17, 1
      %s244 = smul.addr %s243, 8
      %s245 = smul.addr %s244, 8
      %s246 = scalar_lea.vmem %s0, %s245
      %p247 = scmp.lt.s32.totalorder %s17, 1
      %s248 = scalar_select %p247, %s17, 1
      %s249 = smul.addr %s248, 8
      %s250 = smul.addr %s249, 8
      %s251 = scalar_lea.vmem %s6, %s250
      %v252 = vld [vmem:[%s246] sm:$0xff]
      %v253 = vld [vmem:[%s246 + $0x8] sm:$0xff]
      %v254 = vld [vmem:[%s246 + $0x10] sm:$0xff]
      %v255 = vld [vmem:[%s246 + $0x18] sm:$0xff]
      %v256 = vld [vmem:[%s246 + $0x20] sm:$0xff]
      %v257 = vld [vmem:[%s246 + $0x28] sm:$0xff]
      %v258 = vld [vmem:[%s246 + $0x30] sm:$0xff]
      %v259 = vld [vmem:[%s246 + $0x38] sm:$0xff]
      %v260 = vcombine.low %v252, %v254
      %v261 = vcombine.high %v252, %v254
      %v263 = vunpack.c.l.s4 1983009808
      %v264 = vunpack.c.0.s8 %v263
      %v265 = vlaneseq
      %v266 = vshrl.u32 %v265, 7
      %v267 = vsub.s32 %v264, %v266
      %v268 = vrot.slane %v260, %v267
      %v270 = vunpack.c.l.s4 1983009808
      %v271 = vunpack.c.0.s8 %v270
      %v272 = vlaneseq
      %v273 = vshrl.u32 %v272, 7
      %v274 = vsub.s32 %v271, %v273
      %v275 = vrot.slane %v261, %v274
      %v276 = vcombine.low %v253, %v255
      %v277 = vcombine.high %v253, %v255
      %v279 = vunpack.c.l.s4 1983009808
      %v280 = vunpack.c.0.s8 %v279
      %v281 = vlaneseq
      %v282 = vshrl.u32 %v281, 7
      %v283 = vsub.s32 %v280, %v282
      %v284 = vrot.slane %v276, %v283
      %v286 = vunpack.c.l.s4 1983009808
      %v287 = vunpack.c.0.s8 %v286
      %v288 = vlaneseq
      %v289 = vshrl.u32 %v288, 7
      %v290 = vsub.s32 %v287, %v289
      %v291 = vrot.slane %v277, %v290
      %v292 = vcombine.low %v256, %v258
      %v293 = vcombine.high %v256, %v258
      %v295 = vunpack.c.l.s4 1983009808
      %v296 = vunpack.c.0.s8 %v295
      %v297 = vlaneseq
      %v298 = vshrl.u32 %v297, 7
      %v299 = vsub.s32 %v296, %v298
      %v300 = vrot.slane %v292, %v299
      %v302 = vunpack.c.l.s4 1983009808
      %v303 = vunpack.c.0.s8 %v302
      %v304 = vlaneseq
      %v305 = vshrl.u32 %v304, 7
      %v306 = vsub.s32 %v303, %v305
      %v307 = vrot.slane %v293, %v306
      %v308 = vcombine.low %v257, %v259
      %v309 = vcombine.high %v257, %v259
      %v311 = vunpack.c.l.s4 1983009808
      %v312 = vunpack.c.0.s8 %v311
      %v313 = vlaneseq
      %v314 = vshrl.u32 %v313, 7
      %v315 = vsub.s32 %v312, %v314
      %v316 = vrot.slane %v308, %v315
      %v318 = vunpack.c.l.s4 1983009808
      %v319 = vunpack.c.0.s8 %v318
      %v320 = vlaneseq
      %v321 = vshrl.u32 %v320, 7
      %v322 = vsub.s32 %v319, %v321
      %v323 = vrot.slane %v309, %v322
      %v324 = vcombine.low %v268, %v284
      %v325 = vcombine.high %v268, %v284
      %v327 = vunpack.c.l.s4 1934713408
      %v328 = vunpack.c.0.s8 %v327
      %v329 = vlaneseq
      %v330 = vshrl.u32 %v329, 7
      %v331 = vsub.s32 %v328, %v330
      %v332 = vrot.slane %v324, %v331
      %v334 = vunpack.c.l.s4 1934713408
      %v335 = vunpack.c.0.s8 %v334
      %v336 = vlaneseq
      %v337 = vshrl.u32 %v336, 7
      %v338 = vsub.s32 %v335, %v337
      %v339 = vrot.slane %v325, %v338
      %v340 = vcombine.low %v275, %v291
      %v341 = vcombine.high %v275, %v291
      %v343 = vunpack.c.l.s4 1934713408
      %v344 = vunpack.c.0.s8 %v343
      %v345 = vlaneseq
      %v346 = vshrl.u32 %v345, 7
      %v347 = vsub.s32 %v344, %v346
      %v348 = vrot.slane %v340, %v347
      %v350 = vunpack.c.l.s4 1934713408
      %v351 = vunpack.c.0.s8 %v350
      %v352 = vlaneseq
      %v353 = vshrl.u32 %v352, 7
      %v354 = vsub.s32 %v351, %v353
      %v355 = vrot.slane %v341, %v354
      %v356 = vcombine.low %v300, %v316
      %v357 = vcombine.high %v300, %v316
      %v359 = vunpack.c.l.s4 1934713408
      %v360 = vunpack.c.0.s8 %v359
      %v361 = vlaneseq
      %v362 = vshrl.u32 %v361, 7
      %v363 = vsub.s32 %v360, %v362
      %v364 = vrot.slane %v356, %v363
      %v366 = vunpack.c.l.s4 1934713408
      %v367 = vunpack.c.0.s8 %v366
      %v368 = vlaneseq
      %v369 = vshrl.u32 %v368, 7
      %v370 = vsub.s32 %v367, %v369
      %v371 = vrot.slane %v357, %v370
      %v372 = vcombine.low %v307, %v323
      %v373 = vcombine.high %v307, %v323
      %v375 = vunpack.c.l.s4 1934713408
      %v376 = vunpack.c.0.s8 %v375
      %v377 = vlaneseq
      %v378 = vshrl.u32 %v377, 7
      %v379 = vsub.s32 %v376, %v378
      %v380 = vrot.slane %v372, %v379
      %v382 = vunpack.c.l.s4 1934713408
      %v383 = vunpack.c.0.s8 %v382
      %v384 = vlaneseq
      %v385 = vshrl.u32 %v384, 7
      %v386 = vsub.s32 %v383, %v385
      %v387 = vrot.slane %v373, %v386
      %v388 = vcombine.low %v332, %v364
      %v389 = vcombine.high %v332, %v364
      %v390 = vcombine.low %v339, %v371
      %v391 = vcombine.high %v339, %v371
      %v392 = vcombine.low %v348, %v380
      %v393 = vcombine.high %v348, %v380
      %v394 = vcombine.low %v355, %v387
      %v395 = vcombine.high %v355, %v387
      %397 = vrot.lane.b32.xlu0 %v389, 32
      %v398 = vpop.permute.xlu0 %397
      %401 = vrot.lane.b32.xlu0 %v390, 64
      %v402 = vpop.permute.xlu0 %401
      %405 = vrot.lane.b32.xlu0 %v391, 96
      %v406 = vpop.permute.xlu0 %405
      %409 = vrot.lane.b32.xlu0 %v393, 32
      %v410 = vpop.permute.xlu0 %409
      %413 = vrot.lane.b32.xlu0 %v394, 64
      %v414 = vpop.permute.xlu0 %413
      %417 = vrot.lane.b32.xlu0 %v395, 96
      %v418 = vpop.permute.xlu0 %417
      %vm420 = vcmask 261120
      %v421 = vsel %vm420, %v388, %v398
      %vm422 = vcmask 523264
      %v423 = vsel %vm422, %v421, %v402
      %vm424 = vcmask 785408
      %v425 = vsel %vm424, %v423, %v406
      %v426 = vsel %vm420, %v392, %v410
      %v427 = vsel %vm422, %v426, %v414
      %v428 = vsel %vm424, %v427, %v418
      %v429 = vld [vmem:[%s1] sm:$0xff]
      %vm430 = vcmask 64512
      %v432 = vsel %vm430, %v429, 0
      %434 = vmatprep.subr.mxu0 %v428
      %435 = vmatpush1.msra.mxu0 %v425
      %436 = vmatprep.subr.mxu0 0.0
      %437 = vmatpush1.msra.mxu0 0.0
      %438 = vmatprep.subr.mxu0 0.0
      %439 = vmatpush1.msra.mxu0 0.0
      %440 = vmatprep.subr.mxu0 0.0
      %441 = vmatpush1.msra.mxu0 0.0
      %442 = vmatprep.subr.mxu0 0.0
      %443 = vmatpush1.msra.mxu0 0.0
      %444 = vmatprep.subr.mxu0 0.0
      %445 = vmatpush1.msra.mxu0 0.0
      %446 = vmatprep.subr.mxu0 0.0
      %447 = vmatpush1.msra.mxu0 0.0
      %448 = vmatprep.subr.mxu0 0.0
      %449 = vmatpush1.msra.mxu0 0.0
      %450 = vmatprep.subr.mxu0 0.0
      %451 = vmatpush1.msra.mxu0 0.0
      %452 = vmatprep.subr.mxu0 0.0
      %453 = vmatpush1.msra.mxu0 0.0
      %454 = vmatprep.subr.mxu0 0.0
      %455 = vmatpush1.msra.mxu0 0.0
      %456 = vmatprep.subr.mxu0 0.0
      %457 = vmatpush1.msra.mxu0 0.0
      %458 = vmatprep.subr.mxu0 0.0
      %459 = vmatpush1.msra.mxu0 0.0
      %460 = vmatprep.subr.mxu0 0.0
      %461 = vmatpush1.msra.mxu0 0.0
      %462 = vmatprep.subr.mxu0 0.0
      %463 = vmatpush1.msra.mxu0 0.0
      %464 = vmatprep.subr.mxu0 0.0
      %465 = vmatpush1.msra.mxu0 0.0
      %466 = vmatprep.subr.mxu0 0.0
      %467 = vmatpush1.msra.mxu0 0.0
      %468 = vmatprep.subr.mxu0 0.0
      %469 = vmatpush1.msra.mxu0 0.0
      %470 = vmatprep.subr.mxu0 0.0
      %471 = vmatpush1.msra.mxu0 0.0
      %472 = vmatprep.subr.mxu0 0.0
      %473 = vmatpush1.msra.mxu0 0.0
      %474 = vmatprep.subr.mxu0 0.0
      %475 = vmatpush1.msra.mxu0 0.0
      %476 = vmatprep.subr.mxu0 0.0
      %477 = vmatpush1.msra.mxu0 0.0
      %478 = vmatprep.subr.mxu0 0.0
      %479 = vmatpush1.msra.mxu0 0.0
      %480 = vmatprep.subr.mxu0 0.0
      %481 = vmatpush1.msra.mxu0 0.0
      %482 = vmatprep.subr.mxu0 0.0
      %483 = vmatpush1.msra.mxu0 0.0
      %484 = vmatprep.subr.mxu0 0.0
      %485 = vmatpush1.msra.mxu0 0.0
      %486 = vmatprep.subr.mxu0 0.0
      %487 = vmatpush1.msra.mxu0 0.0
      %488 = vmatprep.subr.mxu0 0.0
      %489 = vmatpush1.msra.mxu0 0.0
      %490 = vmatprep.subr.mxu0 0.0
      %491 = vmatpush1.msra.mxu0 0.0
      %492 = vmatprep.subr.mxu0 0.0
      %493 = vmatpush1.msra.mxu0 0.0
      %494 = vmatprep.subr.mxu0 0.0
      %495 = vmatpush1.msra.mxu0 0.0
      %496 = vmatprep.subr.mxu0 0.0
      %497 = vmatpush1.msra.mxu0 0.0
      %498 = vmatprep.mubr.f32.mxu0 0.0
      %499 = vmatmul.mubr.f32.gmra.mrb[0].mxu0 %v432
      %v500 = vpop.f32.mrb[0].mxu0
      %v501 = vadd.f32 0.0, %v500
      %v502 = vpop.f32.mrb[0].mxu0
      %v503 = vadd.f32 0.0, %v502
      %504 = vdwg.mxu0
      %505 = vmatprep.subr.mxu0 %v503
      %506 = vmatpush1.msra.mxu0 %v501
      %507 = vmatprep.subr.mxu0 0.0
      %508 = vmatpush1.msra.mxu0 0.0
      %509 = vmatprep.subr.mxu0 0.0
      %510 = vmatpush1.msra.mxu0 0.0
      %511 = vmatprep.subr.mxu0 0.0
      %512 = vmatpush1.msra.mxu0 0.0
      %513 = vmatprep.subr.mxu0 0.0
      %514 = vmatpush1.msra.mxu0 0.0
      %515 = vmatprep.subr.mxu0 0.0
      %516 = vmatpush1.msra.mxu0 0.0
      %517 = vmatprep.subr.mxu0 0.0
      %518 = vmatpush1.msra.mxu0 0.0
      %519 = vmatprep.subr.mxu0 0.0
      %520 = vmatpush1.msra.mxu0 0.0
      %521 = vmatprep.subr.mxu0 0.0
      %522 = vmatpush1.msra.mxu0 0.0
      %523 = vmatprep.subr.mxu0 0.0
      %524 = vmatpush1.msra.mxu0 0.0
      %525 = vmatprep.subr.mxu0 0.0
      %526 = vmatpush1.msra.mxu0 0.0
      %527 = vmatprep.subr.mxu0 0.0
      %528 = vmatpush1.msra.mxu0 0.0
      %529 = vmatprep.subr.mxu0 0.0
      %530 = vmatpush1.msra.mxu0 0.0
      %531 = vmatprep.subr.mxu0 0.0
      %532 = vmatpush1.msra.mxu0 0.0
      %533 = vmatprep.subr.mxu0 0.0
      %534 = vmatpush1.msra.mxu0 0.0
      %535 = vmatprep.subr.mxu0 0.0
      %536 = vmatpush1.msra.mxu0 0.0
      %537 = vmatprep.subr.mxu0 0.0
      %538 = vmatpush1.msra.mxu0 0.0
      %539 = vmatprep.subr.mxu0 0.0
      %540 = vmatpush1.msra.mxu0 0.0
      %541 = vmatprep.subr.mxu0 0.0
      %542 = vmatpush1.msra.mxu0 0.0
      %543 = vmatprep.subr.mxu0 0.0
      %544 = vmatpush1.msra.mxu0 0.0
      %545 = vmatprep.subr.mxu0 0.0
      %546 = vmatpush1.msra.mxu0 0.0
      %547 = vmatprep.subr.mxu0 0.0
      %548 = vmatpush1.msra.mxu0 0.0
      %549 = vmatprep.subr.mxu0 0.0
      %550 = vmatpush1.msra.mxu0 0.0
      %551 = vmatprep.subr.mxu0 0.0
      %552 = vmatpush1.msra.mxu0 0.0
      %553 = vmatprep.subr.mxu0 0.0
      %554 = vmatpush1.msra.mxu0 0.0
      %555 = vmatprep.subr.mxu0 0.0
      %556 = vmatpush1.msra.mxu0 0.0
      %557 = vmatprep.subr.mxu0 0.0
      %558 = vmatpush1.msra.mxu0 0.0
      %559 = vmatprep.subr.mxu0 0.0
      %560 = vmatpush1.msra.mxu0 0.0
      %561 = vmatprep.subr.mxu0 0.0
      %562 = vmatpush1.msra.mxu0 0.0
      %563 = vmatprep.subr.mxu0 0.0
      %564 = vmatpush1.msra.mxu0 0.0
      %565 = vmatprep.subr.mxu0 0.0
      %566 = vmatpush1.msra.mxu0 0.0
      %567 = vmatprep.subr.mxu0 0.0
      %568 = vmatpush1.msra.mxu0 0.0
      %569 = vmatprep.mubr.f32.mxu0 0.0
      %570 = vmatmul.mubr.f32.gmra.mrb[0].mxu0 %v432
      %v571 = vpop.f32.mrb[0].mxu0
      %v572 = vadd.f32 0.0, %v571
      %v573 = vpop.f32.mrb[0].mxu0
      %v574 = vadd.f32 0.0, %v573
      %575 = vdwg.mxu0
      %s576 = scalar_lea.vmem %s1, 8
      %v577 = vld [vmem:[%s576] sm:$0xff]
      %v579 = vsel %vm430, %v577, 0
      %581 = vmatprep.subr.mxu0 %v428
      %582 = vmatpush1.msra.mxu0 %v425
      %583 = vmatprep.subr.mxu0 0.0
      %584 = vmatpush1.msra.mxu0 0.0
      %585 = vmatprep.subr.mxu0 0.0
      %586 = vmatpush1.msra.mxu0 0.0
      %587 = vmatprep.subr.mxu0 0.0
      %588 = vmatpush1.msra.mxu0 0.0
      %589 = vmatprep.subr.mxu0 0.0
      %590 = vmatpush1.msra.mxu0 0.0
      %591 = vmatprep.subr.mxu0 0.0
      %592 = vmatpush1.msra.mxu0 0.0
      %593 = vmatprep.subr.mxu0 0.0
      %594 = vmatpush1.msra.mxu0 0.0
      %595 = vmatprep.subr.mxu0 0.0
      %596 = vmatpush1.msra.mxu0 0.0
      %597 = vmatprep.subr.mxu0 0.0
      %598 = vmatpush1.msra.mxu0 0.0
      %599 = vmatprep.subr.mxu0 0.0
      %600 = vmatpush1.msra.mxu0 0.0
      %601 = vmatprep.subr.mxu0 0.0
      %602 = vmatpush1.msra.mxu0 0.0
      %603 = vmatprep.subr.mxu0 0.0
      %604 = vmatpush1.msra.mxu0 0.0
      %605 = vmatprep.subr.mxu0 0.0
      %606 = vmatpush1.msra.mxu0 0.0
      %607 = vmatprep.subr.mxu0 0.0
      %608 = vmatpush1.msra.mxu0 0.0
      %609 = vmatprep.subr.mxu0 0.0
      %610 = vmatpush1.msra.mxu0 0.0
      %611 = vmatprep.subr.mxu0 0.0
      %612 = vmatpush1.msra.mxu0 0.0
      %613 = vmatprep.subr.mxu0 0.0
      %614 = vmatpush1.msra.mxu0 0.0
      %615 = vmatprep.subr.mxu0 0.0
      %616 = vmatpush1.msra.mxu0 0.0
      %617 = vmatprep.subr.mxu0 0.0
      %618 = vmatpush1.msra.mxu0 0.0
      %619 = vmatprep.subr.mxu0 0.0
      %620 = vmatpush1.msra.mxu0 0.0
      %621 = vmatprep.subr.mxu0 0.0
      %622 = vmatpush1.msra.mxu0 0.0
      %623 = vmatprep.subr.mxu0 0.0
      %624 = vmatpush1.msra.mxu0 0.0
      %625 = vmatprep.subr.mxu0 0.0
      %626 = vmatpush1.msra.mxu0 0.0
      %627 = vmatprep.subr.mxu0 0.0
      %628 = vmatpush1.msra.mxu0 0.0
      %629 = vmatprep.subr.mxu0 0.0
      %630 = vmatpush1.msra.mxu0 0.0
      %631 = vmatprep.subr.mxu0 0.0
      %632 = vmatpush1.msra.mxu0 0.0
      %633 = vmatprep.subr.mxu0 0.0
      %634 = vmatpush1.msra.mxu0 0.0
      %635 = vmatprep.subr.mxu0 0.0
      %636 = vmatpush1.msra.mxu0 0.0
      %637 = vmatprep.subr.mxu0 0.0
      %638 = vmatpush1.msra.mxu0 0.0
      %639 = vmatprep.subr.mxu0 0.0
      %640 = vmatpush1.msra.mxu0 0.0
      %641 = vmatprep.subr.mxu0 0.0
      %642 = vmatpush1.msra.mxu0 0.0
      %643 = vmatprep.subr.mxu0 0.0
      %644 = vmatpush1.msra.mxu0 0.0
      %645 = vmatprep.mubr.f32.mxu0 0.0
      %646 = vmatmul.mubr.f32.gmra.mrb[0].mxu0 %v579
      %v647 = vpop.f32.mrb[0].mxu0
      %v648 = vadd.f32 0.0, %v647
      %v649 = vpop.f32.mrb[0].mxu0
      %v650 = vadd.f32 0.0, %v649
      %651 = vdwg.mxu0
      %652 = vmatprep.subr.mxu0 %v650
      %653 = vmatpush1.msra.mxu0 %v648
      %654 = vmatprep.subr.mxu0 0.0
      %655 = vmatpush1.msra.mxu0 0.0
      %656 = vmatprep.subr.mxu0 0.0
      %657 = vmatpush1.msra.mxu0 0.0
      %658 = vmatprep.subr.mxu0 0.0
      %659 = vmatpush1.msra.mxu0 0.0
      %660 = vmatprep.subr.mxu0 0.0
      %661 = vmatpush1.msra.mxu0 0.0
      %662 = vmatprep.subr.mxu0 0.0
      %663 = vmatpush1.msra.mxu0 0.0
      %664 = vmatprep.subr.mxu0 0.0
      %665 = vmatpush1.msra.mxu0 0.0
      %666 = vmatprep.subr.mxu0 0.0
      %667 = vmatpush1.msra.mxu0 0.0
      %668 = vmatprep.subr.mxu0 0.0
      %669 = vmatpush1.msra.mxu0 0.0
      %670 = vmatprep.subr.mxu0 0.0
      %671 = vmatpush1.msra.mxu0 0.0
      %672 = vmatprep.subr.mxu0 0.0
      %673 = vmatpush1.msra.mxu0 0.0
      %674 = vmatprep.subr.mxu0 0.0
      %675 = vmatpush1.msra.mxu0 0.0
      %676 = vmatprep.subr.mxu0 0.0
      %677 = vmatpush1.msra.mxu0 0.0
      %678 = vmatprep.subr.mxu0 0.0
      %679 = vmatpush1.msra.mxu0 0.0
      %680 = vmatprep.subr.mxu0 0.0
      %681 = vmatpush1.msra.mxu0 0.0
      %682 = vmatprep.subr.mxu0 0.0
      %683 = vmatpush1.msra.mxu0 0.0
      %684 = vmatprep.subr.mxu0 0.0
      %685 = vmatpush1.msra.mxu0 0.0
      %686 = vmatprep.subr.mxu0 0.0
      %687 = vmatpush1.msra.mxu0 0.0
      %688 = vmatprep.subr.mxu0 0.0
      %689 = vmatpush1.msra.mxu0 0.0
      %690 = vmatprep.subr.mxu0 0.0
      %691 = vmatpush1.msra.mxu0 0.0
      %692 = vmatprep.subr.mxu0 0.0
      %693 = vmatpush1.msra.mxu0 0.0
      %694 = vmatprep.subr.mxu0 0.0
      %695 = vmatpush1.msra.mxu0 0.0
      %696 = vmatprep.subr.mxu0 0.0
      %697 = vmatpush1.msra.mxu0 0.0
      %698 = vmatprep.subr.mxu0 0.0
      %699 = vmatpush1.msra.mxu0 0.0
      %700 = vmatprep.subr.mxu0 0.0
      %701 = vmatpush1.msra.mxu0 0.0
      %702 = vmatprep.subr.mxu0 0.0
      %703 = vmatpush1.msra.mxu0 0.0
      %704 = vmatprep.subr.mxu0 0.0
      %705 = vmatpush1.msra.mxu0 0.0
      %706 = vmatprep.subr.mxu0 0.0
      %707 = vmatpush1.msra.mxu0 0.0
      %708 = vmatprep.subr.mxu0 0.0
      %709 = vmatpush1.msra.mxu0 0.0
      %710 = vmatprep.subr.mxu0 0.0
      %711 = vmatpush1.msra.mxu0 0.0
      %712 = vmatprep.subr.mxu0 0.0
      %713 = vmatpush1.msra.mxu0 0.0
      %714 = vmatprep.subr.mxu0 0.0
      %715 = vmatpush1.msra.mxu0 0.0
      %716 = vmatprep.mubr.f32.mxu0 0.0
      %717 = vmatmul.mubr.f32.gmra.mrb[0].mxu0 %v579
      %v718 = vpop.f32.mrb[0].mxu0
      %v719 = vadd.f32 0.0, %v718
      %v720 = vpop.f32.mrb[0].mxu0
      %v721 = vadd.f32 0.0, %v720
      %722 = vdwg.mxu0
      %724 = vrot.lane.b32.xlu0 %v501, 96
      %v725 = vpop.permute.xlu0 %724
      %727 = vrot.lane.b32.xlu0 %v501, 64
      %v728 = vpop.permute.xlu0 %727
      %730 = vrot.lane.b32.xlu0 %v501, 32
      %v731 = vpop.permute.xlu0 %730
      %734 = vrot.lane.b32.xlu0 %v503, 96
      %v735 = vpop.permute.xlu0 %734
      %737 = vrot.lane.b32.xlu0 %v503, 64
      %v738 = vpop.permute.xlu0 %737
      %740 = vrot.lane.b32.xlu0 %v503, 32
      %v741 = vpop.permute.xlu0 %740
      %v743 = vcombine.low %v501, %v728
      %v744 = vcombine.high %v501, %v728
      %v746 = vunpack.c.l.s4 1983009808
      %v747 = vunpack.c.0.s8 %v746
      %v748 = vlaneseq
      %v749 = vshrl.u32 %v748, 7
      %v750 = vsub.s32 %v747, %v749
      %v751 = vrot.slane %v743, %v750
      %v753 = vunpack.c.l.s4 1983009808
      %v754 = vunpack.c.0.s8 %v753
      %v755 = vlaneseq
      %v756 = vshrl.u32 %v755, 7
      %v757 = vsub.s32 %v754, %v756
      %v758 = vrot.slane %v744, %v757
      %v759 = vcombine.low %v725, %v731
      %v760 = vcombine.high %v725, %v731
      %v762 = vunpack.c.l.s4 1983009808
      %v763 = vunpack.c.0.s8 %v762
      %v764 = vlaneseq
      %v765 = vshrl.u32 %v764, 7
      %v766 = vsub.s32 %v763, %v765
      %v767 = vrot.slane %v759, %v766
      %v769 = vunpack.c.l.s4 1983009808
      %v770 = vunpack.c.0.s8 %v769
      %v771 = vlaneseq
      %v772 = vshrl.u32 %v771, 7
      %v773 = vsub.s32 %v770, %v772
      %v774 = vrot.slane %v760, %v773
      %v775 = vcombine.low %v503, %v738
      %v776 = vcombine.high %v503, %v738
      %v778 = vunpack.c.l.s4 1983009808
      %v779 = vunpack.c.0.s8 %v778
      %v780 = vlaneseq
      %v781 = vshrl.u32 %v780, 7
      %v782 = vsub.s32 %v779, %v781
      %v783 = vrot.slane %v775, %v782
      %v785 = vunpack.c.l.s4 1983009808
      %v786 = vunpack.c.0.s8 %v785
      %v787 = vlaneseq
      %v788 = vshrl.u32 %v787, 7
      %v789 = vsub.s32 %v786, %v788
      %v790 = vrot.slane %v776, %v789
      %v791 = vcombine.low %v735, %v741
      %v792 = vcombine.high %v735, %v741
      %v794 = vunpack.c.l.s4 1983009808
      %v795 = vunpack.c.0.s8 %v794
      %v796 = vlaneseq
      %v797 = vshrl.u32 %v796, 7
      %v798 = vsub.s32 %v795, %v797
      %v799 = vrot.slane %v791, %v798
      %v801 = vunpack.c.l.s4 1983009808
      %v802 = vunpack.c.0.s8 %v801
      %v803 = vlaneseq
      %v804 = vshrl.u32 %v803, 7
      %v805 = vsub.s32 %v802, %v804
      %v806 = vrot.slane %v792, %v805
      %v807 = vcombine.low %v751, %v767
      %v808 = vcombine.high %v751, %v767
      %v810 = vunpack.c.l.s4 1934713408
      %v811 = vunpack.c.0.s8 %v810
      %v812 = vlaneseq
      %v813 = vshrl.u32 %v812, 7
      %v814 = vsub.s32 %v811, %v813
      %v815 = vrot.slane %v807, %v814
      %v817 = vunpack.c.l.s4 1934713408
      %v818 = vunpack.c.0.s8 %v817
      %v819 = vlaneseq
      %v820 = vshrl.u32 %v819, 7
      %v821 = vsub.s32 %v818, %v820
      %v822 = vrot.slane %v808, %v821
      %v823 = vcombine.low %v758, %v774
      %v824 = vcombine.high %v758, %v774
      %v826 = vunpack.c.l.s4 1934713408
      %v827 = vunpack.c.0.s8 %v826
      %v828 = vlaneseq
      %v829 = vshrl.u32 %v828, 7
      %v830 = vsub.s32 %v827, %v829
      %v831 = vrot.slane %v823, %v830
      %v833 = vunpack.c.l.s4 1934713408
      %v834 = vunpack.c.0.s8 %v833
      %v835 = vlaneseq
      %v836 = vshrl.u32 %v835, 7
      %v837 = vsub.s32 %v834, %v836
      %v838 = vrot.slane %v824, %v837
      %v839 = vcombine.low %v783, %v799
      %v840 = vcombine.high %v783, %v799
      %v842 = vunpack.c.l.s4 1934713408
      %v843 = vunpack.c.0.s8 %v842
      %v844 = vlaneseq
      %v845 = vshrl.u32 %v844, 7
      %v846 = vsub.s32 %v843, %v845
      %v847 = vrot.slane %v839, %v846
      %v849 = vunpack.c.l.s4 1934713408
      %v850 = vunpack.c.0.s8 %v849
      %v851 = vlaneseq
      %v852 = vshrl.u32 %v851, 7
      %v853 = vsub.s32 %v850, %v852
      %v854 = vrot.slane %v840, %v853
      %v855 = vcombine.low %v790, %v806
      %v856 = vcombine.high %v790, %v806
      %v858 = vunpack.c.l.s4 1934713408
      %v859 = vunpack.c.0.s8 %v858
      %v860 = vlaneseq
      %v861 = vshrl.u32 %v860, 7
      %v862 = vsub.s32 %v859, %v861
      %v863 = vrot.slane %v855, %v862
      %v865 = vunpack.c.l.s4 1934713408
      %v866 = vunpack.c.0.s8 %v865
      %v867 = vlaneseq
      %v868 = vshrl.u32 %v867, 7
      %v869 = vsub.s32 %v866, %v868
      %v870 = vrot.slane %v856, %v869
      %v871 = vcombine.low %v815, %v847
      %v872 = vcombine.high %v815, %v847
      %v873 = vcombine.low %v822, %v854
      %v874 = vcombine.high %v822, %v854
      %v875 = vcombine.low %v831, %v863
      %v876 = vcombine.high %v831, %v863
      %v877 = vcombine.low %v838, %v870
      %v878 = vcombine.high %v838, %v870
      %880 = vrot.lane.b32.xlu0 %v572, 96
      %v881 = vpop.permute.xlu0 %880
      %883 = vrot.lane.b32.xlu0 %v572, 64
      %v884 = vpop.permute.xlu0 %883
      %886 = vrot.lane.b32.xlu0 %v572, 32
      %v887 = vpop.permute.xlu0 %886
      %890 = vrot.lane.b32.xlu0 %v574, 96
      %v891 = vpop.permute.xlu0 %890
      %893 = vrot.lane.b32.xlu0 %v574, 64
      %v894 = vpop.permute.xlu0 %893
      %896 = vrot.lane.b32.xlu0 %v574, 32
      %v897 = vpop.permute.xlu0 %896
      %v899 = vcombine.low %v572, %v884
      %v900 = vcombine.high %v572, %v884
      %v902 = vunpack.c.l.s4 1983009808
      %v903 = vunpack.c.0.s8 %v902
      %v904 = vlaneseq
      %v905 = vshrl.u32 %v904, 7
      %v906 = vsub.s32 %v903, %v905
      %v907 = vrot.slane %v899, %v906
      %v909 = vunpack.c.l.s4 1983009808
      %v910 = vunpack.c.0.s8 %v909
      %v911 = vlaneseq
      %v912 = vshrl.u32 %v911, 7
      %v913 = vsub.s32 %v910, %v912
      %v914 = vrot.slane %v900, %v913
      %v915 = vcombine.low %v881, %v887
      %v916 = vcombine.high %v881, %v887
      %v918 = vunpack.c.l.s4 1983009808
      %v919 = vunpack.c.0.s8 %v918
      %v920 = vlaneseq
      %v921 = vshrl.u32 %v920, 7
      %v922 = vsub.s32 %v919, %v921
      %v923 = vrot.slane %v915, %v922
      %v925 = vunpack.c.l.s4 1983009808
      %v926 = vunpack.c.0.s8 %v925
      %v927 = vlaneseq
      %v928 = vshrl.u32 %v927, 7
      %v929 = vsub.s32 %v926, %v928
      %v930 = vrot.slane %v916, %v929
      %v931 = vcombine.low %v574, %v894
      %v932 = vcombine.high %v574, %v894
      %v934 = vunpack.c.l.s4 1983009808
      %v935 = vunpack.c.0.s8 %v934
      %v936 = vlaneseq
      %v937 = vshrl.u32 %v936, 7
      %v938 = vsub.s32 %v935, %v937
      %v939 = vrot.slane %v931, %v938
      %v941 = vunpack.c.l.s4 1983009808
      %v942 = vunpack.c.0.s8 %v941
      %v943 = vlaneseq
      %v944 = vshrl.u32 %v943, 7
      %v945 = vsub.s32 %v942, %v944
      %v946 = vrot.slane %v932, %v945
      %v947 = vcombine.low %v891, %v897
      %v948 = vcombine.high %v891, %v897
      %v950 = vunpack.c.l.s4 1983009808
      %v951 = vunpack.c.0.s8 %v950
      %v952 = vlaneseq
      %v953 = vshrl.u32 %v952, 7
      %v954 = vsub.s32 %v951, %v953
      %v955 = vrot.slane %v947, %v954
      %v957 = vunpack.c.l.s4 1983009808
      %v958 = vunpack.c.0.s8 %v957
      %v959 = vlaneseq
      %v960 = vshrl.u32 %v959, 7
      %v961 = vsub.s32 %v958, %v960
      %v962 = vrot.slane %v948, %v961
      %v963 = vcombine.low %v907, %v923
      %v964 = vcombine.high %v907, %v923
      %v966 = vunpack.c.l.s4 1934713408
      %v967 = vunpack.c.0.s8 %v966
      %v968 = vlaneseq
      %v969 = vshrl.u32 %v968, 7
      %v970 = vsub.s32 %v967, %v969
      %v971 = vrot.slane %v963, %v970
      %v973 = vunpack.c.l.s4 1934713408
      %v974 = vunpack.c.0.s8 %v973
      %v975 = vlaneseq
      %v976 = vshrl.u32 %v975, 7
      %v977 = vsub.s32 %v974, %v976
      %v978 = vrot.slane %v964, %v977
      %v979 = vcombine.low %v914, %v930
      %v980 = vcombine.high %v914, %v930
      %v982 = vunpack.c.l.s4 1934713408
      %v983 = vunpack.c.0.s8 %v982
      %v984 = vlaneseq
      %v985 = vshrl.u32 %v984, 7
      %v986 = vsub.s32 %v983, %v985
      %v987 = vrot.slane %v979, %v986
      %v989 = vunpack.c.l.s4 1934713408
      %v990 = vunpack.c.0.s8 %v989
      %v991 = vlaneseq
      %v992 = vshrl.u32 %v991, 7
      %v993 = vsub.s32 %v990, %v992
      %v994 = vrot.slane %v980, %v993
      %v995 = vcombine.low %v939, %v955
      %v996 = vcombine.high %v939, %v955
      %v998 = vunpack.c.l.s4 1934713408
      %v999 = vunpack.c.0.s8 %v998
      %v1000 = vlaneseq
      %v1001 = vshrl.u32 %v1000, 7
      %v1002 = vsub.s32 %v999, %v1001
      %v1003 = vrot.slane %v995, %v1002
      %v1005 = vunpack.c.l.s4 1934713408
      %v1006 = vunpack.c.0.s8 %v1005
      %v1007 = vlaneseq
      %v1008 = vshrl.u32 %v1007, 7
      %v1009 = vsub.s32 %v1006, %v1008
      %v1010 = vrot.slane %v996, %v1009
      %v1011 = vcombine.low %v946, %v962
      %v1012 = vcombine.high %v946, %v962
      %v1014 = vunpack.c.l.s4 1934713408
      %v1015 = vunpack.c.0.s8 %v1014
      %v1016 = vlaneseq
      %v1017 = vshrl.u32 %v1016, 7
      %v1018 = vsub.s32 %v1015, %v1017
      %v1019 = vrot.slane %v1011, %v1018
      %v1021 = vunpack.c.l.s4 1934713408
      %v1022 = vunpack.c.0.s8 %v1021
      %v1023 = vlaneseq
      %v1024 = vshrl.u32 %v1023, 7
      %v1025 = vsub.s32 %v1022, %v1024
      %v1026 = vrot.slane %v1012, %v1025
      %v1027 = vcombine.low %v971, %v1003
      %v1028 = vcombine.high %v971, %v1003
      %v1029 = vcombine.low %v978, %v1010
      %v1030 = vcombine.high %v978, %v1010
      %v1031 = vcombine.low %v987, %v1019
      %v1032 = vcombine.high %v987, %v1019
      %v1033 = vcombine.low %v994, %v1026
      %v1034 = vcombine.high %v994, %v1026
      %1036 = vrot.lane.b32.xlu0 %v648, 96
      %v1037 = vpop.permute.xlu0 %1036
      %1039 = vrot.lane.b32.xlu0 %v648, 64
      %v1040 = vpop.permute.xlu0 %1039
      %1042 = vrot.lane.b32.xlu0 %v648, 32
      %v1043 = vpop.permute.xlu0 %1042
      %1046 = vrot.lane.b32.xlu0 %v650, 96
      %v1047 = vpop.permute.xlu0 %1046
      %1049 = vrot.lane.b32.xlu0 %v650, 64
      %v1050 = vpop.permute.xlu0 %1049
      %1052 = vrot.lane.b32.xlu0 %v650, 32
      %v1053 = vpop.permute.xlu0 %1052
      %v1055 = vcombine.low %v648, %v1040
      %v1056 = vcombine.high %v648, %v1040
      %v1058 = vunpack.c.l.s4 1983009808
      %v1059 = vunpack.c.0.s8 %v1058
      %v1060 = vlaneseq
      %v1061 = vshrl.u32 %v1060, 7
      %v1062 = vsub.s32 %v1059, %v1061
      %v1063 = vrot.slane %v1055, %v1062
      %v1065 = vunpack.c.l.s4 1983009808
      %v1066 = vunpack.c.0.s8 %v1065
      %v1067 = vlaneseq
      %v1068 = vshrl.u32 %v1067, 7
      %v1069 = vsub.s32 %v1066, %v1068
      %v1070 = vrot.slane %v1056, %v1069
      %v1071 = vcombine.low %v1037, %v1043
      %v1072 = vcombine.high %v1037, %v1043
      %v1074 = vunpack.c.l.s4 1983009808
      %v1075 = vunpack.c.0.s8 %v1074
      %v1076 = vlaneseq
      %v1077 = vshrl.u32 %v1076, 7
      %v1078 = vsub.s32 %v1075, %v1077
      %v1079 = vrot.slane %v1071, %v1078
      %v1081 = vunpack.c.l.s4 1983009808
      %v1082 = vunpack.c.0.s8 %v1081
      %v1083 = vlaneseq
      %v1084 = vshrl.u32 %v1083, 7
      %v1085 = vsub.s32 %v1082, %v1084
      %v1086 = vrot.slane %v1072, %v1085
      %v1087 = vcombine.low %v650, %v1050
      %v1088 = vcombine.high %v650, %v1050
      %v1090 = vunpack.c.l.s4 1983009808
      %v1091 = vunpack.c.0.s8 %v1090
      %v1092 = vlaneseq
      %v1093 = vshrl.u32 %v1092, 7
      %v1094 = vsub.s32 %v1091, %v1093
      %v1095 = vrot.slane %v1087, %v1094
      %v1097 = vunpack.c.l.s4 1983009808
      %v1098 = vunpack.c.0.s8 %v1097
      %v1099 = vlaneseq
      %v1100 = vshrl.u32 %v1099, 7
      %v1101 = vsub.s32 %v1098, %v1100
      %v1102 = vrot.slane %v1088, %v1101
      %v1103 = vcombine.low %v1047, %v1053
      %v1104 = vcombine.high %v1047, %v1053
      %v1106 = vunpack.c.l.s4 1983009808
      %v1107 = vunpack.c.0.s8 %v1106
      %v1108 = vlaneseq
      %v1109 = vshrl.u32 %v1108, 7
      %v1110 = vsub.s32 %v1107, %v1109
      %v1111 = vrot.slane %v1103, %v1110
      %v1113 = vunpack.c.l.s4 1983009808
      %v1114 = vunpack.c.0.s8 %v1113
      %v1115 = vlaneseq
      %v1116 = vshrl.u32 %v1115, 7
      %v1117 = vsub.s32 %v1114, %v1116
      %v1118 = vrot.slane %v1104, %v1117
      %v1119 = vcombine.low %v1063, %v1079
      %v1120 = vcombine.high %v1063, %v1079
      %v1122 = vunpack.c.l.s4 1934713408
      %v1123 = vunpack.c.0.s8 %v1122
      %v1124 = vlaneseq
      %v1125 = vshrl.u32 %v1124, 7
      %v1126 = vsub.s32 %v1123, %v1125
      %v1127 = vrot.slane %v1119, %v1126
      %v1129 = vunpack.c.l.s4 1934713408
      %v1130 = vunpack.c.0.s8 %v1129
      %v1131 = vlaneseq
      %v1132 = vshrl.u32 %v1131, 7
      %v1133 = vsub.s32 %v1130, %v1132
      %v1134 = vrot.slane %v1120, %v1133
      %v1135 = vcombine.low %v1070, %v1086
      %v1136 = vcombine.high %v1070, %v1086
      %v1138 = vunpack.c.l.s4 1934713408
      %v1139 = vunpack.c.0.s8 %v1138
      %v1140 = vlaneseq
      %v1141 = vshrl.u32 %v1140, 7
      %v1142 = vsub.s32 %v1139, %v1141
      %v1143 = vrot.slane %v1135, %v1142
      %v1145 = vunpack.c.l.s4 1934713408
      %v1146 = vunpack.c.0.s8 %v1145
      %v1147 = vlaneseq
      %v1148 = vshrl.u32 %v1147, 7
      %v1149 = vsub.s32 %v1146, %v1148
      %v1150 = vrot.slane %v1136, %v1149
      %v1151 = vcombine.low %v1095, %v1111
      %v1152 = vcombine.high %v1095, %v1111
      %v1154 = vunpack.c.l.s4 1934713408
      %v1155 = vunpack.c.0.s8 %v1154
      %v1156 = vlaneseq
      %v1157 = vshrl.u32 %v1156, 7
      %v1158 = vsub.s32 %v1155, %v1157
      %v1159 = vrot.slane %v1151, %v1158
      %v1161 = vunpack.c.l.s4 1934713408
      %v1162 = vunpack.c.0.s8 %v1161
      %v1163 = vlaneseq
      %v1164 = vshrl.u32 %v1163, 7
      %v1165 = vsub.s32 %v1162, %v1164
      %v1166 = vrot.slane %v1152, %v1165
      %v1167 = vcombine.low %v1102, %v1118
      %v1168 = vcombine.high %v1102, %v1118
      %v1170 = vunpack.c.l.s4 1934713408
      %v1171 = vunpack.c.0.s8 %v1170
      %v1172 = vlaneseq
      %v1173 = vshrl.u32 %v1172, 7
      %v1174 = vsub.s32 %v1171, %v1173
      %v1175 = vrot.slane %v1167, %v1174
      %v1177 = vunpack.c.l.s4 1934713408
      %v1178 = vunpack.c.0.s8 %v1177
      %v1179 = vlaneseq
      %v1180 = vshrl.u32 %v1179, 7
      %v1181 = vsub.s32 %v1178, %v1180
      %v1182 = vrot.slane %v1168, %v1181
      %v1183 = vcombine.low %v1127, %v1159
      %v1184 = vcombine.high %v1127, %v1159
      %v1185 = vcombine.low %v1134, %v1166
      %v1186 = vcombine.high %v1134, %v1166
      %v1187 = vcombine.low %v1143, %v1175
      %v1188 = vcombine.high %v1143, %v1175
      %v1189 = vcombine.low %v1150, %v1182
      %v1190 = vcombine.high %v1150, %v1182
      %1192 = vrot.lane.b32.xlu0 %v719, 96
      %v1193 = vpop.permute.xlu0 %1192
      %1195 = vrot.lane.b32.xlu0 %v719, 64
      %v1196 = vpop.permute.xlu0 %1195
      %1198 = vrot.lane.b32.xlu0 %v719, 32
      %v1199 = vpop.permute.xlu0 %1198
      %1202 = vrot.lane.b32.xlu0 %v721, 96
      %v1203 = vpop.permute.xlu0 %1202
      %1205 = vrot.lane.b32.xlu0 %v721, 64
      %v1206 = vpop.permute.xlu0 %1205
      %1208 = vrot.lane.b32.xlu0 %v721, 32
      %v1209 = vpop.permute.xlu0 %1208
      %v1211 = vcombine.low %v719, %v1196
      %v1212 = vcombine.high %v719, %v1196
      %v1214 = vunpack.c.l.s4 1983009808
      %v1215 = vunpack.c.0.s8 %v1214
      %v1216 = vlaneseq
      %v1217 = vshrl.u32 %v1216, 7
      %v1218 = vsub.s32 %v1215, %v1217
      %v1219 = vrot.slane %v1211, %v1218
      %v1221 = vunpack.c.l.s4 1983009808
      %v1222 = vunpack.c.0.s8 %v1221
      %v1223 = vlaneseq
      %v1224 = vshrl.u32 %v1223, 7
      %v1225 = vsub.s32 %v1222, %v1224
      %v1226 = vrot.slane %v1212, %v1225
      %v1227 = vcombine.low %v1193, %v1199
      %v1228 = vcombine.high %v1193, %v1199
      %v1230 = vunpack.c.l.s4 1983009808
      %v1231 = vunpack.c.0.s8 %v1230
      %v1232 = vlaneseq
      %v1233 = vshrl.u32 %v1232, 7
      %v1234 = vsub.s32 %v1231, %v1233
      %v1235 = vrot.slane %v1227, %v1234
      %v1237 = vunpack.c.l.s4 1983009808
      %v1238 = vunpack.c.0.s8 %v1237
      %v1239 = vlaneseq
      %v1240 = vshrl.u32 %v1239, 7
      %v1241 = vsub.s32 %v1238, %v1240
      %v1242 = vrot.slane %v1228, %v1241
      %v1243 = vcombine.low %v721, %v1206
      %v1244 = vcombine.high %v721, %v1206
      %v1246 = vunpack.c.l.s4 1983009808
      %v1247 = vunpack.c.0.s8 %v1246
      %v1248 = vlaneseq
      %v1249 = vshrl.u32 %v1248, 7
      %v1250 = vsub.s32 %v1247, %v1249
      %v1251 = vrot.slane %v1243, %v1250
      %v1253 = vunpack.c.l.s4 1983009808
      %v1254 = vunpack.c.0.s8 %v1253
      %v1255 = vlaneseq
      %v1256 = vshrl.u32 %v1255, 7
      %v1257 = vsub.s32 %v1254, %v1256
      %v1258 = vrot.slane %v1244, %v1257
      %v1259 = vcombine.low %v1203, %v1209
      %v1260 = vcombine.high %v1203, %v1209
      %v1262 = vunpack.c.l.s4 1983009808
      %v1263 = vunpack.c.0.s8 %v1262
      %v1264 = vlaneseq
      %v1265 = vshrl.u32 %v1264, 7
      %v1266 = vsub.s32 %v1263, %v1265
      %v1267 = vrot.slane %v1259, %v1266
      %v1269 = vunpack.c.l.s4 1983009808
      %v1270 = vunpack.c.0.s8 %v1269
      %v1271 = vlaneseq
      %v1272 = vshrl.u32 %v1271, 7
      %v1273 = vsub.s32 %v1270, %v1272
      %v1274 = vrot.slane %v1260, %v1273
      %v1275 = vcombine.low %v1219, %v1235
      %v1276 = vcombine.high %v1219, %v1235
      %v1278 = vunpack.c.l.s4 1934713408
      %v1279 = vunpack.c.0.s8 %v1278
      %v1280 = vlaneseq
      %v1281 = vshrl.u32 %v1280, 7
      %v1282 = vsub.s32 %v1279, %v1281
      %v1283 = vrot.slane %v1275, %v1282
      %v1285 = vunpack.c.l.s4 1934713408
      %v1286 = vunpack.c.0.s8 %v1285
      %v1287 = vlaneseq
      %v1288 = vshrl.u32 %v1287, 7
      %v1289 = vsub.s32 %v1286, %v1288
      %v1290 = vrot.slane %v1276, %v1289
      %v1291 = vcombine.low %v1226, %v1242
      %v1292 = vcombine.high %v1226, %v1242
      %v1294 = vunpack.c.l.s4 1934713408
      %v1295 = vunpack.c.0.s8 %v1294
      %v1296 = vlaneseq
      %v1297 = vshrl.u32 %v1296, 7
      %v1298 = vsub.s32 %v1295, %v1297
      %v1299 = vrot.slane %v1291, %v1298
      %v1301 = vunpack.c.l.s4 1934713408
      %v1302 = vunpack.c.0.s8 %v1301
      %v1303 = vlaneseq
      %v1304 = vshrl.u32 %v1303, 7
      %v1305 = vsub.s32 %v1302, %v1304
      %v1306 = vrot.slane %v1292, %v1305
      %v1307 = vcombine.low %v1251, %v1267
      %v1308 = vcombine.high %v1251, %v1267
      %v1310 = vunpack.c.l.s4 1934713408
      %v1311 = vunpack.c.0.s8 %v1310
      %v1312 = vlaneseq
      %v1313 = vshrl.u32 %v1312, 7
      %v1314 = vsub.s32 %v1311, %v1313
      %v1315 = vrot.slane %v1307, %v1314
      %v1317 = vunpack.c.l.s4 1934713408
      %v1318 = vunpack.c.0.s8 %v1317
      %v1319 = vlaneseq
      %v1320 = vshrl.u32 %v1319, 7
      %v1321 = vsub.s32 %v1318, %v1320
      %v1322 = vrot.slane %v1308, %v1321
      %v1323 = vcombine.low %v1258, %v1274
      %v1324 = vcombine.high %v1258, %v1274
      %v1326 = vunpack.c.l.s4 1934713408
      %v1327 = vunpack.c.0.s8 %v1326
      %v1328 = vlaneseq
      %v1329 = vshrl.u32 %v1328, 7
      %v1330 = vsub.s32 %v1327, %v1329
      %v1331 = vrot.slane %v1323, %v1330
      %v1333 = vunpack.c.l.s4 1934713408
      %v1334 = vunpack.c.0.s8 %v1333
      %v1335 = vlaneseq
      %v1336 = vshrl.u32 %v1335, 7
      %v1337 = vsub.s32 %v1334, %v1336
      %v1338 = vrot.slane %v1324, %v1337
      %v1339 = vcombine.low %v1283, %v1315
      %v1340 = vcombine.high %v1283, %v1315
      %v1341 = vcombine.low %v1290, %v1322
      %v1342 = vcombine.high %v1290, %v1322
      %v1343 = vcombine.low %v1299, %v1331
      %v1344 = vcombine.high %v1299, %v1331
      %v1345 = vcombine.low %v1306, %v1338
      %v1346 = vcombine.high %v1306, %v1338
      %1355 = vrot.lane.b32.xlu0 %v871, 32
      %v1356 = vpop.permute.xlu0 %1355
      %1357 = vrot.lane.b32.xlu0 %v872, 32
      %v1358 = vpop.permute.xlu0 %1357
      %1359 = vrot.lane.b32.xlu0 %v873, 32
      %v1360 = vpop.permute.xlu0 %1359
      %1361 = vrot.lane.b32.xlu0 %v874, 32
      %v1362 = vpop.permute.xlu0 %1361
      %1363 = vrot.lane.b32.xlu0 %v875, 32
      %v1364 = vpop.permute.xlu0 %1363
      %1365 = vrot.lane.b32.xlu0 %v876, 32
      %v1366 = vpop.permute.xlu0 %1365
      %1367 = vrot.lane.b32.xlu0 %v877, 32
      %v1368 = vpop.permute.xlu0 %1367
      %1369 = vrot.lane.b32.xlu0 %v878, 32
      %v1370 = vpop.permute.xlu0 %1369
      %1387 = vrot.lane.b32.xlu0 %v1027, 64
      %v1388 = vpop.permute.xlu0 %1387
      %1389 = vrot.lane.b32.xlu0 %v1028, 64
      %v1390 = vpop.permute.xlu0 %1389
      %1391 = vrot.lane.b32.xlu0 %v1029, 64
      %v1392 = vpop.permute.xlu0 %1391
      %1393 = vrot.lane.b32.xlu0 %v1030, 64
      %v1394 = vpop.permute.xlu0 %1393
      %1395 = vrot.lane.b32.xlu0 %v1031, 64
      %v1396 = vpop.permute.xlu0 %1395
      %1397 = vrot.lane.b32.xlu0 %v1032, 64
      %v1398 = vpop.permute.xlu0 %1397
      %1399 = vrot.lane.b32.xlu0 %v1033, 64
      %v1400 = vpop.permute.xlu0 %1399
      %1401 = vrot.lane.b32.xlu0 %v1034, 64
      %v1402 = vpop.permute.xlu0 %1401
      %1419 = vrot.lane.b32.xlu0 %v1183, 96
      %v1420 = vpop.permute.xlu0 %1419
      %1421 = vrot.lane.b32.xlu0 %v1184, 96
      %v1422 = vpop.permute.xlu0 %1421
      %1423 = vrot.lane.b32.xlu0 %v1185, 96
      %v1424 = vpop.permute.xlu0 %1423
      %1425 = vrot.lane.b32.xlu0 %v1186, 96
      %v1426 = vpop.permute.xlu0 %1425
      %1427 = vrot.lane.b32.xlu0 %v1187, 96
      %v1428 = vpop.permute.xlu0 %1427
      %1429 = vrot.lane.b32.xlu0 %v1188, 96
      %v1430 = vpop.permute.xlu0 %1429
      %1431 = vrot.lane.b32.xlu0 %v1189, 96
      %v1432 = vpop.permute.xlu0 %1431
      %1433 = vrot.lane.b32.xlu0 %v1190, 96
      %v1434 = vpop.permute.xlu0 %1433
      %v1443 = vsel %vm420, %v252, %v1356
      %v1444 = vsel %vm420, %v253, %v1358
      %v1445 = vsel %vm420, %v254, %v1360
      %v1446 = vsel %vm420, %v255, %v1362
      %v1447 = vsel %vm420, %v256, %v1364
      %v1448 = vsel %vm420, %v257, %v1366
      %v1449 = vsel %vm420, %v258, %v1368
      %v1450 = vsel %vm420, %v259, %v1370
      %v1451 = vsel %vm422, %v1443, %v1388
      %v1452 = vsel %vm422, %v1444, %v1390
      %v1453 = vsel %vm422, %v1445, %v1392
      %v1454 = vsel %vm422, %v1446, %v1394
      %v1455 = vsel %vm422, %v1447, %v1396
      %v1456 = vsel %vm422, %v1448, %v1398
      %v1457 = vsel %vm422, %v1449, %v1400
      %v1458 = vsel %vm422, %v1450, %v1402
      %v1459 = vsel %vm424, %v1451, %v1420
      %v1460 = vsel %vm424, %v1452, %v1422
      %v1461 = vsel %vm424, %v1453, %v1424
      %v1462 = vsel %vm424, %v1454, %v1426
      %v1463 = vsel %vm424, %v1455, %v1428
      %v1464 = vsel %vm424, %v1456, %v1430
      %v1465 = vsel %vm424, %v1457, %v1432
      %v1466 = vsel %vm424, %v1458, %v1434
      %v1467 = vld [vmem:[%s2] sm:$0xff]
      %v1468 = vld [vmem:[%s2 + $0x8] sm:$0xff]
      %v1469 = vld [vmem:[%s2 + $0x10] sm:$0xff]
      %v1470 = vld [vmem:[%s2 + $0x18] sm:$0xff]
      %v1471 = vld [vmem:[%s2 + $0x20] sm:$0xff]
      %v1472 = vld [vmem:[%s2 + $0x28] sm:$0xff]
      %v1473 = vld [vmem:[%s2 + $0x30] sm:$0xff]
      %v1474 = vld [vmem:[%s2 + $0x38] sm:$0xff]
      %v1475 = vld [vmem:[%s2 + $0x40] sm:$0xff]
      %v1476 = vld [vmem:[%s2 + $0x48] sm:$0xff]
      %v1477 = vld [vmem:[%s2 + $0x50] sm:$0xff]
      %v1478 = vld [vmem:[%s2 + $0x58] sm:$0xff]
      %v1479 = vld [vmem:[%s2 + $0x60] sm:$0xff]
      %v1480 = vld [vmem:[%s2 + $0x68] sm:$0xff]
      %v1481 = vld [vmem:[%s2 + $0x70] sm:$0xff]
      %v1482 = vld [vmem:[%s2 + $0x78] sm:$0xff]
      %v1483 = vld [vmem:[%s2 + $0x80] sm:$0xff]
      %v1484 = vld [vmem:[%s2 + $0x88] sm:$0xff]
      %v1485 = vld [vmem:[%s2 + $0x90] sm:$0xff]
      %v1486 = vld [vmem:[%s2 + $0x98] sm:$0xff]
      %v1487 = vld [vmem:[%s3] sm:$0x1]
      %v1489 = vlaneseq
      %v1490 = vshrl.u32 %v1489, 7
      %v1491 = vsub.s32 0, %v1490
      %v1492 = vrot.slane %v1487, %v1491
      %v1495 = vsel %vm420, %v1339, 0
      %v1498 = vsel %vm420, %v1340, 0
      %v1501 = vsel %vm420, %v1341, 0
      %v1504 = vsel %vm420, %v1342, 0
      %v1507 = vsel %vm420, %v1343, 0
      %v1510 = vsel %vm420, %v1344, 0
      %v1513 = vsel %vm420, %v1345, 0
      %v1516 = vsel %vm420, %v1346, 0
      %1518 = vmatprep.subr.mxu0 0.0
      %1519 = vmatpush1.msra.mxu0 %v1467
      %1520 = vmatprep.subr.mxu0 0.0
      %1521 = vmatpush1.msra.mxu0 %v1468
      %1522 = vmatprep.subr.mxu0 0.0
      %1523 = vmatpush1.msra.mxu0 %v1469
      %1524 = vmatprep.subr.mxu0 0.0
      %1525 = vmatpush1.msra.mxu0 %v1470
      %1526 = vmatprep.subr.mxu0 0.0
      %1527 = vmatpush1.msra.mxu0 %v1471
      %1528 = vmatprep.subr.mxu0 0.0
      %1529 = vmatpush1.msra.mxu0 %v1472
      %1530 = vmatprep.subr.mxu0 0.0
      %1531 = vmatpush1.msra.mxu0 %v1473
      %1532 = vmatprep.subr.mxu0 0.0
      %1533 = vmatpush1.msra.mxu0 %v1474
      %1534 = vmatprep.subr.mxu0 0.0
      %1535 = vmatpush1.msra.mxu0 %v1475
      %1536 = vmatprep.subr.mxu0 0.0
      %1537 = vmatpush1.msra.mxu0 %v1476
      %1538 = vmatprep.subr.mxu0 0.0
      %1539 = vmatpush1.msra.mxu0 %v1477
      %1540 = vmatprep.subr.mxu0 0.0
      %1541 = vmatpush1.msra.mxu0 %v1478
      %1542 = vmatprep.subr.mxu0 0.0
      %1543 = vmatpush1.msra.mxu0 %v1479
      %1544 = vmatprep.subr.mxu0 0.0
      %1545 = vmatpush1.msra.mxu0 %v1480
      %1546 = vmatprep.subr.mxu0 0.0
      %1547 = vmatpush1.msra.mxu0 %v1481
      %1548 = vmatprep.subr.mxu0 0.0
      %1549 = vmatpush1.msra.mxu0 %v1482
      %1550 = vmatprep.subr.mxu0 0.0
      %1551 = vmatpush1.msra.mxu0 %v1483
      %1552 = vmatprep.subr.mxu0 0.0
      %1553 = vmatpush1.msra.mxu0 %v1484
      %1554 = vmatprep.subr.mxu0 0.0
      %1555 = vmatpush1.msra.mxu0 %v1485
      %1556 = vmatprep.subr.mxu0 0.0
      %1557 = vmatpush1.msra.mxu0 %v1486
      %1558 = vmatprep.subr.mxu0 0.0
      %1559 = vmatpush1.msra.mxu0 0.0
      %1560 = vmatprep.subr.mxu0 0.0
      %1561 = vmatpush1.msra.mxu0 0.0
      %1562 = vmatprep.subr.mxu0 0.0
      %1563 = vmatpush1.msra.mxu0 0.0
      %1564 = vmatprep.subr.mxu0 0.0
      %1565 = vmatpush1.msra.mxu0 0.0
      %1566 = vmatprep.subr.mxu0 0.0
      %1567 = vmatpush1.msra.mxu0 0.0
      %1568 = vmatprep.subr.mxu0 0.0
      %1569 = vmatpush1.msra.mxu0 0.0
      %1570 = vmatprep.subr.mxu0 0.0
      %1571 = vmatpush1.msra.mxu0 0.0
      %1572 = vmatprep.subr.mxu0 0.0
      %1573 = vmatpush1.msra.mxu0 0.0
      %1574 = vmatprep.subr.mxu0 0.0
      %1575 = vmatpush1.msra.mxu0 0.0
      %1576 = vmatprep.subr.mxu0 0.0
      %1577 = vmatpush1.msra.mxu0 0.0
      %1578 = vmatprep.subr.mxu0 0.0
      %1579 = vmatpush1.msra.mxu0 0.0
      %1580 = vmatprep.subr.mxu0 0.0
      %1581 = vmatpush1.msra.mxu0 0.0
      %1582 = vmatprep.mubr.f32.mxu0 %v1495
      %1583 = vmatmul.mubr.f32.gmra.mrb[0].mxu0 %v1459
      %v1584 = vpop.f32.mrb[0].mxu0
      %v1585 = vadd.f32 %v1492, %v1584
      %v1586 = vpop.f32.mrb[0].mxu0
      %1587 = vmatprep.mubr.f32.mxu0 %v1498
      %1588 = vmatmul.mubr.f32.gmra.mrb[0].mxu0 %v1460
      %v1589 = vpop.f32.mrb[0].mxu0
      %v1590 = vadd.f32 %v1492, %v1589
      %v1591 = vpop.f32.mrb[0].mxu0
      %1592 = vmatprep.mubr.f32.mxu0 %v1501
      %1593 = vmatmul.mubr.f32.gmra.mrb[0].mxu0 %v1461
      %v1594 = vpop.f32.mrb[0].mxu0
      %v1595 = vadd.f32 %v1492, %v1594
      %v1596 = vpop.f32.mrb[0].mxu0
      %1597 = vmatprep.mubr.f32.mxu0 %v1504
      %1598 = vmatmul.mubr.f32.gmra.mrb[0].mxu0 %v1462
      %v1599 = vpop.f32.mrb[0].mxu0
      %v1600 = vadd.f32 %v1492, %v1599
      %v1601 = vpop.f32.mrb[0].mxu0
      %1602 = vmatprep.mubr.f32.mxu0 %v1507
      %1603 = vmatmul.mubr.f32.gmra.mrb[0].mxu0 %v1463
      %v1604 = vpop.f32.mrb[0].mxu0
      %v1605 = vadd.f32 %v1492, %v1604
      %v1606 = vpop.f32.mrb[0].mxu0
      %1607 = vmatprep.mubr.f32.mxu0 %v1510
      %1608 = vmatmul.mubr.f32.gmra.mrb[0].mxu0 %v1464
      %v1609 = vpop.f32.mrb[0].mxu0
      %v1610 = vadd.f32 %v1492, %v1609
      %v1611 = vpop.f32.mrb[0].mxu0
      %1612 = vmatprep.mubr.f32.mxu0 %v1513
      %1613 = vmatmul.mubr.f32.gmra.mrb[0].mxu0 %v1465
      %v1614 = vpop.f32.mrb[0].mxu0
      %v1615 = vadd.f32 %v1492, %v1614
      %v1616 = vpop.f32.mrb[0].mxu0
      %1617 = vmatprep.mubr.f32.mxu0 %v1516
      %1618 = vmatmul.mubr.f32.gmra.mrb[0].mxu0 %v1466
      %v1619 = vpop.f32.mrb[0].mxu0
      %v1620 = vadd.f32 %v1492, %v1619
      %v1621 = vpop.f32.mrb[0].mxu0
      %1622 = vdwg.mxu0
      %v1623 = vadd.f32 %v1585, %v252
      %v1624 = vadd.f32 %v1590, %v253
      %v1625 = vadd.f32 %v1595, %v254
      %v1626 = vadd.f32 %v1600, %v255
      %v1627 = vadd.f32 %v1605, %v256
      %v1628 = vadd.f32 %v1610, %v257
      %v1629 = vadd.f32 %v1615, %v258
      %v1630 = vadd.f32 %v1620, %v259
      %v1631 = vld [vmem:[%s4] sm:$0x1]
      %v1632 = vld [vmem:[%s5] sm:$0x1]
      %v1633 = vsel %vm420, %v1623, 0.0
      %1634 = vadd.xlane.f32.xlu0 %v1633
      %v1635 = vpop.xlane.xlu0 %1634
      %v1636 = vsel %vm420, %v1624, 0.0
      %1637 = vadd.xlane.f32.xlu0 %v1636
      %v1638 = vpop.xlane.xlu0 %1637
      %v1639 = vsel %vm420, %v1625, 0.0
      %1640 = vadd.xlane.f32.xlu0 %v1639
      %v1641 = vpop.xlane.xlu0 %1640
      %v1642 = vsel %vm420, %v1626, 0.0
      %1643 = vadd.xlane.f32.xlu0 %v1642
      %v1644 = vpop.xlane.xlu0 %1643
      %v1645 = vsel %vm420, %v1627, 0.0
      %1646 = vadd.xlane.f32.xlu0 %v1645
      %v1647 = vpop.xlane.xlu0 %1646
      %v1648 = vsel %vm420, %v1628, 0.0
      %1649 = vadd.xlane.f32.xlu0 %v1648
      %v1650 = vpop.xlane.xlu0 %1649
      %v1651 = vsel %vm420, %v1629, 0.0
      %1652 = vadd.xlane.f32.xlu0 %v1651
      %v1653 = vpop.xlane.xlu0 %1652
      %v1654 = vsel %vm420, %v1630, 0.0
      %1655 = vadd.xlane.f32.xlu0 %v1654
      %v1656 = vpop.xlane.xlu0 %1655
      %v1657 = vrcp.pop 32.0
      %v1658 = vmul.f32 %v1635, %v1657
      %v1659 = vmul.f32 %v1638, %v1657
      %v1660 = vmul.f32 %v1641, %v1657
      %v1661 = vmul.f32 %v1644, %v1657
      %v1662 = vmul.f32 %v1647, %v1657
      %v1663 = vmul.f32 %v1650, %v1657
      %v1664 = vmul.f32 %v1653, %v1657
      %v1665 = vmul.f32 %v1656, %v1657
      %v1666 = vsub.f32 %v1623, %v1658
      %v1667 = vsub.f32 %v1624, %v1659
      %v1668 = vsub.f32 %v1625, %v1660
      %v1669 = vsub.f32 %v1626, %v1661
      %v1670 = vsub.f32 %v1627, %v1662
      %v1671 = vsub.f32 %v1628, %v1663
      %v1672 = vsub.f32 %v1629, %v1664
      %v1673 = vsub.f32 %v1630, %v1665
      %v1674 = vmul.f32 %v1666, %v1666
      %v1675 = vmul.f32 %v1667, %v1667
      %v1676 = vmul.f32 %v1668, %v1668
      %v1677 = vmul.f32 %v1669, %v1669
      %v1678 = vmul.f32 %v1670, %v1670
      %v1679 = vmul.f32 %v1671, %v1671
      %v1680 = vmul.f32 %v1672, %v1672
      %v1681 = vmul.f32 %v1673, %v1673
      %v1682 = vsel %vm420, %v1674, 0.0
      %1683 = vadd.xlane.f32.xlu0 %v1682
      %v1684 = vpop.xlane.xlu0 %1683
      %v1685 = vsel %vm420, %v1675, 0.0
      %1686 = vadd.xlane.f32.xlu0 %v1685
      %v1687 = vpop.xlane.xlu0 %1686
      %v1688 = vsel %vm420, %v1676, 0.0
      %1689 = vadd.xlane.f32.xlu0 %v1688
      %v1690 = vpop.xlane.xlu0 %1689
      %v1691 = vsel %vm420, %v1677, 0.0
      %1692 = vadd.xlane.f32.xlu0 %v1691
      %v1693 = vpop.xlane.xlu0 %1692
      %v1694 = vsel %vm420, %v1678, 0.0
      %1695 = vadd.xlane.f32.xlu0 %v1694
      %v1696 = vpop.xlane.xlu0 %1695
      %v1697 = vsel %vm420, %v1679, 0.0
      %1698 = vadd.xlane.f32.xlu0 %v1697
      %v1699 = vpop.xlane.xlu0 %1698
      %v1700 = vsel %vm420, %v1680, 0.0
      %1701 = vadd.xlane.f32.xlu0 %v1700
      %v1702 = vpop.xlane.xlu0 %1701
      %v1703 = vsel %vm420, %v1681, 0.0
      %1704 = vadd.xlane.f32.xlu0 %v1703
      %v1705 = vpop.xlane.xlu0 %1704
      %v1706 = vmul.f32 %v1684, %v1657
      %v1707 = vmul.f32 %v1687, %v1657
      %v1708 = vmul.f32 %v1690, %v1657
      %v1709 = vmul.f32 %v1693, %v1657
      %v1710 = vmul.f32 %v1696, %v1657
      %v1711 = vmul.f32 %v1699, %v1657
      %v1712 = vmul.f32 %v1702, %v1657
      %v1713 = vmul.f32 %v1705, %v1657
      %v1714 = vadd.f32 %v1706, 1e-05
      %v1715 = vadd.f32 %v1707, 1e-05
      %v1716 = vadd.f32 %v1708, 1e-05
      %v1717 = vadd.f32 %v1709, 1e-05
      %v1718 = vadd.f32 %v1710, 1e-05
      %v1719 = vadd.f32 %v1711, 1e-05
      %v1720 = vadd.f32 %v1712, 1e-05
      %v1721 = vadd.f32 %v1713, 1e-05
      %v1722 = vrsqrt.pop %v1714
      %v1723 = vrsqrt.pop %v1715
      %v1724 = vrsqrt.pop %v1716
      %v1725 = vrsqrt.pop %v1717
      %v1726 = vrsqrt.pop %v1718
      %v1727 = vrsqrt.pop %v1719
      %v1728 = vrsqrt.pop %v1720
      %v1729 = vrsqrt.pop %v1721
      %v1730 = vmul.f32 %v1666, %v1722
      %v1731 = vmul.f32 %v1667, %v1723
      %v1732 = vmul.f32 %v1668, %v1724
      %v1733 = vmul.f32 %v1669, %v1725
      %v1734 = vmul.f32 %v1670, %v1726
      %v1735 = vmul.f32 %v1671, %v1727
      %v1736 = vmul.f32 %v1672, %v1728
      %v1737 = vmul.f32 %v1673, %v1729
      %v1739 = vlaneseq
      %v1740 = vshrl.u32 %v1739, 7
      %v1741 = vsub.s32 0, %v1740
      %v1742 = vrot.slane %v1631, %v1741
      %v1744 = vmul.f32 %v1730, %v1742
      %v1745 = vmul.f32 %v1731, %v1742
      %v1746 = vmul.f32 %v1732, %v1742
      %v1747 = vmul.f32 %v1733, %v1742
      %v1748 = vmul.f32 %v1734, %v1742
      %v1749 = vmul.f32 %v1735, %v1742
      %v1750 = vmul.f32 %v1736, %v1742
      %v1751 = vmul.f32 %v1737, %v1742
      %v1753 = vlaneseq
      %v1754 = vshrl.u32 %v1753, 7
      %v1755 = vsub.s32 0, %v1754
      %v1756 = vrot.slane %v1632, %v1755
      %v1758 = vadd.f32 %v1744, %v1756
      %v1759 = vadd.f32 %v1745, %v1756
      %v1760 = vadd.f32 %v1746, %v1756
      %v1761 = vadd.f32 %v1747, %v1756
      %v1762 = vadd.f32 %v1748, %v1756
      %v1763 = vadd.f32 %v1749, %v1756
      %v1764 = vadd.f32 %v1750, %v1756
      %v1765 = vadd.f32 %v1751, %v1756
      %1766 = vst.msk [vmem:[%s251] sm:$0xff] %vm420, %v1758
      %1767 = vst.msk [vmem:[%s251 + $0x8] sm:$0xff] %vm420, %v1759
      %1768 = vst.msk [vmem:[%s251 + $0x10] sm:$0xff] %vm420, %v1760
      %1769 = vst.msk [vmem:[%s251 + $0x18] sm:$0xff] %vm420, %v1761
      %1770 = vst.msk [vmem:[%s251 + $0x20] sm:$0xff] %vm420, %v1762
      %1771 = vst.msk [vmem:[%s251 + $0x28] sm:$0xff] %vm420, %v1763
      %1772 = vst.msk [vmem:[%s251 + $0x30] sm:$0xff] %vm420, %v1764
      %1773 = vst.msk [vmem:[%s251 + $0x38] sm:$0xff] %vm420, %v1765
      %p1774 = scmp.lt.s32.totalorder %s17, 1
      %s1775 = scalar_select %p1774, %s17, 1
      %s1776 = smul.addr %s1775, 8
      %s1777 = smul.addr %s1776, 8
      %s1778 = scalar_lea.vmem %s6, %s1777
      // Predicated region
      $region45: #{st_model_forward.16} parent=43 // pred_check
        %p1779 = pneg %p166
      $region46: #{st_model_forward.16} parent=43 // pred_check_branch
        %1781 = sbr.rel (%p1779) target = $region48
      $region47: #{st_model_forward.16} parent=43 // pred_region
        _
      $region48: #{st_model_forward.16} parent=43 // pred_fallthru
        _
    $region44: #{st_model_forward.16} parent=5 // pred_fallthru
      _
    %p1782 = scmp.le.s32.totalorder 2, %s12
    // Predicated region
    $region49: #{st_model_forward.16} parent=5 // pred_check
      %p1783 = pneg %p1782
    $region50: #{st_model_forward.16} parent=5 // pred_check_branch
      %1785 = sbr.rel (%p1783) target = $region52
    $region51: #{st_model_forward.16} parent=5 // pred_region
      %s1786 = ssub.s32 %s12, 2
      // Predicated region
      $region53: #{st_model_forward.16} parent=51 // pred_check
        %p1787 = pneg %p172
      $region54: #{st_model_forward.16} parent=51 // pred_check_branch
        %1789 = sbr.rel (%p1787) target = $region56
      $region55: #{st_model_forward.16} parent=51 // pred_region
        %p1790 = scmp.lt.s32.totalorder %s18, 1
        %s1791 = scalar_select %p1790, %s18, 1
        %s1792 = smul.addr %s1791, 8
        %s1793 = smul.addr %s1792, 8
        %s1794 = scalar_lea.vmem %s6, %s1793
      $region56: #{st_model_forward.16} parent=51 // pred_fallthru
        _
    $region52: #{st_model_forward.16} parent=5 // pred_fallthru
      _
  $region6: #{st_model_forward.16} parent=0 // loop_footer
    %s16 = sadd.s32 1, %s12
  $region7: #{st_model_forward.16} parent=0 // loop_footer_branch
    %11 = sbr.rel target = $region3
  $region8: #{st_model_forward.16} parent=0 // loop_exit
    _

// kernel: st_model_forward.15
$region0: #{st_model_forward.15}
  #allocation0 [shape = 'u32[]', space=smem, size = 0x4, offset = 0x4, fixed_abs, tag = 'smem constant byte address 0x4 - core index']
  #allocation1 [shape = 'u32[144,128]{1,0:T(1,128)}', space=vmem, size = 0x12000, scoped, tag = 'internal scratch']
  %s0 = inlined_call_operand.vmem [shape: f32[2,8,8,32], index: 0, kind: input, shape index: {}, may-alias: {0,1}]
  %s1 = inlined_call_operand.vmem [shape: f32[2,8,8,32], index: 1, kind: input, shape index: {}, may-alias: {0,1}]
  %s2 = inlined_call_operand.vmem [shape: f32[32,32], index: 2, kind: input, shape index: {}]
  %s3 = inlined_call_operand.vmem [shape: f32[1,32], index: 3, kind: input, shape index: {}]
  %s4 = inlined_call_operand.vmem [shape: f32[32,64], index: 4, kind: input, shape index: {}]
  %s5 = inlined_call_operand.vmem [shape: f32[1,64], index: 5, kind: input, shape index: {}]
  %s6 = inlined_call_operand.vmem [shape: f32[32,32], index: 6, kind: input, shape index: {}]
  %s7 = inlined_call_operand.vmem [shape: f32[1,32], index: 7, kind: input, shape index: {}]
  %s8 = inlined_call_operand.vmem [shape: f32[1,32], index: 8, kind: input, shape index: {}]
  %s9 = inlined_call_operand.vmem [shape: f32[1,32], index: 9, kind: input, shape index: {}]
  %s10 = inlined_call_operand.vmem [shape: f32[2,8,8,32], index: 10, kind: output, shape index: {}]
  %s11 = sld [smem:[#allocation0]]
  $region73: #{st_model_forward.15} parent=0
    _
  %s13 = ssub.s32 1, %s11
  %s14 = scalar_select 0, %s13, %s11
  loop: start=0, step=1, limit=4
  $region2: #{st_model_forward.15} parent=0 // loop_pre_header
    _
  $region3: #{st_model_forward.15} parent=0 // loop_header
    %s16 = sphi 0, %s20
    %p17 = scmp.ge.s32.totalorder %s16, 4
    %s26 = sphi 0, %s28
    %s29 = sphi 0, %s26
    %s30 = sphi 0, %s29
    %s46 = sphi 0, %s30
    %s52 = sphi 0, %s54
    %s55 = sphi 0, %s52
    %s56 = sphi 0, %s55
    %s72 = sphi 0, %s56
    %s76 = sphi 0, %s76
    %s78 = sphi 0, %s76
    %s79 = sphi 0, %s78
    %s93 = sphi 0, %s79
    %s97 = sphi 0, %s97
    %s99 = sphi 0, %s97
    %s100 = sphi 0, %s99
    %s114 = sphi 0, %s100
    %s118 = sphi 0, %s118
    %s120 = sphi 0, %s118
    %s121 = sphi 0, %s120
    %s135 = sphi 0, %s121
    %s139 = sphi 0, %s139
    %s141 = sphi 0, %s139
    %s142 = sphi 0, %s141
    %s156 = sphi 0, %s142
    %s160 = sphi 0, %s160
    %s162 = sphi 0, %s160
    %s163 = sphi 0, %s162
    %s177 = sphi 0, %s163
    %s181 = sphi 0, %s181
    %s183 = sphi 0, %s181
    %s184 = sphi 0, %s183
    %s198 = sphi 0, %s184
    %s202 = sphi 0, %s202
    %s204 = sphi 0, %s202
    %s205 = sphi 0, %s204
    %s219 = sphi 0, %s205
    %s223 = sphi 0, %s223
    %s225 = sphi 0, %s223
    %s226 = sphi 0, %s225
    %s240 = sphi 0, %s226
    %s246 = sphi 0, %s248
    %s249 = sphi 0, %s246
    %s250 = sphi 0, %s249
    %s266 = sphi 0, %s250
  $region4: #{st_model_forward.15} parent=0 // loop_header_branch
    %19 = sbr.rel (%p17) target = $region8
  $region5: #{st_model_forward.15} parent=0 // loop_body
    %s21 = ssub.s32 %s16, 1
    %s22 = ssub.s32 %s16, 2
    %s23 = sadd.s32 %s16, 1
    %s24 = ssub.s32 %s16, %s23
    %p25 = scmp.eq.s32.totalorder %s24, 0
    %s27 = sadd.s32 %s26, 1
    %s28 = scalar_select %p25, %s26, %s27
    %p31 = pneg %p25
    %p32 = scmp.eq.s32.totalorder %s16, 1
    %p33 = por %p31, %p32
    %p34 = scmp.ne.s32.totalorder %s26, %s29
    %p35 = scmp.eq.s32.totalorder %s16, 0
    %p36 = por %p34, %p35
    %p37 = scmp.ne.s32.totalorder %s26, %s29
    %p38 = scmp.eq.s32.totalorder %s21, 1
    %p39 = por %p37, %p38
    %p40 = scmp.ne.s32.totalorder %s29, %s30
    %p41 = scmp.eq.s32.totalorder %s21, 0
    %p42 = por %p40, %p41
    %p43 = scmp.ne.s32.totalorder %s29, %s30
    %p44 = scmp.eq.s32.totalorder %s22, 1
    %p45 = por %p43, %p44
    %p47 = scmp.ne.s32.totalorder %s30, %s46
    %p48 = scmp.eq.s32.totalorder %s22, 0
    %p49 = por %p47, %p48
    %s50 = ssub.s32 %s16, %s23
    %p51 = scmp.eq.s32.totalorder %s50, 0
    %s53 = sadd.s32 %s52, 1
    %s54 = scalar_select %p51, %s52, %s53
    %p57 = pneg %p51
    %p58 = scmp.eq.s32.totalorder %s16, 1
    %p59 = por %p57, %p58
    %p60 = scmp.ne.s32.totalorder %s52, %s55
    %p61 = scmp.eq.s32.totalorder %s16, 0
    %p62 = por %p60, %p61
    %p63 = scmp.ne.s32.totalorder %s52, %s55
    %p64 = scmp.eq.s32.totalorder %s21, 1
    %p65 = por %p63, %p64
    %p66 = scmp.ne.s32.totalorder %s55, %s56
    %p67 = scmp.eq.s32.totalorder %s21, 0
    %p68 = por %p66, %p67
    %p69 = scmp.ne.s32.totalorder %s55, %s56
    %p70 = scmp.eq.s32.totalorder %s22, 1
    %p71 = por %p69, %p70
    %p73 = scmp.ne.s32.totalorder %s56, %s72
    %p74 = scmp.eq.s32.totalorder %s22, 0
    %p75 = por %p73, %p74
    %s77 = sadd.s32 %s76, 1
    %p80 = scmp.eq.s32.totalorder %s16, 1
    %p81 = scmp.ne.s32.totalorder %s76, %s78
    %p82 = scmp.eq.s32.totalorder %s16, 0
    %p83 = por %p81, %p82
    %p84 = scmp.ne.s32.totalorder %s76, %s78
    %p85 = scmp.eq.s32.totalorder %s21, 1
    %p86 = por %p84, %p85
    %p87 = scmp.ne.s32.totalorder %s78, %s79
    %p88 = scmp.eq.s32.totalorder %s21, 0
    %p89 = por %p87, %p88
    %p90 = scmp.ne.s32.totalorder %s78, %s79
    %p91 = scmp.eq.s32.totalorder %s22, 1
    %p92 = por %p90, %p91
    %p94 = scmp.ne.s32.totalorder %s79, %s93
    %p95 = scmp.eq.s32.totalorder %s22, 0
    %p96 = por %p94, %p95
    %s98 = sadd.s32 %s97, 1
    %p101 = scmp.eq.s32.totalorder %s16, 1
    %p102 = scmp.ne.s32.totalorder %s97, %s99
    %p103 = scmp.eq.s32.totalorder %s16, 0
    %p104 = por %p102, %p103
    %p105 = scmp.ne.s32.totalorder %s97, %s99
    %p106 = scmp.eq.s32.totalorder %s21, 1
    %p107 = por %p105, %p106
    %p108 = scmp.ne.s32.totalorder %s99, %s100
    %p109 = scmp.eq.s32.totalorder %s21, 0
    %p110 = por %p108, %p109
    %p111 = scmp.ne.s32.totalorder %s99, %s100
    %p112 = scmp.eq.s32.totalorder %s22, 1
    %p113 = por %p111, %p112
    %p115 = scmp.ne.s32.totalorder %s100, %s114
    %p116 = scmp.eq.s32.totalorder %s22, 0
    %p117 = por %p115, %p116
    %s119 = sadd.s32 %s118, 1
    %p122 = scmp.eq.s32.totalorder %s16, 1
    %p123 = scmp.ne.s32.totalorder %s118, %s120
    %p124 = scmp.eq.s32.totalorder %s16, 0
    %p125 = por %p123, %p124
    %p126 = scmp.ne.s32.totalorder %s118, %s120
    %p127 = scmp.eq.s32.totalorder %s21, 1
    %p128 = por %p126, %p127
    %p129 = scmp.ne.s32.totalorder %s120, %s121
    %p130 = scmp.eq.s32.totalorder %s21, 0
    %p131 = por %p129, %p130
    %p132 = scmp.ne.s32.totalorder %s120, %s121
    %p133 = scmp.eq.s32.totalorder %s22, 1
    %p134 = por %p132, %p133
    %p136 = scmp.ne.s32.totalorder %s121, %s135
    %p137 = scmp.eq.s32.totalorder %s22, 0
    %p138 = por %p136, %p137
    %s140 = sadd.s32 %s139, 1
    %p143 = scmp.eq.s32.totalorder %s16, 1
    %p144 = scmp.ne.s32.totalorder %s139, %s141
    %p145 = scmp.eq.s32.totalorder %s16, 0
    %p146 = por %p144, %p145
    %p147 = scmp.ne.s32.totalorder %s139, %s141
    %p148 = scmp.eq.s32.totalorder %s21, 1
    %p149 = por %p147, %p148
    %p150 = scmp.ne.s32.totalorder %s141, %s142
    %p151 = scmp.eq.s32.totalorder %s21, 0
    %p152 = por %p150, %p151
    %p153 = scmp.ne.s32.totalorder %s141, %s142
    %p154 = scmp.eq.s32.totalorder %s22, 1
    %p155 = por %p153, %p154
    %p157 = scmp.ne.s32.totalorder %s142, %s156
    %p158 = scmp.eq.s32.totalorder %s22, 0
    %p159 = por %p157, %p158
    %s161 = sadd.s32 %s160, 1
    %p164 = scmp.eq.s32.totalorder %s16, 1
    %p165 = scmp.ne.s32.totalorder %s160, %s162
    %p166 = scmp.eq.s32.totalorder %s16, 0
    %p167 = por %p165, %p166
    %p168 = scmp.ne.s32.totalorder %s160, %s162
    %p169 = scmp.eq.s32.totalorder %s21, 1
    %p170 = por %p168, %p169
    %p171 = scmp.ne.s32.totalorder %s162, %s163
    %p172 = scmp.eq.s32.totalorder %s21, 0
    %p173 = por %p171, %p172
    %p174 = scmp.ne.s32.totalorder %s162, %s163
    %p175 = scmp.eq.s32.totalorder %s22, 1
    %p176 = por %p174, %p175
    %p178 = scmp.ne.s32.totalorder %s163, %s177
    %p179 = scmp.eq.s32.totalorder %s22, 0
    %p180 = por %p178, %p179
    %s182 = sadd.s32 %s181, 1
    %p185 = scmp.eq.s32.totalorder %s16, 1
    %p186 = scmp.ne.s32.totalorder %s181, %s183
    %p187 = scmp.eq.s32.totalorder %s16, 0
    %p188 = por %p186, %p187
    %p189 = scmp.ne.s32.totalorder %s181, %s183
    %p190 = scmp.eq.s32.totalorder %s21, 1
    %p191 = por %p189, %p190
    %p192 = scmp.ne.s32.totalorder %s183, %s184
    %p193 = scmp.eq.s32.totalorder %s21, 0
    %p194 = por %p192, %p193
    %p195 = scmp.ne.s32.totalorder %s183, %s184
    %p196 = scmp.eq.s32.totalorder %s22, 1
    %p197 = por %p195, %p196
    %p199 = scmp.ne.s32.totalorder %s184, %s198
    %p200 = scmp.eq.s32.totalorder %s22, 0
    %p201 = por %p199, %p200
    %s203 = sadd.s32 %s202, 1
    %p206 = scmp.eq.s32.totalorder %s16, 1
    %p207 = scmp.ne.s32.totalorder %s202, %s204
    %p208 = scmp.eq.s32.totalorder %s16, 0
    %p209 = por %p207, %p208
    %p210 = scmp.ne.s32.totalorder %s202, %s204
    %p211 = scmp.eq.s32.totalorder %s21, 1
    %p212 = por %p210, %p211
    %p213 = scmp.ne.s32.totalorder %s204, %s205
    %p214 = scmp.eq.s32.totalorder %s21, 0
    %p215 = por %p213, %p214
    %p216 = scmp.ne.s32.totalorder %s204, %s205
    %p217 = scmp.eq.s32.totalorder %s22, 1
    %p218 = por %p216, %p217
    %p220 = scmp.ne.s32.totalorder %s205, %s219
    %p221 = scmp.eq.s32.totalorder %s22, 0
    %p222 = por %p220, %p221
    %s224 = sadd.s32 %s223, 1
    %p227 = scmp.eq.s32.totalorder %s16, 1
    %p228 = scmp.ne.s32.totalorder %s223, %s225
    %p229 = scmp.eq.s32.totalorder %s16, 0
    %p230 = por %p228, %p229
    %p231 = scmp.ne.s32.totalorder %s223, %s225
    %p232 = scmp.eq.s32.totalorder %s21, 1
    %p233 = por %p231, %p232
    %p234 = scmp.ne.s32.totalorder %s225, %s226
    %p235 = scmp.eq.s32.totalorder %s21, 0
    %p236 = por %p234, %p235
    %p237 = scmp.ne.s32.totalorder %s225, %s226
    %p238 = scmp.eq.s32.totalorder %s22, 1
    %p239 = por %p237, %p238
    %p241 = scmp.ne.s32.totalorder %s226, %s240
    %p242 = scmp.eq.s32.totalorder %s22, 0
    %p243 = por %p241, %p242
    %s244 = ssub.s32 %s16, %s23
    %p245 = scmp.eq.s32.totalorder %s244, 0
    %s247 = sadd.s32 %s246, 1
    %s248 = scalar_select %p245, %s246, %s247
    %p251 = pneg %p245
    %p252 = scmp.eq.s32.totalorder %s16, 1
    %p253 = por %p251, %p252
    %p254 = scmp.ne.s32.totalorder %s246, %s249
    %p255 = scmp.eq.s32.totalorder %s16, 0
    %p256 = por %p254, %p255
    %p257 = scmp.ne.s32.totalorder %s246, %s249
    %p258 = scmp.eq.s32.totalorder %s21, 1
    %p259 = por %p257, %p258
    %p260 = scmp.ne.s32.totalorder %s249, %s250
    %p261 = scmp.eq.s32.totalorder %s21, 0
    %p262 = por %p260, %p261
    %p263 = scmp.ne.s32.totalorder %s249, %s250
    %p264 = scmp.eq.s32.totalorder %s22, 1
    %p265 = por %p263, %p264
    %p267 = scmp.ne.s32.totalorder %s250, %s266
    %p268 = scmp.eq.s32.totalorder %s22, 0
    %p269 = por %p267, %p268
    %p270 = scmp.le.s32.totalorder 1, %s16
    %p271 = scmp.lt.s32.totalorder %s16, 3
    %p272 = pnand %p270, %p271
    %p273 = pneg %p272
    // Predicated region
    $region9: #{st_model_forward.15} parent=5 // pred_check
      _
    $region10: #{st_model_forward.15} parent=5 // pred_check_branch
      %275 = sbr.rel (%p272) target = $region12
    $region11: #{st_model_forward.15} parent=5 // pred_region
      %s276 = ssub.s32 %s16, 1
      // Predicated region
      $region13: #{st_model_forward.15} parent=11 // pred_check
        %p277 = pneg %p89
      $region14: #{st_model_forward.15} parent=11 // pred_check_branch
        %279 = sbr.rel (%p277) target = $region16
      $region15: #{st_model_forward.15} parent=11 // pred_region
        _
      $region16: #{st_model_forward.15} parent=11 // pred_fallthru
        _
      // Predicated region
      $region17: #{st_model_forward.15} parent=11 // pred_check
        %p280 = pneg %p110
      $region18: #{st_model_forward.15} parent=11 // pred_check_branch
        %282 = sbr.rel (%p280) target = $region20
      $region19: #{st_model_forward.15} parent=11 // pred_region
        _
      $region20: #{st_model_forward.15} parent=11 // pred_fallthru
        _
      // Predicated region
      $region21: #{st_model_forward.15} parent=11 // pred_check
        %p283 = pneg %p131
      $region22: #{st_model_forward.15} parent=11 // pred_check_branch
        %285 = sbr.rel (%p283) target = $region24
      $region23: #{st_model_forward.15} parent=11 // pred_region
        _
      $region24: #{st_model_forward.15} parent=11 // pred_fallthru
        _
      // Predicated region
      $region25: #{st_model_forward.15} parent=11 // pred_check
        %p286 = pneg %p152
      $region26: #{st_model_forward.15} parent=11 // pred_check_branch
        %288 = sbr.rel (%p286) target = $region28
      $region27: #{st_model_forward.15} parent=11 // pred_region
        _
      $region28: #{st_model_forward.15} parent=11 // pred_fallthru
        _
      // Predicated region
      $region29: #{st_model_forward.15} parent=11 // pred_check
        %p289 = pneg %p173
      $region30: #{st_model_forward.15} parent=11 // pred_check_branch
        %291 = sbr.rel (%p289) target = $region32
      $region31: #{st_model_forward.15} parent=11 // pred_region
        _
      $region32: #{st_model_forward.15} parent=11 // pred_fallthru
        _
      // Predicated region
      $region33: #{st_model_forward.15} parent=11 // pred_check
        %p292 = pneg %p194
      $region34: #{st_model_forward.15} parent=11 // pred_check_branch
        %294 = sbr.rel (%p292) target = $region36
      $region35: #{st_model_forward.15} parent=11 // pred_region
        _
      $region36: #{st_model_forward.15} parent=11 // pred_fallthru
        _
      // Predicated region
      $region37: #{st_model_forward.15} parent=11 // pred_check
        %p295 = pneg %p215
      $region38: #{st_model_forward.15} parent=11 // pred_check_branch
        %297 = sbr.rel (%p295) target = $region40
      $region39: #{st_model_forward.15} parent=11 // pred_region
        _
      $region40: #{st_model_forward.15} parent=11 // pred_fallthru
        _
      // Predicated region
      $region41: #{st_model_forward.15} parent=11 // pred_check
        %p298 = pneg %p236
      $region42: #{st_model_forward.15} parent=11 // pred_check_branch
        %300 = sbr.rel (%p298) target = $region44
      $region43: #{st_model_forward.15} parent=11 // pred_region
        _
      $region44: #{st_model_forward.15} parent=11 // pred_fallthru
        _
    $region12: #{st_model_forward.15} parent=5 // pred_fallthru
      _
    %p301 = scmp.lt.s32.totalorder %s16, 2
    // Predicated region
    $region45: #{st_model_forward.15} parent=5 // pred_check
      %p302 = pneg %p301
    $region46: #{st_model_forward.15} parent=5 // pred_check_branch
      %304 = sbr.rel (%p302) target = $region48
    $region47: #{st_model_forward.15} parent=5 // pred_region
      // Predicated region
      $region49: #{st_model_forward.15} parent=47 // pred_check
        %p305 = pneg %p36
      $region50: #{st_model_forward.15} parent=47 // pred_check_branch
        %307 = sbr.rel (%p305) target = $region52
      $region51: #{st_model_forward.15} parent=47 // pred_region
        %p308 = scmp.lt.s32.totalorder %s16, 1
        %s309 = scalar_select %p308, %s16, 1
        %s310 = smul.addr %s309, 8
        %s311 = smul.addr %s310, 8
        %s312 = scalar_lea.vmem %s0, %s311
      $region52: #{st_model_forward.15} parent=47 // pred_fallthru
        _
      // Predicated region
      $region53: #{st_model_forward.15} parent=47 // pred_check
        %p313 = pneg %p62
      $region54: #{st_model_forward.15} parent=47 // pred_check_branch
        %315 = sbr.rel (%p313) target = $region56
      $region55: #{st_model_forward.15} parent=47 // pred_region
        %p316 = scmp.lt.s32.totalorder %s16, 1
        %s317 = scalar_select %p316, %s16, 1
        %s318 = smul.addr %s317, 8
        %s319 = smul.addr %s318, 8
        %s320 = scalar_lea.vmem %s1, %s319
      $region56: #{st_model_forward.15} parent=47 // pred_fallthru
        _
    $region48: #{st_model_forward.15} parent=5 // pred_fallthru
      _
    %p321 = scmp.le.s32.totalorder 1, %s16
    %p322 = scmp.lt.s32.totalorder %s16, 3
    %p323 = pnand %p321, %p322
    %p324 = pneg %p323
    // Predicated region
    $region57: #{st_model_forward.15} parent=5 // pred_check
      _
    $region58: #{st_model_forward.15} parent=5 // pred_check_branch
      %326 = sbr.rel (%p323) target = $region60
    $region59: #{st_model_forward.15} parent=5 // pred_region
      %s327 = ssub.s32 %s16, 1
      %p328 = scmp.lt.s32.totalorder %s21, 1
      %s329 = scalar_select %p328, %s21, 1
      %s330 = smul.addr %s329, 8
      %s331 = smul.addr %s330, 8
      %s332 = scalar_lea.vmem %s0, %s331
      %p333 = pneg %p42
      %p334 = pneg %p39
      %p335 = scmp.lt.s32.totalorder %s21, 1
      %s336 = scalar_select %p335, %s21, 1
      %s337 = smul.addr %s336, 8
      %s338 = smul.addr %s337, 8
      %s339 = scalar_lea.vmem %s1, %s338
      %p340 = pneg %p68
      %p341 = pneg %p65
      %p342 = pneg %p89
      %p343 = pneg %p86
      %p344 = pneg %p110
      %p345 = pneg %p107
      %p346 = pneg %p131
      %p347 = pneg %p128
      %p348 = pneg %p152
      %p349 = pneg %p149
      %p350 = pneg %p173
      %p351 = pneg %p170
      %p352 = pneg %p194
      %p353 = pneg %p191
      %p354 = pneg %p215
      %p355 = pneg %p212
      %p356 = pneg %p236
      %p357 = pneg %p233
      %p358 = pneg %p262
      %p359 = pneg %p259
      %p360 = scmp.lt.s32.totalorder %s21, 1
      %s361 = scalar_select %p360, %s21, 1
      %s362 = smul.addr %s361, 8
      %s363 = smul.addr %s362, 8
      %s364 = scalar_lea.vmem %s10, %s363
      %p365 = scmp.lt.s32.totalorder %s21, 1
      %s366 = scalar_select %p365, %s21, 1
      %s367 = smul.addr %s366, 8
      %s368 = smul.addr %s367, 8
      %s369 = scalar_lea.vmem %s0, %s368
      %p370 = scmp.lt.s32.totalorder %s21, 1
      %s371 = scalar_select %p370, %s21, 1
      %s372 = smul.addr %s371, 8
      %s373 = smul.addr %s372, 8
      %s374 = scalar_lea.vmem %s1, %s373
      %p375 = scmp.lt.s32.totalorder %s21, 1
      %s376 = scalar_select %p375, %s21, 1
      %s377 = smul.addr %s376, 8
      %s378 = smul.addr %s377, 8
      %s379 = scalar_lea.vmem %s10, %s378
      %v380 = vld [vmem:[%s369] sm:$0xff]
      %v381 = vld [vmem:[%s369 + $0x8] sm:$0xff]
      %v382 = vld [vmem:[%s369 + $0x10] sm:$0xff]
      %v383 = vld [vmem:[%s369 + $0x18] sm:$0xff]
      %v384 = vld [vmem:[%s369 + $0x20] sm:$0xff]
      %v385 = vld [vmem:[%s369 + $0x28] sm:$0xff]
      %v386 = vld [vmem:[%s369 + $0x30] sm:$0xff]
      %v387 = vld [vmem:[%s369 + $0x38] sm:$0xff]
      %v388 = vld [vmem:[%s374] sm:$0xff]
      %v389 = vld [vmem:[%s374 + $0x8] sm:$0xff]
      %v390 = vld [vmem:[%s374 + $0x10] sm:$0xff]
      %v391 = vld [vmem:[%s374 + $0x18] sm:$0xff]
      %v392 = vld [vmem:[%s374 + $0x20] sm:$0xff]
      %v393 = vld [vmem:[%s374 + $0x28] sm:$0xff]
      %v394 = vld [vmem:[%s374 + $0x30] sm:$0xff]
      %v395 = vld [vmem:[%s374 + $0x38] sm:$0xff]
      %v396 = vld [vmem:[%s2] sm:$0xff]
      %v397 = vld [vmem:[%s2 + $0x8] sm:$0xff]
      %v398 = vld [vmem:[%s2 + $0x10] sm:$0xff]
      %v399 = vld [vmem:[%s2 + $0x18] sm:$0xff]
      %v400 = vld [vmem:[%s3] sm:$0x1]
      %v402 = vlaneseq
      %v403 = vshrl.u32 %v402, 7
      %v404 = vsub.s32 0, %v403
      %v405 = vrot.slane %v400, %v404
      %vm407 = vcmask 261120
      %v409 = vsel %vm407, %v380, 0
      %v412 = vsel %vm407, %v381, 0
      %v415 = vsel %vm407, %v382, 0
      %v418 = vsel %vm407, %v383, 0
      %v421 = vsel %vm407, %v384, 0
      %v424 = vsel %vm407, %v385, 0
      %v427 = vsel %vm407, %v386, 0
      %v430 = vsel %vm407, %v387, 0
      %432 = vmatprep.subr.mxu0 0.0
      %433 = vmatpush1.msra.mxu0 %v396
      %434 = vmatprep.subr.mxu0 0.0
      %435 = vmatpush1.msra.mxu0 %v397
      %436 = vmatprep.subr.mxu0 0.0
      %437 = vmatpush1.msra.mxu0 %v398
      %438 = vmatprep.subr.mxu0 0.0
      %439 = vmatpush1.msra.mxu0 %v399
      %440 = vmatprep.subr.mxu0 0.0
      %441 = vmatpush1.msra.mxu0 0.0
      %442 = vmatprep.subr.mxu0 0.0
      %443 = vmatpush1.msra.mxu0 0.0
      %444 = vmatprep.subr.mxu0 0.0
      %445 = vmatpush1.msra.mxu0 0.0
      %446 = vmatprep.subr.mxu0 0.0
      %447 = vmatpush1.msra.mxu0 0.0
      %448 = vmatprep.subr.mxu0 0.0
      %449 = vmatpush1.msra.mxu0 0.0
      %450 = vmatprep.subr.mxu0 0.0
      %451 = vmatpush1.msra.mxu0 0.0
      %452 = vmatprep.subr.mxu0 0.0
      %453 = vmatpush1.msra.mxu0 0.0
      %454 = vmatprep.subr.mxu0 0.0
      %455 = vmatpush1.msra.mxu0 0.0
      %456 = vmatprep.subr.mxu0 0.0
      %457 = vmatpush1.msra.mxu0 0.0
      %458 = vmatprep.subr.mxu0 0.0
      %459 = vmatpush1.msra.mxu0 0.0
      %460 = vmatprep.subr.mxu0 0.0
      %461 = vmatpush1.msra.mxu0 0.0
      %462 = vmatprep.subr.mxu0 0.0
      %463 = vmatpush1.msra.mxu0 0.0
      %464 = vmatprep.subr.mxu0 0.0
      %465 = vmatpush1.msra.mxu0 0.0
      %466 = vmatprep.subr.mxu0 0.0
      %467 = vmatpush1.msra.mxu0 0.0
      %468 = vmatprep.subr.mxu0 0.0
      %469 = vmatpush1.msra.mxu0 0.0
      %470 = vmatprep.subr.mxu0 0.0
      %471 = vmatpush1.msra.mxu0 0.0
      %472 = vmatprep.subr.mxu0 0.0
      %473 = vmatpush1.msra.mxu0 0.0
      %474 = vmatprep.subr.mxu0 0.0
      %475 = vmatpush1.msra.mxu0 0.0
      %476 = vmatprep.subr.mxu0 0.0
      %477 = vmatpush1.msra.mxu0 0.0
      %478 = vmatprep.subr.mxu0 0.0
      %479 = vmatpush1.msra.mxu0 0.0
      %480 = vmatprep.subr.mxu0 0.0
      %481 = vmatpush1.msra.mxu0 0.0
      %482 = vmatprep.subr.mxu0 0.0
      %483 = vmatpush1.msra.mxu0 0.0
      %484 = vmatprep.subr.mxu0 0.0
      %485 = vmatpush1.msra.mxu0 0.0
      %486 = vmatprep.subr.mxu0 0.0
      %487 = vmatpush1.msra.mxu0 0.0
      %488 = vmatprep.subr.mxu0 0.0
      %489 = vmatpush1.msra.mxu0 0.0
      %490 = vmatprep.subr.mxu0 0.0
      %491 = vmatpush1.msra.mxu0 0.0
      %492 = vmatprep.subr.mxu0 0.0
      %493 = vmatpush1.msra.mxu0 0.0
      %494 = vmatprep.subr.mxu0 0.0
      %495 = vmatpush1.msra.mxu0 0.0
      %496 = vmatprep.mubr.f32.mxu0 0.0
      %497 = vmatmul.mubr.f32.gmra.mrb[0].mxu0 %v409
      %v498 = vpop.f32.mrb[0].mxu0
      %v499 = vadd.f32 %v405, %v498
      %v500 = vpop.f32.mrb[0].mxu0
      %501 = vmatprep.mubr.f32.mxu0 0.0
      %502 = vmatmul.mubr.f32.gmra.mrb[0].mxu0 %v412
      %v503 = vpop.f32.mrb[0].mxu0
      %v504 = vadd.f32 %v405, %v503
      %v505 = vpop.f32.mrb[0].mxu0
      %506 = vmatprep.mubr.f32.mxu0 0.0
      %507 = vmatmul.mubr.f32.gmra.mrb[0].mxu0 %v415
      %v508 = vpop.f32.mrb[0].mxu0
      %v509 = vadd.f32 %v405, %v508
      %v510 = vpop.f32.mrb[0].mxu0
      %511 = vmatprep.mubr.f32.mxu0 0.0
      %512 = vmatmul.mubr.f32.gmra.mrb[0].mxu0 %v418
      %v513 = vpop.f32.mrb[0].mxu0
      %v514 = vadd.f32 %v405, %v513
      %v515 = vpop.f32.mrb[0].mxu0
      %516 = vmatprep.mubr.f32.mxu0 0.0
      %517 = vmatmul.mubr.f32.gmra.mrb[0].mxu0 %v421
      %v518 = vpop.f32.mrb[0].mxu0
      %v519 = vadd.f32 %v405, %v518
      %v520 = vpop.f32.mrb[0].mxu0
      %521 = vmatprep.mubr.f32.mxu0 0.0
      %522 = vmatmul.mubr.f32.gmra.mrb[0].mxu0 %v424
      %v523 = vpop.f32.mrb[0].mxu0
      %v524 = vadd.f32 %v405, %v523
      %v525 = vpop.f32.mrb[0].mxu0
      %526 = vmatprep.mubr.f32.mxu0 0.0
      %527 = vmatmul.mubr.f32.gmra.mrb[0].mxu0 %v427
      %v528 = vpop.f32.mrb[0].mxu0
      %v529 = vadd.f32 %v405, %v528
      %v530 = vpop.f32.mrb[0].mxu0
      %531 = vmatprep.mubr.f32.mxu0 0.0
      %532 = vmatmul.mubr.f32.gmra.mrb[0].mxu0 %v430
      %v533 = vpop.f32.mrb[0].mxu0
      %v534 = vadd.f32 %v405, %v533
      %v535 = vpop.f32.mrb[0].mxu0
      %536 = vdwg.mxu0
      %v537 = vld [vmem:[%s4] sm:$0xff]
      %v538 = vld [vmem:[%s4 + $0x8] sm:$0xff]
      %v539 = vld [vmem:[%s4 + $0x10] sm:$0xff]
      %v540 = vld [vmem:[%s4 + $0x18] sm:$0xff]
      %v541 = vld [vmem:[%s5] sm:$0x1]
      %v543 = vlaneseq
      %v544 = vshrl.u32 %v543, 7
      %v545 = vsub.s32 0, %v544
      %v546 = vrot.slane %v541, %v545
      %v549 = vsel %vm407, %v388, 0
      %v552 = vsel %vm407, %v389, 0
      %v555 = vsel %vm407, %v390, 0
      %v558 = vsel %vm407, %v391, 0
      %v561 = vsel %vm407, %v392, 0
      %v564 = vsel %vm407, %v393, 0
      %v567 = vsel %vm407, %v394, 0
      %v570 = vsel %vm407, %v395, 0
      %572 = vmatprep.subr.mxu0 0.0
      %573 = vmatpush1.msra.mxu0 %v537
      %574 = vmatprep.subr.mxu0 0.0
      %575 = vmatpush1.msra.mxu0 %v538
      %576 = vmatprep.subr.mxu0 0.0
      %577 = vmatpush1.msra.mxu0 %v539
      %578 = vmatprep.subr.mxu0 0.0
      %579 = vmatpush1.msra.mxu0 %v540
      %580 = vmatprep.subr.mxu0 0.0
      %581 = vmatpush1.msra.mxu0 0.0
      %582 = vmatprep.subr.mxu0 0.0
      %583 = vmatpush1.msra.mxu0 0.0
      %584 = vmatprep.subr.mxu0 0.0
      %585 = vmatpush1.msra.mxu0 0.0
      %586 = vmatprep.subr.mxu0 0.0
      %587 = vmatpush1.msra.mxu0 0.0
      %588 = vmatprep.subr.mxu0 0.0
      %589 = vmatpush1.msra.mxu0 0.0
      %590 = vmatprep.subr.mxu0 0.0
      %591 = vmatpush1.msra.mxu0 0.0
      %592 = vmatprep.subr.mxu0 0.0
      %593 = vmatpush1.msra.mxu0 0.0
      %594 = vmatprep.subr.mxu0 0.0
      %595 = vmatpush1.msra.mxu0 0.0
      %596 = vmatprep.subr.mxu0 0.0
      %597 = vmatpush1.msra.mxu0 0.0
      %598 = vmatprep.subr.mxu0 0.0
      %599 = vmatpush1.msra.mxu0 0.0
      %600 = vmatprep.subr.mxu0 0.0
      %601 = vmatpush1.msra.mxu0 0.0
      %602 = vmatprep.subr.mxu0 0.0
      %603 = vmatpush1.msra.mxu0 0.0
      %604 = vmatprep.subr.mxu0 0.0
      %605 = vmatpush1.msra.mxu0 0.0
      %606 = vmatprep.subr.mxu0 0.0
      %607 = vmatpush1.msra.mxu0 0.0
      %608 = vmatprep.subr.mxu0 0.0
      %609 = vmatpush1.msra.mxu0 0.0
      %610 = vmatprep.subr.mxu0 0.0
      %611 = vmatpush1.msra.mxu0 0.0
      %612 = vmatprep.subr.mxu0 0.0
      %613 = vmatpush1.msra.mxu0 0.0
      %614 = vmatprep.subr.mxu0 0.0
      %615 = vmatpush1.msra.mxu0 0.0
      %616 = vmatprep.subr.mxu0 0.0
      %617 = vmatpush1.msra.mxu0 0.0
      %618 = vmatprep.subr.mxu0 0.0
      %619 = vmatpush1.msra.mxu0 0.0
      %620 = vmatprep.subr.mxu0 0.0
      %621 = vmatpush1.msra.mxu0 0.0
      %622 = vmatprep.subr.mxu0 0.0
      %623 = vmatpush1.msra.mxu0 0.0
      %624 = vmatprep.subr.mxu0 0.0
      %625 = vmatpush1.msra.mxu0 0.0
      %626 = vmatprep.subr.mxu0 0.0
      %627 = vmatpush1.msra.mxu0 0.0
      %628 = vmatprep.subr.mxu0 0.0
      %629 = vmatpush1.msra.mxu0 0.0
      %630 = vmatprep.subr.mxu0 0.0
      %631 = vmatpush1.msra.mxu0 0.0
      %632 = vmatprep.subr.mxu0 0.0
      %633 = vmatpush1.msra.mxu0 0.0
      %634 = vmatprep.subr.mxu0 0.0
      %635 = vmatpush1.msra.mxu0 0.0
      %636 = vmatprep.mubr.f32.mxu0 0.0
      %637 = vmatmul.mubr.f32.gmra.mrb[0].mxu0 %v549
      %v638 = vpop.f32.mrb[0].mxu0
      %v639 = vadd.f32 %v546, %v638
      %v640 = vpop.f32.mrb[0].mxu0
      %641 = vmatprep.mubr.f32.mxu0 0.0
      %642 = vmatmul.mubr.f32.gmra.mrb[0].mxu0 %v552
      %v643 = vpop.f32.mrb[0].mxu0
      %v644 = vadd.f32 %v546, %v643
      %v645 = vpop.f32.mrb[0].mxu0
      %646 = vmatprep.mubr.f32.mxu0 0.0
      %647 = vmatmul.mubr.f32.gmra.mrb[0].mxu0 %v555
      %v648 = vpop.f32.mrb[0].mxu0
      %v649 = vadd.f32 %v546, %v648
      %v650 = vpop.f32.mrb[0].mxu0
      %651 = vmatprep.mubr.f32.mxu0 0.0
      %652 = vmatmul.mubr.f32.gmra.mrb[0].mxu0 %v558
      %v653 = vpop.f32.mrb[0].mxu0
      %v654 = vadd.f32 %v546, %v653
      %v655 = vpop.f32.mrb[0].mxu0
      %656 = vmatprep.mubr.f32.mxu0 0.0
      %657 = vmatmul.mubr.f32.gmra.mrb[0].mxu0 %v561
      %v658 = vpop.f32.mrb[0].mxu0
      %v659 = vadd.f32 %v546, %v658
      %v660 = vpop.f32.mrb[0].mxu0
      %661 = vmatprep.mubr.f32.mxu0 0.0
      %662 = vmatmul.mubr.f32.gmra.mrb[0].mxu0 %v564
      %v663 = vpop.f32.mrb[0].mxu0
      %v664 = vadd.f32 %v546, %v663
      %v665 = vpop.f32.mrb[0].mxu0
      %666 = vmatprep.mubr.f32.mxu0 0.0
      %667 = vmatmul.mubr.f32.gmra.mrb[0].mxu0 %v567
      %v668 = vpop.f32.mrb[0].mxu0
      %v669 = vadd.f32 %v546, %v668
      %v670 = vpop.f32.mrb[0].mxu0
      %671 = vmatprep.mubr.f32.mxu0 0.0
      %672 = vmatmul.mubr.f32.gmra.mrb[0].mxu0 %v570
      %v673 = vpop.f32.mrb[0].mxu0
      %v674 = vadd.f32 %v546, %v673
      %v675 = vpop.f32.mrb[0].mxu0
      %676 = vdwg.mxu0
      %vm677 = vcmask 64512
      %v679 = vsel %vm677, %v499, 0
      %v682 = vsel %vm677, %v639, 0
      %684 = vmatprep.subr.mxu0 0.0
      %685 = vmatpush1.xpose.msra.mxu0 %v682
      %686 = vmatprep.subr.mxu0 0.0
      %687 = vmatpush1.xpose.msra.mxu0 0.0
      %688 = vmatprep.subr.mxu0 0.0
      %689 = vmatpush1.xpose.msra.mxu0 0.0
      %690 = vmatprep.subr.mxu0 0.0
      %691 = vmatpush1.xpose.msra.mxu0 0.0
      %692 = vmatprep.subr.mxu0 0.0
      %693 = vmatpush1.xpose.msra.mxu0 0.0
      %694 = vmatprep.subr.mxu0 0.0
      %695 = vmatpush1.xpose.msra.mxu0 0.0
      %696 = vmatprep.subr.mxu0 0.0
      %697 = vmatpush1.xpose.msra.mxu0 0.0
      %698 = vmatprep.subr.mxu0 0.0
      %699 = vmatpush1.xpose.msra.mxu0 0.0
      %700 = vmatprep.subr.mxu0 0.0
      %701 = vmatpush1.xpose.msra.mxu0 0.0
      %702 = vmatprep.subr.mxu0 0.0
      %703 = vmatpush1.xpose.msra.mxu0 0.0
      %704 = vmatprep.subr.mxu0 0.0
      %705 = vmatpush1.xpose.msra.mxu0 0.0
      %706 = vmatprep.subr.mxu0 0.0
      %707 = vmatpush1.xpose.msra.mxu0 0.0
      %708 = vmatprep.subr.mxu0 0.0
      %709 = vmatpush1.xpose.msra.mxu0 0.0
      %710 = vmatprep.subr.mxu0 0.0
      %711 = vmatpush1.xpose.msra.mxu0 0.0
      %712 = vmatprep.subr.mxu0 0.0
      %713 = vmatpush1.xpose.msra.mxu0 0.0
      %714 = vmatprep.subr.mxu0 0.0
      %715 = vmatpush1.xpose.msra.mxu0 0.0
      %716 = vmatprep.subr.mxu0 0.0
      %717 = vmatpush1.xpose.msra.mxu0 0.0
      %718 = vmatprep.subr.mxu0 0.0
      %719 = vmatpush1.xpose.msra.mxu0 0.0
      %720 = vmatprep.subr.mxu0 0.0
      %721 = vmatpush1.xpose.msra.mxu0 0.0
      %722 = vmatprep.subr.mxu0 0.0
      %723 = vmatpush1.xpose.msra.mxu0 0.0
      %724 = vmatprep.subr.mxu0 0.0
      %725 = vmatpush1.xpose.msra.mxu0 0.0
      %726 = vmatprep.subr.mxu0 0.0
      %727 = vmatpush1.xpose.msra.mxu0 0.0
      %728 = vmatprep.subr.mxu0 0.0
      %729 = vmatpush1.xpose.msra.mxu0 0.0
      %730 = vmatprep.subr.mxu0 0.0
      %731 = vmatpush1.xpose.msra.mxu0 0.0
      %732 = vmatprep.subr.mxu0 0.0
      %733 = vmatpush1.xpose.msra.mxu0 0.0
      %734 = vmatprep.subr.mxu0 0.0
      %735 = vmatpush1.xpose.msra.mxu0 0.0
      %736 = vmatprep.subr.mxu0 0.0
      %737 = vmatpush1.xpose.msra.mxu0 0.0
      %738 = vmatprep.subr.mxu0 0.0
      %739 = vmatpush1.xpose.msra.mxu0 0.0
      %740 = vmatprep.subr.mxu0 0.0
      %741 = vmatpush1.xpose.msra.mxu0 0.0
      %742 = vmatprep.subr.mxu0 0.0
      %743 = vmatpush1.xpose.msra.mxu0 0.0
      %744 = vmatprep.subr.mxu0 0.0
      %745 = vmatpush1.xpose.msra.mxu0 0.0
      %746 = vmatprep.subr.mxu0 0.0
      %747 = vmatpush1.xpose.msra.mxu0 0.0
      %748 = vmatprep.mubr.f32.mxu0 0.0
      %749 = vmatmul.mubr.f32.gmra.mrb[0].mxu0 %v679
      %v750 = vpop.f32.mrb[0].mxu0
      %v751 = vadd.f32 0.0, %v750
      %v752 = vpop.f32.mrb[0].mxu0
      %753 = vdwg.mxu0
      %v755 = vsel %vm677, %v504, 0
      %v758 = vsel %vm677, %v644, 0
      %760 = vmatprep.subr.mxu0 0.0
      %761 = vmatpush1.xpose.msra.mxu0 %v758
      %762 = vmatprep.subr.mxu0 0.0
      %763 = vmatpush1.xpose.msra.mxu0 0.0
      %764 = vmatprep.subr.mxu0 0.0
      %765 = vmatpush1.xpose.msra.mxu0 0.0
      %766 = vmatprep.subr.mxu0 0.0
      %767 = vmatpush1.xpose.msra.mxu0 0.0
      %768 = vmatprep.subr.mxu0 0.0
      %769 = vmatpush1.xpose.msra.mxu0 0.0
      %770 = vmatprep.subr.mxu0 0.0
      %771 = vmatpush1.xpose.msra.mxu0 0.0
      %772 = vmatprep.subr.mxu0 0.0
      %773 = vmatpush1.xpose.msra.mxu0 0.0
      %774 = vmatprep.subr.mxu0 0.0
      %775 = vmatpush1.xpose.msra.mxu0 0.0
      %776 = vmatprep.subr.mxu0 0.0
      %777 = vmatpush1.xpose.msra.mxu0 0.0
      %778 = vmatprep.subr.mxu0 0.0
      %779 = vmatpush1.xpose.msra.mxu0 0.0
      %780 = vmatprep.subr.mxu0 0.0
      %781 = vmatpush1.xpose.msra.mxu0 0.0
      %782 = vmatprep.subr.mxu0 0.0
      %783 = vmatpush1.xpose.msra.mxu0 0.0
      %784 = vmatprep.subr.mxu0 0.0
      %785 = vmatpush1.xpose.msra.mxu0 0.0
      %786 = vmatprep.subr.mxu0 0.0
      %787 = vmatpush1.xpose.msra.mxu0 0.0
      %788 = vmatprep.subr.mxu0 0.0
      %789 = vmatpush1.xpose.msra.mxu0 0.0
      %790 = vmatprep.subr.mxu0 0.0
      %791 = vmatpush1.xpose.msra.mxu0 0.0
      %792 = vmatprep.subr.mxu0 0.0
      %793 = vmatpush1.xpose.msra.mxu0 0.0
      %794 = vmatprep.subr.mxu0 0.0
      %795 = vmatpush1.xpose.msra.mxu0 0.0
      %796 = vmatprep.subr.mxu0 0.0
      %797 = vmatpush1.xpose.msra.mxu0 0.0
      %798 = vmatprep.subr.mxu0 0.0
      %799 = vmatpush1.xpose.msra.mxu0 0.0
      %800 = vmatprep.subr.mxu0 0.0
      %801 = vmatpush1.xpose.msra.mxu0 0.0
      %802 = vmatprep.subr.mxu0 0.0
      %803 = vmatpush1.xpose.msra.mxu0 0.0
      %804 = vmatprep.subr.mxu0 0.0
      %805 = vmatpush1.xpose.msra.mxu0 0.0
      %806 = vmatprep.subr.mxu0 0.0
      %807 = vmatpush1.xpose.msra.mxu0 0.0
      %808 = vmatprep.subr.mxu0 0.0
      %809 = vmatpush1.xpose.msra.mxu0 0.0
      %810 = vmatprep.subr.mxu0 0.0
      %811 = vmatpush1.xpose.msra.mxu0 0.0
      %812 = vmatprep.subr.mxu0 0.0
      %813 = vmatpush1.xpose.msra.mxu0 0.0
      %814 = vmatprep.subr.mxu0 0.0
      %815 = vmatpush1.xpose.msra.mxu0 0.0
      %816 = vmatprep.subr.mxu0 0.0
      %817 = vmatpush1.xpose.msra.mxu0 0.0
      %818 = vmatprep.subr.mxu0 0.0
      %819 = vmatpush1.xpose.msra.mxu0 0.0
      %820 = vmatprep.subr.mxu0 0.0
      %821 = vmatpush1.xpose.msra.mxu0 0.0
      %822 = vmatprep.subr.mxu0 0.0
      %823 = vmatpush1.xpose.msra.mxu0 0.0
      %824 = vmatprep.mubr.f32.mxu0 0.0
      %825 = vmatmul.mubr.f32.gmra.mrb[0].mxu0 %v755
      %v826 = vpop.f32.mrb[0].mxu0
      %v827 = vadd.f32 0.0, %v826
      %v828 = vpop.f32.mrb[0].mxu0
      %829 = vdwg.mxu0
      %v831 = vsel %vm677, %v509, 0
      %v834 = vsel %vm677, %v649, 0
      %836 = vmatprep.subr.mxu0 0.0
      %837 = vmatpush1.xpose.msra.mxu0 %v834
      %838 = vmatprep.subr.mxu0 0.0
      %839 = vmatpush1.xpose.msra.mxu0 0.0
      %840 = vmatprep.subr.mxu0 0.0
      %841 = vmatpush1.xpose.msra.mxu0 0.0
      %842 = vmatprep.subr.mxu0 0.0
      %843 = vmatpush1.xpose.msra.mxu0 0.0
      %844 = vmatprep.subr.mxu0 0.0
      %845 = vmatpush1.xpose.msra.mxu0 0.0
      %846 = vmatprep.subr.mxu0 0.0
      %847 = vmatpush1.xpose.msra.mxu0 0.0
      %848 = vmatprep.subr.mxu0 0.0
      %849 = vmatpush1.xpose.msra.mxu0 0.0
      %850 = vmatprep.subr.mxu0 0.0
      %851 = vmatpush1.xpose.msra.mxu0 0.0
      %852 = vmatprep.subr.mxu0 0.0
      %853 = vmatpush1.xpose.msra.mxu0 0.0
      %854 = vmatprep.subr.mxu0 0.0
      %855 = vmatpush1.xpose.msra.mxu0 0.0
      %856 = vmatprep.subr.mxu0 0.0
      %857 = vmatpush1.xpose.msra.mxu0 0.0
      %858 = vmatprep.subr.mxu0 0.0
      %859 = vmatpush1.xpose.msra.mxu0 0.0
      %860 = vmatprep.subr.mxu0 0.0
      %861 = vmatpush1.xpose.msra.mxu0 0.0
      %862 = vmatprep.subr.mxu0 0.0
      %863 = vmatpush1.xpose.msra.mxu0 0.0
      %864 = vmatprep.subr.mxu0 0.0
      %865 = vmatpush1.xpose.msra.mxu0 0.0
      %866 = vmatprep.subr.mxu0 0.0
      %867 = vmatpush1.xpose.msra.mxu0 0.0
      %868 = vmatprep.subr.mxu0 0.0
      %869 = vmatpush1.xpose.msra.mxu0 0.0
      %870 = vmatprep.subr.mxu0 0.0
      %871 = vmatpush1.xpose.msra.mxu0 0.0
      %872 = vmatprep.subr.mxu0 0.0
      %873 = vmatpush1.xpose.msra.mxu0 0.0
      %874 = vmatprep.subr.mxu0 0.0
      %875 = vmatpush1.xpose.msra.mxu0 0.0
      %876 = vmatprep.subr.mxu0 0.0
      %877 = vmatpush1.xpose.msra.mxu0 0.0
      %878 = vmatprep.subr.mxu0 0.0
      %879 = vmatpush1.xpose.msra.mxu0 0.0
      %880 = vmatprep.subr.mxu0 0.0
      %881 = vmatpush1.xpose.msra.mxu0 0.0
      %882 = vmatprep.subr.mxu0 0.0
      %883 = vmatpush1.xpose.msra.mxu0 0.0
      %884 = vmatprep.subr.mxu0 0.0
      %885 = vmatpush1.xpose.msra.mxu0 0.0
      %886 = vmatprep.subr.mxu0 0.0
      %887 = vmatpush1.xpose.msra.mxu0 0.0
      %888 = vmatprep.subr.mxu0 0.0
      %889 = vmatpush1.xpose.msra.mxu0 0.0
      %890 = vmatprep.subr.mxu0 0.0
      %891 = vmatpush1.xpose.msra.mxu0 0.0
      %892 = vmatprep.subr.mxu0 0.0
      %893 = vmatpush1.xpose.msra.mxu0 0.0
      %894 = vmatprep.subr.mxu0 0.0
      %895 = vmatpush1.xpose.msra.mxu0 0.0
      %896 = vmatprep.subr.mxu0 0.0
      %897 = vmatpush1.xpose.msra.mxu0 0.0
      %898 = vmatprep.subr.mxu0 0.0
      %899 = vmatpush1.xpose.msra.mxu0 0.0
      %900 = vmatprep.mubr.f32.mxu0 0.0
      %901 = vmatmul.mubr.f32.gmra.mrb[0].mxu0 %v831
      %v902 = vpop.f32.mrb[0].mxu0
      %v903 = vadd.f32 0.0, %v902
      %v904 = vpop.f32.mrb[0].mxu0
      %905 = vdwg.mxu0
      %v907 = vsel %vm677, %v514, 0
      %v910 = vsel %vm677, %v654, 0
      %912 = vmatprep.subr.mxu0 0.0
      %913 = vmatpush1.xpose.msra.mxu0 %v910
      %914 = vmatprep.subr.mxu0 0.0
      %915 = vmatpush1.xpose.msra.mxu0 0.0
      %916 = vmatprep.subr.mxu0 0.0
      %917 = vmatpush1.xpose.msra.mxu0 0.0
      %918 = vmatprep.subr.mxu0 0.0
      %919 = vmatpush1.xpose.msra.mxu0 0.0
      %920 = vmatprep.subr.mxu0 0.0
      %921 = vmatpush1.xpose.msra.mxu0 0.0
      %922 = vmatprep.subr.mxu0 0.0
      %923 = vmatpush1.xpose.msra.mxu0 0.0
      %924 = vmatprep.subr.mxu0 0.0
      %925 = vmatpush1.xpose.msra.mxu0 0.0
      %926 = vmatprep.subr.mxu0 0.0
      %927 = vmatpush1.xpose.msra.mxu0 0.0
      %928 = vmatprep.subr.mxu0 0.0
      %929 = vmatpush1.xpose.msra.mxu0 0.0
      %930 = vmatprep.subr.mxu0 0.0
      %931 = vmatpush1.xpose.msra.mxu0 0.0
      %932 = vmatprep.subr.mxu0 0.0
      %933 = vmatpush1.xpose.msra.mxu0 0.0
      %934 = vmatprep.subr.mxu0 0.0
      %935 = vmatpush1.xpose.msra.mxu0 0.0
      %936 = vmatprep.subr.mxu0 0.0
      %937 = vmatpush1.xpose.msra.mxu0 0.0
      %938 = vmatprep.subr.mxu0 0.0
      %939 = vmatpush1.xpose.msra.mxu0 0.0
      %940 = vmatprep.subr.mxu0 0.0
      %941 = vmatpush1.xpose.msra.mxu0 0.0
      %942 = vmatprep.subr.mxu0 0.0
      %943 = vmatpush1.xpose.msra.mxu0 0.0
      %944 = vmatprep.subr.mxu0 0.0
      %945 = vmatpush1.xpose.msra.mxu0 0.0
      %946 = vmatprep.subr.mxu0 0.0
      %947 = vmatpush1.xpose.msra.mxu0 0.0
      %948 = vmatprep.subr.mxu0 0.0
      %949 = vmatpush1.xpose.msra.mxu0 0.0
      %950 = vmatprep.subr.mxu0 0.0
      %951 = vmatpush1.xpose.msra.mxu0 0.0
      %952 = vmatprep.subr.mxu0 0.0
      %953 = vmatpush1.xpose.msra.mxu0 0.0
      %954 = vmatprep.subr.mxu0 0.0
      %955 = vmatpush1.xpose.msra.mxu0 0.0
      %956 = vmatprep.subr.mxu0 0.0
      %957 = vmatpush1.xpose.msra.mxu0 0.0
      %958 = vmatprep.subr.mxu0 0.0
      %959 = vmatpush1.xpose.msra.mxu0 0.0
      %960 = vmatprep.subr.mxu0 0.0
      %961 = vmatpush1.xpose.msra.mxu0 0.0
      %962 = vmatprep.subr.mxu0 0.0
      %963 = vmatpush1.xpose.msra.mxu0 0.0
      %964 = vmatprep.subr.mxu0 0.0
      %965 = vmatpush1.xpose.msra.mxu0 0.0
      %966 = vmatprep.subr.mxu0 0.0
      %967 = vmatpush1.xpose.msra.mxu0 0.0
      %968 = vmatprep.subr.mxu0 0.0
      %969 = vmatpush1.xpose.msra.mxu0 0.0
      %970 = vmatprep.subr.mxu0 0.0
      %971 = vmatpush1.xpose.msra.mxu0 0.0
      %972 = vmatprep.subr.mxu0 0.0
      %973 = vmatpush1.xpose.msra.mxu0 0.0
      %974 = vmatprep.subr.mxu0 0.0
      %975 = vmatpush1.xpose.msra.mxu0 0.0
      %976 = vmatprep.mubr.f32.mxu0 0.0
      %977 = vmatmul.mubr.f32.gmra.mrb[0].mxu0 %v907
      %v978 = vpop.f32.mrb[0].mxu0
      %v979 = vadd.f32 0.0, %v978
      %v980 = vpop.f32.mrb[0].mxu0
      %981 = vdwg.mxu0
      %v983 = vsel %vm677, %v519, 0
      %v986 = vsel %vm677, %v659, 0
      %988 = vmatprep.subr.mxu0 0.0
      %989 = vmatpush1.xpose.msra.mxu0 %v986
      %990 = vmatprep.subr.mxu0 0.0
      %991 = vmatpush1.xpose.msra.mxu0 0.0
      %992 = vmatprep.subr.mxu0 0.0
      %993 = vmatpush1.xpose.msra.mxu0 0.0
      %994 = vmatprep.subr.mxu0 0.0
      %995 = vmatpush1.xpose.msra.mxu0 0.0
      %996 = vmatprep.subr.mxu0 0.0
      %997 = vmatpush1.xpose.msra.mxu0 0.0
      %998 = vmatprep.subr.mxu0 0.0
      %999 = vmatpush1.xpose.msra.mxu0 0.0
      %1000 = vmatprep.subr.mxu0 0.0
      %1001 = vmatpush1.xpose.msra.mxu0 0.0
      %1002 = vmatprep.subr.mxu0 0.0
      %1003 = vmatpush1.xpose.msra.mxu0 0.0
      %1004 = vmatprep.subr.mxu0 0.0
      %1005 = vmatpush1.xpose.msra.mxu0 0.0
      %1006 = vmatprep.subr.mxu0 0.0
      %1007 = vmatpush1.xpose.msra.mxu0 0.0
      %1008 = vmatprep.subr.mxu0 0.0
      %1009 = vmatpush1.xpose.msra.mxu0 0.0
      %1010 = vmatprep.subr.mxu0 0.0
      %1011 = vmatpush1.xpose.msra.mxu0 0.0
      %1012 = vmatprep.subr.mxu0 0.0
      %1013 = vmatpush1.xpose.msra.mxu0 0.0
      %1014 = vmatprep.subr.mxu0 0.0
      %1015 = vmatpush1.xpose.msra.mxu0 0.0
      %1016 = vmatprep.subr.mxu0 0.0
      %1017 = vmatpush1.xpose.msra.mxu0 0.0
      %1018 = vmatprep.subr.mxu0 0.0
      %1019 = vmatpush1.xpose.msra.mxu0 0.0
      %1020 = vmatprep.subr.mxu0 0.0
      %1021 = vmatpush1.xpose.msra.mxu0 0.0
      %1022 = vmatprep.subr.mxu0 0.0
      %1023 = vmatpush1.xpose.msra.mxu0 0.0
      %1024 = vmatprep.subr.mxu0 0.0
      %1025 = vmatpush1.xpose.msra.mxu0 0.0
      %1026 = vmatprep.subr.mxu0 0.0
      %1027 = vmatpush1.xpose.msra.mxu0 0.0
      %1028 = vmatprep.subr.mxu0 0.0
      %1029 = vmatpush1.xpose.msra.mxu0 0.0
      %1030 = vmatprep.subr.mxu0 0.0
      %1031 = vmatpush1.xpose.msra.mxu0 0.0
      %1032 = vmatprep.subr.mxu0 0.0
      %1033 = vmatpush1.xpose.msra.mxu0 0.0
      %1034 = vmatprep.subr.mxu0 0.0
      %1035 = vmatpush1.xpose.msra.mxu0 0.0
      %1036 = vmatprep.subr.mxu0 0.0
      %1037 = vmatpush1.xpose.msra.mxu0 0.0
      %1038 = vmatprep.subr.mxu0 0.0
      %1039 = vmatpush1.xpose.msra.mxu0 0.0
      %1040 = vmatprep.subr.mxu0 0.0
      %1041 = vmatpush1.xpose.msra.mxu0 0.0
      %1042 = vmatprep.subr.mxu0 0.0
      %1043 = vmatpush1.xpose.msra.mxu0 0.0
      %1044 = vmatprep.subr.mxu0 0.0
      %1045 = vmatpush1.xpose.msra.mxu0 0.0
      %1046 = vmatprep.subr.mxu0 0.0
      %1047 = vmatpush1.xpose.msra.mxu0 0.0
      %1048 = vmatprep.subr.mxu0 0.0
      %1049 = vmatpush1.xpose.msra.mxu0 0.0
      %1050 = vmatprep.subr.mxu0 0.0
      %1051 = vmatpush1.xpose.msra.mxu0 0.0
      %1052 = vmatprep.mubr.f32.mxu0 0.0
      %1053 = vmatmul.mubr.f32.gmra.mrb[0].mxu0 %v983
      %v1054 = vpop.f32.mrb[0].mxu0
      %v1055 = vadd.f32 0.0, %v1054
      %v1056 = vpop.f32.mrb[0].mxu0
      %1057 = vdwg.mxu0
      %v1059 = vsel %vm677, %v524, 0
      %v1062 = vsel %vm677, %v664, 0
      %1064 = vmatprep.subr.mxu0 0.0
      %1065 = vmatpush1.xpose.msra.mxu0 %v1062
      %1066 = vmatprep.subr.mxu0 0.0
      %1067 = vmatpush1.xpose.msra.mxu0 0.0
      %1068 = vmatprep.subr.mxu0 0.0
      %1069 = vmatpush1.xpose.msra.mxu0 0.0
      %1070 = vmatprep.subr.mxu0 0.0
      %1071 = vmatpush1.xpose.msra.mxu0 0.0
      %1072 = vmatprep.subr.mxu0 0.0
      %1073 = vmatpush1.xpose.msra.mxu0 0.0
      %1074 = vmatprep.subr.mxu0 0.0
      %1075 = vmatpush1.xpose.msra.mxu0 0.0
      %1076 = vmatprep.subr.mxu0 0.0
      %1077 = vmatpush1.xpose.msra.mxu0 0.0
      %1078 = vmatprep.subr.mxu0 0.0
      %1079 = vmatpush1.xpose.msra.mxu0 0.0
      %1080 = vmatprep.subr.mxu0 0.0
      %1081 = vmatpush1.xpose.msra.mxu0 0.0
      %1082 = vmatprep.subr.mxu0 0.0
      %1083 = vmatpush1.xpose.msra.mxu0 0.0
      %1084 = vmatprep.subr.mxu0 0.0
      %1085 = vmatpush1.xpose.msra.mxu0 0.0
      %1086 = vmatprep.subr.mxu0 0.0
      %1087 = vmatpush1.xpose.msra.mxu0 0.0
      %1088 = vmatprep.subr.mxu0 0.0
      %1089 = vmatpush1.xpose.msra.mxu0 0.0
      %1090 = vmatprep.subr.mxu0 0.0
      %1091 = vmatpush1.xpose.msra.mxu0 0.0
      %1092 = vmatprep.subr.mxu0 0.0
      %1093 = vmatpush1.xpose.msra.mxu0 0.0
      %1094 = vmatprep.subr.mxu0 0.0
      %1095 = vmatpush1.xpose.msra.mxu0 0.0
      %1096 = vmatprep.subr.mxu0 0.0
      %1097 = vmatpush1.xpose.msra.mxu0 0.0
      %1098 = vmatprep.subr.mxu0 0.0
      %1099 = vmatpush1.xpose.msra.mxu0 0.0
      %1100 = vmatprep.subr.mxu0 0.0
      %1101 = vmatpush1.xpose.msra.mxu0 0.0
      %1102 = vmatprep.subr.mxu0 0.0
      %1103 = vmatpush1.xpose.msra.mxu0 0.0
      %1104 = vmatprep.subr.mxu0 0.0
      %1105 = vmatpush1.xpose.msra.mxu0 0.0
      %1106 = vmatprep.subr.mxu0 0.0
      %1107 = vmatpush1.xpose.msra.mxu0 0.0
      %1108 = vmatprep.subr.mxu0 0.0
      %1109 = vmatpush1.xpose.msra.mxu0 0.0
      %1110 = vmatprep.subr.mxu0 0.0
      %1111 = vmatpush1.xpose.msra.mxu0 0.0
      %1112 = vmatprep.subr.mxu0 0.0
      %1113 = vmatpush1.xpose.msra.mxu0 0.0
      %1114 = vmatprep.subr.mxu0 0.0
      %1115 = vmatpush1.xpose.msra.mxu0 0.0
      %1116 = vmatprep.subr.mxu0 0.0
      %1117 = vmatpush1.xpose.msra.mxu0 0.0
      %1118 = vmatprep.subr.mxu0 0.0
      %1119 = vmatpush1.xpose.msra.mxu0 0.0
      %1120 = vmatprep.subr.mxu0 0.0
      %1121 = vmatpush1.xpose.msra.mxu0 0.0
      %1122 = vmatprep.subr.mxu0 0.0
      %1123 = vmatpush1.xpose.msra.mxu0 0.0
      %1124 = vmatprep.subr.mxu0 0.0
      %1125 = vmatpush1.xpose.msra.mxu0 0.0
      %1126 = vmatprep.subr.mxu0 0.0
      %1127 = vmatpush1.xpose.msra.mxu0 0.0
      %1128 = vmatprep.mubr.f32.mxu0 0.0
      %1129 = vmatmul.mubr.f32.gmra.mrb[0].mxu0 %v1059
      %v1130 = vpop.f32.mrb[0].mxu0
      %v1131 = vadd.f32 0.0, %v1130
      %v1132 = vpop.f32.mrb[0].mxu0
      %1133 = vdwg.mxu0
      %v1135 = vsel %vm677, %v529, 0
      %v1138 = vsel %vm677, %v669, 0
      %1140 = vmatprep.subr.mxu0 0.0
      %1141 = vmatpush1.xpose.msra.mxu0 %v1138
      %1142 = vmatprep.subr.mxu0 0.0
      %1143 = vmatpush1.xpose.msra.mxu0 0.0
      %1144 = vmatprep.subr.mxu0 0.0
      %1145 = vmatpush1.xpose.msra.mxu0 0.0
      %1146 = vmatprep.subr.mxu0 0.0
      %1147 = vmatpush1.xpose.msra.mxu0 0.0
      %1148 = vmatprep.subr.mxu0 0.0
      %1149 = vmatpush1.xpose.msra.mxu0 0.0
      %1150 = vmatprep.subr.mxu0 0.0
      %1151 = vmatpush1.xpose.msra.mxu0 0.0
      %1152 = vmatprep.subr.mxu0 0.0
      %1153 = vmatpush1.xpose.msra.mxu0 0.0
      %1154 = vmatprep.subr.mxu0 0.0
      %1155 = vmatpush1.xpose.msra.mxu0 0.0
      %1156 = vmatprep.subr.mxu0 0.0
      %1157 = vmatpush1.xpose.msra.mxu0 0.0
      %1158 = vmatprep.subr.mxu0 0.0
      %1159 = vmatpush1.xpose.msra.mxu0 0.0
      %1160 = vmatprep.subr.mxu0 0.0
      %1161 = vmatpush1.xpose.msra.mxu0 0.0
      %1162 = vmatprep.subr.mxu0 0.0
      %1163 = vmatpush1.xpose.msra.mxu0 0.0
      %1164 = vmatprep.subr.mxu0 0.0
      %1165 = vmatpush1.xpose.msra.mxu0 0.0
      %1166 = vmatprep.subr.mxu0 0.0
      %1167 = vmatpush1.xpose.msra.mxu0 0.0
      %1168 = vmatprep.subr.mxu0 0.0
      %1169 = vmatpush1.xpose.msra.mxu0 0.0
      %1170 = vmatprep.subr.mxu0 0.0
      %1171 = vmatpush1.xpose.msra.mxu0 0.0
      %1172 = vmatprep.subr.mxu0 0.0
      %1173 = vmatpush1.xpose.msra.mxu0 0.0
      %1174 = vmatprep.subr.mxu0 0.0
      %1175 = vmatpush1.xpose.msra.mxu0 0.0
      %1176 = vmatprep.subr.mxu0 0.0
      %1177 = vmatpush1.xpose.msra.mxu0 0.0
      %1178 = vmatprep.subr.mxu0 0.0
      %1179 = vmatpush1.xpose.msra.mxu0 0.0
      %1180 = vmatprep.subr.mxu0 0.0
      %1181 = vmatpush1.xpose.msra.mxu0 0.0
      %1182 = vmatprep.subr.mxu0 0.0
      %1183 = vmatpush1.xpose.msra.mxu0 0.0
      %1184 = vmatprep.subr.mxu0 0.0
      %1185 = vmatpush1.xpose.msra.mxu0 0.0
      %1186 = vmatprep.subr.mxu0 0.0
      %1187 = vmatpush1.xpose.msra.mxu0 0.0
      %1188 = vmatprep.subr.mxu0 0.0
      %1189 = vmatpush1.xpose.msra.mxu0 0.0
      %1190 = vmatprep.subr.mxu0 0.0
      %1191 = vmatpush1.xpose.msra.mxu0 0.0
      %1192 = vmatprep.subr.mxu0 0.0
      %1193 = vmatpush1.xpose.msra.mxu0 0.0
      %1194 = vmatprep.subr.mxu0 0.0
      %1195 = vmatpush1.xpose.msra.mxu0 0.0
      %1196 = vmatprep.subr.mxu0 0.0
      %1197 = vmatpush1.xpose.msra.mxu0 0.0
      %1198 = vmatprep.subr.mxu0 0.0
      %1199 = vmatpush1.xpose.msra.mxu0 0.0
      %1200 = vmatprep.subr.mxu0 0.0
      %1201 = vmatpush1.xpose.msra.mxu0 0.0
      %1202 = vmatprep.subr.mxu0 0.0
      %1203 = vmatpush1.xpose.msra.mxu0 0.0
      %1204 = vmatprep.mubr.f32.mxu0 0.0
      %1205 = vmatmul.mubr.f32.gmra.mrb[0].mxu0 %v1135
      %v1206 = vpop.f32.mrb[0].mxu0
      %v1207 = vadd.f32 0.0, %v1206
      %v1208 = vpop.f32.mrb[0].mxu0
      %1209 = vdwg.mxu0
      %v1211 = vsel %vm677, %v534, 0
      %v1214 = vsel %vm677, %v674, 0
      %1216 = vmatprep.subr.mxu0 0.0
      %1217 = vmatpush1.xpose.msra.mxu0 %v1214
      %1218 = vmatprep.subr.mxu0 0.0
      %1219 = vmatpush1.xpose.msra.mxu0 0.0
      %1220 = vmatprep.subr.mxu0 0.0
      %1221 = vmatpush1.xpose.msra.mxu0 0.0
      %1222 = vmatprep.subr.mxu0 0.0
      %1223 = vmatpush1.xpose.msra.mxu0 0.0
      %1224 = vmatprep.subr.mxu0 0.0
      %1225 = vmatpush1.xpose.msra.mxu0 0.0
      %1226 = vmatprep.subr.mxu0 0.0
      %1227 = vmatpush1.xpose.msra.mxu0 0.0
      %1228 = vmatprep.subr.mxu0 0.0
      %1229 = vmatpush1.xpose.msra.mxu0 0.0
      %1230 = vmatprep.subr.mxu0 0.0
      %1231 = vmatpush1.xpose.msra.mxu0 0.0
      %1232 = vmatprep.subr.mxu0 0.0
      %1233 = vmatpush1.xpose.msra.mxu0 0.0
      %1234 = vmatprep.subr.mxu0 0.0
      %1235 = vmatpush1.xpose.msra.mxu0 0.0
      %1236 = vmatprep.subr.mxu0 0.0
      %1237 = vmatpush1.xpose.msra.mxu0 0.0
      %1238 = vmatprep.subr.mxu0 0.0
      %1239 = vmatpush1.xpose.msra.mxu0 0.0
      %1240 = vmatprep.subr.mxu0 0.0
      %1241 = vmatpush1.xpose.msra.mxu0 0.0
      %1242 = vmatprep.subr.mxu0 0.0
      %1243 = vmatpush1.xpose.msra.mxu0 0.0
      %1244 = vmatprep.subr.mxu0 0.0
      %1245 = vmatpush1.xpose.msra.mxu0 0.0
      %1246 = vmatprep.subr.mxu0 0.0
      %1247 = vmatpush1.xpose.msra.mxu0 0.0
      %1248 = vmatprep.subr.mxu0 0.0
      %1249 = vmatpush1.xpose.msra.mxu0 0.0
      %1250 = vmatprep.subr.mxu0 0.0
      %1251 = vmatpush1.xpose.msra.mxu0 0.0
      %1252 = vmatprep.subr.mxu0 0.0
      %1253 = vmatpush1.xpose.msra.mxu0 0.0
      %1254 = vmatprep.subr.mxu0 0.0
      %1255 = vmatpush1.xpose.msra.mxu0 0.0
      %1256 = vmatprep.subr.mxu0 0.0
      %1257 = vmatpush1.xpose.msra.mxu0 0.0
      %1258 = vmatprep.subr.mxu0 0.0
      %1259 = vmatpush1.xpose.msra.mxu0 0.0
      %1260 = vmatprep.subr.mxu0 0.0
      %1261 = vmatpush1.xpose.msra.mxu0 0.0
      %1262 = vmatprep.subr.mxu0 0.0
      %1263 = vmatpush1.xpose.msra.mxu0 0.0
      %1264 = vmatprep.subr.mxu0 0.0
      %1265 = vmatpush1.xpose.msra.mxu0 0.0
      %1266 = vmatprep.subr.mxu0 0.0
      %1267 = vmatpush1.xpose.msra.mxu0 0.0
      %1268 = vmatprep.subr.mxu0 0.0
      %1269 = vmatpush1.xpose.msra.mxu0 0.0
      %1270 = vmatprep.subr.mxu0 0.0
      %1271 = vmatpush1.xpose.msra.mxu0 0.0
      %1272 = vmatprep.subr.mxu0 0.0
      %1273 = vmatpush1.xpose.msra.mxu0 0.0
      %1274 = vmatprep.subr.mxu0 0.0
      %1275 = vmatpush1.xpose.msra.mxu0 0.0
      %1276 = vmatprep.subr.mxu0 0.0
      %1277 = vmatpush1.xpose.msra.mxu0 0.0
      %1278 = vmatprep.subr.mxu0 0.0
      %1279 = vmatpush1.xpose.msra.mxu0 0.0
      %1280 = vmatprep.mubr.f32.mxu0 0.0
      %1281 = vmatmul.mubr.f32.gmra.mrb[0].mxu0 %v1211
      %v1282 = vpop.f32.mrb[0].mxu0
      %v1283 = vadd.f32 0.0, %v1282
      %v1284 = vpop.f32.mrb[0].mxu0
      %1285 = vdwg.mxu0
      %v1286 = vmul.f32 %v751, 0.35355338
      %v1287 = vmul.f32 %v827, 0.35355338
      %v1288 = vmul.f32 %v903, 0.35355338
      %v1289 = vmul.f32 %v979, 0.35355338
      %v1290 = vmul.f32 %v1055, 0.35355338
      %v1291 = vmul.f32 %v1131, 0.35355338
      %v1292 = vmul.f32 %v1207, 0.35355338
      %v1293 = vmul.f32 %v1283, 0.35355338
      %v1294 = vsel %vm677, %v1286, -inf
      %1295 = vmax.xlane.f32.xlu0 %v1294
      %v1296 = vpop.xlane.xlu0 %1295
      %v1297 = vsel %vm677, %v1287, -inf
      %1298 = vmax.xlane.f32.xlu0 %v1297
      %v1299 = vpop.xlane.xlu0 %1298
      %v1300 = vsel %vm677, %v1288, -inf
      %1301 = vmax.xlane.f32.xlu0 %v1300
      %v1302 = vpop.xlane.xlu0 %1301
      %v1303 = vsel %vm677, %v1289, -inf
      %1304 = vmax.xlane.f32.xlu0 %v1303
      %v1305 = vpop.xlane.xlu0 %1304
      %v1306 = vsel %vm677, %v1290, -inf
      %1307 = vmax.xlane.f32.xlu0 %v1306
      %v1308 = vpop.xlane.xlu0 %1307
      %v1309 = vsel %vm677, %v1291, -inf
      %1310 = vmax.xlane.f32.xlu0 %v1309
      %v1311 = vpop.xlane.xlu0 %1310
      %v1312 = vsel %vm677, %v1292, -inf
      %1313 = vmax.xlane.f32.xlu0 %v1312
      %v1314 = vpop.xlane.xlu0 %1313
      %v1315 = vsel %vm677, %v1293, -inf
      %1316 = vmax.xlane.f32.xlu0 %v1315
      %v1317 = vpop.xlane.xlu0 %1316
      %v1318 = vsub.f32 %v1286, %v1296
      %v1319 = vsub.f32 %v1287, %v1299
      %v1320 = vsub.f32 %v1288, %v1302
      %v1321 = vsub.f32 %v1289, %v1305
      %v1322 = vsub.f32 %v1290, %v1308
      %v1323 = vsub.f32 %v1291, %v1311
      %v1324 = vsub.f32 %v1292, %v1314
      %v1325 = vsub.f32 %v1293, %v1317
      %v1326 = vmul.f32 %v1318, 1.442695
      %v1327 = vpow.pop %v1326
      %v1328 = vmul.f32 %v1319, 1.442695
      %v1329 = vpow.pop %v1328
      %v1330 = vmul.f32 %v1320, 1.442695
      %v1331 = vpow.pop %v1330
      %v1332 = vmul.f32 %v1321, 1.442695
      %v1333 = vpow.pop %v1332
      %v1334 = vmul.f32 %v1322, 1.442695
      %v1335 = vpow.pop %v1334
      %v1336 = vmul.f32 %v1323, 1.442695
      %v1337 = vpow.pop %v1336
      %v1338 = vmul.f32 %v1324, 1.442695
      %v1339 = vpow.pop %v1338
      %v1340 = vmul.f32 %v1325, 1.442695
      %v1341 = vpow.pop %v1340
      %v1342 = vsel %vm677, %v1327, 0.0
      %1343 = vadd.xlane.f32.xlu0 %v1342
      %v1344 = vpop.xlane.xlu0 %1343
      %v1345 = vsel %vm677, %v1329, 0.0
      %1346 = vadd.xlane.f32.xlu0 %v1345
      %v1347 = vpop.xlane.xlu0 %1346
      %v1348 = vsel %vm677, %v1331, 0.0
      %1349 = vadd.xlane.f32.xlu0 %v1348
      %v1350 = vpop.xlane.xlu0 %1349
      %v1351 = vsel %vm677, %v1333, 0.0
      %1352 = vadd.xlane.f32.xlu0 %v1351
      %v1353 = vpop.xlane.xlu0 %1352
      %v1354 = vsel %vm677, %v1335, 0.0
      %1355 = vadd.xlane.f32.xlu0 %v1354
      %v1356 = vpop.xlane.xlu0 %1355
      %v1357 = vsel %vm677, %v1337, 0.0
      %1358 = vadd.xlane.f32.xlu0 %v1357
      %v1359 = vpop.xlane.xlu0 %1358
      %v1360 = vsel %vm677, %v1339, 0.0
      %1361 = vadd.xlane.f32.xlu0 %v1360
      %v1362 = vpop.xlane.xlu0 %1361
      %v1363 = vsel %vm677, %v1341, 0.0
      %1364 = vadd.xlane.f32.xlu0 %v1363
      %v1365 = vpop.xlane.xlu0 %1364
      %v1366 = vrcp.pop %v1344
      %v1367 = vmul.f32 %v1327, %v1366
      %v1368 = vrcp.pop %v1347
      %v1369 = vmul.f32 %v1329, %v1368
      %v1370 = vrcp.pop %v1350
      %v1371 = vmul.f32 %v1331, %v1370
      %v1372 = vrcp.pop %v1353
      %v1373 = vmul.f32 %v1333, %v1372
      %v1374 = vrcp.pop %v1356
      %v1375 = vmul.f32 %v1335, %v1374
      %v1376 = vrcp.pop %v1359
      %v1377 = vmul.f32 %v1337, %v1376
      %v1378 = vrcp.pop %v1362
      %v1379 = vmul.f32 %v1339, %v1378
      %v1380 = vrcp.pop %v1365
      %v1381 = vmul.f32 %v1341, %v1380
      %1382 = vrot.lane.b32.xlu0 %v639, 96
      %v1383 = vpop.permute.xlu0 %1382
      %v1386 = vsel %vm677, %v1367, 0
      %1388 = vmatprep.subr.mxu0 0.0
      %1389 = vmatpush1.msra.mxu0 %v1383
      %1390 = vmatprep.subr.mxu0 0.0
      %1391 = vmatpush1.msra.mxu0 0.0
      %1392 = vmatprep.subr.mxu0 0.0
      %1393 = vmatpush1.msra.mxu0 0.0
      %1394 = vmatprep.subr.mxu0 0.0
      %1395 = vmatpush1.msra.mxu0 0.0
      %1396 = vmatprep.subr.mxu0 0.0
      %1397 = vmatpush1.msra.mxu0 0.0
      %1398 = vmatprep.subr.mxu0 0.0
      %1399 = vmatpush1.msra.mxu0 0.0
      %1400 = vmatprep.subr.mxu0 0.0
      %1401 = vmatpush1.msra.mxu0 0.0
      %1402 = vmatprep.subr.mxu0 0.0
      %1403 = vmatpush1.msra.mxu0 0.0
      %1404 = vmatprep.subr.mxu0 0.0
      %1405 = vmatpush1.msra.mxu0 0.0
      %1406 = vmatprep.subr.mxu0 0.0
      %1407 = vmatpush1.msra.mxu0 0.0
      %1408 = vmatprep.subr.mxu0 0.0
      %1409 = vmatpush1.msra.mxu0 0.0
      %1410 = vmatprep.subr.mxu0 0.0
      %1411 = vmatpush1.msra.mxu0 0.0
      %1412 = vmatprep.subr.mxu0 0.0
      %1413 = vmatpush1.msra.mxu0 0.0
      %1414 = vmatprep.subr.mxu0 0.0
      %1415 = vmatpush1.msra.mxu0 0.0
      %1416 = vmatprep.subr.mxu0 0.0
      %1417 = vmatpush1.msra.mxu0 0.0
      %1418 = vmatprep.subr.mxu0 0.0
      %1419 = vmatpush1.msra.mxu0 0.0
      %1420 = vmatprep.subr.mxu0 0.0
      %1421 = vmatpush1.msra.mxu0 0.0
      %1422 = vmatprep.subr.mxu0 0.0
      %1423 = vmatpush1.msra.mxu0 0.0
      %1424 = vmatprep.subr.mxu0 0.0
      %1425 = vmatpush1.msra.mxu0 0.0
      %1426 = vmatprep.subr.mxu0 0.0
      %1427 = vmatpush1.msra.mxu0 0.0
      %1428 = vmatprep.subr.mxu0 0.0
      %1429 = vmatpush1.msra.mxu0 0.0
      %1430 = vmatprep.subr.mxu0 0.0
      %1431 = vmatpush1.msra.mxu0 0.0
      %1432 = vmatprep.subr.mxu0 0.0
      %1433 = vmatpush1.msra.mxu0 0.0
      %1434 = vmatprep.subr.mxu0 0.0
      %1435 = vmatpush1.msra.mxu0 0.0
      %1436 = vmatprep.subr.mxu0 0.0
      %1437 = vmatpush1.msra.mxu0 0.0
      %1438 = vmatprep.subr.mxu0 0.0
      %1439 = vmatpush1.msra.mxu0 0.0
      %1440 = vmatprep.subr.mxu0 0.0
      %1441 = vmatpush1.msra.mxu0 0.0
      %1442 = vmatprep.subr.mxu0 0.0
      %1443 = vmatpush1.msra.mxu0 0.0
      %1444 = vmatprep.subr.mxu0 0.0
      %1445 = vmatpush1.msra.mxu0 0.0
      %1446 = vmatprep.subr.mxu0 0.0
      %1447 = vmatpush1.msra.mxu0 0.0
      %1448 = vmatprep.subr.mxu0 0.0
      %1449 = vmatpush1.msra.mxu0 0.0
      %1450 = vmatprep.subr.mxu0 0.0
      %1451 = vmatpush1.msra.mxu0 0.0
      %1452 = vmatprep.mubr.f32.mxu0 0.0
      %1453 = vmatmul.mubr.f32.gmra.mrb[0].mxu0 %v1386
      %v1454 = vpop.f32.mrb[0].mxu0
      %v1455 = vadd.f32 0.0, %v1454
      %v1456 = vpop.f32.mrb[0].mxu0
      %1457 = vdwg.mxu0
      %1458 = vrot.lane.b32.xlu0 %v644, 96
      %v1459 = vpop.permute.xlu0 %1458
      %v1462 = vsel %vm677, %v1369, 0
      %1464 = vmatprep.subr.mxu0 0.0
      %1465 = vmatpush1.msra.mxu0 %v1459
      %1466 = vmatprep.subr.mxu0 0.0
      %1467 = vmatpush1.msra.mxu0 0.0
      %1468 = vmatprep.subr.mxu0 0.0
      %1469 = vmatpush1.msra.mxu0 0.0
      %1470 = vmatprep.subr.mxu0 0.0
      %1471 = vmatpush1.msra.mxu0 0.0
      %1472 = vmatprep.subr.mxu0 0.0
      %1473 = vmatpush1.msra.mxu0 0.0
      %1474 = vmatprep.subr.mxu0 0.0
      %1475 = vmatpush1.msra.mxu0 0.0
      %1476 = vmatprep.subr.mxu0 0.0
      %1477 = vmatpush1.msra.mxu0 0.0
      %1478 = vmatprep.subr.mxu0 0.0
      %1479 = vmatpush1.msra.mxu0 0.0
      %1480 = vmatprep.subr.mxu0 0.0
      %1481 = vmatpush1.msra.mxu0 0.0
      %1482 = vmatprep.subr.mxu0 0.0
      %1483 = vmatpush1.msra.mxu0 0.0
      %1484 = vmatprep.subr.mxu0 0.0
      %1485 = vmatpush1.msra.mxu0 0.0
      %1486 = vmatprep.subr.mxu0 0.0
      %1487 = vmatpush1.msra.mxu0 0.0
      %1488 = vmatprep.subr.mxu0 0.0
      %1489 = vmatpush1.msra.mxu0 0.0
      %1490 = vmatprep.subr.mxu0 0.0
      %1491 = vmatpush1.msra.mxu0 0.0
      %1492 = vmatprep.subr.mxu0 0.0
      %1493 = vmatpush1.msra.mxu0 0.0
      %1494 = vmatprep.subr.mxu0 0.0
      %1495 = vmatpush1.msra.mxu0 0.0
      %1496 = vmatprep.subr.mxu0 0.0
      %1497 = vmatpush1.msra.mxu0 0.0
      %1498 = vmatprep.subr.mxu0 0.0
      %1499 = vmatpush1.msra.mxu0 0.0
      %1500 = vmatprep.subr.mxu0 0.0
      %1501 = vmatpush1.msra.mxu0 0.0
      %1502 = vmatprep.subr.mxu0 0.0
      %1503 = vmatpush1.msra.mxu0 0.0
      %1504 = vmatprep.subr.mxu0 0.0
      %1505 = vmatpush1.msra.mxu0 0.0
      %1506 = vmatprep.subr.mxu0 0.0
      %1507 = vmatpush1.msra.mxu0 0.0
      %1508 = vmatprep.subr.mxu0 0.0
      %1509 = vmatpush1.msra.mxu0 0.0
      %1510 = vmatprep.subr.mxu0 0.0
      %1511 = vmatpush1.msra.mxu0 0.0
      %1512 = vmatprep.subr.mxu0 0.0
      %1513 = vmatpush1.msra.mxu0 0.0
      %1514 = vmatprep.subr.mxu0 0.0
      %1515 = vmatpush1.msra.mxu0 0.0
      %1516 = vmatprep.subr.mxu0 0.0
      %1517 = vmatpush1.msra.mxu0 0.0
      %1518 = vmatprep.subr.mxu0 0.0
      %1519 = vmatpush1.msra.mxu0 0.0
      %1520 = vmatprep.subr.mxu0 0.0
      %1521 = vmatpush1.msra.mxu0 0.0
      %1522 = vmatprep.subr.mxu0 0.0
      %1523 = vmatpush1.msra.mxu0 0.0
      %1524 = vmatprep.subr.mxu0 0.0
      %1525 = vmatpush1.msra.mxu0 0.0
      %1526 = vmatprep.subr.mxu0 0.0
      %1527 = vmatpush1.msra.mxu0 0.0
      %1528 = vmatprep.mubr.f32.mxu0 0.0
      %1529 = vmatmul.mubr.f32.gmra.mrb[0].mxu0 %v1462
      %v1530 = vpop.f32.mrb[0].mxu0
      %v1531 = vadd.f32 0.0, %v1530
      %v1532 = vpop.f32.mrb[0].mxu0
      %1533 = vdwg.mxu0
      %1534 = vrot.lane.b32.xlu0 %v649, 96
      %v1535 = vpop.permute.xlu0 %1534
      %v1538 = vsel %vm677, %v1371, 0
      %1540 = vmatprep.subr.mxu0 0.0
      %1541 = vmatpush1.msra.mxu0 %v1535
      %1542 = vmatprep.subr.mxu0 0.0
      %1543 = vmatpush1.msra.mxu0 0.0
      %1544 = vmatprep.subr.mxu0 0.0
      %1545 = vmatpush1.msra.mxu0 0.0
      %1546 = vmatprep.subr.mxu0 0.0
      %1547 = vmatpush1.msra.mxu0 0.0
      %1548 = vmatprep.subr.mxu0 0.0
      %1549 = vmatpush1.msra.mxu0 0.0
      %1550 = vmatprep.subr.mxu0 0.0
      %1551 = vmatpush1.msra.mxu0 0.0
      %1552 = vmatprep.subr.mxu0 0.0
      %1553 = vmatpush1.msra.mxu0 0.0
      %1554 = vmatprep.subr.mxu0 0.0
      %1555 = vmatpush1.msra.mxu0 0.0
      %1556 = vmatprep.subr.mxu0 0.0
      %1557 = vmatpush1.msra.mxu0 0.0
      %1558 = vmatprep.subr.mxu0 0.0
      %1559 = vmatpush1.msra.mxu0 0.0
      %1560 = vmatprep.subr.mxu0 0.0
      %1561 = vmatpush1.msra.mxu0 0.0
      %1562 = vmatprep.subr.mxu0 0.0
      %1563 = vmatpush1.msra.mxu0 0.0
      %1564 = vmatprep.subr.mxu0 0.0
      %1565 = vmatpush1.msra.mxu0 0.0
      %1566 = vmatprep.subr.mxu0 0.0
      %1567 = vmatpush1.msra.mxu0 0.0
      %1568 = vmatprep.subr.mxu0 0.0
      %1569 = vmatpush1.msra.mxu0 0.0
      %1570 = vmatprep.subr.mxu0 0.0
      %1571 = vmatpush1.msra.mxu0 0.0
      %1572 = vmatprep.subr.mxu0 0.0
      %1573 = vmatpush1.msra.mxu0 0.0
      %1574 = vmatprep.subr.mxu0 0.0
      %1575 = vmatpush1.msra.mxu0 0.0
      %1576 = vmatprep.subr.mxu0 0.0
      %1577 = vmatpush1.msra.mxu0 0.0
      %1578 = vmatprep.subr.mxu0 0.0
      %1579 = vmatpush1.msra.mxu0 0.0
      %1580 = vmatprep.subr.mxu0 0.0
      %1581 = vmatpush1.msra.mxu0 0.0
      %1582 = vmatprep.subr.mxu0 0.0
      %1583 = vmatpush1.msra.mxu0 0.0
      %1584 = vmatprep.subr.mxu0 0.0
      %1585 = vmatpush1.msra.mxu0 0.0
      %1586 = vmatprep.subr.mxu0 0.0
      %1587 = vmatpush1.msra.mxu0 0.0
      %1588 = vmatprep.subr.mxu0 0.0
      %1589 = vmatpush1.msra.mxu0 0.0
      %1590 = vmatprep.subr.mxu0 0.0
      %1591 = vmatpush1.msra.mxu0 0.0
      %1592 = vmatprep.subr.mxu0 0.0
      %1593 = vmatpush1.msra.mxu0 0.0
      %1594 = vmatprep.subr.mxu0 0.0
      %1595 = vmatpush1.msra.mxu0 0.0
      %1596 = vmatprep.subr.mxu0 0.0
      %1597 = vmatpush1.msra.mxu0 0.0
      %1598 = vmatprep.subr.mxu0 0.0
      %1599 = vmatpush1.msra.mxu0 0.0
      %1600 = vmatprep.subr.mxu0 0.0
      %1601 = vmatpush1.msra.mxu0 0.0
      %1602 = vmatprep.subr.mxu0 0.0
      %1603 = vmatpush1.msra.mxu0 0.0
      %1604 = vmatprep.mubr.f32.mxu0 0.0
      %1605 = vmatmul.mubr.f32.gmra.mrb[0].mxu0 %v1538
      %v1606 = vpop.f32.mrb[0].mxu0
      %v1607 = vadd.f32 0.0, %v1606
      %v1608 = vpop.f32.mrb[0].mxu0
      %1609 = vdwg.mxu0
      %1610 = vrot.lane.b32.xlu0 %v654, 96
      %v1611 = vpop.permute.xlu0 %1610
      %v1614 = vsel %vm677, %v1373, 0
      %1616 = vmatprep.subr.mxu0 0.0
      %1617 = vmatpush1.msra.mxu0 %v1611
      %1618 = vmatprep.subr.mxu0 0.0
      %1619 = vmatpush1.msra.mxu0 0.0
      %1620 = vmatprep.subr.mxu0 0.0
      %1621 = vmatpush1.msra.mxu0 0.0
      %1622 = vmatprep.subr.mxu0 0.0
      %1623 = vmatpush1.msra.mxu0 0.0
      %1624 = vmatprep.subr.mxu0 0.0
      %1625 = vmatpush1.msra.mxu0 0.0
      %1626 = vmatprep.subr.mxu0 0.0
      %1627 = vmatpush1.msra.mxu0 0.0
      %1628 = vmatprep.subr.mxu0 0.0
      %1629 = vmatpush1.msra.mxu0 0.0
      %1630 = vmatprep.subr.mxu0 0.0
      %1631 = vmatpush1.msra.mxu0 0.0
      %1632 = vmatprep.subr.mxu0 0.0
      %1633 = vmatpush1.msra.mxu0 0.0
      %1634 = vmatprep.subr.mxu0 0.0
      %1635 = vmatpush1.msra.mxu0 0.0
      %1636 = vmatprep.subr.mxu0 0.0
      %1637 = vmatpush1.msra.mxu0 0.0
      %1638 = vmatprep.subr.mxu0 0.0
      %1639 = vmatpush1.msra.mxu0 0.0
      %1640 = vmatprep.subr.mxu0 0.0
      %1641 = vmatpush1.msra.mxu0 0.0
      %1642 = vmatprep.subr.mxu0 0.0
      %1643 = vmatpush1.msra.mxu0 0.0
      %1644 = vmatprep.subr.mxu0 0.0
      %1645 = vmatpush1.msra.mxu0 0.0
      %1646 = vmatprep.subr.mxu0 0.0
      %1647 = vmatpush1.msra.mxu0 0.0
      %1648 = vmatprep.subr.mxu0 0.0
      %1649 = vmatpush1.msra.mxu0 0.0
      %1650 = vmatprep.subr.mxu0 0.0
      %1651 = vmatpush1.msra.mxu0 0.0
      %1652 = vmatprep.subr.mxu0 0.0
      %1653 = vmatpush1.msra.mxu0 0.0
      %1654 = vmatprep.subr.mxu0 0.0
      %1655 = vmatpush1.msra.mxu0 0.0
      %1656 = vmatprep.subr.mxu0 0.0
      %1657 = vmatpush1.msra.mxu0 0.0
      %1658 = vmatprep.subr.mxu0 0.0
      %1659 = vmatpush1.msra.mxu0 0.0
      %1660 = vmatprep.subr.mxu0 0.0
      %1661 = vmatpush1.msra.mxu0 0.0
      %1662 = vmatprep.subr.mxu0 0.0
      %1663 = vmatpush1.msra.mxu0 0.0
      %1664 = vmatprep.subr.mxu0 0.0
      %1665 = vmatpush1.msra.mxu0 0.0
      %1666 = vmatprep.subr.mxu0 0.0
      %1667 = vmatpush1.msra.mxu0 0.0
      %1668 = vmatprep.subr.mxu0 0.0
      %1669 = vmatpush1.msra.mxu0 0.0
      %1670 = vmatprep.subr.mxu0 0.0
      %1671 = vmatpush1.msra.mxu0 0.0
      %1672 = vmatprep.subr.mxu0 0.0
      %1673 = vmatpush1.msra.mxu0 0.0
      %1674 = vmatprep.subr.mxu0 0.0
      %1675 = vmatpush1.msra.mxu0 0.0
      %1676 = vmatprep.subr.mxu0 0.0
      %1677 = vmatpush1.msra.mxu0 0.0
      %1678 = vmatprep.subr.mxu0 0.0
      %1679 = vmatpush1.msra.mxu0 0.0
      %1680 = vmatprep.mubr.f32.mxu0 0.0
      %1681 = vmatmul.mubr.f32.gmra.mrb[0].mxu0 %v1614
      %v1682 = vpop.f32.mrb[0].mxu0
      %v1683 = vadd.f32 0.0, %v1682
      %v1684 = vpop.f32.mrb[0].mxu0
      %1685 = vdwg.mxu0
      %1686 = vrot.lane.b32.xlu0 %v659, 96
      %v1687 = vpop.permute.xlu0 %1686
      %v1690 = vsel %vm677, %v1375, 0
      %1692 = vmatprep.subr.mxu0 0.0
      %1693 = vmatpush1.msra.mxu0 %v1687
      %1694 = vmatprep.subr.mxu0 0.0
      %1695 = vmatpush1.msra.mxu0 0.0
      %1696 = vmatprep.subr.mxu0 0.0
      %1697 = vmatpush1.msra.mxu0 0.0
      %1698 = vmatprep.subr.mxu0 0.0
      %1699 = vmatpush1.msra.mxu0 0.0
      %1700 = vmatprep.subr.mxu0 0.0
      %1701 = vmatpush1.msra.mxu0 0.0
      %1702 = vmatprep.subr.mxu0 0.0
      %1703 = vmatpush1.msra.mxu0 0.0
      %1704 = vmatprep.subr.mxu0 0.0
      %1705 = vmatpush1.msra.mxu0 0.0
      %1706 = vmatprep.subr.mxu0 0.0
      %1707 = vmatpush1.msra.mxu0 0.0
      %1708 = vmatprep.subr.mxu0 0.0
      %1709 = vmatpush1.msra.mxu0 0.0
      %1710 = vmatprep.subr.mxu0 0.0
      %1711 = vmatpush1.msra.mxu0 0.0
      %1712 = vmatprep.subr.mxu0 0.0
      %1713 = vmatpush1.msra.mxu0 0.0
      %1714 = vmatprep.subr.mxu0 0.0
      %1715 = vmatpush1.msra.mxu0 0.0
      %1716 = vmatprep.subr.mxu0 0.0
      %1717 = vmatpush1.msra.mxu0 0.0
      %1718 = vmatprep.subr.mxu0 0.0
      %1719 = vmatpush1.msra.mxu0 0.0
      %1720 = vmatprep.subr.mxu0 0.0
      %1721 = vmatpush1.msra.mxu0 0.0
      %1722 = vmatprep.subr.mxu0 0.0
      %1723 = vmatpush1.msra.mxu0 0.0
      %1724 = vmatprep.subr.mxu0 0.0
      %1725 = vmatpush1.msra.mxu0 0.0
      %1726 = vmatprep.subr.mxu0 0.0
      %1727 = vmatpush1.msra.mxu0 0.0
      %1728 = vmatprep.subr.mxu0 0.0
      %1729 = vmatpush1.msra.mxu0 0.0
      %1730 = vmatprep.subr.mxu0 0.0
      %1731 = vmatpush1.msra.mxu0 0.0
      %1732 = vmatprep.subr.mxu0 0.0
      %1733 = vmatpush1.msra.mxu0 0.0
      %1734 = vmatprep.subr.mxu0 0.0
      %1735 = vmatpush1.msra.mxu0 0.0
      %1736 = vmatprep.subr.mxu0 0.0
      %1737 = vmatpush1.msra.mxu0 0.0
      %1738 = vmatprep.subr.mxu0 0.0
      %1739 = vmatpush1.msra.mxu0 0.0
      %1740 = vmatprep.subr.mxu0 0.0
      %1741 = vmatpush1.msra.mxu0 0.0
      %1742 = vmatprep.subr.mxu0 0.0
      %1743 = vmatpush1.msra.mxu0 0.0
      %1744 = vmatprep.subr.mxu0 0.0
      %1745 = vmatpush1.msra.mxu0 0.0
      %1746 = vmatprep.subr.mxu0 0.0
      %1747 = vmatpush1.msra.mxu0 0.0
      %1748 = vmatprep.subr.mxu0 0.0
      %1749 = vmatpush1.msra.mxu0 0.0
      %1750 = vmatprep.subr.mxu0 0.0
      %1751 = vmatpush1.msra.mxu0 0.0
      %1752 = vmatprep.subr.mxu0 0.0
      %1753 = vmatpush1.msra.mxu0 0.0
      %1754 = vmatprep.subr.mxu0 0.0
      %1755 = vmatpush1.msra.mxu0 0.0
      %1756 = vmatprep.mubr.f32.mxu0 0.0
      %1757 = vmatmul.mubr.f32.gmra.mrb[0].mxu0 %v1690
      %v1758 = vpop.f32.mrb[0].mxu0
      %v1759 = vadd.f32 0.0, %v1758
      %v1760 = vpop.f32.mrb[0].mxu0
      %1761 = vdwg.mxu0
      %1762 = vrot.lane.b32.xlu0 %v664, 96
      %v1763 = vpop.permute.xlu0 %1762
      %v1766 = vsel %vm677, %v1377, 0
      %1768 = vmatprep.subr.mxu0 0.0
      %1769 = vmatpush1.msra.mxu0 %v1763
      %1770 = vmatprep.subr.mxu0 0.0
      %1771 = vmatpush1.msra.mxu0 0.0
      %1772 = vmatprep.subr.mxu0 0.0
      %1773 = vmatpush1.msra.mxu0 0.0
      %1774 = vmatprep.subr.mxu0 0.0
      %1775 = vmatpush1.msra.mxu0 0.0
      %1776 = vmatprep.subr.mxu0 0.0
      %1777 = vmatpush1.msra.mxu0 0.0
      %1778 = vmatprep.subr.mxu0 0.0
      %1779 = vmatpush1.msra.mxu0 0.0
      %1780 = vmatprep.subr.mxu0 0.0
      %1781 = vmatpush1.msra.mxu0 0.0
      %1782 = vmatprep.subr.mxu0 0.0
      %1783 = vmatpush1.msra.mxu0 0.0
      %1784 = vmatprep.subr.mxu0 0.0
      %1785 = vmatpush1.msra.mxu0 0.0
      %1786 = vmatprep.subr.mxu0 0.0
      %1787 = vmatpush1.msra.mxu0 0.0
      %1788 = vmatprep.subr.mxu0 0.0
      %1789 = vmatpush1.msra.mxu0 0.0
      %1790 = vmatprep.subr.mxu0 0.0
      %1791 = vmatpush1.msra.mxu0 0.0
      %1792 = vmatprep.subr.mxu0 0.0
      %1793 = vmatpush1.msra.mxu0 0.0
      %1794 = vmatprep.subr.mxu0 0.0
      %1795 = vmatpush1.msra.mxu0 0.0
      %1796 = vmatprep.subr.mxu0 0.0
      %1797 = vmatpush1.msra.mxu0 0.0
      %1798 = vmatprep.subr.mxu0 0.0
      %1799 = vmatpush1.msra.mxu0 0.0
      %1800 = vmatprep.subr.mxu0 0.0
      %1801 = vmatpush1.msra.mxu0 0.0
      %1802 = vmatprep.subr.mxu0 0.0
      %1803 = vmatpush1.msra.mxu0 0.0
      %1804 = vmatprep.subr.mxu0 0.0
      %1805 = vmatpush1.msra.mxu0 0.0
      %1806 = vmatprep.subr.mxu0 0.0
      %1807 = vmatpush1.msra.mxu0 0.0
      %1808 = vmatprep.subr.mxu0 0.0
      %1809 = vmatpush1.msra.mxu0 0.0
      %1810 = vmatprep.subr.mxu0 0.0
      %1811 = vmatpush1.msra.mxu0 0.0
      %1812 = vmatprep.subr.mxu0 0.0
      %1813 = vmatpush1.msra.mxu0 0.0
      %1814 = vmatprep.subr.mxu0 0.0
      %1815 = vmatpush1.msra.mxu0 0.0
      %1816 = vmatprep.subr.mxu0 0.0
      %1817 = vmatpush1.msra.mxu0 0.0
      %1818 = vmatprep.subr.mxu0 0.0
      %1819 = vmatpush1.msra.mxu0 0.0
      %1820 = vmatprep.subr.mxu0 0.0
      %1821 = vmatpush1.msra.mxu0 0.0
      %1822 = vmatprep.subr.mxu0 0.0
      %1823 = vmatpush1.msra.mxu0 0.0
      %1824 = vmatprep.subr.mxu0 0.0
      %1825 = vmatpush1.msra.mxu0 0.0
      %1826 = vmatprep.subr.mxu0 0.0
      %1827 = vmatpush1.msra.mxu0 0.0
      %1828 = vmatprep.subr.mxu0 0.0
      %1829 = vmatpush1.msra.mxu0 0.0
      %1830 = vmatprep.subr.mxu0 0.0
      %1831 = vmatpush1.msra.mxu0 0.0
      %1832 = vmatprep.mubr.f32.mxu0 0.0
      %1833 = vmatmul.mubr.f32.gmra.mrb[0].mxu0 %v1766
      %v1834 = vpop.f32.mrb[0].mxu0
      %v1835 = vadd.f32 0.0, %v1834
      %v1836 = vpop.f32.mrb[0].mxu0
      %1837 = vdwg.mxu0
      %1838 = vrot.lane.b32.xlu0 %v669, 96
      %v1839 = vpop.permute.xlu0 %1838
      %v1842 = vsel %vm677, %v1379, 0
      %1844 = vmatprep.subr.mxu0 0.0
      %1845 = vmatpush1.msra.mxu0 %v1839
      %1846 = vmatprep.subr.mxu0 0.0
      %1847 = vmatpush1.msra.mxu0 0.0
      %1848 = vmatprep.subr.mxu0 0.0
      %1849 = vmatpush1.msra.mxu0 0.0
      %1850 = vmatprep.subr.mxu0 0.0
      %1851 = vmatpush1.msra.mxu0 0.0
      %1852 = vmatprep.subr.mxu0 0.0
      %1853 = vmatpush1.msra.mxu0 0.0
      %1854 = vmatprep.subr.mxu0 0.0
      %1855 = vmatpush1.msra.mxu0 0.0
      %1856 = vmatprep.subr.mxu0 0.0
      %1857 = vmatpush1.msra.mxu0 0.0
      %1858 = vmatprep.subr.mxu0 0.0
      %1859 = vmatpush1.msra.mxu0 0.0
      %1860 = vmatprep.subr.mxu0 0.0
      %1861 = vmatpush1.msra.mxu0 0.0
      %1862 = vmatprep.subr.mxu0 0.0
      %1863 = vmatpush1.msra.mxu0 0.0
      %1864 = vmatprep.subr.mxu0 0.0
      %1865 = vmatpush1.msra.mxu0 0.0
      %1866 = vmatprep.subr.mxu0 0.0
      %1867 = vmatpush1.msra.mxu0 0.0
      %1868 = vmatprep.subr.mxu0 0.0
      %1869 = vmatpush1.msra.mxu0 0.0
      %1870 = vmatprep.subr.mxu0 0.0
      %1871 = vmatpush1.msra.mxu0 0.0
      %1872 = vmatprep.subr.mxu0 0.0
      %1873 = vmatpush1.msra.mxu0 0.0
      %1874 = vmatprep.subr.mxu0 0.0
      %1875 = vmatpush1.msra.mxu0 0.0
      %1876 = vmatprep.subr.mxu0 0.0
      %1877 = vmatpush1.msra.mxu0 0.0
      %1878 = vmatprep.subr.mxu0 0.0
      %1879 = vmatpush1.msra.mxu0 0.0
      %1880 = vmatprep.subr.mxu0 0.0
      %1881 = vmatpush1.msra.mxu0 0.0
      %1882 = vmatprep.subr.mxu0 0.0
      %1883 = vmatpush1.msra.mxu0 0.0
      %1884 = vmatprep.subr.mxu0 0.0
      %1885 = vmatpush1.msra.mxu0 0.0
      %1886 = vmatprep.subr.mxu0 0.0
      %1887 = vmatpush1.msra.mxu0 0.0
      %1888 = vmatprep.subr.mxu0 0.0
      %1889 = vmatpush1.msra.mxu0 0.0
      %1890 = vmatprep.subr.mxu0 0.0
      %1891 = vmatpush1.msra.mxu0 0.0
      %1892 = vmatprep.subr.mxu0 0.0
      %1893 = vmatpush1.msra.mxu0 0.0
      %1894 = vmatprep.subr.mxu0 0.0
      %1895 = vmatpush1.msra.mxu0 0.0
      %1896 = vmatprep.subr.mxu0 0.0
      %1897 = vmatpush1.msra.mxu0 0.0
      %1898 = vmatprep.subr.mxu0 0.0
      %1899 = vmatpush1.msra.mxu0 0.0
      %1900 = vmatprep.subr.mxu0 0.0
      %1901 = vmatpush1.msra.mxu0 0.0
      %1902 = vmatprep.subr.mxu0 0.0
      %1903 = vmatpush1.msra.mxu0 0.0
      %1904 = vmatprep.subr.mxu0 0.0
      %1905 = vmatpush1.msra.mxu0 0.0
      %1906 = vmatprep.subr.mxu0 0.0
      %1907 = vmatpush1.msra.mxu0 0.0
      %1908 = vmatprep.mubr.f32.mxu0 0.0
      %1909 = vmatmul.mubr.f32.gmra.mrb[0].mxu0 %v1842
      %v1910 = vpop.f32.mrb[0].mxu0
      %v1911 = vadd.f32 0.0, %v1910
      %v1912 = vpop.f32.mrb[0].mxu0
      %1913 = vdwg.mxu0
      %1914 = vrot.lane.b32.xlu0 %v674, 96
      %v1915 = vpop.permute.xlu0 %1914
      %v1918 = vsel %vm677, %v1381, 0
      %1920 = vmatprep.subr.mxu0 0.0
      %1921 = vmatpush1.msra.mxu0 %v1915
      %1922 = vmatprep.subr.mxu0 0.0
      %1923 = vmatpush1.msra.mxu0 0.0
      %1924 = vmatprep.subr.mxu0 0.0
      %1925 = vmatpush1.msra.mxu0 0.0
      %1926 = vmatprep.subr.mxu0 0.0
      %1927 = vmatpush1.msra.mxu0 0.0
      %1928 = vmatprep.subr.mxu0 0.0
      %1929 = vmatpush1.msra.mxu0 0.0
      %1930 = vmatprep.subr.mxu0 0.0
      %1931 = vmatpush1.msra.mxu0 0.0
      %1932 = vmatprep.subr.mxu0 0.0
      %1933 = vmatpush1.msra.mxu0 0.0
      %1934 = vmatprep.subr.mxu0 0.0
      %1935 = vmatpush1.msra.mxu0 0.0
      %1936 = vmatprep.subr.mxu0 0.0
      %1937 = vmatpush1.msra.mxu0 0.0
      %1938 = vmatprep.subr.mxu0 0.0
      %1939 = vmatpush1.msra.mxu0 0.0
      %1940 = vmatprep.subr.mxu0 0.0
      %1941 = vmatpush1.msra.mxu0 0.0
      %1942 = vmatprep.subr.mxu0 0.0
      %1943 = vmatpush1.msra.mxu0 0.0
      %1944 = vmatprep.subr.mxu0 0.0
      %1945 = vmatpush1.msra.mxu0 0.0
      %1946 = vmatprep.subr.mxu0 0.0
      %1947 = vmatpush1.msra.mxu0 0.0
      %1948 = vmatprep.subr.mxu0 0.0
      %1949 = vmatpush1.msra.mxu0 0.0
      %1950 = vmatprep.subr.mxu0 0.0
      %1951 = vmatpush1.msra.mxu0 0.0
      %1952 = vmatprep.subr.mxu0 0.0
      %1953 = vmatpush1.msra.mxu0 0.0
      %1954 = vmatprep.subr.mxu0 0.0
      %1955 = vmatpush1.msra.mxu0 0.0
      %1956 = vmatprep.subr.mxu0 0.0
      %1957 = vmatpush1.msra.mxu0 0.0
      %1958 = vmatprep.subr.mxu0 0.0
      %1959 = vmatpush1.msra.mxu0 0.0
      %1960 = vmatprep.subr.mxu0 0.0
      %1961 = vmatpush1.msra.mxu0 0.0
      %1962 = vmatprep.subr.mxu0 0.0
      %1963 = vmatpush1.msra.mxu0 0.0
      %1964 = vmatprep.subr.mxu0 0.0
      %1965 = vmatpush1.msra.mxu0 0.0
      %1966 = vmatprep.subr.mxu0 0.0
      %1967 = vmatpush1.msra.mxu0 0.0
      %1968 = vmatprep.subr.mxu0 0.0
      %1969 = vmatpush1.msra.mxu0 0.0
      %1970 = vmatprep.subr.mxu0 0.0
      %1971 = vmatpush1.msra.mxu0 0.0
      %1972 = vmatprep.subr.mxu0 0.0
      %1973 = vmatpush1.msra.mxu0 0.0
      %1974 = vmatprep.subr.mxu0 0.0
      %1975 = vmatpush1.msra.mxu0 0.0
      %1976 = vmatprep.subr.mxu0 0.0
      %1977 = vmatpush1.msra.mxu0 0.0
      %1978 = vmatprep.subr.mxu0 0.0
      %1979 = vmatpush1.msra.mxu0 0.0
      %1980 = vmatprep.subr.mxu0 0.0
      %1981 = vmatpush1.msra.mxu0 0.0
      %1982 = vmatprep.subr.mxu0 0.0
      %1983 = vmatpush1.msra.mxu0 0.0
      %1984 = vmatprep.mubr.f32.mxu0 0.0
      %1985 = vmatmul.mubr.f32.gmra.mrb[0].mxu0 %v1918
      %v1986 = vpop.f32.mrb[0].mxu0
      %v1987 = vadd.f32 0.0, %v1986
      %v1988 = vpop.f32.mrb[0].mxu0
      %1989 = vdwg.mxu0
      %1990 = vrot.lane.b32.xlu0 %v499, 120
      %v1991 = vpop.permute.xlu0 %1990
      %1992 = vrot.lane.b32.xlu0 %v639, 120
      %v1993 = vpop.permute.xlu0 %1992
      %v1994 = vsel %vm677, %v1991, 0
      %v1996 = vsel %vm677, %v1993, 0
      %1998 = vmatprep.subr.mxu0 0.0
      %1999 = vmatpush1.xpose.msra.mxu0 %v1996
      %2000 = vmatprep.subr.mxu0 0.0
      %2001 = vmatpush1.xpose.msra.mxu0 0.0
      %2002 = vmatprep.subr.mxu0 0.0
      %2003 = vmatpush1.xpose.msra.mxu0 0.0
      %2004 = vmatprep.subr.mxu0 0.0
      %2005 = vmatpush1.xpose.msra.mxu0 0.0
      %2006 = vmatprep.subr.mxu0 0.0
      %2007 = vmatpush1.xpose.msra.mxu0 0.0
      %2008 = vmatprep.subr.mxu0 0.0
      %2009 = vmatpush1.xpose.msra.mxu0 0.0
      %2010 = vmatprep.subr.mxu0 0.0
      %2011 = vmatpush1.xpose.msra.mxu0 0.0
      %2012 = vmatprep.subr.mxu0 0.0
      %2013 = vmatpush1.xpose.msra.mxu0 0.0
      %2014 = vmatprep.subr.mxu0 0.0
      %2015 = vmatpush1.xpose.msra.mxu0 0.0
      %2016 = vmatprep.subr.mxu0 0.0
      %2017 = vmatpush1.xpose.msra.mxu0 0.0
      %2018 = vmatprep.subr.mxu0 0.0
      %2019 = vmatpush1.xpose.msra.mxu0 0.0
      %2020 = vmatprep.subr.mxu0 0.0
      %2021 = vmatpush1.xpose.msra.mxu0 0.0
      %2022 = vmatprep.subr.mxu0 0.0
      %2023 = vmatpush1.xpose.msra.mxu0 0.0
      %2024 = vmatprep.subr.mxu0 0.0
      %2025 = vmatpush1.xpose.msra.mxu0 0.0
      %2026 = vmatprep.subr.mxu0 0.0
      %2027 = vmatpush1.xpose.msra.mxu0 0.0
      %2028 = vmatprep.subr.mxu0 0.0
      %2029 = vmatpush1.xpose.msra.mxu0 0.0
      %2030 = vmatprep.subr.mxu0 0.0
      %2031 = vmatpush1.xpose.msra.mxu0 0.0
      %2032 = vmatprep.subr.mxu0 0.0
      %2033 = vmatpush1.xpose.msra.mxu0 0.0
      %2034 = vmatprep.subr.mxu0 0.0
      %2035 = vmatpush1.xpose.msra.mxu0 0.0
      %2036 = vmatprep.subr.mxu0 0.0
      %2037 = vmatpush1.xpose.msra.mxu0 0.0
      %2038 = vmatprep.subr.mxu0 0.0
      %2039 = vmatpush1.xpose.msra.mxu0 0.0
      %2040 = vmatprep.subr.mxu0 0.0
      %2041 = vmatpush1.xpose.msra.mxu0 0.0
      %2042 = vmatprep.subr.mxu0 0.0
      %2043 = vmatpush1.xpose.msra.mxu0 0.0
      %2044 = vmatprep.subr.mxu0 0.0
      %2045 = vmatpush1.xpose.msra.mxu0 0.0
      %2046 = vmatprep.subr.mxu0 0.0
      %2047 = vmatpush1.xpose.msra.mxu0 0.0
      %2048 = vmatprep.subr.mxu0 0.0
      %2049 = vmatpush1.xpose.msra.mxu0 0.0
      %2050 = vmatprep.subr.mxu0 0.0
      %2051 = vmatpush1.xpose.msra.mxu0 0.0
      %2052 = vmatprep.subr.mxu0 0.0
      %2053 = vmatpush1.xpose.msra.mxu0 0.0
      %2054 = vmatprep.subr.mxu0 0.0
      %2055 = vmatpush1.xpose.msra.mxu0 0.0
      %2056 = vmatprep.subr.mxu0 0.0
      %2057 = vmatpush1.xpose.msra.mxu0 0.0
      %2058 = vmatprep.subr.mxu0 0.0
      %2059 = vmatpush1.xpose.msra.mxu0 0.0
      %2060 = vmatprep.subr.mxu0 0.0
      %2061 = vmatpush1.xpose.msra.mxu0 0.0
      %2062 = vmatprep.mubr.f32.mxu0 0.0
      %2063 = vmatmul.mubr.f32.gmra.mrb[0].mxu0 %v1994
      %v2064 = vpop.f32.mrb[0].mxu0
      %v2065 = vadd.f32 0.0, %v2064
      %v2066 = vpop.f32.mrb[0].mxu0
      %2067 = vdwg.mxu0
      %2068 = vrot.lane.b32.xlu0 %v504, 120
      %v2069 = vpop.permute.xlu0 %2068
      %2070 = vrot.lane.b32.xlu0 %v644, 120
      %v2071 = vpop.permute.xlu0 %2070
      %v2072 = vsel %vm677, %v2069, 0
      %v2074 = vsel %vm677, %v2071, 0
      %2076 = vmatprep.subr.mxu0 0.0
      %2077 = vmatpush1.xpose.msra.mxu0 %v2074
      %2078 = vmatprep.subr.mxu0 0.0
      %2079 = vmatpush1.xpose.msra.mxu0 0.0
      %2080 = vmatprep.subr.mxu0 0.0
      %2081 = vmatpush1.xpose.msra.mxu0 0.0
      %2082 = vmatprep.subr.mxu0 0.0
      %2083 = vmatpush1.xpose.msra.mxu0 0.0
      %2084 = vmatprep.subr.mxu0 0.0
      %2085 = vmatpush1.xpose.msra.mxu0 0.0
      %2086 = vmatprep.subr.mxu0 0.0
      %2087 = vmatpush1.xpose.msra.mxu0 0.0
      %2088 = vmatprep.subr.mxu0 0.0
      %2089 = vmatpush1.xpose.msra.mxu0 0.0
      %2090 = vmatprep.subr.mxu0 0.0
      %2091 = vmatpush1.xpose.msra.mxu0 0.0
      %2092 = vmatprep.subr.mxu0 0.0
      %2093 = vmatpush1.xpose.msra.mxu0 0.0
      %2094 = vmatprep.subr.mxu0 0.0
      %2095 = vmatpush1.xpose.msra.mxu0 0.0
      %2096 = vmatprep.subr.mxu0 0.0
      %2097 = vmatpush1.xpose.msra.mxu0 0.0
      %2098 = vmatprep.subr.mxu0 0.0
      %2099 = vmatpush1.xpose.msra.mxu0 0.0
      %2100 = vmatprep.subr.mxu0 0.0
      %2101 = vmatpush1.xpose.msra.mxu0 0.0
      %2102 = vmatprep.subr.mxu0 0.0
      %2103 = vmatpush1.xpose.msra.mxu0 0.0
      %2104 = vmatprep.subr.mxu0 0.0
      %2105 = vmatpush1.xpose.msra.mxu0 0.0
      %2106 = vmatprep.subr.mxu0 0.0
      %2107 = vmatpush1.xpose.msra.mxu0 0.0
      %2108 = vmatprep.subr.mxu0 0.0
      %2109 = vmatpush1.xpose.msra.mxu0 0.0
      %2110 = vmatprep.subr.mxu0 0.0
      %2111 = vmatpush1.xpose.msra.mxu0 0.0
      %2112 = vmatprep.subr.mxu0 0.0
      %2113 = vmatpush1.xpose.msra.mxu0 0.0
      %2114 = vmatprep.subr.mxu0 0.0
      %2115 = vmatpush1.xpose.msra.mxu0 0.0
      %2116 = vmatprep.subr.mxu0 0.0
      %2117 = vmatpush1.xpose.msra.mxu0 0.0
      %2118 = vmatprep.subr.mxu0 0.0
      %2119 = vmatpush1.xpose.msra.mxu0 0.0
      %2120 = vmatprep.subr.mxu0 0.0
      %2121 = vmatpush1.xpose.msra.mxu0 0.0
      %2122 = vmatprep.subr.mxu0 0.0
      %2123 = vmatpush1.xpose.msra.mxu0 0.0
      %2124 = vmatprep.subr.mxu0 0.0
      %2125 = vmatpush1.xpose.msra.mxu0 0.0
      %2126 = vmatprep.subr.mxu0 0.0
      %2127 = vmatpush1.xpose.msra.mxu0 0.0
      %2128 = vmatprep.subr.mxu0 0.0
      %2129 = vmatpush1.xpose.msra.mxu0 0.0
      %2130 = vmatprep.subr.mxu0 0.0
      %2131 = vmatpush1.xpose.msra.mxu0 0.0
      %2132 = vmatprep.subr.mxu0 0.0
      %2133 = vmatpush1.xpose.msra.mxu0 0.0
      %2134 = vmatprep.subr.mxu0 0.0
      %2135 = vmatpush1.xpose.msra.mxu0 0.0
      %2136 = vmatprep.subr.mxu0 0.0
      %2137 = vmatpush1.xpose.msra.mxu0 0.0
      %2138 = vmatprep.subr.mxu0 0.0
      %2139 = vmatpush1.xpose.msra.mxu0 0.0
      %2140 = vmatprep.mubr.f32.mxu0 0.0
      %2141 = vmatmul.mubr.f32.gmra.mrb[0].mxu0 %v2072
      %v2142 = vpop.f32.mrb[0].mxu0
      %v2143 = vadd.f32 0.0, %v2142
      %v2144 = vpop.f32.mrb[0].mxu0
      %2145 = vdwg.mxu0
      %2146 = vrot.lane.b32.xlu0 %v509, 120
      %v2147 = vpop.permute.xlu0 %2146
      %2148 = vrot.lane.b32.xlu0 %v649, 120
      %v2149 = vpop.permute.xlu0 %2148
      %v2150 = vsel %vm677, %v2147, 0
      %v2152 = vsel %vm677, %v2149, 0
      %2154 = vmatprep.subr.mxu0 0.0
      %2155 = vmatpush1.xpose.msra.mxu0 %v2152
      %2156 = vmatprep.subr.mxu0 0.0
      %2157 = vmatpush1.xpose.msra.mxu0 0.0
      %2158 = vmatprep.subr.mxu0 0.0
      %2159 = vmatpush1.xpose.msra.mxu0 0.0
      %2160 = vmatprep.subr.mxu0 0.0
      %2161 = vmatpush1.xpose.msra.mxu0 0.0
      %2162 = vmatprep.subr.mxu0 0.0
      %2163 = vmatpush1.xpose.msra.mxu0 0.0
      %2164 = vmatprep.subr.mxu0 0.0
      %2165 = vmatpush1.xpose.msra.mxu0 0.0
      %2166 = vmatprep.subr.mxu0 0.0
      %2167 = vmatpush1.xpose.msra.mxu0 0.0
      %2168 = vmatprep.subr.mxu0 0.0
      %2169 = vmatpush1.xpose.msra.mxu0 0.0
      %2170 = vmatprep.subr.mxu0 0.0
      %2171 = vmatpush1.xpose.msra.mxu0 0.0
      %2172 = vmatprep.subr.mxu0 0.0
      %2173 = vmatpush1.xpose.msra.mxu0 0.0
      %2174 = vmatprep.subr.mxu0 0.0
      %2175 = vmatpush1.xpose.msra.mxu0 0.0
      %2176 = vmatprep.subr.mxu0 0.0
      %2177 = vmatpush1.xpose.msra.mxu0 0.0
      %2178 = vmatprep.subr.mxu0 0.0
      %2179 = vmatpush1.xpose.msra.mxu0 0.0
      %2180 = vmatprep.subr.mxu0 0.0
      %2181 = vmatpush1.xpose.msra.mxu0 0.0
      %2182 = vmatprep.subr.mxu0 0.0
      %2183 = vmatpush1.xpose.msra.mxu0 0.0
      %2184 = vmatprep.subr.mxu0 0.0
      %2185 = vmatpush1.xpose.msra.mxu0 0.0
      %2186 = vmatprep.subr.mxu0 0.0
      %2187 = vmatpush1.xpose.msra.mxu0 0.0
      %2188 = vmatprep.subr.mxu0 0.0
      %2189 = vmatpush1.xpose.msra.mxu0 0.0
      %2190 = vmatprep.subr.mxu0 0.0
      %2191 = vmatpush1.xpose.msra.mxu0 0.0
      %2192 = vmatprep.subr.mxu0 0.0
      %2193 = vmatpush1.xpose.msra.mxu0 0.0
      %2194 = vmatprep.subr.mxu0 0.0
      %2195 = vmatpush1.xpose.msra.mxu0 0.0
      %2196 = vmatprep.subr.mxu0 0.0
      %2197 = vmatpush1.xpose.msra.mxu0 0.0
      %2198 = vmatprep.subr.mxu0 0.0
      %2199 = vmatpush1.xpose.msra.mxu0 0.0
      %2200 = vmatprep.subr.mxu0 0.0
      %2201 = vmatpush1.xpose.msra.mxu0 0.0
      %2202 = vmatprep.subr.mxu0 0.0
      %2203 = vmatpush1.xpose.msra.mxu0 0.0
      %2204 = vmatprep.subr.mxu0 0.0
      %2205 = vmatpush1.xpose.msra.mxu0 0.0
      %2206 = vmatprep.subr.mxu0 0.0
      %2207 = vmatpush1.xpose.msra.mxu0 0.0
      %2208 = vmatprep.subr.mxu0 0.0
      %2209 = vmatpush1.xpose.msra.mxu0 0.0
      %2210 = vmatprep.subr.mxu0 0.0
      %2211 = vmatpush1.xpose.msra.mxu0 0.0
      %2212 = vmatprep.subr.mxu0 0.0
      %2213 = vmatpush1.xpose.msra.mxu0 0.0
      %2214 = vmatprep.subr.mxu0 0.0
      %2215 = vmatpush1.xpose.msra.mxu0 0.0
      %2216 = vmatprep.subr.mxu0 0.0
      %2217 = vmatpush1.xpose.msra.mxu0 0.0
      %2218 = vmatprep.mubr.f32.mxu0 0.0
      %2219 = vmatmul.mubr.f32.gmra.mrb[0].mxu0 %v2150
      %v2220 = vpop.f32.mrb[0].mxu0
      %v2221 = vadd.f32 0.0, %v2220
      %v2222 = vpop.f32.mrb[0].mxu0
      %2223 = vdwg.mxu0
      %2224 = vrot.lane.b32.xlu0 %v514, 120
      %v2225 = vpop.permute.xlu0 %2224
      %2226 = vrot.lane.b32.xlu0 %v654, 120
      %v2227 = vpop.permute.xlu0 %2226
      %v2228 = vsel %vm677, %v2225, 0
      %v2230 = vsel %vm677, %v2227, 0
      %2232 = vmatprep.subr.mxu0 0.0
      %2233 = vmatpush1.xpose.msra.mxu0 %v2230
      %2234 = vmatprep.subr.mxu0 0.0
      %2235 = vmatpush1.xpose.msra.mxu0 0.0
      %2236 = vmatprep.subr.mxu0 0.0
      %2237 = vmatpush1.xpose.msra.mxu0 0.0
      %2238 = vmatprep.subr.mxu0 0.0
      %2239 = vmatpush1.xpose.msra.mxu0 0.0
      %2240 = vmatprep.subr.mxu0 0.0
      %2241 = vmatpush1.xpose.msra.mxu0 0.0
      %2242 = vmatprep.subr.mxu0 0.0
      %2243 = vmatpush1.xpose.msra.mxu0 0.0
      %2244 = vmatprep.subr.mxu0 0.0
      %2245 = vmatpush1.xpose.msra.mxu0 0.0
      %2246 = vmatprep.subr.mxu0 0.0
      %2247 = vmatpush1.xpose.msra.mxu0 0.0
      %2248 = vmatprep.subr.mxu0 0.0
      %2249 = vmatpush1.xpose.msra.mxu0 0.0
      %2250 = vmatprep.subr.mxu0 0.0
      %2251 = vmatpush1.xpose.msra.mxu0 0.0
      %2252 = vmatprep.subr.mxu0 0.0
      %2253 = vmatpush1.xpose.msra.mxu0 0.0
      %2254 = vmatprep.subr.mxu0 0.0
      %2255 = vmatpush1.xpose.msra.mxu0 0.0
      %2256 = vmatprep.subr.mxu0 0.0
      %2257 = vmatpush1.xpose.msra.mxu0 0.0
      %2258 = vmatprep.subr.mxu0 0.0
      %2259 = vmatpush1.xpose.msra.mxu0 0.0
      %2260 = vmatprep.subr.mxu0 0.0
      %2261 = vmatpush1.xpose.msra.mxu0 0.0
      %2262 = vmatprep.subr.mxu0 0.0
      %2263 = vmatpush1.xpose.msra.mxu0 0.0
      %2264 = vmatprep.subr.mxu0 0.0
      %2265 = vmatpush1.xpose.msra.mxu0 0.0
      %2266 = vmatprep.subr.mxu0 0.0
      %2267 = vmatpush1.xpose.msra.mxu0 0.0
      %2268 = vmatprep.subr.mxu0 0.0
      %2269 = vmatpush1.xpose.msra.mxu0 0.0
      %2270 = vmatprep.subr.mxu0 0.0
      %2271 = vmatpush1.xpose.msra.mxu0 0.0
      %2272 = vmatprep.subr.mxu0 0.0
      %2273 = vmatpush1.xpose.msra.mxu0 0.0
      %2274 = vmatprep.subr.mxu0 0.0
      %2275 = vmatpush1.xpose.msra.mxu0 0.0
      %2276 = vmatprep.subr.mxu0 0.0
      %2277 = vmatpush1.xpose.msra.mxu0 0.0
      %2278 = vmatprep.subr.mxu0 0.0
      %2279 = vmatpush1.xpose.msra.mxu0 0.0
      %2280 = vmatprep.subr.mxu0 0.0
      %2281 = vmatpush1.xpose.msra.mxu0 0.0
      %2282 = vmatprep.subr.mxu0 0.0
      %2283 = vmatpush1.xpose.msra.mxu0 0.0
      %2284 = vmatprep.subr.mxu0 0.0
      %2285 = vmatpush1.xpose.msra.mxu0 0.0
      %2286 = vmatprep.subr.mxu0 0.0
      %2287 = vmatpush1.xpose.msra.mxu0 0.0
      %2288 = vmatprep.subr.mxu0 0.0
      %2289 = vmatpush1.xpose.msra.mxu0 0.0
      %2290 = vmatprep.subr.mxu0 0.0
      %2291 = vmatpush1.xpose.msra.mxu0 0.0
      %2292 = vmatprep.subr.mxu0 0.0
      %2293 = vmatpush1.xpose.msra.mxu0 0.0
      %2294 = vmatprep.subr.mxu0 0.0
      %2295 = vmatpush1.xpose.msra.mxu0 0.0
      %2296 = vmatprep.mubr.f32.mxu0 0.0
      %2297 = vmatmul.mubr.f32.gmra.mrb[0].mxu0 %v2228
      %v2298 = vpop.f32.mrb[0].mxu0
      %v2299 = vadd.f32 0.0, %v2298
      %v2300 = vpop.f32.mrb[0].mxu0
      %2301 = vdwg.mxu0
      %2302 = vrot.lane.b32.xlu0 %v519, 120
      %v2303 = vpop.permute.xlu0 %2302
      %2304 = vrot.lane.b32.xlu0 %v659, 120
      %v2305 = vpop.permute.xlu0 %2304
      %v2306 = vsel %vm677, %v2303, 0
      %v2308 = vsel %vm677, %v2305, 0
      %2310 = vmatprep.subr.mxu0 0.0
      %2311 = vmatpush1.xpose.msra.mxu0 %v2308
      %2312 = vmatprep.subr.mxu0 0.0
      %2313 = vmatpush1.xpose.msra.mxu0 0.0
      %2314 = vmatprep.subr.mxu0 0.0
      %2315 = vmatpush1.xpose.msra.mxu0 0.0
      %2316 = vmatprep.subr.mxu0 0.0
      %2317 = vmatpush1.xpose.msra.mxu0 0.0
      %2318 = vmatprep.subr.mxu0 0.0
      %2319 = vmatpush1.xpose.msra.mxu0 0.0
      %2320 = vmatprep.subr.mxu0 0.0
      %2321 = vmatpush1.xpose.msra.mxu0 0.0
      %2322 = vmatprep.subr.mxu0 0.0
      %2323 = vmatpush1.xpose.msra.mxu0 0.0
      %2324 = vmatprep.subr.mxu0 0.0
      %2325 = vmatpush1.xpose.msra.mxu0 0.0
      %2326 = vmatprep.subr.mxu0 0.0
      %2327 = vmatpush1.xpose.msra.mxu0 0.0
      %2328 = vmatprep.subr.mxu0 0.0
      %2329 = vmatpush1.xpose.msra.mxu0 0.0
      %2330 = vmatprep.subr.mxu0 0.0
      %2331 = vmatpush1.xpose.msra.mxu0 0.0
      %2332 = vmatprep.subr.mxu0 0.0
      %2333 = vmatpush1.xpose.msra.mxu0 0.0
      %2334 = vmatprep.subr.mxu0 0.0
      %2335 = vmatpush1.xpose.msra.mxu0 0.0
      %2336 = vmatprep.subr.mxu0 0.0
      %2337 = vmatpush1.xpose.msra.mxu0 0.0
      %2338 = vmatprep.subr.mxu0 0.0
      %2339 = vmatpush1.xpose.msra.mxu0 0.0
      %2340 = vmatprep.subr.mxu0 0.0
      %2341 = vmatpush1.xpose.msra.mxu0 0.0
      %2342 = vmatprep.subr.mxu0 0.0
      %2343 = vmatpush1.xpose.msra.mxu0 0.0
      %2344 = vmatprep.subr.mxu0 0.0
      %2345 = vmatpush1.xpose.msra.mxu0 0.0
      %2346 = vmatprep.subr.mxu0 0.0
      %2347 = vmatpush1.xpose.msra.mxu0 0.0
      %2348 = vmatprep.subr.mxu0 0.0
      %2349 = vmatpush1.xpose.msra.mxu0 0.0
      %2350 = vmatprep.subr.mxu0 0.0
      %2351 = vmatpush1.xpose.msra.mxu0 0.0
      %2352 = vmatprep.subr.mxu0 0.0
      %2353 = vmatpush1.xpose.msra.mxu0 0.0
      %2354 = vmatprep.subr.mxu0 0.0
      %2355 = vmatpush1.xpose.msra.mxu0 0.0
      %2356 = vmatprep.subr.mxu0 0.0
      %2357 = vmatpush1.xpose.msra.mxu0 0.0
      %2358 = vmatprep.subr.mxu0 0.0
      %2359 = vmatpush1.xpose.msra.mxu0 0.0
      %2360 = vmatprep.subr.mxu0 0.0
      %2361 = vmatpush1.xpose.msra.mxu0 0.0
      %2362 = vmatprep.subr.mxu0 0.0
      %2363 = vmatpush1.xpose.msra.mxu0 0.0
      %2364 = vmatprep.subr.mxu0 0.0
      %2365 = vmatpush1.xpose.msra.mxu0 0.0
      %2366 = vmatprep.subr.mxu0 0.0
      %2367 = vmatpush1.xpose.msra.mxu0 0.0
      %2368 = vmatprep.subr.mxu0 0.0
      %2369 = vmatpush1.xpose.msra.mxu0 0.0
      %2370 = vmatprep.subr.mxu0 0.0
      %2371 = vmatpush1.xpose.msra.mxu0 0.0
      %2372 = vmatprep.subr.mxu0 0.0
      %2373 = vmatpush1.xpose.msra.mxu0 0.0
      %2374 = vmatprep.mubr.f32.mxu0 0.0
      %2375 = vmatmul.mubr.f32.gmra.mrb[0].mxu0 %v2306
      %v2376 = vpop.f32.mrb[0].mxu0
      %v2377 = vadd.f32 0.0, %v2376
      %v2378 = vpop.f32.mrb[0].mxu0
      %2379 = vdwg.mxu0
      %2380 = vrot.lane.b32.xlu0 %v524, 120
      %v2381 = vpop.permute.xlu0 %2380
      %2382 = vrot.lane.b32.xlu0 %v664, 120
      %v2383 = vpop.permute.xlu0 %2382
      %v2384 = vsel %vm677, %v2381, 0
      %v2386 = vsel %vm677, %v2383, 0
      %2388 = vmatprep.subr.mxu0 0.0
      %2389 = vmatpush1.xpose.msra.mxu0 %v2386
      %2390 = vmatprep.subr.mxu0 0.0
      %2391 = vmatpush1.xpose.msra.mxu0 0.0
      %2392 = vmatprep.subr.mxu0 0.0
      %2393 = vmatpush1.xpose.msra.mxu0 0.0
      %2394 = vmatprep.subr.mxu0 0.0
      %2395 = vmatpush1.xpose.msra.mxu0 0.0
      %2396 = vmatprep.subr.mxu0 0.0
      %2397 = vmatpush1.xpose.msra.mxu0 0.0
      %2398 = vmatprep.subr.mxu0 0.0
      %2399 = vmatpush1.xpose.msra.mxu0 0.0
      %2400 = vmatprep.subr.mxu0 0.0
      %2401 = vmatpush1.xpose.msra.mxu0 0.0
      %2402 = vmatprep.subr.mxu0 0.0
      %2403 = vmatpush1.xpose.msra.mxu0 0.0
      %2404 = vmatprep.subr.mxu0 0.0
      %2405 = vmatpush1.xpose.msra.mxu0 0.0
      %2406 = vmatprep.subr.mxu0 0.0
      %2407 = vmatpush1.xpose.msra.mxu0 0.0
      %2408 = vmatprep.subr.mxu0 0.0
      %2409 = vmatpush1.xpose.msra.mxu0 0.0
      %2410 = vmatprep.subr.mxu0 0.0
      %2411 = vmatpush1.xpose.msra.mxu0 0.0
      %2412 = vmatprep.subr.mxu0 0.0
      %2413 = vmatpush1.xpose.msra.mxu0 0.0
      %2414 = vmatprep.subr.mxu0 0.0
      %2415 = vmatpush1.xpose.msra.mxu0 0.0
      %2416 = vmatprep.subr.mxu0 0.0
      %2417 = vmatpush1.xpose.msra.mxu0 0.0
      %2418 = vmatprep.subr.mxu0 0.0
      %2419 = vmatpush1.xpose.msra.mxu0 0.0
      %2420 = vmatprep.subr.mxu0 0.0
      %2421 = vmatpush1.xpose.msra.mxu0 0.0
      %2422 = vmatprep.subr.mxu0 0.0
      %2423 = vmatpush1.xpose.msra.mxu0 0.0
      %2424 = vmatprep.subr.mxu0 0.0
      %2425 = vmatpush1.xpose.msra.mxu0 0.0
      %2426 = vmatprep.subr.mxu0 0.0
      %2427 = vmatpush1.xpose.msra.mxu0 0.0
      %2428 = vmatprep.subr.mxu0 0.0
      %2429 = vmatpush1.xpose.msra.mxu0 0.0
      %2430 = vmatprep.subr.mxu0 0.0
      %2431 = vmatpush1.xpose.msra.mxu0 0.0
      %2432 = vmatprep.subr.mxu0 0.0
      %2433 = vmatpush1.xpose.msra.mxu0 0.0
      %2434 = vmatprep.subr.mxu0 0.0
      %2435 = vmatpush1.xpose.msra.mxu0 0.0
      %2436 = vmatprep.subr.mxu0 0.0
      %2437 = vmatpush1.xpose.msra.mxu0 0.0
      %2438 = vmatprep.subr.mxu0 0.0
      %2439 = vmatpush1.xpose.msra.mxu0 0.0
      %2440 = vmatprep.subr.mxu0 0.0
      %2441 = vmatpush1.xpose.msra.mxu0 0.0
      %2442 = vmatprep.subr.mxu0 0.0
      %2443 = vmatpush1.xpose.msra.mxu0 0.0
      %2444 = vmatprep.subr.mxu0 0.0
      %2445 = vmatpush1.xpose.msra.mxu0 0.0
      %2446 = vmatprep.subr.mxu0 0.0
      %2447 = vmatpush1.xpose.msra.mxu0 0.0
      %2448 = vmatprep.subr.mxu0 0.0
      %2449 = vmatpush1.xpose.msra.mxu0 0.0
      %2450 = vmatprep.subr.mxu0 0.0
      %2451 = vmatpush1.xpose.msra.mxu0 0.0
      %2452 = vmatprep.mubr.f32.mxu0 0.0
      %2453 = vmatmul.mubr.f32.gmra.mrb[0].mxu0 %v2384
      %v2454 = vpop.f32.mrb[0].mxu0
      %v2455 = vadd.f32 0.0, %v2454
      %v2456 = vpop.f32.mrb[0].mxu0
      %2457 = vdwg.mxu0
      %2458 = vrot.lane.b32.xlu0 %v529, 120
      %v2459 = vpop.permute.xlu0 %2458
      %2460 = vrot.lane.b32.xlu0 %v669, 120
      %v2461 = vpop.permute.xlu0 %2460
      %v2462 = vsel %vm677, %v2459, 0
      %v2464 = vsel %vm677, %v2461, 0
      %2466 = vmatprep.subr.mxu0 0.0
      %2467 = vmatpush1.xpose.msra.mxu0 %v2464
      %2468 = vmatprep.subr.mxu0 0.0
      %2469 = vmatpush1.xpose.msra.mxu0 0.0
      %2470 = vmatprep.subr.mxu0 0.0
      %2471 = vmatpush1.xpose.msra.mxu0 0.0
      %2472 = vmatprep.subr.mxu0 0.0
      %2473 = vmatpush1.xpose.msra.mxu0 0.0
      %2474 = vmatprep.subr.mxu0 0.0
      %2475 = vmatpush1.xpose.msra.mxu0 0.0
      %2476 = vmatprep.subr.mxu0 0.0
      %2477 = vmatpush1.xpose.msra.mxu0 0.0
      %2478 = vmatprep.subr.mxu0 0.0
      %2479 = vmatpush1.xpose.msra.mxu0 0.0
      %2480 = vmatprep.subr.mxu0 0.0
      %2481 = vmatpush1.xpose.msra.mxu0 0.0
      %2482 = vmatprep.subr.mxu0 0.0
      %2483 = vmatpush1.xpose.msra.mxu0 0.0
      %2484 = vmatprep.subr.mxu0 0.0
      %2485 = vmatpush1.xpose.msra.mxu0 0.0
      %2486 = vmatprep.subr.mxu0 0.0
      %2487 = vmatpush1.xpose.msra.mxu0 0.0
      %2488 = vmatprep.subr.mxu0 0.0
      %2489 = vmatpush1.xpose.msra.mxu0 0.0
      %2490 = vmatprep.subr.mxu0 0.0
      %2491 = vmatpush1.xpose.msra.mxu0 0.0
      %2492 = vmatprep.subr.mxu0 0.0
      %2493 = vmatpush1.xpose.msra.mxu0 0.0
      %2494 = vmatprep.subr.mxu0 0.0
      %2495 = vmatpush1.xpose.msra.mxu0 0.0
      %2496 = vmatprep.subr.mxu0 0.0
      %2497 = vmatpush1.xpose.msra.mxu0 0.0
      %2498 = vmatprep.subr.mxu0 0.0
      %2499 = vmatpush1.xpose.msra.mxu0 0.0
      %2500 = vmatprep.subr.mxu0 0.0
      %2501 = vmatpush1.xpose.msra.mxu0 0.0
      %2502 = vmatprep.subr.mxu0 0.0
      %2503 = vmatpush1.xpose.msra.mxu0 0.0
      %2504 = vmatprep.subr.mxu0 0.0
      %2505 = vmatpush1.xpose.msra.mxu0 0.0
      %2506 = vmatprep.subr.mxu0 0.0
      %2507 = vmatpush1.xpose.msra.mxu0 0.0
      %2508 = vmatprep.subr.mxu0 0.0
      %2509 = vmatpush1.xpose.msra.mxu0 0.0
      %2510 = vmatprep.subr.mxu0 0.0
      %2511 = vmatpush1.xpose.msra.mxu0 0.0
      %2512 = vmatprep.subr.mxu0 0.0
      %2513 = vmatpush1.xpose.msra.mxu0 0.0
      %2514 = vmatprep.subr.mxu0 0.0
      %2515 = vmatpush1.xpose.msra.mxu0 0.0
      %2516 = vmatprep.subr.mxu0 0.0
      %2517 = vmatpush1.xpose.msra.mxu0 0.0
      %2518 = vmatprep.subr.mxu0 0.0
      %2519 = vmatpush1.xpose.msra.mxu0 0.0
      %2520 = vmatprep.subr.mxu0 0.0
      %2521 = vmatpush1.xpose.msra.mxu0 0.0
      %2522 = vmatprep.subr.mxu0 0.0
      %2523 = vmatpush1.xpose.msra.mxu0 0.0
      %2524 = vmatprep.subr.mxu0 0.0
      %2525 = vmatpush1.xpose.msra.mxu0 0.0
      %2526 = vmatprep.subr.mxu0 0.0
      %2527 = vmatpush1.xpose.msra.mxu0 0.0
      %2528 = vmatprep.subr.mxu0 0.0
      %2529 = vmatpush1.xpose.msra.mxu0 0.0
      %2530 = vmatprep.mubr.f32.mxu0 0.0
      %2531 = vmatmul.mubr.f32.gmra.mrb[0].mxu0 %v2462
      %v2532 = vpop.f32.mrb[0].mxu0
      %v2533 = vadd.f32 0.0, %v2532
      %v2534 = vpop.f32.mrb[0].mxu0
      %2535 = vdwg.mxu0
      %2536 = vrot.lane.b32.xlu0 %v534, 120
      %v2537 = vpop.permute.xlu0 %2536
      %2538 = vrot.lane.b32.xlu0 %v674, 120
      %v2539 = vpop.permute.xlu0 %2538
      %v2540 = vsel %vm677, %v2537, 0
      %v2542 = vsel %vm677, %v2539, 0
      %2544 = vmatprep.subr.mxu0 0.0
      %2545 = vmatpush1.xpose.msra.mxu0 %v2542
      %2546 = vmatprep.subr.mxu0 0.0
      %2547 = vmatpush1.xpose.msra.mxu0 0.0
      %2548 = vmatprep.subr.mxu0 0.0
      %2549 = vmatpush1.xpose.msra.mxu0 0.0
      %2550 = vmatprep.subr.mxu0 0.0
      %2551 = vmatpush1.xpose.msra.mxu0 0.0
      %2552 = vmatprep.subr.mxu0 0.0
      %2553 = vmatpush1.xpose.msra.mxu0 0.0
      %2554 = vmatprep.subr.mxu0 0.0
      %2555 = vmatpush1.xpose.msra.mxu0 0.0
      %2556 = vmatprep.subr.mxu0 0.0
      %2557 = vmatpush1.xpose.msra.mxu0 0.0
      %2558 = vmatprep.subr.mxu0 0.0
      %2559 = vmatpush1.xpose.msra.mxu0 0.0
      %2560 = vmatprep.subr.mxu0 0.0
      %2561 = vmatpush1.xpose.msra.mxu0 0.0
      %2562 = vmatprep.subr.mxu0 0.0
      %2563 = vmatpush1.xpose.msra.mxu0 0.0
      %2564 = vmatprep.subr.mxu0 0.0
      %2565 = vmatpush1.xpose.msra.mxu0 0.0
      %2566 = vmatprep.subr.mxu0 0.0
      %2567 = vmatpush1.xpose.msra.mxu0 0.0
      %2568 = vmatprep.subr.mxu0 0.0
      %2569 = vmatpush1.xpose.msra.mxu0 0.0
      %2570 = vmatprep.subr.mxu0 0.0
      %2571 = vmatpush1.xpose.msra.mxu0 0.0
      %2572 = vmatprep.subr.mxu0 0.0
      %2573 = vmatpush1.xpose.msra.mxu0 0.0
      %2574 = vmatprep.subr.mxu0 0.0
      %2575 = vmatpush1.xpose.msra.mxu0 0.0
      %2576 = vmatprep.subr.mxu0 0.0
      %2577 = vmatpush1.xpose.msra.mxu0 0.0
      %2578 = vmatprep.subr.mxu0 0.0
      %2579 = vmatpush1.xpose.msra.mxu0 0.0
      %2580 = vmatprep.subr.mxu0 0.0
      %2581 = vmatpush1.xpose.msra.mxu0 0.0
      %2582 = vmatprep.subr.mxu0 0.0
      %2583 = vmatpush1.xpose.msra.mxu0 0.0
      %2584 = vmatprep.subr.mxu0 0.0
      %2585 = vmatpush1.xpose.msra.mxu0 0.0
      %2586 = vmatprep.subr.mxu0 0.0
      %2587 = vmatpush1.xpose.msra.mxu0 0.0
      %2588 = vmatprep.subr.mxu0 0.0
      %2589 = vmatpush1.xpose.msra.mxu0 0.0
      %2590 = vmatprep.subr.mxu0 0.0
      %2591 = vmatpush1.xpose.msra.mxu0 0.0
      %2592 = vmatprep.subr.mxu0 0.0
      %2593 = vmatpush1.xpose.msra.mxu0 0.0
      %2594 = vmatprep.subr.mxu0 0.0
      %2595 = vmatpush1.xpose.msra.mxu0 0.0
      %2596 = vmatprep.subr.mxu0 0.0
      %2597 = vmatpush1.xpose.msra.mxu0 0.0
      %2598 = vmatprep.subr.mxu0 0.0
      %2599 = vmatpush1.xpose.msra.mxu0 0.0
      %2600 = vmatprep.subr.mxu0 0.0
      %2601 = vmatpush1.xpose.msra.mxu0 0.0
      %2602 = vmatprep.subr.mxu0 0.0
      %2603 = vmatpush1.xpose.msra.mxu0 0.0
      %2604 = vmatprep.subr.mxu0 0.0
      %2605 = vmatpush1.xpose.msra.mxu0 0.0
      %2606 = vmatprep.subr.mxu0 0.0
      %2607 = vmatpush1.xpose.msra.mxu0 0.0
      %2608 = vmatprep.mubr.f32.mxu0 0.0
      %2609 = vmatmul.mubr.f32.gmra.mrb[0].mxu0 %v2540
      %v2610 = vpop.f32.mrb[0].mxu0
      %v2611 = vadd.f32 0.0, %v2610
      %v2612 = vpop.f32.mrb[0].mxu0
      %2613 = vdwg.mxu0
      %v2614 = vmul.f32 %v2065, 0.35355338
      %v2615 = vmul.f32 %v2143, 0.35355338
      %v2616 = vmul.f32 %v2221, 0.35355338
      %v2617 = vmul.f32 %v2299, 0.35355338
      %v2618 = vmul.f32 %v2377, 0.35355338
      %v2619 = vmul.f32 %v2455, 0.35355338
      %v2620 = vmul.f32 %v2533, 0.35355338
      %v2621 = vmul.f32 %v2611, 0.35355338
      %v2622 = vsel %vm677, %v2614, -inf
      %2623 = vmax.xlane.f32.xlu0 %v2622
      %v2624 = vpop.xlane.xlu0 %2623
      %v2625 = vsel %vm677, %v2615, -inf
      %2626 = vmax.xlane.f32.xlu0 %v2625
      %v2627 = vpop.xlane.xlu0 %2626
      %v2628 = vsel %vm677, %v2616, -inf
      %2629 = vmax.xlane.f32.xlu0 %v2628
      %v2630 = vpop.xlane.xlu0 %2629
      %v2631 = vsel %vm677, %v2617, -inf
      %2632 = vmax.xlane.f32.xlu0 %v2631
      %v2633 = vpop.xlane.xlu0 %2632
      %v2634 = vsel %vm677, %v2618, -inf
      %2635 = vmax.xlane.f32.xlu0 %v2634
      %v2636 = vpop.xlane.xlu0 %2635
      %v2637 = vsel %vm677, %v2619, -inf
      %2638 = vmax.xlane.f32.xlu0 %v2637
      %v2639 = vpop.xlane.xlu0 %2638
      %v2640 = vsel %vm677, %v2620, -inf
      %2641 = vmax.xlane.f32.xlu0 %v2640
      %v2642 = vpop.xlane.xlu0 %2641
      %v2643 = vsel %vm677, %v2621, -inf
      %2644 = vmax.xlane.f32.xlu0 %v2643
      %v2645 = vpop.xlane.xlu0 %2644
      %v2646 = vsub.f32 %v2614, %v2624
      %v2647 = vsub.f32 %v2615, %v2627
      %v2648 = vsub.f32 %v2616, %v2630
      %v2649 = vsub.f32 %v2617, %v2633
      %v2650 = vsub.f32 %v2618, %v2636
      %v2651 = vsub.f32 %v2619, %v2639
      %v2652 = vsub.f32 %v2620, %v2642
      %v2653 = vsub.f32 %v2621, %v2645
      %v2654 = vmul.f32 %v2646, 1.442695
      %v2655 = vpow.pop %v2654
      %v2656 = vmul.f32 %v2647, 1.442695
      %v2657 = vpow.pop %v2656
      %v2658 = vmul.f32 %v2648, 1.442695
      %v2659 = vpow.pop %v2658
      %v2660 = vmul.f32 %v2649, 1.442695
      %v2661 = vpow.pop %v2660
      %v2662 = vmul.f32 %v2650, 1.442695
      %v2663 = vpow.pop %v2662
      %v2664 = vmul.f32 %v2651, 1.442695
      %v2665 = vpow.pop %v2664
      %v2666 = vmul.f32 %v2652, 1.442695
      %v2667 = vpow.pop %v2666
      %v2668 = vmul.f32 %v2653, 1.442695
      %v2669 = vpow.pop %v2668
      %v2670 = vsel %vm677, %v2655, 0.0
      %2671 = vadd.xlane.f32.xlu0 %v2670
      %v2672 = vpop.xlane.xlu0 %2671
      %v2673 = vsel %vm677, %v2657, 0.0
      %2674 = vadd.xlane.f32.xlu0 %v2673
      %v2675 = vpop.xlane.xlu0 %2674
      %v2676 = vsel %vm677, %v2659, 0.0
      %2677 = vadd.xlane.f32.xlu0 %v2676
      %v2678 = vpop.xlane.xlu0 %2677
      %v2679 = vsel %vm677, %v2661, 0.0
      %2680 = vadd.xlane.f32.xlu0 %v2679
      %v2681 = vpop.xlane.xlu0 %2680
      %v2682 = vsel %vm677, %v2663, 0.0
      %2683 = vadd.xlane.f32.xlu0 %v2682
      %v2684 = vpop.xlane.xlu0 %2683
      %v2685 = vsel %vm677, %v2665, 0.0
      %2686 = vadd.xlane.f32.xlu0 %v2685
      %v2687 = vpop.xlane.xlu0 %2686
      %v2688 = vsel %vm677, %v2667, 0.0
      %2689 = vadd.xlane.f32.xlu0 %v2688
      %v2690 = vpop.xlane.xlu0 %2689
      %v2691 = vsel %vm677, %v2669, 0.0
      %2692 = vadd.xlane.f32.xlu0 %v2691
      %v2693 = vpop.xlane.xlu0 %2692
      %v2694 = vrcp.pop %v2672
      %v2695 = vmul.f32 %v2655, %v2694
      %v2696 = vrcp.pop %v2675
      %v2697 = vmul.f32 %v2657, %v2696
      %v2698 = vrcp.pop %v2678
      %v2699 = vmul.f32 %v2659, %v2698
      %v2700 = vrcp.pop %v2681
      %v2701 = vmul.f32 %v2661, %v2700
      %v2702 = vrcp.pop %v2684
      %v2703 = vmul.f32 %v2663, %v2702
      %v2704 = vrcp.pop %v2687
      %v2705 = vmul.f32 %v2665, %v2704
      %v2706 = vrcp.pop %v2690
      %v2707 = vmul.f32 %v2667, %v2706
      %v2708 = vrcp.pop %v2693
      %v2709 = vmul.f32 %v2669, %v2708
      %2710 = vrot.lane.b32.xlu0 %v639, 88
      %v2711 = vpop.permute.xlu0 %2710
      %v2714 = vsel %vm677, %v2695, 0
      %2716 = vmatprep.subr.mxu0 0.0
      %2717 = vmatpush1.msra.mxu0 %v2711
      %2718 = vmatprep.subr.mxu0 0.0
      %2719 = vmatpush1.msra.mxu0 0.0
      %2720 = vmatprep.subr.mxu0 0.0
      %2721 = vmatpush1.msra.mxu0 0.0
      %2722 = vmatprep.subr.mxu0 0.0
      %2723 = vmatpush1.msra.mxu0 0.0
      %2724 = vmatprep.subr.mxu0 0.0
      %2725 = vmatpush1.msra.mxu0 0.0
      %2726 = vmatprep.subr.mxu0 0.0
      %2727 = vmatpush1.msra.mxu0 0.0
      %2728 = vmatprep.subr.mxu0 0.0
      %2729 = vmatpush1.msra.mxu0 0.0
      %2730 = vmatprep.subr.mxu0 0.0
      %2731 = vmatpush1.msra.mxu0 0.0
      %2732 = vmatprep.subr.mxu0 0.0
      %2733 = vmatpush1.msra.mxu0 0.0
      %2734 = vmatprep.subr.mxu0 0.0
      %2735 = vmatpush1.msra.mxu0 0.0
      %2736 = vmatprep.subr.mxu0 0.0
      %2737 = vmatpush1.msra.mxu0 0.0
      %2738 = vmatprep.subr.mxu0 0.0
      %2739 = vmatpush1.msra.mxu0 0.0
      %2740 = vmatprep.subr.mxu0 0.0
      %2741 = vmatpush1.msra.mxu0 0.0
      %2742 = vmatprep.subr.mxu0 0.0
      %2743 = vmatpush1.msra.mxu0 0.0
      %2744 = vmatprep.subr.mxu0 0.0
      %2745 = vmatpush1.msra.mxu0 0.0
      %2746 = vmatprep.subr.mxu0 0.0
      %2747 = vmatpush1.msra.mxu0 0.0
      %2748 = vmatprep.subr.mxu0 0.0
      %2749 = vmatpush1.msra.mxu0 0.0
      %2750 = vmatprep.subr.mxu0 0.0
      %2751 = vmatpush1.msra.mxu0 0.0
      %2752 = vmatprep.subr.mxu0 0.0
      %2753 = vmatpush1.msra.mxu0 0.0
      %2754 = vmatprep.subr.mxu0 0.0
      %2755 = vmatpush1.msra.mxu0 0.0
      %2756 = vmatprep.subr.mxu0 0.0
      %2757 = vmatpush1.msra.mxu0 0.0
      %2758 = vmatprep.subr.mxu0 0.0
      %2759 = vmatpush1.msra.mxu0 0.0
      %2760 = vmatprep.subr.mxu0 0.0
      %2761 = vmatpush1.msra.mxu0 0.0
      %2762 = vmatprep.subr.mxu0 0.0
      %2763 = vmatpush1.msra.mxu0 0.0
      %2764 = vmatprep.subr.mxu0 0.0
      %2765 = vmatpush1.msra.mxu0 0.0
      %2766 = vmatprep.subr.mxu0 0.0
      %2767 = vmatpush1.msra.mxu0 0.0
      %2768 = vmatprep.subr.mxu0 0.0
      %2769 = vmatpush1.msra.mxu0 0.0
      %2770 = vmatprep.subr.mxu0 0.0
      %2771 = vmatpush1.msra.mxu0 0.0
      %2772 = vmatprep.subr.mxu0 0.0
      %2773 = vmatpush1.msra.mxu0 0.0
      %2774 = vmatprep.subr.mxu0 0.0
      %2775 = vmatpush1.msra.mxu0 0.0
      %2776 = vmatprep.subr.mxu0 0.0
      %2777 = vmatpush1.msra.mxu0 0.0
      %2778 = vmatprep.subr.mxu0 0.0
      %2779 = vmatpush1.msra.mxu0 0.0
      %2780 = vmatprep.mubr.f32.mxu0 0.0
      %2781 = vmatmul.mubr.f32.gmra.mrb[0].mxu0 %v2714
      %v2782 = vpop.f32.mrb[0].mxu0
      %v2783 = vadd.f32 0.0, %v2782
      %v2784 = vpop.f32.mrb[0].mxu0
      %2785 = vdwg.mxu0
      %2786 = vrot.lane.b32.xlu0 %v644, 88
      %v2787 = vpop.permute.xlu0 %2786
      %v2790 = vsel %vm677, %v2697, 0
      %2792 = vmatprep.subr.mxu0 0.0
      %2793 = vmatpush1.msra.mxu0 %v2787
      %2794 = vmatprep.subr.mxu0 0.0
      %2795 = vmatpush1.msra.mxu0 0.0
      %2796 = vmatprep.subr.mxu0 0.0
      %2797 = vmatpush1.msra.mxu0 0.0
      %2798 = vmatprep.subr.mxu0 0.0
      %2799 = vmatpush1.msra.mxu0 0.0
      %2800 = vmatprep.subr.mxu0 0.0
      %2801 = vmatpush1.msra.mxu0 0.0
      %2802 = vmatprep.subr.mxu0 0.0
      %2803 = vmatpush1.msra.mxu0 0.0
      %2804 = vmatprep.subr.mxu0 0.0
      %2805 = vmatpush1.msra.mxu0 0.0
      %2806 = vmatprep.subr.mxu0 0.0
      %2807 = vmatpush1.msra.mxu0 0.0
      %2808 = vmatprep.subr.mxu0 0.0
      %2809 = vmatpush1.msra.mxu0 0.0
      %2810 = vmatprep.subr.mxu0 0.0
      %2811 = vmatpush1.msra.mxu0 0.0
      %2812 = vmatprep.subr.mxu0 0.0
      %2813 = vmatpush1.msra.mxu0 0.0
      %2814 = vmatprep.subr.mxu0 0.0
      %2815 = vmatpush1.msra.mxu0 0.0
      %2816 = vmatprep.subr.mxu0 0.0
      %2817 = vmatpush1.msra.mxu0 0.0
      %2818 = vmatprep.subr.mxu0 0.0
      %2819 = vmatpush1.msra.mxu0 0.0
      %2820 = vmatprep.subr.mxu0 0.0
      %2821 = vmatpush1.msra.mxu0 0.0
      %2822 = vmatprep.subr.mxu0 0.0
      %2823 = vmatpush1.msra.mxu0 0.0
      %2824 = vmatprep.subr.mxu0 0.0
      %2825 = vmatpush1.msra.mxu0 0.0
      %2826 = vmatprep.subr.mxu0 0.0
      %2827 = vmatpush1.msra.mxu0 0.0
      %2828 = vmatprep.subr.mxu0 0.0
      %2829 = vmatpush1.msra.mxu0 0.0
      %2830 = vmatprep.subr.mxu0 0.0
      %2831 = vmatpush1.msra.mxu0 0.0
      %2832 = vmatprep.subr.mxu0 0.0
      %2833 = vmatpush1.msra.mxu0 0.0
      %2834 = vmatprep.subr.mxu0 0.0
      %2835 = vmatpush1.msra.mxu0 0.0
      %2836 = vmatprep.subr.mxu0 0.0
      %2837 = vmatpush1.msra.mxu0 0.0
      %2838 = vmatprep.subr.mxu0 0.0
      %2839 = vmatpush1.msra.mxu0 0.0
      %2840 = vmatprep.subr.mxu0 0.0
      %2841 = vmatpush1.msra.mxu0 0.0
      %2842 = vmatprep.subr.mxu0 0.0
      %2843 = vmatpush1.msra.mxu0 0.0
      %2844 = vmatprep.subr.mxu0 0.0
      %2845 = vmatpush1.msra.mxu0 0.0
      %2846 = vmatprep.subr.mxu0 0.0
      %2847 = vmatpush1.msra.mxu0 0.0
      %2848 = vmatprep.subr.mxu0 0.0
      %2849 = vmatpush1.msra.mxu0 0.0
      %2850 = vmatprep.subr.mxu0 0.0
      %2851 = vmatpush1.msra.mxu0 0.0
      %2852 = vmatprep.subr.mxu0 0.0
      %2853 = vmatpush1.msra.mxu0 0.0
      %2854 = vmatprep.subr.mxu0 0.0
      %2855 = vmatpush1.msra.mxu0 0.0
      %2856 = vmatprep.mubr.f32.mxu0 0.0
      %2857 = vmatmul.mubr.f32.gmra.mrb[0].mxu0 %v2790
      %v2858 = vpop.f32.mrb[0].mxu0
      %v2859 = vadd.f32 0.0, %v2858
      %v2860 = vpop.f32.mrb[0].mxu0
      %2861 = vdwg.mxu0
      %2862 = vrot.lane.b32.xlu0 %v649, 88
      %v2863 = vpop.permute.xlu0 %2862
      %v2866 = vsel %vm677, %v2699, 0
      %2868 = vmatprep.subr.mxu0 0.0
      %2869 = vmatpush1.msra.mxu0 %v2863
      %2870 = vmatprep.subr.mxu0 0.0
      %2871 = vmatpush1.msra.mxu0 0.0
      %2872 = vmatprep.subr.mxu0 0.0
      %2873 = vmatpush1.msra.mxu0 0.0
      %2874 = vmatprep.subr.mxu0 0.0
      %2875 = vmatpush1.msra.mxu0 0.0
      %2876 = vmatprep.subr.mxu0 0.0
      %2877 = vmatpush1.msra.mxu0 0.0
      %2878 = vmatprep.subr.mxu0 0.0
      %2879 = vmatpush1.msra.mxu0 0.0
      %2880 = vmatprep.subr.mxu0 0.0
      %2881 = vmatpush1.msra.mxu0 0.0
      %2882 = vmatprep.subr.mxu0 0.0
      %2883 = vmatpush1.msra.mxu0 0.0
      %2884 = vmatprep.subr.mxu0 0.0
      %2885 = vmatpush1.msra.mxu0 0.0
      %2886 = vmatprep.subr.mxu0 0.0
      %2887 = vmatpush1.msra.mxu0 0.0
      %2888 = vmatprep.subr.mxu0 0.0
      %2889 = vmatpush1.msra.mxu0 0.0
      %2890 = vmatprep.subr.mxu0 0.0
      %2891 = vmatpush1.msra.mxu0 0.0
      %2892 = vmatprep.subr.mxu0 0.0
      %2893 = vmatpush1.msra.mxu0 0.0
      %2894 = vmatprep.subr.mxu0 0.0
      %2895 = vmatpush1.msra.mxu0 0.0
      %2896 = vmatprep.subr.mxu0 0.0
      %2897 = vmatpush1.msra.mxu0 0.0
      %2898 = vmatprep.subr.mxu0 0.0
      %2899 = vmatpush1.msra.mxu0 0.0
      %2900 = vmatprep.subr.mxu0 0.0
      %2901 = vmatpush1.msra.mxu0 0.0
      %2902 = vmatprep.subr.mxu0 0.0
      %2903 = vmatpush1.msra.mxu0 0.0
      %2904 = vmatprep.subr.mxu0 0.0
      %2905 = vmatpush1.msra.mxu0 0.0
      %2906 = vmatprep.subr.mxu0 0.0
      %2907 = vmatpush1.msra.mxu0 0.0
      %2908 = vmatprep.subr.mxu0 0.0
      %2909 = vmatpush1.msra.mxu0 0.0
      %2910 = vmatprep.subr.mxu0 0.0
      %2911 = vmatpush1.msra.mxu0 0.0
      %2912 = vmatprep.subr.mxu0 0.0
      %2913 = vmatpush1.msra.mxu0 0.0
      %2914 = vmatprep.subr.mxu0 0.0
      %2915 = vmatpush1.msra.mxu0 0.0
      %2916 = vmatprep.subr.mxu0 0.0
      %2917 = vmatpush1.msra.mxu0 0.0
      %2918 = vmatprep.subr.mxu0 0.0
      %2919 = vmatpush1.msra.mxu0 0.0
      %2920 = vmatprep.subr.mxu0 0.0
      %2921 = vmatpush1.msra.mxu0 0.0
      %2922 = vmatprep.subr.mxu0 0.0
      %2923 = vmatpush1.msra.mxu0 0.0
      %2924 = vmatprep.subr.mxu0 0.0
      %2925 = vmatpush1.msra.mxu0 0.0
      %2926 = vmatprep.subr.mxu0 0.0
      %2927 = vmatpush1.msra.mxu0 0.0
      %2928 = vmatprep.subr.mxu0 0.0
      %2929 = vmatpush1.msra.mxu0 0.0
      %2930 = vmatprep.subr.mxu0 0.0
      %2931 = vmatpush1.msra.mxu0 0.0
      %2932 = vmatprep.mubr.f32.mxu0 0.0
      %2933 = vmatmul.mubr.f32.gmra.mrb[0].mxu0 %v2866
      %v2934 = vpop.f32.mrb[0].mxu0
      %v2935 = vadd.f32 0.0, %v2934
      %v2936 = vpop.f32.mrb[0].mxu0
      %2937 = vdwg.mxu0
      %2938 = vrot.lane.b32.xlu0 %v654, 88
      %v2939 = vpop.permute.xlu0 %2938
      %v2942 = vsel %vm677, %v2701, 0
      %2944 = vmatprep.subr.mxu0 0.0
      %2945 = vmatpush1.msra.mxu0 %v2939
      %2946 = vmatprep.subr.mxu0 0.0
      %2947 = vmatpush1.msra.mxu0 0.0
      %2948 = vmatprep.subr.mxu0 0.0
      %2949 = vmatpush1.msra.mxu0 0.0
      %2950 = vmatprep.subr.mxu0 0.0
      %2951 = vmatpush1.msra.mxu0 0.0
      %2952 = vmatprep.subr.mxu0 0.0
      %2953 = vmatpush1.msra.mxu0 0.0
      %2954 = vmatprep.subr.mxu0 0.0
      %2955 = vmatpush1.msra.mxu0 0.0
      %2956 = vmatprep.subr.mxu0 0.0
      %2957 = vmatpush1.msra.mxu0 0.0
      %2958 = vmatprep.subr.mxu0 0.0
      %2959 = vmatpush1.msra.mxu0 0.0
      %2960 = vmatprep.subr.mxu0 0.0
      %2961 = vmatpush1.msra.mxu0 0.0
      %2962 = vmatprep.subr.mxu0 0.0
      %2963 = vmatpush1.msra.mxu0 0.0
      %2964 = vmatprep.subr.mxu0 0.0
      %2965 = vmatpush1.msra.mxu0 0.0
      %2966 = vmatprep.subr.mxu0 0.0
      %2967 = vmatpush1.msra.mxu0 0.0
      %2968 = vmatprep.subr.mxu0 0.0
      %2969 = vmatpush1.msra.mxu0 0.0
      %2970 = vmatprep.subr.mxu0 0.0
      %2971 = vmatpush1.msra.mxu0 0.0
      %2972 = vmatprep.subr.mxu0 0.0
      %2973 = vmatpush1.msra.mxu0 0.0
      %2974 = vmatprep.subr.mxu0 0.0
      %2975 = vmatpush1.msra.mxu0 0.0
      %2976 = vmatprep.subr.mxu0 0.0
      %2977 = vmatpush1.msra.mxu0 0.0
      %2978 = vmatprep.subr.mxu0 0.0
      %2979 = vmatpush1.msra.mxu0 0.0
      %2980 = vmatprep.subr.mxu0 0.0
      %2981 = vmatpush1.msra.mxu0 0.0
      %2982 = vmatprep.subr.mxu0 0.0
      %2983 = vmatpush1.msra.mxu0 0.0
      %2984 = vmatprep.subr.mxu0 0.0
      %2985 = vmatpush1.msra.mxu0 0.0
      %2986 = vmatprep.subr.mxu0 0.0
      %2987 = vmatpush1.msra.mxu0 0.0
      %2988 = vmatprep.subr.mxu0 0.0
      %2989 = vmatpush1.msra.mxu0 0.0
      %2990 = vmatprep.subr.mxu0 0.0
      %2991 = vmatpush1.msra.mxu0 0.0
      %2992 = vmatprep.subr.mxu0 0.0
      %2993 = vmatpush1.msra.mxu0 0.0
      %2994 = vmatprep.subr.mxu0 0.0
      %2995 = vmatpush1.msra.mxu0 0.0
      %2996 = vmatprep.subr.mxu0 0.0
      %2997 = vmatpush1.msra.mxu0 0.0
      %2998 = vmatprep.subr.mxu0 0.0
      %2999 = vmatpush1.msra.mxu0 0.0
      %3000 = vmatprep.subr.mxu0 0.0
      %3001 = vmatpush1.msra.mxu0 0.0
      %3002 = vmatprep.subr.mxu0 0.0
      %3003 = vmatpush1.msra.mxu0 0.0
      %3004 = vmatprep.subr.mxu0 0.0
      %3005 = vmatpush1.msra.mxu0 0.0
      %3006 = vmatprep.subr.mxu0 0.0
      %3007 = vmatpush1.msra.mxu0 0.0
      %3008 = vmatprep.mubr.f32.mxu0 0.0
      %3009 = vmatmul.mubr.f32.gmra.mrb[0].mxu0 %v2942
      %v3010 = vpop.f32.mrb[0].mxu0
      %v3011 = vadd.f32 0.0, %v3010
      %v3012 = vpop.f32.mrb[0].mxu0
      %3013 = vdwg.mxu0
      %3014 = vrot.lane.b32.xlu0 %v659, 88
      %v3015 = vpop.permute.xlu0 %3014
      %v3018 = vsel %vm677, %v2703, 0
      %3020 = vmatprep.subr.mxu0 0.0
      %3021 = vmatpush1.msra.mxu0 %v3015
      %3022 = vmatprep.subr.mxu0 0.0
      %3023 = vmatpush1.msra.mxu0 0.0
      %3024 = vmatprep.subr.mxu0 0.0
      %3025 = vmatpush1.msra.mxu0 0.0
      %3026 = vmatprep.subr.mxu0 0.0
      %3027 = vmatpush1.msra.mxu0 0.0
      %3028 = vmatprep.subr.mxu0 0.0
      %3029 = vmatpush1.msra.mxu0 0.0
      %3030 = vmatprep.subr.mxu0 0.0
      %3031 = vmatpush1.msra.mxu0 0.0
      %3032 = vmatprep.subr.mxu0 0.0
      %3033 = vmatpush1.msra.mxu0 0.0
      %3034 = vmatprep.subr.mxu0 0.0
      %3035 = vmatpush1.msra.mxu0 0.0
      %3036 = vmatprep.subr.mxu0 0.0
      %3037 = vmatpush1.msra.mxu0 0.0
      %3038 = vmatprep.subr.mxu0 0.0
      %3039 = vmatpush1.msra.mxu0 0.0
      %3040 = vmatprep.subr.mxu0 0.0
      %3041 = vmatpush1.msra.mxu0 0.0
      %3042 = vmatprep.subr.mxu0 0.0
      %3043 = vmatpush1.msra.mxu0 0.0
      %3044 = vmatprep.subr.mxu0 0.0
      %3045 = vmatpush1.msra.mxu0 0.0
      %3046 = vmatprep.subr.mxu0 0.0
      %3047 = vmatpush1.msra.mxu0 0.0
      %3048 = vmatprep.subr.mxu0 0.0
      %3049 = vmatpush1.msra.mxu0 0.0
      %3050 = vmatprep.subr.mxu0 0.0
      %3051 = vmatpush1.msra.mxu0 0.0
      %3052 = vmatprep.subr.mxu0 0.0
      %3053 = vmatpush1.msra.mxu0 0.0
      %3054 = vmatprep.subr.mxu0 0.0
      %3055 = vmatpush1.msra.mxu0 0.0
      %3056 = vmatprep.subr.mxu0 0.0
      %3057 = vmatpush1.msra.mxu0 0.0
      %3058 = vmatprep.subr.mxu0 0.0
      %3059 = vmatpush1.msra.mxu0 0.0
      %3060 = vmatprep.subr.mxu0 0.0
      %3061 = vmatpush1.msra.mxu0 0.0
      %3062 = vmatprep.subr.mxu0 0.0
      %3063 = vmatpush1.msra.mxu0 0.0
      %3064 = vmatprep.subr.mxu0 0.0
      %3065 = vmatpush1.msra.mxu0 0.0
      %3066 = vmatprep.subr.mxu0 0.0
      %3067 = vmatpush1.msra.mxu0 0.0
      %3068 = vmatprep.subr.mxu0 0.0
      %3069 = vmatpush1.msra.mxu0 0.0
      %3070 = vmatprep.subr.mxu0 0.0
      %3071 = vmatpush1.msra.mxu0 0.0
      %3072 = vmatprep.subr.mxu0 0.0
      %3073 = vmatpush1.msra.mxu0 0.0
      %3074 = vmatprep.subr.mxu0 0.0
      %3075 = vmatpush1.msra.mxu0 0.0
      %3076 = vmatprep.subr.mxu0 0.0
      %3077 = vmatpush1.msra.mxu0 0.0
      %3078 = vmatprep.subr.mxu0 0.0
      %3079 = vmatpush1.msra.mxu0 0.0
      %3080 = vmatprep.subr.mxu0 0.0
      %3081 = vmatpush1.msra.mxu0 0.0
      %3082 = vmatprep.subr.mxu0 0.0
      %3083 = vmatpush1.msra.mxu0 0.0
      %3084 = vmatprep.mubr.f32.mxu0 0.0
      %3085 = vmatmul.mubr.f32.gmra.mrb[0].mxu0 %v3018
      %v3086 = vpop.f32.mrb[0].mxu0
      %v3087 = vadd.f32 0.0, %v3086
      %v3088 = vpop.f32.mrb[0].mxu0
      %3089 = vdwg.mxu0
      %3090 = vrot.lane.b32.xlu0 %v664, 88
      %v3091 = vpop.permute.xlu0 %3090
      %v3094 = vsel %vm677, %v2705, 0
      %3096 = vmatprep.subr.mxu0 0.0
      %3097 = vmatpush1.msra.mxu0 %v3091
      %3098 = vmatprep.subr.mxu0 0.0
      %3099 = vmatpush1.msra.mxu0 0.0
      %3100 = vmatprep.subr.mxu0 0.0
      %3101 = vmatpush1.msra.mxu0 0.0
      %3102 = vmatprep.subr.mxu0 0.0
      %3103 = vmatpush1.msra.mxu0 0.0
      %3104 = vmatprep.subr.mxu0 0.0
      %3105 = vmatpush1.msra.mxu0 0.0
      %3106 = vmatprep.subr.mxu0 0.0
      %3107 = vmatpush1.msra.mxu0 0.0
      %3108 = vmatprep.subr.mxu0 0.0
      %3109 = vmatpush1.msra.mxu0 0.0
      %3110 = vmatprep.subr.mxu0 0.0
      %3111 = vmatpush1.msra.mxu0 0.0
      %3112 = vmatprep.subr.mxu0 0.0
      %3113 = vmatpush1.msra.mxu0 0.0
      %3114 = vmatprep.subr.mxu0 0.0
      %3115 = vmatpush1.msra.mxu0 0.0
      %3116 = vmatprep.subr.mxu0 0.0
      %3117 = vmatpush1.msra.mxu0 0.0
      %3118 = vmatprep.subr.mxu0 0.0
      %3119 = vmatpush1.msra.mxu0 0.0
      %3120 = vmatprep.subr.mxu0 0.0
      %3121 = vmatpush1.msra.mxu0 0.0
      %3122 = vmatprep.subr.mxu0 0.0
      %3123 = vmatpush1.msra.mxu0 0.0
      %3124 = vmatprep.subr.mxu0 0.0
      %3125 = vmatpush1.msra.mxu0 0.0
      %3126 = vmatprep.subr.mxu0 0.0
      %3127 = vmatpush1.msra.mxu0 0.0
      %3128 = vmatprep.subr.mxu0 0.0
      %3129 = vmatpush1.msra.mxu0 0.0
      %3130 = vmatprep.subr.mxu0 0.0
      %3131 = vmatpush1.msra.mxu0 0.0
      %3132 = vmatprep.subr.mxu0 0.0
      %3133 = vmatpush1.msra.mxu0 0.0
      %3134 = vmatprep.subr.mxu0 0.0
      %3135 = vmatpush1.msra.mxu0 0.0
      %3136 = vmatprep.subr.mxu0 0.0
      %3137 = vmatpush1.msra.mxu0 0.0
      %3138 = vmatprep.subr.mxu0 0.0
      %3139 = vmatpush1.msra.mxu0 0.0
      %3140 = vmatprep.subr.mxu0 0.0
      %3141 = vmatpush1.msra.mxu0 0.0
      %3142 = vmatprep.subr.mxu0 0.0
      %3143 = vmatpush1.msra.mxu0 0.0
      %3144 = vmatprep.subr.mxu0 0.0
      %3145 = vmatpush1.msra.mxu0 0.0
      %3146 = vmatprep.subr.mxu0 0.0
      %3147 = vmatpush1.msra.mxu0 0.0
      %3148 = vmatprep.subr.mxu0 0.0
      %3149 = vmatpush1.msra.mxu0 0.0
      %3150 = vmatprep.subr.mxu0 0.0
      %3151 = vmatpush1.msra.mxu0 0.0
      %3152 = vmatprep.subr.mxu0 0.0
      %3153 = vmatpush1.msra.mxu0 0.0
      %3154 = vmatprep.subr.mxu0 0.0
      %3155 = vmatpush1.msra.mxu0 0.0
      %3156 = vmatprep.subr.mxu0 0.0
      %3157 = vmatpush1.msra.mxu0 0.0
      %3158 = vmatprep.subr.mxu0 0.0
      %3159 = vmatpush1.msra.mxu0 0.0
      %3160 = vmatprep.mubr.f32.mxu0 0.0
      %3161 = vmatmul.mubr.f32.gmra.mrb[0].mxu0 %v3094
      %v3162 = vpop.f32.mrb[0].mxu0
      %v3163 = vadd.f32 0.0, %v3162
      %v3164 = vpop.f32.mrb[0].mxu0
      %3165 = vdwg.mxu0
      %3166 = vrot.lane.b32.xlu0 %v669, 88
      %v3167 = vpop.permute.xlu0 %3166
      %v3170 = vsel %vm677, %v2707, 0
      %3172 = vmatprep.subr.mxu0 0.0
      %3173 = vmatpush1.msra.mxu0 %v3167
      %3174 = vmatprep.subr.mxu0 0.0
      %3175 = vmatpush1.msra.mxu0 0.0
      %3176 = vmatprep.subr.mxu0 0.0
      %3177 = vmatpush1.msra.mxu0 0.0
      %3178 = vmatprep.subr.mxu0 0.0
      %3179 = vmatpush1.msra.mxu0 0.0
      %3180 = vmatprep.subr.mxu0 0.0
      %3181 = vmatpush1.msra.mxu0 0.0
      %3182 = vmatprep.subr.mxu0 0.0
      %3183 = vmatpush1.msra.mxu0 0.0
      %3184 = vmatprep.subr.mxu0 0.0
      %3185 = vmatpush1.msra.mxu0 0.0
      %3186 = vmatprep.subr.mxu0 0.0
      %3187 = vmatpush1.msra.mxu0 0.0
      %3188 = vmatprep.subr.mxu0 0.0
      %3189 = vmatpush1.msra.mxu0 0.0
      %3190 = vmatprep.subr.mxu0 0.0
      %3191 = vmatpush1.msra.mxu0 0.0
      %3192 = vmatprep.subr.mxu0 0.0
      %3193 = vmatpush1.msra.mxu0 0.0
      %3194 = vmatprep.subr.mxu0 0.0
      %3195 = vmatpush1.msra.mxu0 0.0
      %3196 = vmatprep.subr.mxu0 0.0
      %3197 = vmatpush1.msra.mxu0 0.0
      %3198 = vmatprep.subr.mxu0 0.0
      %3199 = vmatpush1.msra.mxu0 0.0
      %3200 = vmatprep.subr.mxu0 0.0
      %3201 = vmatpush1.msra.mxu0 0.0
      %3202 = vmatprep.subr.mxu0 0.0
      %3203 = vmatpush1.msra.mxu0 0.0
      %3204 = vmatprep.subr.mxu0 0.0
      %3205 = vmatpush1.msra.mxu0 0.0
      %3206 = vmatprep.subr.mxu0 0.0
      %3207 = vmatpush1.msra.mxu0 0.0
      %3208 = vmatprep.subr.mxu0 0.0
      %3209 = vmatpush1.msra.mxu0 0.0
      %3210 = vmatprep.subr.mxu0 0.0
      %3211 = vmatpush1.msra.mxu0 0.0
      %3212 = vmatprep.subr.mxu0 0.0
      %3213 = vmatpush1.msra.mxu0 0.0
      %3214 = vmatprep.subr.mxu0 0.0
      %3215 = vmatpush1.msra.mxu0 0.0
      %3216 = vmatprep.subr.mxu0 0.0
      %3217 = vmatpush1.msra.mxu0 0.0
      %3218 = vmatprep.subr.mxu0 0.0
      %3219 = vmatpush1.msra.mxu0 0.0
      %3220 = vmatprep.subr.mxu0 0.0
      %3221 = vmatpush1.msra.mxu0 0.0
      %3222 = vmatprep.subr.mxu0 0.0
      %3223 = vmatpush1.msra.mxu0 0.0
      %3224 = vmatprep.subr.mxu0 0.0
      %3225 = vmatpush1.msra.mxu0 0.0
      %3226 = vmatprep.subr.mxu0 0.0
      %3227 = vmatpush1.msra.mxu0 0.0
      %3228 = vmatprep.subr.mxu0 0.0
      %3229 = vmatpush1.msra.mxu0 0.0
      %3230 = vmatprep.subr.mxu0 0.0
      %3231 = vmatpush1.msra.mxu0 0.0
      %3232 = vmatprep.subr.mxu0 0.0
      %3233 = vmatpush1.msra.mxu0 0.0
      %3234 = vmatprep.subr.mxu0 0.0
      %3235 = vmatpush1.msra.mxu0 0.0
      %3236 = vmatprep.mubr.f32.mxu0 0.0
      %3237 = vmatmul.mubr.f32.gmra.mrb[0].mxu0 %v3170
      %v3238 = vpop.f32.mrb[0].mxu0
      %v3239 = vadd.f32 0.0, %v3238
      %v3240 = vpop.f32.mrb[0].mxu0
      %3241 = vdwg.mxu0
      %3242 = vrot.lane.b32.xlu0 %v674, 88
      %v3243 = vpop.permute.xlu0 %3242
      %v3246 = vsel %vm677, %v2709, 0
      %3248 = vmatprep.subr.mxu0 0.0
      %3249 = vmatpush1.msra.mxu0 %v3243
      %3250 = vmatprep.subr.mxu0 0.0
      %3251 = vmatpush1.msra.mxu0 0.0
      %3252 = vmatprep.subr.mxu0 0.0
      %3253 = vmatpush1.msra.mxu0 0.0
      %3254 = vmatprep.subr.mxu0 0.0
      %3255 = vmatpush1.msra.mxu0 0.0
      %3256 = vmatprep.subr.mxu0 0.0
      %3257 = vmatpush1.msra.mxu0 0.0
      %3258 = vmatprep.subr.mxu0 0.0
      %3259 = vmatpush1.msra.mxu0 0.0
      %3260 = vmatprep.subr.mxu0 0.0
      %3261 = vmatpush1.msra.mxu0 0.0
      %3262 = vmatprep.subr.mxu0 0.0
      %3263 = vmatpush1.msra.mxu0 0.0
      %3264 = vmatprep.subr.mxu0 0.0
      %3265 = vmatpush1.msra.mxu0 0.0
      %3266 = vmatprep.subr.mxu0 0.0
      %3267 = vmatpush1.msra.mxu0 0.0
      %3268 = vmatprep.subr.mxu0 0.0
      %3269 = vmatpush1.msra.mxu0 0.0
      %3270 = vmatprep.subr.mxu0 0.0
      %3271 = vmatpush1.msra.mxu0 0.0
      %3272 = vmatprep.subr.mxu0 0.0
      %3273 = vmatpush1.msra.mxu0 0.0
      %3274 = vmatprep.subr.mxu0 0.0
      %3275 = vmatpush1.msra.mxu0 0.0
      %3276 = vmatprep.subr.mxu0 0.0
      %3277 = vmatpush1.msra.mxu0 0.0
      %3278 = vmatprep.subr.mxu0 0.0
      %3279 = vmatpush1.msra.mxu0 0.0
      %3280 = vmatprep.subr.mxu0 0.0
      %3281 = vmatpush1.msra.mxu0 0.0
      %3282 = vmatprep.subr.mxu0 0.0
      %3283 = vmatpush1.msra.mxu0 0.0
      %3284 = vmatprep.subr.mxu0 0.0
      %3285 = vmatpush1.msra.mxu0 0.0
      %3286 = vmatprep.subr.mxu0 0.0
      %3287 = vmatpush1.msra.mxu0 0.0
      %3288 = vmatprep.subr.mxu0 0.0
      %3289 = vmatpush1.msra.mxu0 0.0
      %3290 = vmatprep.subr.mxu0 0.0
      %3291 = vmatpush1.msra.mxu0 0.0
      %3292 = vmatprep.subr.mxu0 0.0
      %3293 = vmatpush1.msra.mxu0 0.0
      %3294 = vmatprep.subr.mxu0 0.0
      %3295 = vmatpush1.msra.mxu0 0.0
      %3296 = vmatprep.subr.mxu0 0.0
      %3297 = vmatpush1.msra.mxu0 0.0
      %3298 = vmatprep.subr.mxu0 0.0
      %3299 = vmatpush1.msra.mxu0 0.0
      %3300 = vmatprep.subr.mxu0 0.0
      %3301 = vmatpush1.msra.mxu0 0.0
      %3302 = vmatprep.subr.mxu0 0.0
      %3303 = vmatpush1.msra.mxu0 0.0
      %3304 = vmatprep.subr.mxu0 0.0
      %3305 = vmatpush1.msra.mxu0 0.0
      %3306 = vmatprep.subr.mxu0 0.0
      %3307 = vmatpush1.msra.mxu0 0.0
      %3308 = vmatprep.subr.mxu0 0.0
      %3309 = vmatpush1.msra.mxu0 0.0
      %3310 = vmatprep.subr.mxu0 0.0
      %3311 = vmatpush1.msra.mxu0 0.0
      %3312 = vmatprep.mubr.f32.mxu0 0.0
      %3313 = vmatmul.mubr.f32.gmra.mrb[0].mxu0 %v3246
      %v3314 = vpop.f32.mrb[0].mxu0
      %v3315 = vadd.f32 0.0, %v3314
      %v3316 = vpop.f32.mrb[0].mxu0
      %3317 = vdwg.mxu0
      %3318 = vrot.lane.b32.xlu0 %v499, 112
      %v3319 = vpop.permute.xlu0 %3318
      %3320 = vrot.lane.b32.xlu0 %v639, 112
      %v3321 = vpop.permute.xlu0 %3320
      %v3322 = vsel %vm677, %v3319, 0
      %v3324 = vsel %vm677, %v3321, 0
      %3326 = vmatprep.subr.mxu0 0.0
      %3327 = vmatpush1.xpose.msra.mxu0 %v3324
      %3328 = vmatprep.subr.mxu0 0.0
      %3329 = vmatpush1.xpose.msra.mxu0 0.0
      %3330 = vmatprep.subr.mxu0 0.0
      %3331 = vmatpush1.xpose.msra.mxu0 0.0
      %3332 = vmatprep.subr.mxu0 0.0
      %3333 = vmatpush1.xpose.msra.mxu0 0.0
      %3334 = vmatprep.subr.mxu0 0.0
      %3335 = vmatpush1.xpose.msra.mxu0 0.0
      %3336 = vmatprep.subr.mxu0 0.0
      %3337 = vmatpush1.xpose.msra.mxu0 0.0
      %3338 = vmatprep.subr.mxu0 0.0
      %3339 = vmatpush1.xpose.msra.mxu0 0.0
      %3340 = vmatprep.subr.mxu0 0.0
      %3341 = vmatpush1.xpose.msra.mxu0 0.0
      %3342 = vmatprep.subr.mxu0 0.0
      %3343 = vmatpush1.xpose.msra.mxu0 0.0
      %3344 = vmatprep.subr.mxu0 0.0
      %3345 = vmatpush1.xpose.msra.mxu0 0.0
      %3346 = vmatprep.subr.mxu0 0.0
      %3347 = vmatpush1.xpose.msra.mxu0 0.0
      %3348 = vmatprep.subr.mxu0 0.0
      %3349 = vmatpush1.xpose.msra.mxu0 0.0
      %3350 = vmatprep.subr.mxu0 0.0
      %3351 = vmatpush1.xpose.msra.mxu0 0.0
      %3352 = vmatprep.subr.mxu0 0.0
      %3353 = vmatpush1.xpose.msra.mxu0 0.0
      %3354 = vmatprep.subr.mxu0 0.0
      %3355 = vmatpush1.xpose.msra.mxu0 0.0
      %3356 = vmatprep.subr.mxu0 0.0
      %3357 = vmatpush1.xpose.msra.mxu0 0.0
      %3358 = vmatprep.subr.mxu0 0.0
      %3359 = vmatpush1.xpose.msra.mxu0 0.0
      %3360 = vmatprep.subr.mxu0 0.0
      %3361 = vmatpush1.xpose.msra.mxu0 0.0
      %3362 = vmatprep.subr.mxu0 0.0
      %3363 = vmatpush1.xpose.msra.mxu0 0.0
      %3364 = vmatprep.subr.mxu0 0.0
      %3365 = vmatpush1.xpose.msra.mxu0 0.0
      %3366 = vmatprep.subr.mxu0 0.0
      %3367 = vmatpush1.xpose.msra.mxu0 0.0
      %3368 = vmatprep.subr.mxu0 0.0
      %3369 = vmatpush1.xpose.msra.mxu0 0.0
      %3370 = vmatprep.subr.mxu0 0.0
      %3371 = vmatpush1.xpose.msra.mxu0 0.0
      %3372 = vmatprep.subr.mxu0 0.0
      %3373 = vmatpush1.xpose.msra.mxu0 0.0
      %3374 = vmatprep.subr.mxu0 0.0
      %3375 = vmatpush1.xpose.msra.mxu0 0.0
      %3376 = vmatprep.subr.mxu0 0.0
      %3377 = vmatpush1.xpose.msra.mxu0 0.0
      %3378 = vmatprep.subr.mxu0 0.0
      %3379 = vmatpush1.xpose.msra.mxu0 0.0
      %3380 = vmatprep.subr.mxu0 0.0
      %3381 = vmatpush1.xpose.msra.mxu0 0.0
      %3382 = vmatprep.subr.mxu0 0.0
      %3383 = vmatpush1.xpose.msra.mxu0 0.0
      %3384 = vmatprep.subr.mxu0 0.0
      %3385 = vmatpush1.xpose.msra.mxu0 0.0
      %3386 = vmatprep.subr.mxu0 0.0
      %3387 = vmatpush1.xpose.msra.mxu0 0.0
      %3388 = vmatprep.subr.mxu0 0.0
      %3389 = vmatpush1.xpose.msra.mxu0 0.0
      %3390 = vmatprep.mubr.f32.mxu0 0.0
      %3391 = vmatmul.mubr.f32.gmra.mrb[0].mxu0 %v3322
      %v3392 = vpop.f32.mrb[0].mxu0
      %v3393 = vadd.f32 0.0, %v3392
      %v3394 = vpop.f32.mrb[0].mxu0
      %3395 = vdwg.mxu0
      %3396 = vrot.lane.b32.xlu0 %v504, 112
      %v3397 = vpop.permute.xlu0 %3396
      %3398 = vrot.lane.b32.xlu0 %v644, 112
      %v3399 = vpop.permute.xlu0 %3398
      %v3400 = vsel %vm677, %v3397, 0
      %v3402 = vsel %vm677, %v3399, 0
      %3404 = vmatprep.subr.mxu0 0.0
      %3405 = vmatpush1.xpose.msra.mxu0 %v3402
      %3406 = vmatprep.subr.mxu0 0.0
      %3407 = vmatpush1.xpose.msra.mxu0 0.0
      %3408 = vmatprep.subr.mxu0 0.0
      %3409 = vmatpush1.xpose.msra.mxu0 0.0
      %3410 = vmatprep.subr.mxu0 0.0
      %3411 = vmatpush1.xpose.msra.mxu0 0.0
      %3412 = vmatprep.subr.mxu0 0.0
      %3413 = vmatpush1.xpose.msra.mxu0 0.0
      %3414 = vmatprep.subr.mxu0 0.0
      %3415 = vmatpush1.xpose.msra.mxu0 0.0
      %3416 = vmatprep.subr.mxu0 0.0
      %3417 = vmatpush1.xpose.msra.mxu0 0.0
      %3418 = vmatprep.subr.mxu0 0.0
      %3419 = vmatpush1.xpose.msra.mxu0 0.0
      %3420 = vmatprep.subr.mxu0 0.0
      %3421 = vmatpush1.xpose.msra.mxu0 0.0
      %3422 = vmatprep.subr.mxu0 0.0
      %3423 = vmatpush1.xpose.msra.mxu0 0.0
      %3424 = vmatprep.subr.mxu0 0.0
      %3425 = vmatpush1.xpose.msra.mxu0 0.0
      %3426 = vmatprep.subr.mxu0 0.0
      %3427 = vmatpush1.xpose.msra.mxu0 0.0
      %3428 = vmatprep.subr.mxu0 0.0
      %3429 = vmatpush1.xpose.msra.mxu0 0.0
      %3430 = vmatprep.subr.mxu0 0.0
      %3431 = vmatpush1.xpose.msra.mxu0 0.0
      %3432 = vmatprep.subr.mxu0 0.0
      %3433 = vmatpush1.xpose.msra.mxu0 0.0
      %3434 = vmatprep.subr.mxu0 0.0
      %3435 = vmatpush1.xpose.msra.mxu0 0.0
      %3436 = vmatprep.subr.mxu0 0.0
      %3437 = vmatpush1.xpose.msra.mxu0 0.0
      %3438 = vmatprep.subr.mxu0 0.0
      %3439 = vmatpush1.xpose.msra.mxu0 0.0
      %3440 = vmatprep.subr.mxu0 0.0
      %3441 = vmatpush1.xpose.msra.mxu0 0.0
      %3442 = vmatprep.subr.mxu0 0.0
      %3443 = vmatpush1.xpose.msra.mxu0 0.0
      %3444 = vmatprep.subr.mxu0 0.0
      %3445 = vmatpush1.xpose.msra.mxu0 0.0
      %3446 = vmatprep.subr.mxu0 0.0
      %3447 = vmatpush1.xpose.msra.mxu0 0.0
      %3448 = vmatprep.subr.mxu0 0.0
      %3449 = vmatpush1.xpose.msra.mxu0 0.0
      %3450 = vmatprep.subr.mxu0 0.0
      %3451 = vmatpush1.xpose.msra.mxu0 0.0
      %3452 = vmatprep.subr.mxu0 0.0
      %3453 = vmatpush1.xpose.msra.mxu0 0.0
      %3454 = vmatprep.subr.mxu0 0.0
      %3455 = vmatpush1.xpose.msra.mxu0 0.0
      %3456 = vmatprep.subr.mxu0 0.0
      %3457 = vmatpush1.xpose.msra.mxu0 0.0
      %3458 = vmatprep.subr.mxu0 0.0
      %3459 = vmatpush1.xpose.msra.mxu0 0.0
      %3460 = vmatprep.subr.mxu0 0.0
      %3461 = vmatpush1.xpose.msra.mxu0 0.0
      %3462 = vmatprep.subr.mxu0 0.0
      %3463 = vmatpush1.xpose.msra.mxu0 0.0
      %3464 = vmatprep.subr.mxu0 0.0
      %3465 = vmatpush1.xpose.msra.mxu0 0.0
      %3466 = vmatprep.subr.mxu0 0.0
      %3467 = vmatpush1.xpose.msra.mxu0 0.0
      %3468 = vmatprep.mubr.f32.mxu0 0.0
      %3469 = vmatmul.mubr.f32.gmra.mrb[0].mxu0 %v3400
      %v3470 = vpop.f32.mrb[0].mxu0
      %v3471 = vadd.f32 0.0, %v3470
      %v3472 = vpop.f32.mrb[0].mxu0
      %3473 = vdwg.mxu0
      %3474 = vrot.lane.b32.xlu0 %v509, 112
      %v3475 = vpop.permute.xlu0 %3474
      %3476 = vrot.lane.b32.xlu0 %v649, 112
      %v3477 = vpop.permute.xlu0 %3476
      %v3478 = vsel %vm677, %v3475, 0
      %v3480 = vsel %vm677, %v3477, 0
      %3482 = vmatprep.subr.mxu0 0.0
      %3483 = vmatpush1.xpose.msra.mxu0 %v3480
      %3484 = vmatprep.subr.mxu0 0.0
      %3485 = vmatpush1.xpose.msra.mxu0 0.0
      %3486 = vmatprep.subr.mxu0 0.0
      %3487 = vmatpush1.xpose.msra.mxu0 0.0
      %3488 = vmatprep.subr.mxu0 0.0
      %3489 = vmatpush1.xpose.msra.mxu0 0.0
      %3490 = vmatprep.subr.mxu0 0.0
      %3491 = vmatpush1.xpose.msra.mxu0 0.0
      %3492 = vmatprep.subr.mxu0 0.0
      %3493 = vmatpush1.xpose.msra.mxu0 0.0
      %3494 = vmatprep.subr.mxu0 0.0
      %3495 = vmatpush1.xpose.msra.mxu0 0.0
      %3496 = vmatprep.subr.mxu0 0.0
      %3497 = vmatpush1.xpose.msra.mxu0 0.0
      %3498 = vmatprep.subr.mxu0 0.0
      %3499 = vmatpush1.xpose.msra.mxu0 0.0
      %3500 = vmatprep.subr.mxu0 0.0
      %3501 = vmatpush1.xpose.msra.mxu0 0.0
      %3502 = vmatprep.subr.mxu0 0.0
      %3503 = vmatpush1.xpose.msra.mxu0 0.0
      %3504 = vmatprep.subr.mxu0 0.0
      %3505 = vmatpush1.xpose.msra.mxu0 0.0
      %3506 = vmatprep.subr.mxu0 0.0
      %3507 = vmatpush1.xpose.msra.mxu0 0.0
      %3508 = vmatprep.subr.mxu0 0.0
      %3509 = vmatpush1.xpose.msra.mxu0 0.0
      %3510 = vmatprep.subr.mxu0 0.0
      %3511 = vmatpush1.xpose.msra.mxu0 0.0
      %3512 = vmatprep.subr.mxu0 0.0
      %3513 = vmatpush1.xpose.msra.mxu0 0.0
      %3514 = vmatprep.subr.mxu0 0.0
      %3515 = vmatpush1.xpose.msra.mxu0 0.0
      %3516 = vmatprep.subr.mxu0 0.0
      %3517 = vmatpush1.xpose.msra.mxu0 0.0
      %3518 = vmatprep.subr.mxu0 0.0
      %3519 = vmatpush1.xpose.msra.mxu0 0.0
      %3520 = vmatprep.subr.mxu0 0.0
      %3521 = vmatpush1.xpose.msra.mxu0 0.0
      %3522 = vmatprep.subr.mxu0 0.0
      %3523 = vmatpush1.xpose.msra.mxu0 0.0
      %3524 = vmatprep.subr.mxu0 0.0
      %3525 = vmatpush1.xpose.msra.mxu0 0.0
      %3526 = vmatprep.subr.mxu0 0.0
      %3527 = vmatpush1.xpose.msra.mxu0 0.0
      %3528 = vmatprep.subr.mxu0 0.0
      %3529 = vmatpush1.xpose.msra.mxu0 0.0
      %3530 = vmatprep.subr.mxu0 0.0
      %3531 = vmatpush1.xpose.msra.mxu0 0.0
      %3532 = vmatprep.subr.mxu0 0.0
      %3533 = vmatpush1.xpose.msra.mxu0 0.0
      %3534 = vmatprep.subr.mxu0 0.0
      %3535 = vmatpush1.xpose.msra.mxu0 0.0
      %3536 = vmatprep.subr.mxu0 0.0
      %3537 = vmatpush1.xpose.msra.mxu0 0.0
      %3538 = vmatprep.subr.mxu0 0.0
      %3539 = vmatpush1.xpose.msra.mxu0 0.0
      %3540 = vmatprep.subr.mxu0 0.0
      %3541 = vmatpush1.xpose.msra.mxu0 0.0
      %3542 = vmatprep.subr.mxu0 0.0
      %3543 = vmatpush1.xpose.msra.mxu0 0.0
      %3544 = vmatprep.subr.mxu0 0.0
      %3545 = vmatpush1.xpose.msra.mxu0 0.0
      %3546 = vmatprep.mubr.f32.mxu0 0.0
      %3547 = vmatmul.mubr.f32.gmra.mrb[0].mxu0 %v3478
      %v3548 = vpop.f32.mrb[0].mxu0
      %v3549 = vadd.f32 0.0, %v3548
      %v3550 = vpop.f32.mrb[0].mxu0
      %3551 = vdwg.mxu0
      %3552 = vrot.lane.b32.xlu0 %v514, 112
      %v3553 = vpop.permute.xlu0 %3552
      %3554 = vrot.lane.b32.xlu0 %v654, 112
      %v3555 = vpop.permute.xlu0 %3554
      %v3556 = vsel %vm677, %v3553, 0
      %v3558 = vsel %vm677, %v3555, 0
      %3560 = vmatprep.subr.mxu0 0.0
      %3561 = vmatpush1.xpose.msra.mxu0 %v3558
      %3562 = vmatprep.subr.mxu0 0.0
      %3563 = vmatpush1.xpose.msra.mxu0 0.0
      %3564 = vmatprep.subr.mxu0 0.0
      %3565 = vmatpush1.xpose.msra.mxu0 0.0
      %3566 = vmatprep.subr.mxu0 0.0
      %3567 = vmatpush1.xpose.msra.mxu0 0.0
      %3568 = vmatprep.subr.mxu0 0.0
      %3569 = vmatpush1.xpose.msra.mxu0 0.0
      %3570 = vmatprep.subr.mxu0 0.0
      %3571 = vmatpush1.xpose.msra.mxu0 0.0
      %3572 = vmatprep.subr.mxu0 0.0
      %3573 = vmatpush1.xpose.msra.mxu0 0.0
      %3574 = vmatprep.subr.mxu0 0.0
      %3575 = vmatpush1.xpose.msra.mxu0 0.0
      %3576 = vmatprep.subr.mxu0 0.0
      %3577 = vmatpush1.xpose.msra.mxu0 0.0
      %3578 = vmatprep.subr.mxu0 0.0
      %3579 = vmatpush1.xpose.msra.mxu0 0.0
      %3580 = vmatprep.subr.mxu0 0.0
      %3581 = vmatpush1.xpose.msra.mxu0 0.0
      %3582 = vmatprep.subr.mxu0 0.0
      %3583 = vmatpush1.xpose.msra.mxu0 0.0
      %3584 = vmatprep.subr.mxu0 0.0
      %3585 = vmatpush1.xpose.msra.mxu0 0.0
      %3586 = vmatprep.subr.mxu0 0.0
      %3587 = vmatpush1.xpose.msra.mxu0 0.0
      %3588 = vmatprep.subr.mxu0 0.0
      %3589 = vmatpush1.xpose.msra.mxu0 0.0
      %3590 = vmatprep.subr.mxu0 0.0
      %3591 = vmatpush1.xpose.msra.mxu0 0.0
      %3592 = vmatprep.subr.mxu0 0.0
      %3593 = vmatpush1.xpose.msra.mxu0 0.0
      %3594 = vmatprep.subr.mxu0 0.0
      %3595 = vmatpush1.xpose.msra.mxu0 0.0
      %3596 = vmatprep.subr.mxu0 0.0
      %3597 = vmatpush1.xpose.msra.mxu0 0.0
      %3598 = vmatprep.subr.mxu0 0.0
      %3599 = vmatpush1.xpose.msra.mxu0 0.0
      %3600 = vmatprep.subr.mxu0 0.0
      %3601 = vmatpush1.xpose.msra.mxu0 0.0
      %3602 = vmatprep.subr.mxu0 0.0
      %3603 = vmatpush1.xpose.msra.mxu0 0.0
      %3604 = vmatprep.subr.mxu0 0.0
      %3605 = vmatpush1.xpose.msra.mxu0 0.0
      %3606 = vmatprep.subr.mxu0 0.0
      %3607 = vmatpush1.xpose.msra.mxu0 0.0
      %3608 = vmatprep.subr.mxu0 0.0
      %3609 = vmatpush1.xpose.msra.mxu0 0.0
      %3610 = vmatprep.subr.mxu0 0.0
      %3611 = vmatpush1.xpose.msra.mxu0 0.0
      %3612 = vmatprep.subr.mxu0 0.0
      %3613 = vmatpush1.xpose.msra.mxu0 0.0
      %3614 = vmatprep.subr.mxu0 0.0
      %3615 = vmatpush1.xpose.msra.mxu0 0.0
      %3616 = vmatprep.subr.mxu0 0.0
      %3617 = vmatpush1.xpose.msra.mxu0 0.0
      %3618 = vmatprep.subr.mxu0 0.0
      %3619 = vmatpush1.xpose.msra.mxu0 0.0
      %3620 = vmatprep.subr.mxu0 0.0
      %3621 = vmatpush1.xpose.msra.mxu0 0.0
      %3622 = vmatprep.subr.mxu0 0.0
      %3623 = vmatpush1.xpose.msra.mxu0 0.0
      %3624 = vmatprep.mubr.f32.mxu0 0.0
      %3625 = vmatmul.mubr.f32.gmra.mrb[0].mxu0 %v3556
      %v3626 = vpop.f32.mrb[0].mxu0
      %v3627 = vadd.f32 0.0, %v3626
      %v3628 = vpop.f32.mrb[0].mxu0
      %3629 = vdwg.mxu0
      %3630 = vrot.lane.b32.xlu0 %v519, 112
      %v3631 = vpop.permute.xlu0 %3630
      %3632 = vrot.lane.b32.xlu0 %v659, 112
      %v3633 = vpop.permute.xlu0 %3632
      %v3634 = vsel %vm677, %v3631, 0
      %v3636 = vsel %vm677, %v3633, 0
      %3638 = vmatprep.subr.mxu0 0.0
      %3639 = vmatpush1.xpose.msra.mxu0 %v3636
      %3640 = vmatprep.subr.mxu0 0.0
      %3641 = vmatpush1.xpose.msra.mxu0 0.0
      %3642 = vmatprep.subr.mxu0 0.0
      %3643 = vmatpush1.xpose.msra.mxu0 0.0
      %3644 = vmatprep.subr.mxu0 0.0
      %3645 = vmatpush1.xpose.msra.mxu0 0.0
      %3646 = vmatprep.subr.mxu0 0.0
      %3647 = vmatpush1.xpose.msra.mxu0 0.0
      %3648 = vmatprep.subr.mxu0 0.0
      %3649 = vmatpush1.xpose.msra.mxu0 0.0
      %3650 = vmatprep.subr.mxu0 0.0
      %3651 = vmatpush1.xpose.msra.mxu0 0.0
      %3652 = vmatprep.subr.mxu0 0.0
      %3653 = vmatpush1.xpose.msra.mxu0 0.0
      %3654 = vmatprep.subr.mxu0 0.0
      %3655 = vmatpush1.xpose.msra.mxu0 0.0
      %3656 = vmatprep.subr.mxu0 0.0
      %3657 = vmatpush1.xpose.msra.mxu0 0.0
      %3658 = vmatprep.subr.mxu0 0.0
      %3659 = vmatpush1.xpose.msra.mxu0 0.0
      %3660 = vmatprep.subr.mxu0 0.0
      %3661 = vmatpush1.xpose.msra.mxu0 0.0
      %3662 = vmatprep.subr.mxu0 0.0
      %3663 = vmatpush1.xpose.msra.mxu0 0.0
      %3664 = vmatprep.subr.mxu0 0.0
      %3665 = vmatpush1.xpose.msra.mxu0 0.0
      %3666 = vmatprep.subr.mxu0 0.0
      %3667 = vmatpush1.xpose.msra.mxu0 0.0
      %3668 = vmatprep.subr.mxu0 0.0
      %3669 = vmatpush1.xpose.msra.mxu0 0.0
      %3670 = vmatprep.subr.mxu0 0.0
      %3671 = vmatpush1.xpose.msra.mxu0 0.0
      %3672 = vmatprep.subr.mxu0 0.0
      %3673 = vmatpush1.xpose.msra.mxu0 0.0
      %3674 = vmatprep.subr.mxu0 0.0
      %3675 = vmatpush1.xpose.msra.mxu0 0.0
      %3676 = vmatprep.subr.mxu0 0.0
      %3677 = vmatpush1.xpose.msra.mxu0 0.0
      %3678 = vmatprep.subr.mxu0 0.0
      %3679 = vmatpush1.xpose.msra.mxu0 0.0
      %3680 = vmatprep.subr.mxu0 0.0
      %3681 = vmatpush1.xpose.msra.mxu0 0.0
      %3682 = vmatprep.subr.mxu0 0.0
      %3683 = vmatpush1.xpose.msra.mxu0 0.0
      %3684 = vmatprep.subr.mxu0 0.0
      %3685 = vmatpush1.xpose.msra.mxu0 0.0
      %3686 = vmatprep.subr.mxu0 0.0
      %3687 = vmatpush1.xpose.msra.mxu0 0.0
      %3688 = vmatprep.subr.mxu0 0.0
      %3689 = vmatpush1.xpose.msra.mxu0 0.0
      %3690 = vmatprep.subr.mxu0 0.0
      %3691 = vmatpush1.xpose.msra.mxu0 0.0
      %3692 = vmatprep.subr.mxu0 0.0
      %3693 = vmatpush1.xpose.msra.mxu0 0.0
      %3694 = vmatprep.subr.mxu0 0.0
      %3695 = vmatpush1.xpose.msra.mxu0 0.0
      %3696 = vmatprep.subr.mxu0 0.0
      %3697 = vmatpush1.xpose.msra.mxu0 0.0
      %3698 = vmatprep.subr.mxu0 0.0
      %3699 = vmatpush1.xpose.msra.mxu0 0.0
      %3700 = vmatprep.subr.mxu0 0.0
      %3701 = vmatpush1.xpose.msra.mxu0 0.0
      %3702 = vmatprep.mubr.f32.mxu0 0.0
      %3703 = vmatmul.mubr.f32.gmra.mrb[0].mxu0 %v3634
      %v3704 = vpop.f32.mrb[0].mxu0
      %v3705 = vadd.f32 0.0, %v3704
      %v3706 = vpop.f32.mrb[0].mxu0
      %3707 = vdwg.mxu0
      %3708 = vrot.lane.b32.xlu0 %v524, 112
      %v3709 = vpop.permute.xlu0 %3708
      %3710 = vrot.lane.b32.xlu0 %v664, 112
      %v3711 = vpop.permute.xlu0 %3710
      %v3712 = vsel %vm677, %v3709, 0
      %v3714 = vsel %vm677, %v3711, 0
      %3716 = vmatprep.subr.mxu0 0.0
      %3717 = vmatpush1.xpose.msra.mxu0 %v3714
      %3718 = vmatprep.subr.mxu0 0.0
      %3719 = vmatpush1.xpose.msra.mxu0 0.0
      %3720 = vmatprep.subr.mxu0 0.0
      %3721 = vmatpush1.xpose.msra.mxu0 0.0
      %3722 = vmatprep.subr.mxu0 0.0
      %3723 = vmatpush1.xpose.msra.mxu0 0.0
      %3724 = vmatprep.subr.mxu0 0.0
      %3725 = vmatpush1.xpose.msra.mxu0 0.0
      %3726 = vmatprep.subr.mxu0 0.0
      %3727 = vmatpush1.xpose.msra.mxu0 0.0
      %3728 = vmatprep.subr.mxu0 0.0
      %3729 = vmatpush1.xpose.msra.mxu0 0.0
      %3730 = vmatprep.subr.mxu0 0.0
      %3731 = vmatpush1.xpose.msra.mxu0 0.0
      %3732 = vmatprep.subr.mxu0 0.0
      %3733 = vmatpush1.xpose.msra.mxu0 0.0
      %3734 = vmatprep.subr.mxu0 0.0
      %3735 = vmatpush1.xpose.msra.mxu0 0.0
      %3736 = vmatprep.subr.mxu0 0.0
      %3737 = vmatpush1.xpose.msra.mxu0 0.0
      %3738 = vmatprep.subr.mxu0 0.0
      %3739 = vmatpush1.xpose.msra.mxu0 0.0
      %3740 = vmatprep.subr.mxu0 0.0
      %3741 = vmatpush1.xpose.msra.mxu0 0.0
      %3742 = vmatprep.subr.mxu0 0.0
      %3743 = vmatpush1.xpose.msra.mxu0 0.0
      %3744 = vmatprep.subr.mxu0 0.0
      %3745 = vmatpush1.xpose.msra.mxu0 0.0
      %3746 = vmatprep.subr.mxu0 0.0
      %3747 = vmatpush1.xpose.msra.mxu0 0.0
      %3748 = vmatprep.subr.mxu0 0.0
      %3749 = vmatpush1.xpose.msra.mxu0 0.0
      %3750 = vmatprep.subr.mxu0 0.0
      %3751 = vmatpush1.xpose.msra.mxu0 0.0
      %3752 = vmatprep.subr.mxu0 0.0
      %3753 = vmatpush1.xpose.msra.mxu0 0.0
      %3754 = vmatprep.subr.mxu0 0.0
      %3755 = vmatpush1.xpose.msra.mxu0 0.0
      %3756 = vmatprep.subr.mxu0 0.0
      %3757 = vmatpush1.xpose.msra.mxu0 0.0
      %3758 = vmatprep.subr.mxu0 0.0
      %3759 = vmatpush1.xpose.msra.mxu0 0.0
      %3760 = vmatprep.subr.mxu0 0.0
      %3761 = vmatpush1.xpose.msra.mxu0 0.0
      %3762 = vmatprep.subr.mxu0 0.0
      %3763 = vmatpush1.xpose.msra.mxu0 0.0
      %3764 = vmatprep.subr.mxu0 0.0
      %3765 = vmatpush1.xpose.msra.mxu0 0.0
      %3766 = vmatprep.subr.mxu0 0.0
      %3767 = vmatpush1.xpose.msra.mxu0 0.0
      %3768 = vmatprep.subr.mxu0 0.0
      %3769 = vmatpush1.xpose.msra.mxu0 0.0
      %3770 = vmatprep.subr.mxu0 0.0
      %3771 = vmatpush1.xpose.msra.mxu0 0.0
      %3772 = vmatprep.subr.mxu0 0.0
      %3773 = vmatpush1.xpose.msra.mxu0 0.0
      %3774 = vmatprep.subr.mxu0 0.0
      %3775 = vmatpush1.xpose.msra.mxu0 0.0
      %3776 = vmatprep.subr.mxu0 0.0
      %3777 = vmatpush1.xpose.msra.mxu0 0.0
      %3778 = vmatprep.subr.mxu0 0.0
      %3779 = vmatpush1.xpose.msra.mxu0 0.0
      %3780 = vmatprep.mubr.f32.mxu0 0.0
      %3781 = vmatmul.mubr.f32.gmra.mrb[0].mxu0 %v3712
      %v3782 = vpop.f32.mrb[0].mxu0
      %v3783 = vadd.f32 0.0, %v3782
      %v3784 = vpop.f32.mrb[0].mxu0
      %3785 = vdwg.mxu0
      %3786 = vrot.lane.b32.xlu0 %v529, 112
      %v3787 = vpop.permute.xlu0 %3786
      %3788 = vrot.lane.b32.xlu0 %v669, 112
      %v3789 = vpop.permute.xlu0 %3788
      %v3790 = vsel %vm677, %v3787, 0
      %v3792 = vsel %vm677, %v3789, 0
      %3794 = vmatprep.subr.mxu0 0.0
      %3795 = vmatpush1.xpose.msra.mxu0 %v3792
      %3796 = vmatprep.subr.mxu0 0.0
      %3797 = vmatpush1.xpose.msra.mxu0 0.0
      %3798 = vmatprep.subr.mxu0 0.0
      %3799 = vmatpush1.xpose.msra.mxu0 0.0
      %3800 = vmatprep.subr.mxu0 0.0
      %3801 = vmatpush1.xpose.msra.mxu0 0.0
      %3802 = vmatprep.subr.mxu0 0.0
      %3803 = vmatpush1.xpose.msra.mxu0 0.0
      %3804 = vmatprep.subr.mxu0 0.0
      %3805 = vmatpush1.xpose.msra.mxu0 0.0
      %3806 = vmatprep.subr.mxu0 0.0
      %3807 = vmatpush1.xpose.msra.mxu0 0.0
      %3808 = vmatprep.subr.mxu0 0.0
      %3809 = vmatpush1.xpose.msra.mxu0 0.0
      %3810 = vmatprep.subr.mxu0 0.0
      %3811 = vmatpush1.xpose.msra.mxu0 0.0
      %3812 = vmatprep.subr.mxu0 0.0
      %3813 = vmatpush1.xpose.msra.mxu0 0.0
      %3814 = vmatprep.subr.mxu0 0.0
      %3815 = vmatpush1.xpose.msra.mxu0 0.0
      %3816 = vmatprep.subr.mxu0 0.0
      %3817 = vmatpush1.xpose.msra.mxu0 0.0
      %3818 = vmatprep.subr.mxu0 0.0
      %3819 = vmatpush1.xpose.msra.mxu0 0.0
      %3820 = vmatprep.subr.mxu0 0.0
      %3821 = vmatpush1.xpose.msra.mxu0 0.0
      %3822 = vmatprep.subr.mxu0 0.0
      %3823 = vmatpush1.xpose.msra.mxu0 0.0
      %3824 = vmatprep.subr.mxu0 0.0
      %3825 = vmatpush1.xpose.msra.mxu0 0.0
      %3826 = vmatprep.subr.mxu0 0.0
      %3827 = vmatpush1.xpose.msra.mxu0 0.0
      %3828 = vmatprep.subr.mxu0 0.0
      %3829 = vmatpush1.xpose.msra.mxu0 0.0
      %3830 = vmatprep.subr.mxu0 0.0
      %3831 = vmatpush1.xpose.msra.mxu0 0.0
      %3832 = vmatprep.subr.mxu0 0.0
      %3833 = vmatpush1.xpose.msra.mxu0 0.0
      %3834 = vmatprep.subr.mxu0 0.0
      %3835 = vmatpush1.xpose.msra.mxu0 0.0
      %3836 = vmatprep.subr.mxu0 0.0
      %3837 = vmatpush1.xpose.msra.mxu0 0.0
      %3838 = vmatprep.subr.mxu0 0.0
      %3839 = vmatpush1.xpose.msra.mxu0 0.0
      %3840 = vmatprep.subr.mxu0 0.0
      %3841 = vmatpush1.xpose.msra.mxu0 0.0
      %3842 = vmatprep.subr.mxu0 0.0
      %3843 = vmatpush1.xpose.msra.mxu0 0.0
      %3844 = vmatprep.subr.mxu0 0.0
      %3845 = vmatpush1.xpose.msra.mxu0 0.0
      %3846 = vmatprep.subr.mxu0 0.0
      %3847 = vmatpush1.xpose.msra.mxu0 0.0
      %3848 = vmatprep.subr.mxu0 0.0
      %3849 = vmatpush1.xpose.msra.mxu0 0.0
      %3850 = vmatprep.subr.mxu0 0.0
      %3851 = vmatpush1.xpose.msra.mxu0 0.0
      %3852 = vmatprep.subr.mxu0 0.0
      %3853 = vmatpush1.xpose.msra.mxu0 0.0
      %3854 = vmatprep.subr.mxu0 0.0
      %3855 = vmatpush1.xpose.msra.mxu0 0.0
      %3856 = vmatprep.subr.mxu0 0.0
      %3857 = vmatpush1.xpose.msra.mxu0 0.0
      %3858 = vmatprep.mubr.f32.mxu0 0.0
      %3859 = vmatmul.mubr.f32.gmra.mrb[0].mxu0 %v3790
      %v3860 = vpop.f32.mrb[0].mxu0
      %v3861 = vadd.f32 0.0, %v3860
      %v3862 = vpop.f32.mrb[0].mxu0
      %3863 = vdwg.mxu0
      %3864 = vrot.lane.b32.xlu0 %v534, 112
      %v3865 = vpop.permute.xlu0 %3864
      %3866 = vrot.lane.b32.xlu0 %v674, 112
      %v3867 = vpop.permute.xlu0 %3866
      %v3868 = vsel %vm677, %v3865, 0
      %v3870 = vsel %vm677, %v3867, 0
      %3872 = vmatprep.subr.mxu0 0.0
      %3873 = vmatpush1.xpose.msra.mxu0 %v3870
      %3874 = vmatprep.subr.mxu0 0.0
      %3875 = vmatpush1.xpose.msra.mxu0 0.0
      %3876 = vmatprep.subr.mxu0 0.0
      %3877 = vmatpush1.xpose.msra.mxu0 0.0
      %3878 = vmatprep.subr.mxu0 0.0
      %3879 = vmatpush1.xpose.msra.mxu0 0.0
      %3880 = vmatprep.subr.mxu0 0.0
      %3881 = vmatpush1.xpose.msra.mxu0 0.0
      %3882 = vmatprep.subr.mxu0 0.0
      %3883 = vmatpush1.xpose.msra.mxu0 0.0
      %3884 = vmatprep.subr.mxu0 0.0
      %3885 = vmatpush1.xpose.msra.mxu0 0.0
      %3886 = vmatprep.subr.mxu0 0.0
      %3887 = vmatpush1.xpose.msra.mxu0 0.0
      %3888 = vmatprep.subr.mxu0 0.0
      %3889 = vmatpush1.xpose.msra.mxu0 0.0
      %3890 = vmatprep.subr.mxu0 0.0
      %3891 = vmatpush1.xpose.msra.mxu0 0.0
      %3892 = vmatprep.subr.mxu0 0.0
      %3893 = vmatpush1.xpose.msra.mxu0 0.0
      %3894 = vmatprep.subr.mxu0 0.0
      %3895 = vmatpush1.xpose.msra.mxu0 0.0
      %3896 = vmatprep.subr.mxu0 0.0
      %3897 = vmatpush1.xpose.msra.mxu0 0.0
      %3898 = vmatprep.subr.mxu0 0.0
      %3899 = vmatpush1.xpose.msra.mxu0 0.0
      %3900 = vmatprep.subr.mxu0 0.0
      %3901 = vmatpush1.xpose.msra.mxu0 0.0
      %3902 = vmatprep.subr.mxu0 0.0
      %3903 = vmatpush1.xpose.msra.mxu0 0.0
      %3904 = vmatprep.subr.mxu0 0.0
      %3905 = vmatpush1.xpose.msra.mxu0 0.0
      %3906 = vmatprep.subr.mxu0 0.0
      %3907 = vmatpush1.xpose.msra.mxu0 0.0
      %3908 = vmatprep.subr.mxu0 0.0
      %3909 = vmatpush1.xpose.msra.mxu0 0.0
      %3910 = vmatprep.subr.mxu0 0.0
      %3911 = vmatpush1.xpose.msra.mxu0 0.0
      %3912 = vmatprep.subr.mxu0 0.0
      %3913 = vmatpush1.xpose.msra.mxu0 0.0
      %3914 = vmatprep.subr.mxu0 0.0
      %3915 = vmatpush1.xpose.msra.mxu0 0.0
      %3916 = vmatprep.subr.mxu0 0.0
      %3917 = vmatpush1.xpose.msra.mxu0 0.0
      %3918 = vmatprep.subr.mxu0 0.0
      %3919 = vmatpush1.xpose.msra.mxu0 0.0
      %3920 = vmatprep.subr.mxu0 0.0
      %3921 = vmatpush1.xpose.msra.mxu0 0.0
      %3922 = vmatprep.subr.mxu0 0.0
      %3923 = vmatpush1.xpose.msra.mxu0 0.0
      %3924 = vmatprep.subr.mxu0 0.0
      %3925 = vmatpush1.xpose.msra.mxu0 0.0
      %3926 = vmatprep.subr.mxu0 0.0
      %3927 = vmatpush1.xpose.msra.mxu0 0.0
      %3928 = vmatprep.subr.mxu0 0.0
      %3929 = vmatpush1.xpose.msra.mxu0 0.0
      %3930 = vmatprep.subr.mxu0 0.0
      %3931 = vmatpush1.xpose.msra.mxu0 0.0
      %3932 = vmatprep.subr.mxu0 0.0
      %3933 = vmatpush1.xpose.msra.mxu0 0.0
      %3934 = vmatprep.subr.mxu0 0.0
      %3935 = vmatpush1.xpose.msra.mxu0 0.0
      %3936 = vmatprep.mubr.f32.mxu0 0.0
      %3937 = vmatmul.mubr.f32.gmra.mrb[0].mxu0 %v3868
      %v3938 = vpop.f32.mrb[0].mxu0
      %v3939 = vadd.f32 0.0, %v3938
      %v3940 = vpop.f32.mrb[0].mxu0
      %3941 = vdwg.mxu0
      %v3942 = vmul.f32 %v3393, 0.35355338
      %v3943 = vmul.f32 %v3471, 0.35355338
      %v3944 = vmul.f32 %v3549, 0.35355338
      %v3945 = vmul.f32 %v3627, 0.35355338
      %v3946 = vmul.f32 %v3705, 0.35355338
      %v3947 = vmul.f32 %v3783, 0.35355338
      %v3948 = vmul.f32 %v3861, 0.35355338
      %v3949 = vmul.f32 %v3939, 0.35355338
      %v3950 = vsel %vm677, %v3942, -inf
      %3951 = vmax.xlane.f32.xlu0 %v3950
      %v3952 = vpop.xlane.xlu0 %3951
      %v3953 = vsel %vm677, %v3943, -inf
      %3954 = vmax.xlane.f32.xlu0 %v3953
      %v3955 = vpop.xlane.xlu0 %3954
      %v3956 = vsel %vm677, %v3944, -inf
      %3957 = vmax.xlane.f32.xlu0 %v3956
      %v3958 = vpop.xlane.xlu0 %3957
      %v3959 = vsel %vm677, %v3945, -inf
      %3960 = vmax.xlane.f32.xlu0 %v3959
      %v3961 = vpop.xlane.xlu0 %3960
      %v3962 = vsel %vm677, %v3946, -inf
      %3963 = vmax.xlane.f32.xlu0 %v3962
      %v3964 = vpop.xlane.xlu0 %3963
      %v3965 = vsel %vm677, %v3947, -inf
      %3966 = vmax.xlane.f32.xlu0 %v3965
      %v3967 = vpop.xlane.xlu0 %3966
      %v3968 = vsel %vm677, %v3948, -inf
      %3969 = vmax.xlane.f32.xlu0 %v3968
      %v3970 = vpop.xlane.xlu0 %3969
      %v3971 = vsel %vm677, %v3949, -inf
      %3972 = vmax.xlane.f32.xlu0 %v3971
      %v3973 = vpop.xlane.xlu0 %3972
      %v3974 = vsub.f32 %v3942, %v3952
      %v3975 = vsub.f32 %v3943, %v3955
      %v3976 = vsub.f32 %v3944, %v3958
      %v3977 = vsub.f32 %v3945, %v3961
      %v3978 = vsub.f32 %v3946, %v3964
      %v3979 = vsub.f32 %v3947, %v3967
      %v3980 = vsub.f32 %v3948, %v3970
      %v3981 = vsub.f32 %v3949, %v3973
      %v3982 = vmul.f32 %v3974, 1.442695
      %v3983 = vpow.pop %v3982
      %v3984 = vmul.f32 %v3975, 1.442695
      %v3985 = vpow.pop %v3984
      %v3986 = vmul.f32 %v3976, 1.442695
      %v3987 = vpow.pop %v3986
      %v3988 = vmul.f32 %v3977, 1.442695
      %v3989 = vpow.pop %v3988
      %v3990 = vmul.f32 %v3978, 1.442695
      %v3991 = vpow.pop %v3990
      %v3992 = vmul.f32 %v3979, 1.442695
      %v3993 = vpow.pop %v3992
      %v3994 = vmul.f32 %v3980, 1.442695
      %v3995 = vpow.pop %v3994
      %v3996 = vmul.f32 %v3981, 1.442695
      %v3997 = vpow.pop %v3996
      %v3998 = vsel %vm677, %v3983, 0.0
      %3999 = vadd.xlane.f32.xlu0 %v3998
      %v4000 = vpop.xlane.xlu0 %3999
      %v4001 = vsel %vm677, %v3985, 0.0
      %4002 = vadd.xlane.f32.xlu0 %v4001
      %v4003 = vpop.xlane.xlu0 %4002
      %v4004 = vsel %vm677, %v3987, 0.0
      %4005 = vadd.xlane.f32.xlu0 %v4004
      %v4006 = vpop.xlane.xlu0 %4005
      %v4007 = vsel %vm677, %v3989, 0.0
      %4008 = vadd.xlane.f32.xlu0 %v4007
      %v4009 = vpop.xlane.xlu0 %4008
      %v4010 = vsel %vm677, %v3991, 0.0
      %4011 = vadd.xlane.f32.xlu0 %v4010
      %v4012 = vpop.xlane.xlu0 %4011
      %v4013 = vsel %vm677, %v3993, 0.0
      %4014 = vadd.xlane.f32.xlu0 %v4013
      %v4015 = vpop.xlane.xlu0 %4014
      %v4016 = vsel %vm677, %v3995, 0.0
      %4017 = vadd.xlane.f32.xlu0 %v4016
      %v4018 = vpop.xlane.xlu0 %4017
      %v4019 = vsel %vm677, %v3997, 0.0
      %4020 = vadd.xlane.f32.xlu0 %v4019
      %v4021 = vpop.xlane.xlu0 %4020
      %v4022 = vrcp.pop %v4000
      %v4023 = vmul.f32 %v3983, %v4022
      %v4024 = vrcp.pop %v4003
      %v4025 = vmul.f32 %v3985, %v4024
      %v4026 = vrcp.pop %v4006
      %v4027 = vmul.f32 %v3987, %v4026
      %v4028 = vrcp.pop %v4009
      %v4029 = vmul.f32 %v3989, %v4028
      %v4030 = vrcp.pop %v4012
      %v4031 = vmul.f32 %v3991, %v4030
      %v4032 = vrcp.pop %v4015
      %v4033 = vmul.f32 %v3993, %v4032
      %v4034 = vrcp.pop %v4018
      %v4035 = vmul.f32 %v3995, %v4034
      %v4036 = vrcp.pop %v4021
      %v4037 = vmul.f32 %v3997, %v4036
      %4038 = vrot.lane.b32.xlu0 %v639, 80
      %v4039 = vpop.permute.xlu0 %4038
      %v4042 = vsel %vm677, %v4023, 0
      %4044 = vmatprep.subr.mxu0 0.0
      %4045 = vmatpush1.msra.mxu0 %v4039
      %4046 = vmatprep.subr.mxu0 0.0
      %4047 = vmatpush1.msra.mxu0 0.0
      %4048 = vmatprep.subr.mxu0 0.0
      %4049 = vmatpush1.msra.mxu0 0.0
      %4050 = vmatprep.subr.mxu0 0.0
      %4051 = vmatpush1.msra.mxu0 0.0
      %4052 = vmatprep.subr.mxu0 0.0
      %4053 = vmatpush1.msra.mxu0 0.0
      %4054 = vmatprep.subr.mxu0 0.0
      %4055 = vmatpush1.msra.mxu0 0.0
      %4056 = vmatprep.subr.mxu0 0.0
      %4057 = vmatpush1.msra.mxu0 0.0
      %4058 = vmatprep.subr.mxu0 0.0
      %4059 = vmatpush1.msra.mxu0 0.0
      %4060 = vmatprep.subr.mxu0 0.0
      %4061 = vmatpush1.msra.mxu0 0.0
      %4062 = vmatprep.subr.mxu0 0.0
      %4063 = vmatpush1.msra.mxu0 0.0
      %4064 = vmatprep.subr.mxu0 0.0
      %4065 = vmatpush1.msra.mxu0 0.0
      %4066 = vmatprep.subr.mxu0 0.0
      %4067 = vmatpush1.msra.mxu0 0.0
      %4068 = vmatprep.subr.mxu0 0.0
      %4069 = vmatpush1.msra.mxu0 0.0
      %4070 = vmatprep.subr.mxu0 0.0
      %4071 = vmatpush1.msra.mxu0 0.0
      %4072 = vmatprep.subr.mxu0 0.0
      %4073 = vmatpush1.msra.mxu0 0.0
      %4074 = vmatprep.subr.mxu0 0.0
      %4075 = vmatpush1.msra.mxu0 0.0
      %4076 = vmatprep.subr.mxu0 0.0
      %4077 = vmatpush1.msra.mxu0 0.0
      %4078 = vmatprep.subr.mxu0 0.0
      %4079 = vmatpush1.msra.mxu0 0.0
      %4080 = vmatprep.subr.mxu0 0.0
      %4081 = vmatpush1.msra.mxu0 0.0
      %4082 = vmatprep.subr.mxu0 0.0
      %4083 = vmatpush1.msra.mxu0 0.0
      %4084 = vmatprep.subr.mxu0 0.0
      %4085 = vmatpush1.msra.mxu0 0.0
      %4086 = vmatprep.subr.mxu0 0.0
      %4087 = vmatpush1.msra.mxu0 0.0
      %4088 = vmatprep.subr.mxu0 0.0
      %4089 = vmatpush1.msra.mxu0 0.0
      %4090 = vmatprep.subr.mxu0 0.0
      %4091 = vmatpush1.msra.mxu0 0.0
      %4092 = vmatprep.subr.mxu0 0.0
      %4093 = vmatpush1.msra.mxu0 0.0
      %4094 = vmatprep.subr.mxu0 0.0
      %4095 = vmatpush1.msra.mxu0 0.0
      %4096 = vmatprep.subr.mxu0 0.0
      %4097 = vmatpush1.msra.mxu0 0.0
      %4098 = vmatprep.subr.mxu0 0.0
      %4099 = vmatpush1.msra.mxu0 0.0
      %4100 = vmatprep.subr.mxu0 0.0
      %4101 = vmatpush1.msra.mxu0 0.0
      %4102 = vmatprep.subr.mxu0 0.0
      %4103 = vmatpush1.msra.mxu0 0.0
      %4104 = vmatprep.subr.mxu0 0.0
      %4105 = vmatpush1.msra.mxu0 0.0
      %4106 = vmatprep.subr.mxu0 0.0
      %4107 = vmatpush1.msra.mxu0 0.0
      %4108 = vmatprep.mubr.f32.mxu0 0.0
      %4109 = vmatmul.mubr.f32.gmra.mrb[0].mxu0 %v4042
      %v4110 = vpop.f32.mrb[0].mxu0
      %v4111 = vadd.f32 0.0, %v4110
      %v4112 = vpop.f32.mrb[0].mxu0
      %4113 = vdwg.mxu0
      %4114 = vrot.lane.b32.xlu0 %v644, 80
      %v4115 = vpop.permute.xlu0 %4114
      %v4118 = vsel %vm677, %v4025, 0
      %4120 = vmatprep.subr.mxu0 0.0
      %4121 = vmatpush1.msra.mxu0 %v4115
      %4122 = vmatprep.subr.mxu0 0.0
      %4123 = vmatpush1.msra.mxu0 0.0
      %4124 = vmatprep.subr.mxu0 0.0
      %4125 = vmatpush1.msra.mxu0 0.0
      %4126 = vmatprep.subr.mxu0 0.0
      %4127 = vmatpush1.msra.mxu0 0.0
      %4128 = vmatprep.subr.mxu0 0.0
      %4129 = vmatpush1.msra.mxu0 0.0
      %4130 = vmatprep.subr.mxu0 0.0
      %4131 = vmatpush1.msra.mxu0 0.0
      %4132 = vmatprep.subr.mxu0 0.0
      %4133 = vmatpush1.msra.mxu0 0.0
      %4134 = vmatprep.subr.mxu0 0.0
      %4135 = vmatpush1.msra.mxu0 0.0
      %4136 = vmatprep.subr.mxu0 0.0
      %4137 = vmatpush1.msra.mxu0 0.0
      %4138 = vmatprep.subr.mxu0 0.0
      %4139 = vmatpush1.msra.mxu0 0.0
      %4140 = vmatprep.subr.mxu0 0.0
      %4141 = vmatpush1.msra.mxu0 0.0
      %4142 = vmatprep.subr.mxu0 0.0
      %4143 = vmatpush1.msra.mxu0 0.0
      %4144 = vmatprep.subr.mxu0 0.0
      %4145 = vmatpush1.msra.mxu0 0.0
      %4146 = vmatprep.subr.mxu0 0.0
      %4147 = vmatpush1.msra.mxu0 0.0
      %4148 = vmatprep.subr.mxu0 0.0
      %4149 = vmatpush1.msra.mxu0 0.0
      %4150 = vmatprep.subr.mxu0 0.0
      %4151 = vmatpush1.msra.mxu0 0.0
      %4152 = vmatprep.subr.mxu0 0.0
      %4153 = vmatpush1.msra.mxu0 0.0
      %4154 = vmatprep.subr.mxu0 0.0
      %4155 = vmatpush1.msra.mxu0 0.0
      %4156 = vmatprep.subr.mxu0 0.0
      %4157 = vmatpush1.msra.mxu0 0.0
      %4158 = vmatprep.subr.mxu0 0.0
      %4159 = vmatpush1.msra.mxu0 0.0
      %4160 = vmatprep.subr.mxu0 0.0
      %4161 = vmatpush1.msra.mxu0 0.0
      %4162 = vmatprep.subr.mxu0 0.0
      %4163 = vmatpush1.msra.mxu0 0.0
      %4164 = vmatprep.subr.mxu0 0.0
      %4165 = vmatpush1.msra.mxu0 0.0
      %4166 = vmatprep.subr.mxu0 0.0
      %4167 = vmatpush1.msra.mxu0 0.0
      %4168 = vmatprep.subr.mxu0 0.0
      %4169 = vmatpush1.msra.mxu0 0.0
      %4170 = vmatprep.subr.mxu0 0.0
      %4171 = vmatpush1.msra.mxu0 0.0
      %4172 = vmatprep.subr.mxu0 0.0
      %4173 = vmatpush1.msra.mxu0 0.0
      %4174 = vmatprep.subr.mxu0 0.0
      %4175 = vmatpush1.msra.mxu0 0.0
      %4176 = vmatprep.subr.mxu0 0.0
      %4177 = vmatpush1.msra.mxu0 0.0
      %4178 = vmatprep.subr.mxu0 0.0
      %4179 = vmatpush1.msra.mxu0 0.0
      %4180 = vmatprep.subr.mxu0 0.0
      %4181 = vmatpush1.msra.mxu0 0.0
      %4182 = vmatprep.subr.mxu0 0.0
      %4183 = vmatpush1.msra.mxu0 0.0
      %4184 = vmatprep.mubr.f32.mxu0 0.0
      %4185 = vmatmul.mubr.f32.gmra.mrb[0].mxu0 %v4118
      %v4186 = vpop.f32.mrb[0].mxu0
      %v4187 = vadd.f32 0.0, %v4186
      %v4188 = vpop.f32.mrb[0].mxu0
      %4189 = vdwg.mxu0
      %4190 = vrot.lane.b32.xlu0 %v649, 80
      %v4191 = vpop.permute.xlu0 %4190
      %v4194 = vsel %vm677, %v4027, 0
      %4196 = vmatprep.subr.mxu0 0.0
      %4197 = vmatpush1.msra.mxu0 %v4191
      %4198 = vmatprep.subr.mxu0 0.0
      %4199 = vmatpush1.msra.mxu0 0.0
      %4200 = vmatprep.subr.mxu0 0.0
      %4201 = vmatpush1.msra.mxu0 0.0
      %4202 = vmatprep.subr.mxu0 0.0
      %4203 = vmatpush1.msra.mxu0 0.0
      %4204 = vmatprep.subr.mxu0 0.0
      %4205 = vmatpush1.msra.mxu0 0.0
      %4206 = vmatprep.subr.mxu0 0.0
      %4207 = vmatpush1.msra.mxu0 0.0
      %4208 = vmatprep.subr.mxu0 0.0
      %4209 = vmatpush1.msra.mxu0 0.0
      %4210 = vmatprep.subr.mxu0 0.0
      %4211 = vmatpush1.msra.mxu0 0.0
      %4212 = vmatprep.subr.mxu0 0.0
      %4213 = vmatpush1.msra.mxu0 0.0
      %4214 = vmatprep.subr.mxu0 0.0
      %4215 = vmatpush1.msra.mxu0 0.0
      %4216 = vmatprep.subr.mxu0 0.0
      %4217 = vmatpush1.msra.mxu0 0.0
      %4218 = vmatprep.subr.mxu0 0.0
      %4219 = vmatpush1.msra.mxu0 0.0
      %4220 = vmatprep.subr.mxu0 0.0
      %4221 = vmatpush1.msra.mxu0 0.0
      %4222 = vmatprep.subr.mxu0 0.0
      %4223 = vmatpush1.msra.mxu0 0.0
      %4224 = vmatprep.subr.mxu0 0.0
      %4225 = vmatpush1.msra.mxu0 0.0
      %4226 = vmatprep.subr.mxu0 0.0
      %4227 = vmatpush1.msra.mxu0 0.0
      %4228 = vmatprep.subr.mxu0 0.0
      %4229 = vmatpush1.msra.mxu0 0.0
      %4230 = vmatprep.subr.mxu0 0.0
      %4231 = vmatpush1.msra.mxu0 0.0
      %4232 = vmatprep.subr.mxu0 0.0
      %4233 = vmatpush1.msra.mxu0 0.0
      %4234 = vmatprep.subr.mxu0 0.0
      %4235 = vmatpush1.msra.mxu0 0.0
      %4236 = vmatprep.subr.mxu0 0.0
      %4237 = vmatpush1.msra.mxu0 0.0
      %4238 = vmatprep.subr.mxu0 0.0
      %4239 = vmatpush1.msra.mxu0 0.0
      %4240 = vmatprep.subr.mxu0 0.0
      %4241 = vmatpush1.msra.mxu0 0.0
      %4242 = vmatprep.subr.mxu0 0.0
      %4243 = vmatpush1.msra.mxu0 0.0
      %4244 = vmatprep.subr.mxu0 0.0
      %4245 = vmatpush1.msra.mxu0 0.0
      %4246 = vmatprep.subr.mxu0 0.0
      %4247 = vmatpush1.msra.mxu0 0.0
      %4248 = vmatprep.subr.mxu0 0.0
      %4249 = vmatpush1.msra.mxu0 0.0
      %4250 = vmatprep.subr.mxu0 0.0
      %4251 = vmatpush1.msra.mxu0 0.0
      %4252 = vmatprep.subr.mxu0 0.0
      %4253 = vmatpush1.msra.mxu0 0.0
      %4254 = vmatprep.subr.mxu0 0.0
      %4255 = vmatpush1.msra.mxu0 0.0
      %4256 = vmatprep.subr.mxu0 0.0
      %4257 = vmatpush1.msra.mxu0 0.0
      %4258 = vmatprep.subr.mxu0 0.0
      %4259 = vmatpush1.msra.mxu0 0.0
      %4260 = vmatprep.mubr.f32.mxu0 0.0
      %4261 = vmatmul.mubr.f32.gmra.mrb[0].mxu0 %v4194
      %v4262 = vpop.f32.mrb[0].mxu0
      %v4263 = vadd.f32 0.0, %v4262
      %v4264 = vpop.f32.mrb[0].mxu0
      %4265 = vdwg.mxu0
      %4266 = vrot.lane.b32.xlu0 %v654, 80
      %v4267 = vpop.permute.xlu0 %4266
      %v4270 = vsel %vm677, %v4029, 0
      %4272 = vmatprep.subr.mxu0 0.0
      %4273 = vmatpush1.msra.mxu0 %v4267
      %4274 = vmatprep.subr.mxu0 0.0
      %4275 = vmatpush1.msra.mxu0 0.0
      %4276 = vmatprep.subr.mxu0 0.0
      %4277 = vmatpush1.msra.mxu0 0.0
      %4278 = vmatprep.subr.mxu0 0.0
      %4279 = vmatpush1.msra.mxu0 0.0
      %4280 = vmatprep.subr.mxu0 0.0
      %4281 = vmatpush1.msra.mxu0 0.0
      %4282 = vmatprep.subr.mxu0 0.0
      %4283 = vmatpush1.msra.mxu0 0.0
      %4284 = vmatprep.subr.mxu0 0.0
      %4285 = vmatpush1.msra.mxu0 0.0
      %4286 = vmatprep.subr.mxu0 0.0
      %4287 = vmatpush1.msra.mxu0 0.0
      %4288 = vmatprep.subr.mxu0 0.0
      %4289 = vmatpush1.msra.mxu0 0.0
      %4290 = vmatprep.subr.mxu0 0.0
      %4291 = vmatpush1.msra.mxu0 0.0
      %4292 = vmatprep.subr.mxu0 0.0
      %4293 = vmatpush1.msra.mxu0 0.0
      %4294 = vmatprep.subr.mxu0 0.0
      %4295 = vmatpush1.msra.mxu0 0.0
      %4296 = vmatprep.subr.mxu0 0.0
      %4297 = vmatpush1.msra.mxu0 0.0
      %4298 = vmatprep.subr.mxu0 0.0
      %4299 = vmatpush1.msra.mxu0 0.0
      %4300 = vmatprep.subr.mxu0 0.0
      %4301 = vmatpush1.msra.mxu0 0.0
      %4302 = vmatprep.subr.mxu0 0.0
      %4303 = vmatpush1.msra.mxu0 0.0
      %4304 = vmatprep.subr.mxu0 0.0
      %4305 = vmatpush1.msra.mxu0 0.0
      %4306 = vmatprep.subr.mxu0 0.0
      %4307 = vmatpush1.msra.mxu0 0.0
      %4308 = vmatprep.subr.mxu0 0.0
      %4309 = vmatpush1.msra.mxu0 0.0
      %4310 = vmatprep.subr.mxu0 0.0
      %4311 = vmatpush1.msra.mxu0 0.0
      %4312 = vmatprep.subr.mxu0 0.0
      %4313 = vmatpush1.msra.mxu0 0.0
      %4314 = vmatprep.subr.mxu0 0.0
      %4315 = vmatpush1.msra.mxu0 0.0
      %4316 = vmatprep.subr.mxu0 0.0
      %4317 = vmatpush1.msra.mxu0 0.0
      %4318 = vmatprep.subr.mxu0 0.0
      %4319 = vmatpush1.msra.mxu0 0.0
      %4320 = vmatprep.subr.mxu0 0.0
      %4321 = vmatpush1.msra.mxu0 0.0
      %4322 = vmatprep.subr.mxu0 0.0
      %4323 = vmatpush1.msra.mxu0 0.0
      %4324 = vmatprep.subr.mxu0 0.0
      %4325 = vmatpush1.msra.mxu0 0.0
      %4326 = vmatprep.subr.mxu0 0.0
      %4327 = vmatpush1.msra.mxu0 0.0
      %4328 = vmatprep.subr.mxu0 0.0
      %4329 = vmatpush1.msra.mxu0 0.0
      %4330 = vmatprep.subr.mxu0 0.0
      %4331 = vmatpush1.msra.mxu0 0.0
      %4332 = vmatprep.subr.mxu0 0.0
      %4333 = vmatpush1.msra.mxu0 0.0
      %4334 = vmatprep.subr.mxu0 0.0
      %4335 = vmatpush1.msra.mxu0 0.0
      %4336 = vmatprep.mubr.f32.mxu0 0.0
      %4337 = vmatmul.mubr.f32.gmra.mrb[0].mxu0 %v4270
      %v4338 = vpop.f32.mrb[0].mxu0
      %v4339 = vadd.f32 0.0, %v4338
      %v4340 = vpop.f32.mrb[0].mxu0
      %4341 = vdwg.mxu0
      %4342 = vrot.lane.b32.xlu0 %v659, 80
      %v4343 = vpop.permute.xlu0 %4342
      %v4346 = vsel %vm677, %v4031, 0
      %4348 = vmatprep.subr.mxu0 0.0
      %4349 = vmatpush1.msra.mxu0 %v4343
      %4350 = vmatprep.subr.mxu0 0.0
      %4351 = vmatpush1.msra.mxu0 0.0
      %4352 = vmatprep.subr.mxu0 0.0
      %4353 = vmatpush1.msra.mxu0 0.0
      %4354 = vmatprep.subr.mxu0 0.0
      %4355 = vmatpush1.msra.mxu0 0.0
      %4356 = vmatprep.subr.mxu0 0.0
      %4357 = vmatpush1.msra.mxu0 0.0
      %4358 = vmatprep.subr.mxu0 0.0
      %4359 = vmatpush1.msra.mxu0 0.0
      %4360 = vmatprep.subr.mxu0 0.0
      %4361 = vmatpush1.msra.mxu0 0.0
      %4362 = vmatprep.subr.mxu0 0.0
      %4363 = vmatpush1.msra.mxu0 0.0
      %4364 = vmatprep.subr.mxu0 0.0
      %4365 = vmatpush1.msra.mxu0 0.0
      %4366 = vmatprep.subr.mxu0 0.0
      %4367 = vmatpush1.msra.mxu0 0.0
      %4368 = vmatprep.subr.mxu0 0.0
      %4369 = vmatpush1.msra.mxu0 0.0
      %4370 = vmatprep.subr.mxu0 0.0
      %4371 = vmatpush1.msra.mxu0 0.0
      %4372 = vmatprep.subr.mxu0 0.0
      %4373 = vmatpush1.msra.mxu0 0.0
      %4374 = vmatprep.subr.mxu0 0.0
      %4375 = vmatpush1.msra.mxu0 0.0
      %4376 = vmatprep.subr.mxu0 0.0
      %4377 = vmatpush1.msra.mxu0 0.0
      %4378 = vmatprep.subr.mxu0 0.0
      %4379 = vmatpush1.msra.mxu0 0.0
      %4380 = vmatprep.subr.mxu0 0.0
      %4381 = vmatpush1.msra.mxu0 0.0
      %4382 = vmatprep.subr.mxu0 0.0
      %4383 = vmatpush1.msra.mxu0 0.0
      %4384 = vmatprep.subr.mxu0 0.0
      %4385 = vmatpush1.msra.mxu0 0.0
      %4386 = vmatprep.subr.mxu0 0.0
      %4387 = vmatpush1.msra.mxu0 0.0
      %4388 = vmatprep.subr.mxu0 0.0
      %4389 = vmatpush1.msra.mxu0 0.0
      %4390 = vmatprep.subr.mxu0 0.0
      %4391 = vmatpush1.msra.mxu0 0.0
      %4392 = vmatprep.subr.mxu0 0.0
      %4393 = vmatpush1.msra.mxu0 0.0
      %4394 = vmatprep.subr.mxu0 0.0
      %4395 = vmatpush1.msra.mxu0 0.0
      %4396 = vmatprep.subr.mxu0 0.0
      %4397 = vmatpush1.msra.mxu0 0.0
      %4398 = vmatprep.subr.mxu0 0.0
      %4399 = vmatpush1.msra.mxu0 0.0
      %4400 = vmatprep.subr.mxu0 0.0
      %4401 = vmatpush1.msra.mxu0 0.0
      %4402 = vmatprep.subr.mxu0 0.0
      %4403 = vmatpush1.msra.mxu0 0.0
      %4404 = vmatprep.subr.mxu0 0.0
      %4405 = vmatpush1.msra.mxu0 0.0
      %4406 = vmatprep.subr.mxu0 0.0
      %4407 = vmatpush1.msra.mxu0 0.0
      %4408 = vmatprep.subr.mxu0 0.0
      %4409 = vmatpush1.msra.mxu0 0.0
      %4410 = vmatprep.subr.mxu0 0.0
      %4411 = vmatpush1.msra.mxu0 0.0
      %4412 = vmatprep.mubr.f32.mxu0 0.0
      %4413 = vmatmul.mubr.f32.gmra.mrb[0].mxu0 %v4346
      %v4414 = vpop.f32.mrb[0].mxu0
      %v4415 = vadd.f32 0.0, %v4414
      %v4416 = vpop.f32.mrb[0].mxu0
      %4417 = vdwg.mxu0
      %4418 = vrot.lane.b32.xlu0 %v664, 80
      %v4419 = vpop.permute.xlu0 %4418
      %v4422 = vsel %vm677, %v4033, 0
      %4424 = vmatprep.subr.mxu0 0.0
      %4425 = vmatpush1.msra.mxu0 %v4419
      %4426 = vmatprep.subr.mxu0 0.0
      %4427 = vmatpush1.msra.mxu0 0.0
      %4428 = vmatprep.subr.mxu0 0.0
      %4429 = vmatpush1.msra.mxu0 0.0
      %4430 = vmatprep.subr.mxu0 0.0
      %4431 = vmatpush1.msra.mxu0 0.0
      %4432 = vmatprep.subr.mxu0 0.0
      %4433 = vmatpush1.msra.mxu0 0.0
      %4434 = vmatprep.subr.mxu0 0.0
      %4435 = vmatpush1.msra.mxu0 0.0
      %4436 = vmatprep.subr.mxu0 0.0
      %4437 = vmatpush1.msra.mxu0 0.0
      %4438 = vmatprep.subr.mxu0 0.0
      %4439 = vmatpush1.msra.mxu0 0.0
      %4440 = vmatprep.subr.mxu0 0.0
      %4441 = vmatpush1.msra.mxu0 0.0
      %4442 = vmatprep.subr.mxu0 0.0
      %4443 = vmatpush1.msra.mxu0 0.0
      %4444 = vmatprep.subr.mxu0 0.0
      %4445 = vmatpush1.msra.mxu0 0.0
      %4446 = vmatprep.subr.mxu0 0.0
      %4447 = vmatpush1.msra.mxu0 0.0
      %4448 = vmatprep.subr.mxu0 0.0
      %4449 = vmatpush1.msra.mxu0 0.0
      %4450 = vmatprep.subr.mxu0 0.0
      %4451 = vmatpush1.msra.mxu0 0.0
      %4452 = vmatprep.subr.mxu0 0.0
      %4453 = vmatpush1.msra.mxu0 0.0
      %4454 = vmatprep.subr.mxu0 0.0
      %4455 = vmatpush1.msra.mxu0 0.0
      %4456 = vmatprep.subr.mxu0 0.0
      %4457 = vmatpush1.msra.mxu0 0.0
      %4458 = vmatprep.subr.mxu0 0.0
      %4459 = vmatpush1.msra.mxu0 0.0
      %4460 = vmatprep.subr.mxu0 0.0
      %4461 = vmatpush1.msra.mxu0 0.0
      %4462 = vmatprep.subr.mxu0 0.0
      %4463 = vmatpush1.msra.mxu0 0.0
      %4464 = vmatprep.subr.mxu0 0.0
      %4465 = vmatpush1.msra.mxu0 0.0
      %4466 = vmatprep.subr.mxu0 0.0
      %4467 = vmatpush1.msra.mxu0 0.0
      %4468 = vmatprep.subr.mxu0 0.0
      %4469 = vmatpush1.msra.mxu0 0.0
      %4470 = vmatprep.subr.mxu0 0.0
      %4471 = vmatpush1.msra.mxu0 0.0
      %4472 = vmatprep.subr.mxu0 0.0
      %4473 = vmatpush1.msra.mxu0 0.0
      %4474 = vmatprep.subr.mxu0 0.0
      %4475 = vmatpush1.msra.mxu0 0.0
      %4476 = vmatprep.subr.mxu0 0.0
      %4477 = vmatpush1.msra.mxu0 0.0
      %4478 = vmatprep.subr.mxu0 0.0
      %4479 = vmatpush1.msra.mxu0 0.0
      %4480 = vmatprep.subr.mxu0 0.0
      %4481 = vmatpush1.msra.mxu0 0.0
      %4482 = vmatprep.subr.mxu0 0.0
      %4483 = vmatpush1.msra.mxu0 0.0
      %4484 = vmatprep.subr.mxu0 0.0
      %4485 = vmatpush1.msra.mxu0 0.0
      %4486 = vmatprep.subr.mxu0 0.0
      %4487 = vmatpush1.msra.mxu0 0.0
      %4488 = vmatprep.mubr.f32.mxu0 0.0
      %4489 = vmatmul.mubr.f32.gmra.mrb[0].mxu0 %v4422
      %v4490 = vpop.f32.mrb[0].mxu0
      %v4491 = vadd.f32 0.0, %v4490
      %v4492 = vpop.f32.mrb[0].mxu0
      %4493 = vdwg.mxu0
      %4494 = vrot.lane.b32.xlu0 %v669, 80
      %v4495 = vpop.permute.xlu0 %4494
      %v4498 = vsel %vm677, %v4035, 0
      %4500 = vmatprep.subr.mxu0 0.0
      %4501 = vmatpush1.msra.mxu0 %v4495
      %4502 = vmatprep.subr.mxu0 0.0
      %4503 = vmatpush1.msra.mxu0 0.0
      %4504 = vmatprep.subr.mxu0 0.0
      %4505 = vmatpush1.msra.mxu0 0.0
      %4506 = vmatprep.subr.mxu0 0.0
      %4507 = vmatpush1.msra.mxu0 0.0
      %4508 = vmatprep.subr.mxu0 0.0
      %4509 = vmatpush1.msra.mxu0 0.0
      %4510 = vmatprep.subr.mxu0 0.0
      %4511 = vmatpush1.msra.mxu0 0.0
      %4512 = vmatprep.subr.mxu0 0.0
      %4513 = vmatpush1.msra.mxu0 0.0
      %4514 = vmatprep.subr.mxu0 0.0
      %4515 = vmatpush1.msra.mxu0 0.0
      %4516 = vmatprep.subr.mxu0 0.0
      %4517 = vmatpush1.msra.mxu0 0.0
      %4518 = vmatprep.subr.mxu0 0.0
      %4519 = vmatpush1.msra.mxu0 0.0
      %4520 = vmatprep.subr.mxu0 0.0
      %4521 = vmatpush1.msra.mxu0 0.0
      %4522 = vmatprep.subr.mxu0 0.0
      %4523 = vmatpush1.msra.mxu0 0.0
      %4524 = vmatprep.subr.mxu0 0.0
      %4525 = vmatpush1.msra.mxu0 0.0
      %4526 = vmatprep.subr.mxu0 0.0
      %4527 = vmatpush1.msra.mxu0 0.0
      %4528 = vmatprep.subr.mxu0 0.0
      %4529 = vmatpush1.msra.mxu0 0.0
      %4530 = vmatprep.subr.mxu0 0.0
      %4531 = vmatpush1.msra.mxu0 0.0
      %4532 = vmatprep.subr.mxu0 0.0
      %4533 = vmatpush1.msra.mxu0 0.0
      %4534 = vmatprep.subr.mxu0 0.0
      %4535 = vmatpush1.msra.mxu0 0.0
      %4536 = vmatprep.subr.mxu0 0.0
      %4537 = vmatpush1.msra.mxu0 0.0
      %4538 = vmatprep.subr.mxu0 0.0
      %4539 = vmatpush1.msra.mxu0 0.0
      %4540 = vmatprep.subr.mxu0 0.0
      %4541 = vmatpush1.msra.mxu0 0.0
      %4542 = vmatprep.subr.mxu0 0.0
      %4543 = vmatpush1.msra.mxu0 0.0
      %4544 = vmatprep.subr.mxu0 0.0
      %4545 = vmatpush1.msra.mxu0 0.0
      %4546 = vmatprep.subr.mxu0 0.0
      %4547 = vmatpush1.msra.mxu0 0.0
      %4548 = vmatprep.subr.mxu0 0.0
      %4549 = vmatpush1.msra.mxu0 0.0
      %4550 = vmatprep.subr.mxu0 0.0
      %4551 = vmatpush1.msra.mxu0 0.0
      %4552 = vmatprep.subr.mxu0 0.0
      %4553 = vmatpush1.msra.mxu0 0.0
      %4554 = vmatprep.subr.mxu0 0.0
      %4555 = vmatpush1.msra.mxu0 0.0
      %4556 = vmatprep.subr.mxu0 0.0
      %4557 = vmatpush1.msra.mxu0 0.0
      %4558 = vmatprep.subr.mxu0 0.0
      %4559 = vmatpush1.msra.mxu0 0.0
      %4560 = vmatprep.subr.mxu0 0.0
      %4561 = vmatpush1.msra.mxu0 0.0
      %4562 = vmatprep.subr.mxu0 0.0
      %4563 = vmatpush1.msra.mxu0 0.0
      %4564 = vmatprep.mubr.f32.mxu0 0.0
      %4565 = vmatmul.mubr.f32.gmra.mrb[0].mxu0 %v4498
      %v4566 = vpop.f32.mrb[0].mxu0
      %v4567 = vadd.f32 0.0, %v4566
      %v4568 = vpop.f32.mrb[0].mxu0
      %4569 = vdwg.mxu0
      %4570 = vrot.lane.b32.xlu0 %v674, 80
      %v4571 = vpop.permute.xlu0 %4570
      %v4574 = vsel %vm677, %v4037, 0
      %4576 = vmatprep.subr.mxu0 0.0
      %4577 = vmatpush1.msra.mxu0 %v4571
      %4578 = vmatprep.subr.mxu0 0.0
      %4579 = vmatpush1.msra.mxu0 0.0
      %4580 = vmatprep.subr.mxu0 0.0
      %4581 = vmatpush1.msra.mxu0 0.0
      %4582 = vmatprep.subr.mxu0 0.0
      %4583 = vmatpush1.msra.mxu0 0.0
      %4584 = vmatprep.subr.mxu0 0.0
      %4585 = vmatpush1.msra.mxu0 0.0
      %4586 = vmatprep.subr.mxu0 0.0
      %4587 = vmatpush1.msra.mxu0 0.0
      %4588 = vmatprep.subr.mxu0 0.0
      %4589 = vmatpush1.msra.mxu0 0.0
      %4590 = vmatprep.subr.mxu0 0.0
      %4591 = vmatpush1.msra.mxu0 0.0
      %4592 = vmatprep.subr.mxu0 0.0
      %4593 = vmatpush1.msra.mxu0 0.0
      %4594 = vmatprep.subr.mxu0 0.0
      %4595 = vmatpush1.msra.mxu0 0.0
      %4596 = vmatprep.subr.mxu0 0.0
      %4597 = vmatpush1.msra.mxu0 0.0
      %4598 = vmatprep.subr.mxu0 0.0
      %4599 = vmatpush1.msra.mxu0 0.0
      %4600 = vmatprep.subr.mxu0 0.0
      %4601 = vmatpush1.msra.mxu0 0.0
      %4602 = vmatprep.subr.mxu0 0.0
      %4603 = vmatpush1.msra.mxu0 0.0
      %4604 = vmatprep.subr.mxu0 0.0
      %4605 = vmatpush1.msra.mxu0 0.0
      %4606 = vmatprep.subr.mxu0 0.0
      %4607 = vmatpush1.msra.mxu0 0.0
      %4608 = vmatprep.subr.mxu0 0.0
      %4609 = vmatpush1.msra.mxu0 0.0
      %4610 = vmatprep.subr.mxu0 0.0
      %4611 = vmatpush1.msra.mxu0 0.0
      %4612 = vmatprep.subr.mxu0 0.0
      %4613 = vmatpush1.msra.mxu0 0.0
      %4614 = vmatprep.subr.mxu0 0.0
      %4615 = vmatpush1.msra.mxu0 0.0
      %4616 = vmatprep.subr.mxu0 0.0
      %4617 = vmatpush1.msra.mxu0 0.0
      %4618 = vmatprep.subr.mxu0 0.0
      %4619 = vmatpush1.msra.mxu0 0.0
      %4620 = vmatprep.subr.mxu0 0.0
      %4621 = vmatpush1.msra.mxu0 0.0
      %4622 = vmatprep.subr.mxu0 0.0
      %4623 = vmatpush1.msra.mxu0 0.0
      %4624 = vmatprep.subr.mxu0 0.0
      %4625 = vmatpush1.msra.mxu0 0.0
      %4626 = vmatprep.subr.mxu0 0.0
      %4627 = vmatpush1.msra.mxu0 0.0
      %4628 = vmatprep.subr.mxu0 0.0
      %4629 = vmatpush1.msra.mxu0 0.0
      %4630 = vmatprep.subr.mxu0 0.0
      %4631 = vmatpush1.msra.mxu0 0.0
      %4632 = vmatprep.subr.mxu0 0.0
      %4633 = vmatpush1.msra.mxu0 0.0
      %4634 = vmatprep.subr.mxu0 0.0
      %4635 = vmatpush1.msra.mxu0 0.0
      %4636 = vmatprep.subr.mxu0 0.0
      %4637 = vmatpush1.msra.mxu0 0.0
      %4638 = vmatprep.subr.mxu0 0.0
      %4639 = vmatpush1.msra.mxu0 0.0
      %4640 = vmatprep.mubr.f32.mxu0 0.0
      %4641 = vmatmul.mubr.f32.gmra.mrb[0].mxu0 %v4574
      %v4642 = vpop.f32.mrb[0].mxu0
      %v4643 = vadd.f32 0.0, %v4642
      %v4644 = vpop.f32.mrb[0].mxu0
      %4645 = vdwg.mxu0
      %4646 = vrot.lane.b32.xlu0 %v499, 104
      %v4647 = vpop.permute.xlu0 %4646
      %4648 = vrot.lane.b32.xlu0 %v639, 104
      %v4649 = vpop.permute.xlu0 %4648
      %v4650 = vsel %vm677, %v4647, 0
      %v4652 = vsel %vm677, %v4649, 0
      %4654 = vmatprep.subr.mxu0 0.0
      %4655 = vmatpush1.xpose.msra.mxu0 %v4652
      %4656 = vmatprep.subr.mxu0 0.0
      %4657 = vmatpush1.xpose.msra.mxu0 0.0
      %4658 = vmatprep.subr.mxu0 0.0
      %4659 = vmatpush1.xpose.msra.mxu0 0.0
      %4660 = vmatprep.subr.mxu0 0.0
      %4661 = vmatpush1.xpose.msra.mxu0 0.0
      %4662 = vmatprep.subr.mxu0 0.0
      %4663 = vmatpush1.xpose.msra.mxu0 0.0
      %4664 = vmatprep.subr.mxu0 0.0
      %4665 = vmatpush1.xpose.msra.mxu0 0.0
      %4666 = vmatprep.subr.mxu0 0.0
      %4667 = vmatpush1.xpose.msra.mxu0 0.0
      %4668 = vmatprep.subr.mxu0 0.0
      %4669 = vmatpush1.xpose.msra.mxu0 0.0
      %4670 = vmatprep.subr.mxu0 0.0
      %4671 = vmatpush1.xpose.msra.mxu0 0.0
      %4672 = vmatprep.subr.mxu0 0.0
      %4673 = vmatpush1.xpose.msra.mxu0 0.0
      %4674 = vmatprep.subr.mxu0 0.0
      %4675 = vmatpush1.xpose.msra.mxu0 0.0
      %4676 = vmatprep.subr.mxu0 0.0
      %4677 = vmatpush1.xpose.msra.mxu0 0.0
      %4678 = vmatprep.subr.mxu0 0.0
      %4679 = vmatpush1.xpose.msra.mxu0 0.0
      %4680 = vmatprep.subr.mxu0 0.0
      %4681 = vmatpush1.xpose.msra.mxu0 0.0
      %4682 = vmatprep.subr.mxu0 0.0
      %4683 = vmatpush1.xpose.msra.mxu0 0.0
      %4684 = vmatprep.subr.mxu0 0.0
      %4685 = vmatpush1.xpose.msra.mxu0 0.0
      %4686 = vmatprep.subr.mxu0 0.0
      %4687 = vmatpush1.xpose.msra.mxu0 0.0
      %4688 = vmatprep.subr.mxu0 0.0
      %4689 = vmatpush1.xpose.msra.mxu0 0.0
      %4690 = vmatprep.subr.mxu0 0.0
      %4691 = vmatpush1.xpose.msra.mxu0 0.0
      %4692 = vmatprep.subr.mxu0 0.0
      %4693 = vmatpush1.xpose.msra.mxu0 0.0
      %4694 = vmatprep.subr.mxu0 0.0
      %4695 = vmatpush1.xpose.msra.mxu0 0.0
      %4696 = vmatprep.subr.mxu0 0.0
      %4697 = vmatpush1.xpose.msra.mxu0 0.0
      %4698 = vmatprep.subr.mxu0 0.0
      %4699 = vmatpush1.xpose.msra.mxu0 0.0
      %4700 = vmatprep.subr.mxu0 0.0
      %4701 = vmatpush1.xpose.msra.mxu0 0.0
      %4702 = vmatprep.subr.mxu0 0.0
      %4703 = vmatpush1.xpose.msra.mxu0 0.0
      %4704 = vmatprep.subr.mxu0 0.0
      %4705 = vmatpush1.xpose.msra.mxu0 0.0
      %4706 = vmatprep.subr.mxu0 0.0
      %4707 = vmatpush1.xpose.msra.mxu0 0.0
      %4708 = vmatprep.subr.mxu0 0.0
      %4709 = vmatpush1.xpose.msra.mxu0 0.0
      %4710 = vmatprep.subr.mxu0 0.0
      %4711 = vmatpush1.xpose.msra.mxu0 0.0
      %4712 = vmatprep.subr.mxu0 0.0
      %4713 = vmatpush1.xpose.msra.mxu0 0.0
      %4714 = vmatprep.subr.mxu0 0.0
      %4715 = vmatpush1.xpose.msra.mxu0 0.0
      %4716 = vmatprep.subr.mxu0 0.0
      %4717 = vmatpush1.xpose.msra.mxu0 0.0
      %4718 = vmatprep.mubr.f32.mxu0 0.0
      %4719 = vmatmul.mubr.f32.gmra.mrb[0].mxu0 %v4650
      %v4720 = vpop.f32.mrb[0].mxu0
      %v4721 = vadd.f32 0.0, %v4720
      %v4722 = vpop.f32.mrb[0].mxu0
      %4723 = vdwg.mxu0
      %4724 = vrot.lane.b32.xlu0 %v504, 104
      %v4725 = vpop.permute.xlu0 %4724
      %4726 = vrot.lane.b32.xlu0 %v644, 104
      %v4727 = vpop.permute.xlu0 %4726
      %v4728 = vsel %vm677, %v4725, 0
      %v4730 = vsel %vm677, %v4727, 0
      %4732 = vmatprep.subr.mxu0 0.0
      %4733 = vmatpush1.xpose.msra.mxu0 %v4730
      %4734 = vmatprep.subr.mxu0 0.0
      %4735 = vmatpush1.xpose.msra.mxu0 0.0
      %4736 = vmatprep.subr.mxu0 0.0
      %4737 = vmatpush1.xpose.msra.mxu0 0.0
      %4738 = vmatprep.subr.mxu0 0.0
      %4739 = vmatpush1.xpose.msra.mxu0 0.0
      %4740 = vmatprep.subr.mxu0 0.0
      %4741 = vmatpush1.xpose.msra.mxu0 0.0
      %4742 = vmatprep.subr.mxu0 0.0
      %4743 = vmatpush1.xpose.msra.mxu0 0.0
      %4744 = vmatprep.subr.mxu0 0.0
      %4745 = vmatpush1.xpose.msra.mxu0 0.0
      %4746 = vmatprep.subr.mxu0 0.0
      %4747 = vmatpush1.xpose.msra.mxu0 0.0
      %4748 = vmatprep.subr.mxu0 0.0
      %4749 = vmatpush1.xpose.msra.mxu0 0.0
      %4750 = vmatprep.subr.mxu0 0.0
      %4751 = vmatpush1.xpose.msra.mxu0 0.0
      %4752 = vmatprep.subr.mxu0 0.0
      %4753 = vmatpush1.xpose.msra.mxu0 0.0
      %4754 = vmatprep.subr.mxu0 0.0
      %4755 = vmatpush1.xpose.msra.mxu0 0.0
      %4756 = vmatprep.subr.mxu0 0.0
      %4757 = vmatpush1.xpose.msra.mxu0 0.0
      %4758 = vmatprep.subr.mxu0 0.0
      %4759 = vmatpush1.xpose.msra.mxu0 0.0
      %4760 = vmatprep.subr.mxu0 0.0
      %4761 = vmatpush1.xpose.msra.mxu0 0.0
      %4762 = vmatprep.subr.mxu0 0.0
      %4763 = vmatpush1.xpose.msra.mxu0 0.0
      %4764 = vmatprep.subr.mxu0 0.0
      %4765 = vmatpush1.xpose.msra.mxu0 0.0
      %4766 = vmatprep.subr.mxu0 0.0
      %4767 = vmatpush1.xpose.msra.mxu0 0.0
      %4768 = vmatprep.subr.mxu0 0.0
      %4769 = vmatpush1.xpose.msra.mxu0 0.0
      %4770 = vmatprep.subr.mxu0 0.0
      %4771 = vmatpush1.xpose.msra.mxu0 0.0
      %4772 = vmatprep.subr.mxu0 0.0
      %4773 = vmatpush1.xpose.msra.mxu0 0.0
      %4774 = vmatprep.subr.mxu0 0.0
      %4775 = vmatpush1.xpose.msra.mxu0 0.0
      %4776 = vmatprep.subr.mxu0 0.0
      %4777 = vmatpush1.xpose.msra.mxu0 0.0
      %4778 = vmatprep.subr.mxu0 0.0
      %4779 = vmatpush1.xpose.msra.mxu0 0.0
      %4780 = vmatprep.subr.mxu0 0.0
      %4781 = vmatpush1.xpose.msra.mxu0 0.0
      %4782 = vmatprep.subr.mxu0 0.0
      %4783 = vmatpush1.xpose.msra.mxu0 0.0
      %4784 = vmatprep.subr.mxu0 0.0
      %4785 = vmatpush1.xpose.msra.mxu0 0.0
      %4786 = vmatprep.subr.mxu0 0.0
      %4787 = vmatpush1.xpose.msra.mxu0 0.0
      %4788 = vmatprep.subr.mxu0 0.0
      %4789 = vmatpush1.xpose.msra.mxu0 0.0
      %4790 = vmatprep.subr.mxu0 0.0
      %4791 = vmatpush1.xpose.msra.mxu0 0.0
      %4792 = vmatprep.subr.mxu0 0.0
      %4793 = vmatpush1.xpose.msra.mxu0 0.0
      %4794 = vmatprep.subr.mxu0 0.0
      %4795 = vmatpush1.xpose.msra.mxu0 0.0
      %4796 = vmatprep.mubr.f32.mxu0 0.0
      %4797 = vmatmul.mubr.f32.gmra.mrb[0].mxu0 %v4728
      %v4798 = vpop.f32.mrb[0].mxu0
      %v4799 = vadd.f32 0.0, %v4798
      %v4800 = vpop.f32.mrb[0].mxu0
      %4801 = vdwg.mxu0
      %4802 = vrot.lane.b32.xlu0 %v509, 104
      %v4803 = vpop.permute.xlu0 %4802
      %4804 = vrot.lane.b32.xlu0 %v649, 104
      %v4805 = vpop.permute.xlu0 %4804
      %v4806 = vsel %vm677, %v4803, 0
      %v4808 = vsel %vm677, %v4805, 0
      %4810 = vmatprep.subr.mxu0 0.0
      %4811 = vmatpush1.xpose.msra.mxu0 %v4808
      %4812 = vmatprep.subr.mxu0 0.0
      %4813 = vmatpush1.xpose.msra.mxu0 0.0
      %4814 = vmatprep.subr.mxu0 0.0
      %4815 = vmatpush1.xpose.msra.mxu0 0.0
      %4816 = vmatprep.subr.mxu0 0.0
      %4817 = vmatpush1.xpose.msra.mxu0 0.0
      %4818 = vmatprep.subr.mxu0 0.0
      %4819 = vmatpush1.xpose.msra.mxu0 0.0
      %4820 = vmatprep.subr.mxu0 0.0
      %4821 = vmatpush1.xpose.msra.mxu0 0.0
      %4822 = vmatprep.subr.mxu0 0.0
      %4823 = vmatpush1.xpose.msra.mxu0 0.0
      %4824 = vmatprep.subr.mxu0 0.0
      %4825 = vmatpush1.xpose.msra.mxu0 0.0
      %4826 = vmatprep.subr.mxu0 0.0
      %4827 = vmatpush1.xpose.msra.mxu0 0.0
      %4828 = vmatprep.subr.mxu0 0.0
      %4829 = vmatpush1.xpose.msra.mxu0 0.0
      %4830 = vmatprep.subr.mxu0 0.0
      %4831 = vmatpush1.xpose.msra.mxu0 0.0
      %4832 = vmatprep.subr.mxu0 0.0
      %4833 = vmatpush1.xpose.msra.mxu0 0.0
      %4834 = vmatprep.subr.mxu0 0.0
      %4835 = vmatpush1.xpose.msra.mxu0 0.0
      %4836 = vmatprep.subr.mxu0 0.0
      %4837 = vmatpush1.xpose.msra.mxu0 0.0
      %4838 = vmatprep.subr.mxu0 0.0
      %4839 = vmatpush1.xpose.msra.mxu0 0.0
      %4840 = vmatprep.subr.mxu0 0.0
      %4841 = vmatpush1.xpose.msra.mxu0 0.0
      %4842 = vmatprep.subr.mxu0 0.0
      %4843 = vmatpush1.xpose.msra.mxu0 0.0
      %4844 = vmatprep.subr.mxu0 0.0
      %4845 = vmatpush1.xpose.msra.mxu0 0.0
      %4846 = vmatprep.subr.mxu0 0.0
      %4847 = vmatpush1.xpose.msra.mxu0 0.0
      %4848 = vmatprep.subr.mxu0 0.0
      %4849 = vmatpush1.xpose.msra.mxu0 0.0
      %4850 = vmatprep.subr.mxu0 0.0
      %4851 = vmatpush1.xpose.msra.mxu0 0.0
      %4852 = vmatprep.subr.mxu0 0.0
      %4853 = vmatpush1.xpose.msra.mxu0 0.0
      %4854 = vmatprep.subr.mxu0 0.0
      %4855 = vmatpush1.xpose.msra.mxu0 0.0
      %4856 = vmatprep.subr.mxu0 0.0
      %4857 = vmatpush1.xpose.msra.mxu0 0.0
      %4858 = vmatprep.subr.mxu0 0.0
      %4859 = vmatpush1.xpose.msra.mxu0 0.0
      %4860 = vmatprep.subr.mxu0 0.0
      %4861 = vmatpush1.xpose.msra.mxu0 0.0
      %4862 = vmatprep.subr.mxu0 0.0
      %4863 = vmatpush1.xpose.msra.mxu0 0.0
      %4864 = vmatprep.subr.mxu0 0.0
      %4865 = vmatpush1.xpose.msra.mxu0 0.0
      %4866 = vmatprep.subr.mxu0 0.0
      %4867 = vmatpush1.xpose.msra.mxu0 0.0
      %4868 = vmatprep.subr.mxu0 0.0
      %4869 = vmatpush1.xpose.msra.mxu0 0.0
      %4870 = vmatprep.subr.mxu0 0.0
      %4871 = vmatpush1.xpose.msra.mxu0 0.0
      %4872 = vmatprep.subr.mxu0 0.0
      %4873 = vmatpush1.xpose.msra.mxu0 0.0
      %4874 = vmatprep.mubr.f32.mxu0 0.0
      %4875 = vmatmul.mubr.f32.gmra.mrb[0].mxu0 %v4806
      %v4876 = vpop.f32.mrb[0].mxu0
      %v4877 = vadd.f32 0.0, %v4876
      %v4878 = vpop.f32.mrb[0].mxu0
      %4879 = vdwg.mxu0
      %4880 = vrot.lane.b32.xlu0 %v514, 104
      %v4881 = vpop.permute.xlu0 %4880
      %4882 = vrot.lane.b32.xlu0 %v654, 104
      %v4883 = vpop.permute.xlu0 %4882
      %v4884 = vsel %vm677, %v4881, 0
      %v4886 = vsel %vm677, %v4883, 0
      %4888 = vmatprep.subr.mxu0 0.0
      %4889 = vmatpush1.xpose.msra.mxu0 %v4886
      %4890 = vmatprep.subr.mxu0 0.0
      %4891 = vmatpush1.xpose.msra.mxu0 0.0
      %4892 = vmatprep.subr.mxu0 0.0
      %4893 = vmatpush1.xpose.msra.mxu0 0.0
      %4894 = vmatprep.subr.mxu0 0.0
      %4895 = vmatpush1.xpose.msra.mxu0 0.0
      %4896 = vmatprep.subr.mxu0 0.0
      %4897 = vmatpush1.xpose.msra.mxu0 0.0
      %4898 = vmatprep.subr.mxu0 0.0
      %4899 = vmatpush1.xpose.msra.mxu0 0.0
      %4900 = vmatprep.subr.mxu0 0.0
      %4901 = vmatpush1.xpose.msra.mxu0 0.0
      %4902 = vmatprep.subr.mxu0 0.0
      %4903 = vmatpush1.xpose.msra.mxu0 0.0
      %4904 = vmatprep.subr.mxu0 0.0
      %4905 = vmatpush1.xpose.msra.mxu0 0.0
      %4906 = vmatprep.subr.mxu0 0.0
      %4907 = vmatpush1.xpose.msra.mxu0 0.0
      %4908 = vmatprep.subr.mxu0 0.0
      %4909 = vmatpush1.xpose.msra.mxu0 0.0
      %4910 = vmatprep.subr.mxu0 0.0
      %4911 = vmatpush1.xpose.msra.mxu0 0.0
      %4912 = vmatprep.subr.mxu0 0.0
      %4913 = vmatpush1.xpose.msra.mxu0 0.0
      %4914 = vmatprep.subr.mxu0 0.0
      %4915 = vmatpush1.xpose.msra.mxu0 0.0
      %4916 = vmatprep.subr.mxu0 0.0
      %4917 = vmatpush1.xpose.msra.mxu0 0.0
      %4918 = vmatprep.subr.mxu0 0.0
      %4919 = vmatpush1.xpose.msra.mxu0 0.0
      %4920 = vmatprep.subr.mxu0 0.0
      %4921 = vmatpush1.xpose.msra.mxu0 0.0
      %4922 = vmatprep.subr.mxu0 0.0
      %4923 = vmatpush1.xpose.msra.mxu0 0.0
      %4924 = vmatprep.subr.mxu0 0.0
      %4925 = vmatpush1.xpose.msra.mxu0 0.0
      %4926 = vmatprep.subr.mxu0 0.0
      %4927 = vmatpush1.xpose.msra.mxu0 0.0
      %4928 = vmatprep.subr.mxu0 0.0
      %4929 = vmatpush1.xpose.msra.mxu0 0.0
      %4930 = vmatprep.subr.mxu0 0.0
      %4931 = vmatpush1.xpose.msra.mxu0 0.0
      %4932 = vmatprep.subr.mxu0 0.0
      %4933 = vmatpush1.xpose.msra.mxu0 0.0
      %4934 = vmatprep.subr.mxu0 0.0
      %4935 = vmatpush1.xpose.msra.mxu0 0.0
      %4936 = vmatprep.subr.mxu0 0.0
      %4937 = vmatpush1.xpose.msra.mxu0 0.0
      %4938 = vmatprep.subr.mxu0 0.0
      %4939 = vmatpush1.xpose.msra.mxu0 0.0
      %4940 = vmatprep.subr.mxu0 0.0
      %4941 = vmatpush1.xpose.msra.mxu0 0.0
      %4942 = vmatprep.subr.mxu0 0.0
      %4943 = vmatpush1.xpose.msra.mxu0 0.0
      %4944 = vmatprep.subr.mxu0 0.0
      %4945 = vmatpush1.xpose.msra.mxu0 0.0
      %4946 = vmatprep.subr.mxu0 0.0
      %4947 = vmatpush1.xpose.msra.mxu0 0.0
      %4948 = vmatprep.subr.mxu0 0.0
      %4949 = vmatpush1.xpose.msra.mxu0 0.0
      %4950 = vmatprep.subr.mxu0 0.0
      %4951 = vmatpush1.xpose.msra.mxu0 0.0
      %4952 = vmatprep.mubr.f32.mxu0 0.0
      %4953 = vmatmul.mubr.f32.gmra.mrb[0].mxu0 %v4884
      %v4954 = vpop.f32.mrb[0].mxu0
      %v4955 = vadd.f32 0.0, %v4954
      %v4956 = vpop.f32.mrb[0].mxu0
      %4957 = vdwg.mxu0
      %4958 = vrot.lane.b32.xlu0 %v519, 104
      %v4959 = vpop.permute.xlu0 %4958
      %4960 = vrot.lane.b32.xlu0 %v659, 104
      %v4961 = vpop.permute.xlu0 %4960
      %v4962 = vsel %vm677, %v4959, 0
      %v4964 = vsel %vm677, %v4961, 0
      %4966 = vmatprep.subr.mxu0 0.0
      %4967 = vmatpush1.xpose.msra.mxu0 %v4964
      %4968 = vmatprep.subr.mxu0 0.0
      %4969 = vmatpush1.xpose.msra.mxu0 0.0
      %4970 = vmatprep.subr.mxu0 0.0
      %4971 = vmatpush1.xpose.msra.mxu0 0.0
      %4972 = vmatprep.subr.mxu0 0.0
      %4973 = vmatpush1.xpose.msra.mxu0 0.0
      %4974 = vmatprep.subr.mxu0 0.0
      %4975 = vmatpush1.xpose.msra.mxu0 0.0
      %4976 = vmatprep.subr.mxu0 0.0
      %4977 = vmatpush1.xpose.msra.mxu0 0.0
      %4978 = vmatprep.subr.mxu0 0.0
      %4979 = vmatpush1.xpose.msra.mxu0 0.0
      %4980 = vmatprep.subr.mxu0 0.0
      %4981 = vmatpush1.xpose.msra.mxu0 0.0
      %4982 = vmatprep.subr.mxu0 0.0
      %4983 = vmatpush1.xpose.msra.mxu0 0.0
      %4984 = vmatprep.subr.mxu0 0.0
      %4985 = vmatpush1.xpose.msra.mxu0 0.0
      %4986 = vmatprep.subr.mxu0 0.0
      %4987 = vmatpush1.xpose.msra.mxu0 0.0
      %4988 = vmatprep.subr.mxu0 0.0
      %4989 = vmatpush1.xpose.msra.mxu0 0.0
      %4990 = vmatprep.subr.mxu0 0.0
      %4991 = vmatpush1.xpose.msra.mxu0 0.0
      %4992 = vmatprep.subr.mxu0 0.0
      %4993 = vmatpush1.xpose.msra.mxu0 0.0
      %4994 = vmatprep.subr.mxu0 0.0
      %4995 = vmatpush1.xpose.msra.mxu0 0.0
      %4996 = vmatprep.subr.mxu0 0.0
      %4997 = vmatpush1.xpose.msra.mxu0 0.0
      %4998 = vmatprep.subr.mxu0 0.0
      %4999 = vmatpush1.xpose.msra.mxu0 0.0
      %5000 = vmatprep.subr.mxu0 0.0
      %5001 = vmatpush1.xpose.msra.mxu0 0.0
      %5002 = vmatprep.subr.mxu0 0.0
      %5003 = vmatpush1.xpose.msra.mxu0 0.0
      %5004 = vmatprep.subr.mxu0 0.0
      %5005 = vmatpush1.xpose.msra.mxu0 0.0
      %5006 = vmatprep.subr.mxu0 0.0
      %5007 = vmatpush1.xpose.msra.mxu0 0.0
      %5008 = vmatprep.subr.mxu0 0.0
      %5009 = vmatpush1.xpose.msra.mxu0 0.0
      %5010 = vmatprep.subr.mxu0 0.0
      %5011 = vmatpush1.xpose.msra.mxu0 0.0
      %5012 = vmatprep.subr.mxu0 0.0
      %5013 = vmatpush1.xpose.msra.mxu0 0.0
      %5014 = vmatprep.subr.mxu0 0.0
      %5015 = vmatpush1.xpose.msra.mxu0 0.0
      %5016 = vmatprep.subr.mxu0 0.0
      %5017 = vmatpush1.xpose.msra.mxu0 0.0
      %5018 = vmatprep.subr.mxu0 0.0
      %5019 = vmatpush1.xpose.msra.mxu0 0.0
      %5020 = vmatprep.subr.mxu0 0.0
      %5021 = vmatpush1.xpose.msra.mxu0 0.0
      %5022 = vmatprep.subr.mxu0 0.0
      %5023 = vmatpush1.xpose.msra.mxu0 0.0
      %5024 = vmatprep.subr.mxu0 0.0
      %5025 = vmatpush1.xpose.msra.mxu0 0.0
      %5026 = vmatprep.subr.mxu0 0.0
      %5027 = vmatpush1.xpose.msra.mxu0 0.0
      %5028 = vmatprep.subr.mxu0 0.0
      %5029 = vmatpush1.xpose.msra.mxu0 0.0
      %5030 = vmatprep.mubr.f32.mxu0 0.0
      %5031 = vmatmul.mubr.f32.gmra.mrb[0].mxu0 %v4962
      %v5032 = vpop.f32.mrb[0].mxu0
      %v5033 = vadd.f32 0.0, %v5032
      %v5034 = vpop.f32.mrb[0].mxu0
      %5035 = vdwg.mxu0
      %5036 = vrot.lane.b32.xlu0 %v524, 104
      %v5037 = vpop.permute.xlu0 %5036
      %5038 = vrot.lane.b32.xlu0 %v664, 104
      %v5039 = vpop.permute.xlu0 %5038
      %v5040 = vsel %vm677, %v5037, 0
      %v5042 = vsel %vm677, %v5039, 0
      %5044 = vmatprep.subr.mxu0 0.0
      %5045 = vmatpush1.xpose.msra.mxu0 %v5042
      %5046 = vmatprep.subr.mxu0 0.0
      %5047 = vmatpush1.xpose.msra.mxu0 0.0
      %5048 = vmatprep.subr.mxu0 0.0
      %5049 = vmatpush1.xpose.msra.mxu0 0.0
      %5050 = vmatprep.subr.mxu0 0.0
      %5051 = vmatpush1.xpose.msra.mxu0 0.0
      %5052 = vmatprep.subr.mxu0 0.0
      %5053 = vmatpush1.xpose.msra.mxu0 0.0
      %5054 = vmatprep.subr.mxu0 0.0
      %5055 = vmatpush1.xpose.msra.mxu0 0.0
      %5056 = vmatprep.subr.mxu0 0.0
      %5057 = vmatpush1.xpose.msra.mxu0 0.0
      %5058 = vmatprep.subr.mxu0 0.0
      %5059 = vmatpush1.xpose.msra.mxu0 0.0
      %5060 = vmatprep.subr.mxu0 0.0
      %5061 = vmatpush1.xpose.msra.mxu0 0.0
      %5062 = vmatprep.subr.mxu0 0.0
      %5063 = vmatpush1.xpose.msra.mxu0 0.0
      %5064 = vmatprep.subr.mxu0 0.0
      %5065 = vmatpush1.xpose.msra.mxu0 0.0
      %5066 = vmatprep.subr.mxu0 0.0
      %5067 = vmatpush1.xpose.msra.mxu0 0.0
      %5068 = vmatprep.subr.mxu0 0.0
      %5069 = vmatpush1.xpose.msra.mxu0 0.0
      %5070 = vmatprep.subr.mxu0 0.0
      %5071 = vmatpush1.xpose.msra.mxu0 0.0
      %5072 = vmatprep.subr.mxu0 0.0
      %5073 = vmatpush1.xpose.msra.mxu0 0.0
      %5074 = vmatprep.subr.mxu0 0.0
      %5075 = vmatpush1.xpose.msra.mxu0 0.0
      %5076 = vmatprep.subr.mxu0 0.0
      %5077 = vmatpush1.xpose.msra.mxu0 0.0
      %5078 = vmatprep.subr.mxu0 0.0
      %5079 = vmatpush1.xpose.msra.mxu0 0.0
      %5080 = vmatprep.subr.mxu0 0.0
      %5081 = vmatpush1.xpose.msra.mxu0 0.0
      %5082 = vmatprep.subr.mxu0 0.0
      %5083 = vmatpush1.xpose.msra.mxu0 0.0
      %5084 = vmatprep.subr.mxu0 0.0
      %5085 = vmatpush1.xpose.msra.mxu0 0.0
      %5086 = vmatprep.subr.mxu0 0.0
      %5087 = vmatpush1.xpose.msra.mxu0 0.0
      %5088 = vmatprep.subr.mxu0 0.0
      %5089 = vmatpush1.xpose.msra.mxu0 0.0
      %5090 = vmatprep.subr.mxu0 0.0
      %5091 = vmatpush1.xpose.msra.mxu0 0.0
      %5092 = vmatprep.subr.mxu0 0.0
      %5093 = vmatpush1.xpose.msra.mxu0 0.0
      %5094 = vmatprep.subr.mxu0 0.0
      %5095 = vmatpush1.xpose.msra.mxu0 0.0
      %5096 = vmatprep.subr.mxu0 0.0
      %5097 = vmatpush1.xpose.msra.mxu0 0.0
      %5098 = vmatprep.subr.mxu0 0.0
      %5099 = vmatpush1.xpose.msra.mxu0 0.0
      %5100 = vmatprep.subr.mxu0 0.0
      %5101 = vmatpush1.xpose.msra.mxu0 0.0
      %5102 = vmatprep.subr.mxu0 0.0
      %5103 = vmatpush1.xpose.msra.mxu0 0.0
      %5104 = vmatprep.subr.mxu0 0.0
      %5105 = vmatpush1.xpose.msra.mxu0 0.0
      %5106 = vmatprep.subr.mxu0 0.0
      %5107 = vmatpush1.xpose.msra.mxu0 0.0
      %5108 = vmatprep.mubr.f32.mxu0 0.0
      %5109 = vmatmul.mubr.f32.gmra.mrb[0].mxu0 %v5040
      %v5110 = vpop.f32.mrb[0].mxu0
      %v5111 = vadd.f32 0.0, %v5110
      %v5112 = vpop.f32.mrb[0].mxu0
      %5113 = vdwg.mxu0
      %5114 = vrot.lane.b32.xlu0 %v529, 104
      %v5115 = vpop.permute.xlu0 %5114
      %5116 = vrot.lane.b32.xlu0 %v669, 104
      %v5117 = vpop.permute.xlu0 %5116
      %v5118 = vsel %vm677, %v5115, 0
      %v5120 = vsel %vm677, %v5117, 0
      %5122 = vmatprep.subr.mxu0 0.0
      %5123 = vmatpush1.xpose.msra.mxu0 %v5120
      %5124 = vmatprep.subr.mxu0 0.0
      %5125 = vmatpush1.xpose.msra.mxu0 0.0
      %5126 = vmatprep.subr.mxu0 0.0
      %5127 = vmatpush1.xpose.msra.mxu0 0.0
      %5128 = vmatprep.subr.mxu0 0.0
      %5129 = vmatpush1.xpose.msra.mxu0 0.0
      %5130 = vmatprep.subr.mxu0 0.0
      %5131 = vmatpush1.xpose.msra.mxu0 0.0
      %5132 = vmatprep.subr.mxu0 0.0
      %5133 = vmatpush1.xpose.msra.mxu0 0.0
      %5134 = vmatprep.subr.mxu0 0.0
      %5135 = vmatpush1.xpose.msra.mxu0 0.0
      %5136 = vmatprep.subr.mxu0 0.0
      %5137 = vmatpush1.xpose.msra.mxu0 0.0
      %5138 = vmatprep.subr.mxu0 0.0
      %5139 = vmatpush1.xpose.msra.mxu0 0.0
      %5140 = vmatprep.subr.mxu0 0.0
      %5141 = vmatpush1.xpose.msra.mxu0 0.0
      %5142 = vmatprep.subr.mxu0 0.0
      %5143 = vmatpush1.xpose.msra.mxu0 0.0
      %5144 = vmatprep.subr.mxu0 0.0
      %5145 = vmatpush1.xpose.msra.mxu0 0.0
      %5146 = vmatprep.subr.mxu0 0.0
      %5147 = vmatpush1.xpose.msra.mxu0 0.0
      %5148 = vmatprep.subr.mxu0 0.0
      %5149 = vmatpush1.xpose.msra.mxu0 0.0
      %5150 = vmatprep.subr.mxu0 0.0
      %5151 = vmatpush1.xpose.msra.mxu0 0.0
      %5152 = vmatprep.subr.mxu0 0.0
      %5153 = vmatpush1.xpose.msra.mxu0 0.0
      %5154 = vmatprep.subr.mxu0 0.0
      %5155 = vmatpush1.xpose.msra.mxu0 0.0
      %5156 = vmatprep.subr.mxu0 0.0
      %5157 = vmatpush1.xpose.msra.mxu0 0.0
      %5158 = vmatprep.subr.mxu0 0.0
      %5159 = vmatpush1.xpose.msra.mxu0 0.0
      %5160 = vmatprep.subr.mxu0 0.0
      %5161 = vmatpush1.xpose.msra.mxu0 0.0
      %5162 = vmatprep.subr.mxu0 0.0
      %5163 = vmatpush1.xpose.msra.mxu0 0.0
      %5164 = vmatprep.subr.mxu0 0.0
      %5165 = vmatpush1.xpose.msra.mxu0 0.0
      %5166 = vmatprep.subr.mxu0 0.0
      %5167 = vmatpush1.xpose.msra.mxu0 0.0
      %5168 = vmatprep.subr.mxu0 0.0
      %5169 = vmatpush1.xpose.msra.mxu0 0.0
      %5170 = vmatprep.subr.mxu0 0.0
      %5171 = vmatpush1.xpose.msra.mxu0 0.0
      %5172 = vmatprep.subr.mxu0 0.0
      %5173 = vmatpush1.xpose.msra.mxu0 0.0
      %5174 = vmatprep.subr.mxu0 0.0
      %5175 = vmatpush1.xpose.msra.mxu0 0.0
      %5176 = vmatprep.subr.mxu0 0.0
      %5177 = vmatpush1.xpose.msra.mxu0 0.0
      %5178 = vmatprep.subr.mxu0 0.0
      %5179 = vmatpush1.xpose.msra.mxu0 0.0
      %5180 = vmatprep.subr.mxu0 0.0
      %5181 = vmatpush1.xpose.msra.mxu0 0.0
      %5182 = vmatprep.subr.mxu0 0.0
      %5183 = vmatpush1.xpose.msra.mxu0 0.0
      %5184 = vmatprep.subr.mxu0 0.0
      %5185 = vmatpush1.xpose.msra.mxu0 0.0
      %5186 = vmatprep.mubr.f32.mxu0 0.0
      %5187 = vmatmul.mubr.f32.gmra.mrb[0].mxu0 %v5118
      %v5188 = vpop.f32.mrb[0].mxu0
      %v5189 = vadd.f32 0.0, %v5188
      %v5190 = vpop.f32.mrb[0].mxu0
      %5191 = vdwg.mxu0
      %5192 = vrot.lane.b32.xlu0 %v534, 104
      %v5193 = vpop.permute.xlu0 %5192
      %5194 = vrot.lane.b32.xlu0 %v674, 104
      %v5195 = vpop.permute.xlu0 %5194
      %v5196 = vsel %vm677, %v5193, 0
      %v5198 = vsel %vm677, %v5195, 0
      %5200 = vmatprep.subr.mxu0 0.0
      %5201 = vmatpush1.xpose.msra.mxu0 %v5198
      %5202 = vmatprep.subr.mxu0 0.0
      %5203 = vmatpush1.xpose.msra.mxu0 0.0
      %5204 = vmatprep.subr.mxu0 0.0
      %5205 = vmatpush1.xpose.msra.mxu0 0.0
      %5206 = vmatprep.subr.mxu0 0.0
      %5207 = vmatpush1.xpose.msra.mxu0 0.0
      %5208 = vmatprep.subr.mxu0 0.0
      %5209 = vmatpush1.xpose.msra.mxu0 0.0
      %5210 = vmatprep.subr.mxu0 0.0
      %5211 = vmatpush1.xpose.msra.mxu0 0.0
      %5212 = vmatprep.subr.mxu0 0.0
      %5213 = vmatpush1.xpose.msra.mxu0 0.0
      %5214 = vmatprep.subr.mxu0 0.0
      %5215 = vmatpush1.xpose.msra.mxu0 0.0
      %5216 = vmatprep.subr.mxu0 0.0
      %5217 = vmatpush1.xpose.msra.mxu0 0.0
      %5218 = vmatprep.subr.mxu0 0.0
      %5219 = vmatpush1.xpose.msra.mxu0 0.0
      %5220 = vmatprep.subr.mxu0 0.0
      %5221 = vmatpush1.xpose.msra.mxu0 0.0
      %5222 = vmatprep.subr.mxu0 0.0
      %5223 = vmatpush1.xpose.msra.mxu0 0.0
      %5224 = vmatprep.subr.mxu0 0.0
      %5225 = vmatpush1.xpose.msra.mxu0 0.0
      %5226 = vmatprep.subr.mxu0 0.0
      %5227 = vmatpush1.xpose.msra.mxu0 0.0
      %5228 = vmatprep.subr.mxu0 0.0
      %5229 = vmatpush1.xpose.msra.mxu0 0.0
      %5230 = vmatprep.subr.mxu0 0.0
      %5231 = vmatpush1.xpose.msra.mxu0 0.0
      %5232 = vmatprep.subr.mxu0 0.0
      %5233 = vmatpush1.xpose.msra.mxu0 0.0
      %5234 = vmatprep.subr.mxu0 0.0
      %5235 = vmatpush1.xpose.msra.mxu0 0.0
      %5236 = vmatprep.subr.mxu0 0.0
      %5237 = vmatpush1.xpose.msra.mxu0 0.0
      %5238 = vmatprep.subr.mxu0 0.0
      %5239 = vmatpush1.xpose.msra.mxu0 0.0
      %5240 = vmatprep.subr.mxu0 0.0
      %5241 = vmatpush1.xpose.msra.mxu0 0.0
      %5242 = vmatprep.subr.mxu0 0.0
      %5243 = vmatpush1.xpose.msra.mxu0 0.0
      %5244 = vmatprep.subr.mxu0 0.0
      %5245 = vmatpush1.xpose.msra.mxu0 0.0
      %5246 = vmatprep.subr.mxu0 0.0
      %5247 = vmatpush1.xpose.msra.mxu0 0.0
      %5248 = vmatprep.subr.mxu0 0.0
      %5249 = vmatpush1.xpose.msra.mxu0 0.0
      %5250 = vmatprep.subr.mxu0 0.0
      %5251 = vmatpush1.xpose.msra.mxu0 0.0
      %5252 = vmatprep.subr.mxu0 0.0
      %5253 = vmatpush1.xpose.msra.mxu0 0.0
      %5254 = vmatprep.subr.mxu0 0.0
      %5255 = vmatpush1.xpose.msra.mxu0 0.0
      %5256 = vmatprep.subr.mxu0 0.0
      %5257 = vmatpush1.xpose.msra.mxu0 0.0
      %5258 = vmatprep.subr.mxu0 0.0
      %5259 = vmatpush1.xpose.msra.mxu0 0.0
      %5260 = vmatprep.subr.mxu0 0.0
      %5261 = vmatpush1.xpose.msra.mxu0 0.0
      %5262 = vmatprep.subr.mxu0 0.0
      %5263 = vmatpush1.xpose.msra.mxu0 0.0
      %5264 = vmatprep.mubr.f32.mxu0 0.0
      %5265 = vmatmul.mubr.f32.gmra.mrb[0].mxu0 %v5196
      %v5266 = vpop.f32.mrb[0].mxu0
      %v5267 = vadd.f32 0.0, %v5266
      %v5268 = vpop.f32.mrb[0].mxu0
      %5269 = vdwg.mxu0
      %v5270 = vmul.f32 %v4721, 0.35355338
      %v5271 = vmul.f32 %v4799, 0.35355338
      %v5272 = vmul.f32 %v4877, 0.35355338
      %v5273 = vmul.f32 %v4955, 0.35355338
      %v5274 = vmul.f32 %v5033, 0.35355338
      %v5275 = vmul.f32 %v5111, 0.35355338
      %v5276 = vmul.f32 %v5189, 0.35355338
      %v5277 = vmul.f32 %v5267, 0.35355338
      %v5278 = vsel %vm677, %v5270, -inf
      %5279 = vmax.xlane.f32.xlu0 %v5278
      %v5280 = vpop.xlane.xlu0 %5279
      %v5281 = vsel %vm677, %v5271, -inf
      %5282 = vmax.xlane.f32.xlu0 %v5281
      %v5283 = vpop.xlane.xlu0 %5282
      %v5284 = vsel %vm677, %v5272, -inf
      %5285 = vmax.xlane.f32.xlu0 %v5284
      %v5286 = vpop.xlane.xlu0 %5285
      %v5287 = vsel %vm677, %v5273, -inf
      %5288 = vmax.xlane.f32.xlu0 %v5287
      %v5289 = vpop.xlane.xlu0 %5288
      %v5290 = vsel %vm677, %v5274, -inf
      %5291 = vmax.xlane.f32.xlu0 %v5290
      %v5292 = vpop.xlane.xlu0 %5291
      %v5293 = vsel %vm677, %v5275, -inf
      %5294 = vmax.xlane.f32.xlu0 %v5293
      %v5295 = vpop.xlane.xlu0 %5294
      %v5296 = vsel %vm677, %v5276, -inf
      %5297 = vmax.xlane.f32.xlu0 %v5296
      %v5298 = vpop.xlane.xlu0 %5297
      %v5299 = vsel %vm677, %v5277, -inf
      %5300 = vmax.xlane.f32.xlu0 %v5299
      %v5301 = vpop.xlane.xlu0 %5300
      %v5302 = vsub.f32 %v5270, %v5280
      %v5303 = vsub.f32 %v5271, %v5283
      %v5304 = vsub.f32 %v5272, %v5286
      %v5305 = vsub.f32 %v5273, %v5289
      %v5306 = vsub.f32 %v5274, %v5292
      %v5307 = vsub.f32 %v5275, %v5295
      %v5308 = vsub.f32 %v5276, %v5298
      %v5309 = vsub.f32 %v5277, %v5301
      %v5310 = vmul.f32 %v5302, 1.442695
      %v5311 = vpow.pop %v5310
      %v5312 = vmul.f32 %v5303, 1.442695
      %v5313 = vpow.pop %v5312
      %v5314 = vmul.f32 %v5304, 1.442695
      %v5315 = vpow.pop %v5314
      %v5316 = vmul.f32 %v5305, 1.442695
      %v5317 = vpow.pop %v5316
      %v5318 = vmul.f32 %v5306, 1.442695
      %v5319 = vpow.pop %v5318
      %v5320 = vmul.f32 %v5307, 1.442695
      %v5321 = vpow.pop %v5320
      %v5322 = vmul.f32 %v5308, 1.442695
      %v5323 = vpow.pop %v5322
      %v5324 = vmul.f32 %v5309, 1.442695
      %v5325 = vpow.pop %v5324
      %v5326 = vsel %vm677, %v5311, 0.0
      %5327 = vadd.xlane.f32.xlu0 %v5326
      %v5328 = vpop.xlane.xlu0 %5327
      %v5329 = vsel %vm677, %v5313, 0.0
      %5330 = vadd.xlane.f32.xlu0 %v5329
      %v5331 = vpop.xlane.xlu0 %5330
      %v5332 = vsel %vm677, %v5315, 0.0
      %5333 = vadd.xlane.f32.xlu0 %v5332
      %v5334 = vpop.xlane.xlu0 %5333
      %v5335 = vsel %vm677, %v5317, 0.0
      %5336 = vadd.xlane.f32.xlu0 %v5335
      %v5337 = vpop.xlane.xlu0 %5336
      %v5338 = vsel %vm677, %v5319, 0.0
      %5339 = vadd.xlane.f32.xlu0 %v5338
      %v5340 = vpop.xlane.xlu0 %5339
      %v5341 = vsel %vm677, %v5321, 0.0
      %5342 = vadd.xlane.f32.xlu0 %v5341
      %v5343 = vpop.xlane.xlu0 %5342
      %v5344 = vsel %vm677, %v5323, 0.0
      %5345 = vadd.xlane.f32.xlu0 %v5344
      %v5346 = vpop.xlane.xlu0 %5345
      %v5347 = vsel %vm677, %v5325, 0.0
      %5348 = vadd.xlane.f32.xlu0 %v5347
      %v5349 = vpop.xlane.xlu0 %5348
      %v5350 = vrcp.pop %v5328
      %v5351 = vmul.f32 %v5311, %v5350
      %v5352 = vrcp.pop %v5331
      %v5353 = vmul.f32 %v5313, %v5352
      %v5354 = vrcp.pop %v5334
      %v5355 = vmul.f32 %v5315, %v5354
      %v5356 = vrcp.pop %v5337
      %v5357 = vmul.f32 %v5317, %v5356
      %v5358 = vrcp.pop %v5340
      %v5359 = vmul.f32 %v5319, %v5358
      %v5360 = vrcp.pop %v5343
      %v5361 = vmul.f32 %v5321, %v5360
      %v5362 = vrcp.pop %v5346
      %v5363 = vmul.f32 %v5323, %v5362
      %v5364 = vrcp.pop %v5349
      %v5365 = vmul.f32 %v5325, %v5364
      %5366 = vrot.lane.b32.xlu0 %v639, 72
      %v5367 = vpop.permute.xlu0 %5366
      %v5370 = vsel %vm677, %v5351, 0
      %5372 = vmatprep.subr.mxu0 0.0
      %5373 = vmatpush1.msra.mxu0 %v5367
      %5374 = vmatprep.subr.mxu0 0.0
      %5375 = vmatpush1.msra.mxu0 0.0
      %5376 = vmatprep.subr.mxu0 0.0
      %5377 = vmatpush1.msra.mxu0 0.0
      %5378 = vmatprep.subr.mxu0 0.0
      %5379 = vmatpush1.msra.mxu0 0.0
      %5380 = vmatprep.subr.mxu0 0.0
      %5381 = vmatpush1.msra.mxu0 0.0
      %5382 = vmatprep.subr.mxu0 0.0
      %5383 = vmatpush1.msra.mxu0 0.0
      %5384 = vmatprep.subr.mxu0 0.0
      %5385 = vmatpush1.msra.mxu0 0.0
      %5386 = vmatprep.subr.mxu0 0.0
      %5387 = vmatpush1.msra.mxu0 0.0
      %5388 = vmatprep.subr.mxu0 0.0
      %5389 = vmatpush1.msra.mxu0 0.0
      %5390 = vmatprep.subr.mxu0 0.0
      %5391 = vmatpush1.msra.mxu0 0.0
      %5392 = vmatprep.subr.mxu0 0.0
      %5393 = vmatpush1.msra.mxu0 0.0
      %5394 = vmatprep.subr.mxu0 0.0
      %5395 = vmatpush1.msra.mxu0 0.0
      %5396 = vmatprep.subr.mxu0 0.0
      %5397 = vmatpush1.msra.mxu0 0.0
      %5398 = vmatprep.subr.mxu0 0.0
      %5399 = vmatpush1.msra.mxu0 0.0
      %5400 = vmatprep.subr.mxu0 0.0
      %5401 = vmatpush1.msra.mxu0 0.0
      %5402 = vmatprep.subr.mxu0 0.0
      %5403 = vmatpush1.msra.mxu0 0.0
      %5404 = vmatprep.subr.mxu0 0.0
      %5405 = vmatpush1.msra.mxu0 0.0
      %5406 = vmatprep.subr.mxu0 0.0
      %5407 = vmatpush1.msra.mxu0 0.0
      %5408 = vmatprep.subr.mxu0 0.0
      %5409 = vmatpush1.msra.mxu0 0.0
      %5410 = vmatprep.subr.mxu0 0.0
      %5411 = vmatpush1.msra.mxu0 0.0
      %5412 = vmatprep.subr.mxu0 0.0
      %5413 = vmatpush1.msra.mxu0 0.0
      %5414 = vmatprep.subr.mxu0 0.0
      %5415 = vmatpush1.msra.mxu0 0.0
      %5416 = vmatprep.subr.mxu0 0.0
      %5417 = vmatpush1.msra.mxu0 0.0
      %5418 = vmatprep.subr.mxu0 0.0
      %5419 = vmatpush1.msra.mxu0 0.0
      %5420 = vmatprep.subr.mxu0 0.0
      %5421 = vmatpush1.msra.mxu0 0.0
      %5422 = vmatprep.subr.mxu0 0.0
      %5423 = vmatpush1.msra.mxu0 0.0
      %5424 = vmatprep.subr.mxu0 0.0
      %5425 = vmatpush1.msra.mxu0 0.0
      %5426 = vmatprep.subr.mxu0 0.0
      %5427 = vmatpush1.msra.mxu0 0.0
      %5428 = vmatprep.subr.mxu0 0.0
      %5429 = vmatpush1.msra.mxu0 0.0
      %5430 = vmatprep.subr.mxu0 0.0
      %5431 = vmatpush1.msra.mxu0 0.0
      %5432 = vmatprep.subr.mxu0 0.0
      %5433 = vmatpush1.msra.mxu0 0.0
      %5434 = vmatprep.subr.mxu0 0.0
      %5435 = vmatpush1.msra.mxu0 0.0
      %5436 = vmatprep.mubr.f32.mxu0 0.0
      %5437 = vmatmul.mubr.f32.gmra.mrb[0].mxu0 %v5370
      %v5438 = vpop.f32.mrb[0].mxu0
      %v5439 = vadd.f32 0.0, %v5438
      %v5440 = vpop.f32.mrb[0].mxu0
      %5441 = vdwg.mxu0
      %5442 = vrot.lane.b32.xlu0 %v644, 72
      %v5443 = vpop.permute.xlu0 %5442
      %v5446 = vsel %vm677, %v5353, 0
      %5448 = vmatprep.subr.mxu0 0.0
      %5449 = vmatpush1.msra.mxu0 %v5443
      %5450 = vmatprep.subr.mxu0 0.0
      %5451 = vmatpush1.msra.mxu0 0.0
      %5452 = vmatprep.subr.mxu0 0.0
      %5453 = vmatpush1.msra.mxu0 0.0
      %5454 = vmatprep.subr.mxu0 0.0
      %5455 = vmatpush1.msra.mxu0 0.0
      %5456 = vmatprep.subr.mxu0 0.0
      %5457 = vmatpush1.msra.mxu0 0.0
      %5458 = vmatprep.subr.mxu0 0.0
      %5459 = vmatpush1.msra.mxu0 0.0
      %5460 = vmatprep.subr.mxu0 0.0
      %5461 = vmatpush1.msra.mxu0 0.0
      %5462 = vmatprep.subr.mxu0 0.0
      %5463 = vmatpush1.msra.mxu0 0.0
      %5464 = vmatprep.subr.mxu0 0.0
      %5465 = vmatpush1.msra.mxu0 0.0
      %5466 = vmatprep.subr.mxu0 0.0
      %5467 = vmatpush1.msra.mxu0 0.0
      %5468 = vmatprep.subr.mxu0 0.0
      %5469 = vmatpush1.msra.mxu0 0.0
      %5470 = vmatprep.subr.mxu0 0.0
      %5471 = vmatpush1.msra.mxu0 0.0
      %5472 = vmatprep.subr.mxu0 0.0
      %5473 = vmatpush1.msra.mxu0 0.0
      %5474 = vmatprep.subr.mxu0 0.0
      %5475 = vmatpush1.msra.mxu0 0.0
      %5476 = vmatprep.subr.mxu0 0.0
      %5477 = vmatpush1.msra.mxu0 0.0
      %5478 = vmatprep.subr.mxu0 0.0
      %5479 = vmatpush1.msra.mxu0 0.0
      %5480 = vmatprep.subr.mxu0 0.0
      %5481 = vmatpush1.msra.mxu0 0.0
      %5482 = vmatprep.subr.mxu0 0.0
      %5483 = vmatpush1.msra.mxu0 0.0
      %5484 = vmatprep.subr.mxu0 0.0
      %5485 = vmatpush1.msra.mxu0 0.0
      %5486 = vmatprep.subr.mxu0 0.0
      %5487 = vmatpush1.msra.mxu0 0.0
      %5488 = vmatprep.subr.mxu0 0.0
      %5489 = vmatpush1.msra.mxu0 0.0
      %5490 = vmatprep.subr.mxu0 0.0
      %5491 = vmatpush1.msra.mxu0 0.0
      %5492 = vmatprep.subr.mxu0 0.0
      %5493 = vmatpush1.msra.mxu0 0.0
      %5494 = vmatprep.subr.mxu0 0.0
      %5495 = vmatpush1.msra.mxu0 0.0
      %5496 = vmatprep.subr.mxu0 0.0
      %5497 = vmatpush1.msra.mxu0 0.0
      %5498 = vmatprep.subr.mxu0 0.0
      %5499 = vmatpush1.msra.mxu0 0.0
      %5500 = vmatprep.subr.mxu0 0.0
      %5501 = vmatpush1.msra.mxu0 0.0
      %5502 = vmatprep.subr.mxu0 0.0
      %5503 = vmatpush1.msra.mxu0 0.0
      %5504 = vmatprep.subr.mxu0 0.0
      %5505 = vmatpush1.msra.mxu0 0.0
      %5506 = vmatprep.subr.mxu0 0.0
      %5507 = vmatpush1.msra.mxu0 0.0
      %5508 = vmatprep.subr.mxu0 0.0
      %5509 = vmatpush1.msra.mxu0 0.0
      %5510 = vmatprep.subr.mxu0 0.0
      %5511 = vmatpush1.msra.mxu0 0.0
      %5512 = vmatprep.mubr.f32.mxu0 0.0
      %5513 = vmatmul.mubr.f32.gmra.mrb[0].mxu0 %v5446
      %v5514 = vpop.f32.mrb[0].mxu0
      %v5515 = vadd.f32 0.0, %v5514
      %v5516 = vpop.f32.mrb[0].mxu0
      %5517 = vdwg.mxu0
      %5518 = vrot.lane.b32.xlu0 %v649, 72
      %v5519 = vpop.permute.xlu0 %5518
      %v5522 = vsel %vm677, %v5355, 0
      %5524 = vmatprep.subr.mxu0 0.0
      %5525 = vmatpush1.msra.mxu0 %v5519
      %5526 = vmatprep.subr.mxu0 0.0
      %5527 = vmatpush1.msra.mxu0 0.0
      %5528 = vmatprep.subr.mxu0 0.0
      %5529 = vmatpush1.msra.mxu0 0.0
      %5530 = vmatprep.subr.mxu0 0.0
      %5531 = vmatpush1.msra.mxu0 0.0
      %5532 = vmatprep.subr.mxu0 0.0
      %5533 = vmatpush1.msra.mxu0 0.0
      %5534 = vmatprep.subr.mxu0 0.0
      %5535 = vmatpush1.msra.mxu0 0.0
      %5536 = vmatprep.subr.mxu0 0.0
      %5537 = vmatpush1.msra.mxu0 0.0
      %5538 = vmatprep.subr.mxu0 0.0
      %5539 = vmatpush1.msra.mxu0 0.0
      %5540 = vmatprep.subr.mxu0 0.0
      %5541 = vmatpush1.msra.mxu0 0.0
      %5542 = vmatprep.subr.mxu0 0.0
      %5543 = vmatpush1.msra.mxu0 0.0
      %5544 = vmatprep.subr.mxu0 0.0
      %5545 = vmatpush1.msra.mxu0 0.0
      %5546 = vmatprep.subr.mxu0 0.0
      %5547 = vmatpush1.msra.mxu0 0.0
      %5548 = vmatprep.subr.mxu0 0.0
      %5549 = vmatpush1.msra.mxu0 0.0
      %5550 = vmatprep.subr.mxu0 0.0
      %5551 = vmatpush1.msra.mxu0 0.0
      %5552 = vmatprep.subr.mxu0 0.0
      %5553 = vmatpush1.msra.mxu0 0.0
      %5554 = vmatprep.subr.mxu0 0.0
      %5555 = vmatpush1.msra.mxu0 0.0
      %5556 = vmatprep.subr.mxu0 0.0
      %5557 = vmatpush1.msra.mxu0 0.0
      %5558 = vmatprep.subr.mxu0 0.0
      %5559 = vmatpush1.msra.mxu0 0.0
      %5560 = vmatprep.subr.mxu0 0.0
      %5561 = vmatpush1.msra.mxu0 0.0
      %5562 = vmatprep.subr.mxu0 0.0
      %5563 = vmatpush1.msra.mxu0 0.0
      %5564 = vmatprep.subr.mxu0 0.0
      %5565 = vmatpush1.msra.mxu0 0.0
      %5566 = vmatprep.subr.mxu0 0.0
      %5567 = vmatpush1.msra.mxu0 0.0
      %5568 = vmatprep.subr.mxu0 0.0
      %5569 = vmatpush1.msra.mxu0 0.0
      %5570 = vmatprep.subr.mxu0 0.0
      %5571 = vmatpush1.msra.mxu0 0.0
      %5572 = vmatprep.subr.mxu0 0.0
      %5573 = vmatpush1.msra.mxu0 0.0
      %5574 = vmatprep.subr.mxu0 0.0
      %5575 = vmatpush1.msra.mxu0 0.0
      %5576 = vmatprep.subr.mxu0 0.0
      %5577 = vmatpush1.msra.mxu0 0.0
      %5578 = vmatprep.subr.mxu0 0.0
      %5579 = vmatpush1.msra.mxu0 0.0
      %5580 = vmatprep.subr.mxu0 0.0
      %5581 = vmatpush1.msra.mxu0 0.0
      %5582 = vmatprep.subr.mxu0 0.0
      %5583 = vmatpush1.msra.mxu0 0.0
      %5584 = vmatprep.subr.mxu0 0.0
      %5585 = vmatpush1.msra.mxu0 0.0
      %5586 = vmatprep.subr.mxu0 0.0
      %5587 = vmatpush1.msra.mxu0 0.0
      %5588 = vmatprep.mubr.f32.mxu0 0.0
      %5589 = vmatmul.mubr.f32.gmra.mrb[0].mxu0 %v5522
      %v5590 = vpop.f32.mrb[0].mxu0
      %v5591 = vadd.f32 0.0, %v5590
      %v5592 = vpop.f32.mrb[0].mxu0
      %5593 = vdwg.mxu0
      %5594 = vrot.lane.b32.xlu0 %v654, 72
      %v5595 = vpop.permute.xlu0 %5594
      %v5598 = vsel %vm677, %v5357, 0
      %5600 = vmatprep.subr.mxu0 0.0
      %5601 = vmatpush1.msra.mxu0 %v5595
      %5602 = vmatprep.subr.mxu0 0.0
      %5603 = vmatpush1.msra.mxu0 0.0
      %5604 = vmatprep.subr.mxu0 0.0
      %5605 = vmatpush1.msra.mxu0 0.0
      %5606 = vmatprep.subr.mxu0 0.0
      %5607 = vmatpush1.msra.mxu0 0.0
      %5608 = vmatprep.subr.mxu0 0.0
      %5609 = vmatpush1.msra.mxu0 0.0
      %5610 = vmatprep.subr.mxu0 0.0
      %5611 = vmatpush1.msra.mxu0 0.0
      %5612 = vmatprep.subr.mxu0 0.0
      %5613 = vmatpush1.msra.mxu0 0.0
      %5614 = vmatprep.subr.mxu0 0.0
      %5615 = vmatpush1.msra.mxu0 0.0
      %5616 = vmatprep.subr.mxu0 0.0
      %5617 = vmatpush1.msra.mxu0 0.0
      %5618 = vmatprep.subr.mxu0 0.0
      %5619 = vmatpush1.msra.mxu0 0.0
      %5620 = vmatprep.subr.mxu0 0.0
      %5621 = vmatpush1.msra.mxu0 0.0
      %5622 = vmatprep.subr.mxu0 0.0
      %5623 = vmatpush1.msra.mxu0 0.0
      %5624 = vmatprep.subr.mxu0 0.0
      %5625 = vmatpush1.msra.mxu0 0.0
      %5626 = vmatprep.subr.mxu0 0.0
      %5627 = vmatpush1.msra.mxu0 0.0
      %5628 = vmatprep.subr.mxu0 0.0
      %5629 = vmatpush1.msra.mxu0 0.0
      %5630 = vmatprep.subr.mxu0 0.0
      %5631 = vmatpush1.msra.mxu0 0.0
      %5632 = vmatprep.subr.mxu0 0.0
      %5633 = vmatpush1.msra.mxu0 0.0
      %5634 = vmatprep.subr.mxu0 0.0
      %5635 = vmatpush1.msra.mxu0 0.0
      %5636 = vmatprep.subr.mxu0 0.0
      %5637 = vmatpush1.msra.mxu0 0.0
      %5638 = vmatprep.subr.mxu0 0.0
      %5639 = vmatpush1.msra.mxu0 0.0
      %5640 = vmatprep.subr.mxu0 0.0
      %5641 = vmatpush1.msra.mxu0 0.0
      %5642 = vmatprep.subr.mxu0 0.0
      %5643 = vmatpush1.msra.mxu0 0.0
      %5644 = vmatprep.subr.mxu0 0.0
      %5645 = vmatpush1.msra.mxu0 0.0
      %5646 = vmatprep.subr.mxu0 0.0
      %5647 = vmatpush1.msra.mxu0 0.0
      %5648 = vmatprep.subr.mxu0 0.0
      %5649 = vmatpush1.msra.mxu0 0.0
      %5650 = vmatprep.subr.mxu0 0.0
      %5651 = vmatpush1.msra.mxu0 0.0
      %5652 = vmatprep.subr.mxu0 0.0
      %5653 = vmatpush1.msra.mxu0 0.0
      %5654 = vmatprep.subr.mxu0 0.0
      %5655 = vmatpush1.msra.mxu0 0.0
      %5656 = vmatprep.subr.mxu0 0.0
      %5657 = vmatpush1.msra.mxu0 0.0
      %5658 = vmatprep.subr.mxu0 0.0
      %5659 = vmatpush1.msra.mxu0 0.0
      %5660 = vmatprep.subr.mxu0 0.0
      %5661 = vmatpush1.msra.mxu0 0.0
      %5662 = vmatprep.subr.mxu0 0.0
      %5663 = vmatpush1.msra.mxu0 0.0
      %5664 = vmatprep.mubr.f32.mxu0 0.0
      %5665 = vmatmul.mubr.f32.gmra.mrb[0].mxu0 %v5598
      %v5666 = vpop.f32.mrb[0].mxu0
      %v5667 = vadd.f32 0.0, %v5666
      %v5668 = vpop.f32.mrb[0].mxu0
      %5669 = vdwg.mxu0
      %5670 = vrot.lane.b32.xlu0 %v659, 72
      %v5671 = vpop.permute.xlu0 %5670
      %v5674 = vsel %vm677, %v5359, 0
      %5676 = vmatprep.subr.mxu0 0.0
      %5677 = vmatpush1.msra.mxu0 %v5671
      %5678 = vmatprep.subr.mxu0 0.0
      %5679 = vmatpush1.msra.mxu0 0.0
      %5680 = vmatprep.subr.mxu0 0.0
      %5681 = vmatpush1.msra.mxu0 0.0
      %5682 = vmatprep.subr.mxu0 0.0
      %5683 = vmatpush1.msra.mxu0 0.0
      %5684 = vmatprep.subr.mxu0 0.0
      %5685 = vmatpush1.msra.mxu0 0.0
      %5686 = vmatprep.subr.mxu0 0.0
      %5687 = vmatpush1.msra.mxu0 0.0
      %5688 = vmatprep.subr.mxu0 0.0
      %5689 = vmatpush1.msra.mxu0 0.0
      %5690 = vmatprep.subr.mxu0 0.0
      %5691 = vmatpush1.msra.mxu0 0.0
      %5692 = vmatprep.subr.mxu0 0.0
      %5693 = vmatpush1.msra.mxu0 0.0
      %5694 = vmatprep.subr.mxu0 0.0
      %5695 = vmatpush1.msra.mxu0 0.0
      %5696 = vmatprep.subr.mxu0 0.0
      %5697 = vmatpush1.msra.mxu0 0.0
      %5698 = vmatprep.subr.mxu0 0.0
      %5699 = vmatpush1.msra.mxu0 0.0
      %5700 = vmatprep.subr.mxu0 0.0
      %5701 = vmatpush1.msra.mxu0 0.0
      %5702 = vmatprep.subr.mxu0 0.0
      %5703 = vmatpush1.msra.mxu0 0.0
      %5704 = vmatprep.subr.mxu0 0.0
      %5705 = vmatpush1.msra.mxu0 0.0
      %5706 = vmatprep.subr.mxu0 0.0
      %5707 = vmatpush1.msra.mxu0 0.0
      %5708 = vmatprep.subr.mxu0 0.0
      %5709 = vmatpush1.msra.mxu0 0.0
      %5710 = vmatprep.subr.mxu0 0.0
      %5711 = vmatpush1.msra.mxu0 0.0
      %5712 = vmatprep.subr.mxu0 0.0
      %5713 = vmatpush1.msra.mxu0 0.0
      %5714 = vmatprep.subr.mxu0 0.0
      %5715 = vmatpush1.msra.mxu0 0.0
      %5716 = vmatprep.subr.mxu0 0.0
      %5717 = vmatpush1.msra.mxu0 0.0
      %5718 = vmatprep.subr.mxu0 0.0
      %5719 = vmatpush1.msra.mxu0 0.0
      %5720 = vmatprep.subr.mxu0 0.0
      %5721 = vmatpush1.msra.mxu0 0.0
      %5722 = vmatprep.subr.mxu0 0.0
      %5723 = vmatpush1.msra.mxu0 0.0
      %5724 = vmatprep.subr.mxu0 0.0
      %5725 = vmatpush1.msra.mxu0 0.0
      %5726 = vmatprep.subr.mxu0 0.0
      %5727 = vmatpush1.msra.mxu0 0.0
      %5728 = vmatprep.subr.mxu0 0.0
      %5729 = vmatpush1.msra.mxu0 0.0
      %5730 = vmatprep.subr.mxu0 0.0
      %5731 = vmatpush1.msra.mxu0 0.0
      %5732 = vmatprep.subr.mxu0 0.0
      %5733 = vmatpush1.msra.mxu0 0.0
      %5734 = vmatprep.subr.mxu0 0.0
      %5735 = vmatpush1.msra.mxu0 0.0
      %5736 = vmatprep.subr.mxu0 0.0
      %5737 = vmatpush1.msra.mxu0 0.0
      %5738 = vmatprep.subr.mxu0 0.0
      %5739 = vmatpush1.msra.mxu0 0.0
      %5740 = vmatprep.mubr.f32.mxu0 0.0
      %5741 = vmatmul.mubr.f32.gmra.mrb[0].mxu0 %v5674
      %v5742 = vpop.f32.mrb[0].mxu0
      %v5743 = vadd.f32 0.0, %v5742
      %v5744 = vpop.f32.mrb[0].mxu0
      %5745 = vdwg.mxu0
      %5746 = vrot.lane.b32.xlu0 %v664, 72
      %v5747 = vpop.permute.xlu0 %5746
      %v5750 = vsel %vm677, %v5361, 0
      %5752 = vmatprep.subr.mxu0 0.0
      %5753 = vmatpush1.msra.mxu0 %v5747
      %5754 = vmatprep.subr.mxu0 0.0
      %5755 = vmatpush1.msra.mxu0 0.0
      %5756 = vmatprep.subr.mxu0 0.0
      %5757 = vmatpush1.msra.mxu0 0.0
      %5758 = vmatprep.subr.mxu0 0.0
      %5759 = vmatpush1.msra.mxu0 0.0
      %5760 = vmatprep.subr.mxu0 0.0
      %5761 = vmatpush1.msra.mxu0 0.0
      %5762 = vmatprep.subr.mxu0 0.0
      %5763 = vmatpush1.msra.mxu0 0.0
      %5764 = vmatprep.subr.mxu0 0.0
      %5765 = vmatpush1.msra.mxu0 0.0
      %5766 = vmatprep.subr.mxu0 0.0
      %5767 = vmatpush1.msra.mxu0 0.0
      %5768 = vmatprep.subr.mxu0 0.0
      %5769 = vmatpush1.msra.mxu0 0.0
      %5770 = vmatprep.subr.mxu0 0.0
      %5771 = vmatpush1.msra.mxu0 0.0
      %5772 = vmatprep.subr.mxu0 0.0
      %5773 = vmatpush1.msra.mxu0 0.0
      %5774 = vmatprep.subr.mxu0 0.0
      %5775 = vmatpush1.msra.mxu0 0.0
      %5776 = vmatprep.subr.mxu0 0.0
      %5777 = vmatpush1.msra.mxu0 0.0
      %5778 = vmatprep.subr.mxu0 0.0
      %5779 = vmatpush1.msra.mxu0 0.0
      %5780 = vmatprep.subr.mxu0 0.0
      %5781 = vmatpush1.msra.mxu0 0.0
      %5782 = vmatprep.subr.mxu0 0.0
      %5783 = vmatpush1.msra.mxu0 0.0
      %5784 = vmatprep.subr.mxu0 0.0
      %5785 = vmatpush1.msra.mxu0 0.0
      %5786 = vmatprep.subr.mxu0 0.0
      %5787 = vmatpush1.msra.mxu0 0.0
      %5788 = vmatprep.subr.mxu0 0.0
      %5789 = vmatpush1.msra.mxu0 0.0
      %5790 = vmatprep.subr.mxu0 0.0
      %5791 = vmatpush1.msra.mxu0 0.0
      %5792 = vmatprep.subr.mxu0 0.0
      %5793 = vmatpush1.msra.mxu0 0.0
      %5794 = vmatprep.subr.mxu0 0.0
      %5795 = vmatpush1.msra.mxu0 0.0
      %5796 = vmatprep.subr.mxu0 0.0
      %5797 = vmatpush1.msra.mxu0 0.0
      %5798 = vmatprep.subr.mxu0 0.0
      %5799 = vmatpush1.msra.mxu0 0.0
      %5800 = vmatprep.subr.mxu0 0.0
      %5801 = vmatpush1.msra.mxu0 0.0
      %5802 = vmatprep.subr.mxu0 0.0
      %5803 = vmatpush1.msra.mxu0 0.0
      %5804 = vmatprep.subr.mxu0 0.0
      %5805 = vmatpush1.msra.mxu0 0.0
      %5806 = vmatprep.subr.mxu0 0.0
      %5807 = vmatpush1.msra.mxu0 0.0
      %5808 = vmatprep.subr.mxu0 0.0
      %5809 = vmatpush1.msra.mxu0 0.0
      %5810 = vmatprep.subr.mxu0 0.0
      %5811 = vmatpush1.msra.mxu0 0.0
      %5812 = vmatprep.subr.mxu0 0.0
      %5813 = vmatpush1.msra.mxu0 0.0
      %5814 = vmatprep.subr.mxu0 0.0
      %5815 = vmatpush1.msra.mxu0 0.0
      %5816 = vmatprep.mubr.f32.mxu0 0.0
      %5817 = vmatmul.mubr.f32.gmra.mrb[0].mxu0 %v5750
      %v5818 = vpop.f32.mrb[0].mxu0
      %v5819 = vadd.f32 0.0, %v5818
      %v5820 = vpop.f32.mrb[0].mxu0
      %5821 = vdwg.mxu0
      %5822 = vrot.lane.b32.xlu0 %v669, 72
      %v5823 = vpop.permute.xlu0 %5822
      %v5826 = vsel %vm677, %v5363, 0
      %5828 = vmatprep.subr.mxu0 0.0
      %5829 = vmatpush1.msra.mxu0 %v5823
      %5830 = vmatprep.subr.mxu0 0.0
      %5831 = vmatpush1.msra.mxu0 0.0
      %5832 = vmatprep.subr.mxu0 0.0
      %5833 = vmatpush1.msra.mxu0 0.0
      %5834 = vmatprep.subr.mxu0 0.0
      %5835 = vmatpush1.msra.mxu0 0.0
      %5836 = vmatprep.subr.mxu0 0.0
      %5837 = vmatpush1.msra.mxu0 0.0
      %5838 = vmatprep.subr.mxu0 0.0
      %5839 = vmatpush1.msra.mxu0 0.0
      %5840 = vmatprep.subr.mxu0 0.0
      %5841 = vmatpush1.msra.mxu0 0.0
      %5842 = vmatprep.subr.mxu0 0.0
      %5843 = vmatpush1.msra.mxu0 0.0
      %5844 = vmatprep.subr.mxu0 0.0
      %5845 = vmatpush1.msra.mxu0 0.0
      %5846 = vmatprep.subr.mxu0 0.0
      %5847 = vmatpush1.msra.mxu0 0.0
      %5848 = vmatprep.subr.mxu0 0.0
      %5849 = vmatpush1.msra.mxu0 0.0
      %5850 = vmatprep.subr.mxu0 0.0
      %5851 = vmatpush1.msra.mxu0 0.0
      %5852 = vmatprep.subr.mxu0 0.0
      %5853 = vmatpush1.msra.mxu0 0.0
      %5854 = vmatprep.subr.mxu0 0.0
      %5855 = vmatpush1.msra.mxu0 0.0
      %5856 = vmatprep.subr.mxu0 0.0
      %5857 = vmatpush1.msra.mxu0 0.0
      %5858 = vmatprep.subr.mxu0 0.0
      %5859 = vmatpush1.msra.mxu0 0.0
      %5860 = vmatprep.subr.mxu0 0.0
      %5861 = vmatpush1.msra.mxu0 0.0
      %5862 = vmatprep.subr.mxu0 0.0
      %5863 = vmatpush1.msra.mxu0 0.0
      %5864 = vmatprep.subr.mxu0 0.0
      %5865 = vmatpush1.msra.mxu0 0.0
      %5866 = vmatprep.subr.mxu0 0.0
      %5867 = vmatpush1.msra.mxu0 0.0
      %5868 = vmatprep.subr.mxu0 0.0
      %5869 = vmatpush1.msra.mxu0 0.0
      %5870 = vmatprep.subr.mxu0 0.0
      %5871 = vmatpush1.msra.mxu0 0.0
      %5872 = vmatprep.subr.mxu0 0.0
      %5873 = vmatpush1.msra.mxu0 0.0
      %5874 = vmatprep.subr.mxu0 0.0
      %5875 = vmatpush1.msra.mxu0 0.0
      %5876 = vmatprep.subr.mxu0 0.0
      %5877 = vmatpush1.msra.mxu0 0.0
      %5878 = vmatprep.subr.mxu0 0.0
      %5879 = vmatpush1.msra.mxu0 0.0
      %5880 = vmatprep.subr.mxu0 0.0
      %5881 = vmatpush1.msra.mxu0 0.0
      %5882 = vmatprep.subr.mxu0 0.0
      %5883 = vmatpush1.msra.mxu0 0.0
      %5884 = vmatprep.subr.mxu0 0.0
      %5885 = vmatpush1.msra.mxu0 0.0
      %5886 = vmatprep.subr.mxu0 0.0
      %5887 = vmatpush1.msra.mxu0 0.0
      %5888 = vmatprep.subr.mxu0 0.0
      %5889 = vmatpush1.msra.mxu0 0.0
      %5890 = vmatprep.subr.mxu0 0.0
      %5891 = vmatpush1.msra.mxu0 0.0
      %5892 = vmatprep.mubr.f32.mxu0 0.0
      %5893 = vmatmul.mubr.f32.gmra.mrb[0].mxu0 %v5826
      %v5894 = vpop.f32.mrb[0].mxu0
      %v5895 = vadd.f32 0.0, %v5894
      %v5896 = vpop.f32.mrb[0].mxu0
      %5897 = vdwg.mxu0
      %5898 = vrot.lane.b32.xlu0 %v674, 72
      %v5899 = vpop.permute.xlu0 %5898
      %v5902 = vsel %vm677, %v5365, 0
      %5904 = vmatprep.subr.mxu0 0.0
      %5905 = vmatpush1.msra.mxu0 %v5899
      %5906 = vmatprep.subr.mxu0 0.0
      %5907 = vmatpush1.msra.mxu0 0.0
      %5908 = vmatprep.subr.mxu0 0.0
      %5909 = vmatpush1.msra.mxu0 0.0
      %5910 = vmatprep.subr.mxu0 0.0
      %5911 = vmatpush1.msra.mxu0 0.0
      %5912 = vmatprep.subr.mxu0 0.0
      %5913 = vmatpush1.msra.mxu0 0.0
      %5914 = vmatprep.subr.mxu0 0.0
      %5915 = vmatpush1.msra.mxu0 0.0
      %5916 = vmatprep.subr.mxu0 0.0
      %5917 = vmatpush1.msra.mxu0 0.0
      %5918 = vmatprep.subr.mxu0 0.0
      %5919 = vmatpush1.msra.mxu0 0.0
      %5920 = vmatprep.subr.mxu0 0.0
      %5921 = vmatpush1.msra.mxu0 0.0
      %5922 = vmatprep.subr.mxu0 0.0
      %5923 = vmatpush1.msra.mxu0 0.0
      %5924 = vmatprep.subr.mxu0 0.0
      %5925 = vmatpush1.msra.mxu0 0.0
      %5926 = vmatprep.subr.mxu0 0.0
      %5927 = vmatpush1.msra.mxu0 0.0
      %5928 = vmatprep.subr.mxu0 0.0
      %5929 = vmatpush1.msra.mxu0 0.0
      %5930 = vmatprep.subr.mxu0 0.0
      %5931 = vmatpush1.msra.mxu0 0.0
      %5932 = vmatprep.subr.mxu0 0.0
      %5933 = vmatpush1.msra.mxu0 0.0
      %5934 = vmatprep.subr.mxu0 0.0
      %5935 = vmatpush1.msra.mxu0 0.0
      %5936 = vmatprep.subr.mxu0 0.0
      %5937 = vmatpush1.msra.mxu0 0.0
      %5938 = vmatprep.subr.mxu0 0.0
      %5939 = vmatpush1.msra.mxu0 0.0
      %5940 = vmatprep.subr.mxu0 0.0
      %5941 = vmatpush1.msra.mxu0 0.0
      %5942 = vmatprep.subr.mxu0 0.0
      %5943 = vmatpush1.msra.mxu0 0.0
      %5944 = vmatprep.subr.mxu0 0.0
      %5945 = vmatpush1.msra.mxu0 0.0
      %5946 = vmatprep.subr.mxu0 0.0
      %5947 = vmatpush1.msra.mxu0 0.0
      %5948 = vmatprep.subr.mxu0 0.0
      %5949 = vmatpush1.msra.mxu0 0.0
      %5950 = vmatprep.subr.mxu0 0.0
      %5951 = vmatpush1.msra.mxu0 0.0
      %5952 = vmatprep.subr.mxu0 0.0
      %5953 = vmatpush1.msra.mxu0 0.0
      %5954 = vmatprep.subr.mxu0 0.0
      %5955 = vmatpush1.msra.mxu0 0.0
      %5956 = vmatprep.subr.mxu0 0.0
      %5957 = vmatpush1.msra.mxu0 0.0
      %5958 = vmatprep.subr.mxu0 0.0
      %5959 = vmatpush1.msra.mxu0 0.0
      %5960 = vmatprep.subr.mxu0 0.0
      %5961 = vmatpush1.msra.mxu0 0.0
      %5962 = vmatprep.subr.mxu0 0.0
      %5963 = vmatpush1.msra.mxu0 0.0
      %5964 = vmatprep.subr.mxu0 0.0
      %5965 = vmatpush1.msra.mxu0 0.0
      %5966 = vmatprep.subr.mxu0 0.0
      %5967 = vmatpush1.msra.mxu0 0.0
      %5968 = vmatprep.mubr.f32.mxu0 0.0
      %5969 = vmatmul.mubr.f32.gmra.mrb[0].mxu0 %v5902
      %v5970 = vpop.f32.mrb[0].mxu0
      %v5971 = vadd.f32 0.0, %v5970
      %v5972 = vpop.f32.mrb[0].mxu0
      %5973 = vdwg.mxu0
      %5982 = vrot.lane.b32.xlu0 %v2783, 8
      %v5983 = vpop.permute.xlu0 %5982
      %5984 = vrot.lane.b32.xlu0 %v2859, 8
      %v5985 = vpop.permute.xlu0 %5984
      %5986 = vrot.lane.b32.xlu0 %v2935, 8
      %v5987 = vpop.permute.xlu0 %5986
      %5988 = vrot.lane.b32.xlu0 %v3011, 8
      %v5989 = vpop.permute.xlu0 %5988
      %5990 = vrot.lane.b32.xlu0 %v3087, 8
      %v5991 = vpop.permute.xlu0 %5990
      %5992 = vrot.lane.b32.xlu0 %v3163, 8
      %v5993 = vpop.permute.xlu0 %5992
      %5994 = vrot.lane.b32.xlu0 %v3239, 8
      %v5995 = vpop.permute.xlu0 %5994
      %5996 = vrot.lane.b32.xlu0 %v3315, 8
      %v5997 = vpop.permute.xlu0 %5996
      %6014 = vrot.lane.b32.xlu0 %v4111, 16
      %v6015 = vpop.permute.xlu0 %6014
      %6016 = vrot.lane.b32.xlu0 %v4187, 16
      %v6017 = vpop.permute.xlu0 %6016
      %6018 = vrot.lane.b32.xlu0 %v4263, 16
      %v6019 = vpop.permute.xlu0 %6018
      %6020 = vrot.lane.b32.xlu0 %v4339, 16
      %v6021 = vpop.permute.xlu0 %6020
      %6022 = vrot.lane.b32.xlu0 %v4415, 16
      %v6023 = vpop.permute.xlu0 %6022
      %6024 = vrot.lane.b32.xlu0 %v4491, 16
      %v6025 = vpop.permute.xlu0 %6024
      %6026 = vrot.lane.b32.xlu0 %v4567, 16
      %v6027 = vpop.permute.xlu0 %6026
      %6028 = vrot.lane.b32.xlu0 %v4643, 16
      %v6029 = vpop.permute.xlu0 %6028
      %6046 = vrot.lane.b32.xlu0 %v5439, 24
      %v6047 = vpop.permute.xlu0 %6046
      %6048 = vrot.lane.b32.xlu0 %v5515, 24
      %v6049 = vpop.permute.xlu0 %6048
      %6050 = vrot.lane.b32.xlu0 %v5591, 24
      %v6051 = vpop.permute.xlu0 %6050
      %6052 = vrot.lane.b32.xlu0 %v5667, 24
      %v6053 = vpop.permute.xlu0 %6052
      %6054 = vrot.lane.b32.xlu0 %v5743, 24
      %v6055 = vpop.permute.xlu0 %6054
      %6056 = vrot.lane.b32.xlu0 %v5819, 24
      %v6057 = vpop.permute.xlu0 %6056
      %6058 = vrot.lane.b32.xlu0 %v5895, 24
      %v6059 = vpop.permute.xlu0 %6058
      %6060 = vrot.lane.b32.xlu0 %v5971, 24
      %v6061 = vpop.permute.xlu0 %6060
      %v6070 = vsel %vm677, %v1455, %v5983
      %v6071 = vsel %vm677, %v1531, %v5985
      %v6072 = vsel %vm677, %v1607, %v5987
      %v6073 = vsel %vm677, %v1683, %v5989
      %v6074 = vsel %vm677, %v1759, %v5991
      %v6075 = vsel %vm677, %v1835, %v5993
      %v6076 = vsel %vm677, %v1911, %v5995
      %v6077 = vsel %vm677, %v1987, %v5997
      %vm6078 = vcmask 130048
      %v6079 = vsel %vm6078, %v6070, %v6015
      %v6080 = vsel %vm6078, %v6071, %v6017
      %v6081 = vsel %vm6078, %v6072, %v6019
      %v6082 = vsel %vm6078, %v6073, %v6021
      %v6083 = vsel %vm6078, %v6074, %v6023
      %v6084 = vsel %vm6078, %v6075, %v6025
      %v6085 = vsel %vm6078, %v6076, %v6027
      %v6086 = vsel %vm6078, %v6077, %v6029
      %vm6087 = vcmask 195584
      %v6088 = vsel %vm6087, %v6079, %v6047
      %v6089 = vsel %vm6087, %v6080, %v6049
      %v6090 = vsel %vm6087, %v6081, %v6051
      %v6091 = vsel %vm6087, %v6082, %v6053
      %v6092 = vsel %vm6087, %v6083, %v6055
      %v6093 = vsel %vm6087, %v6084, %v6057
      %v6094 = vsel %vm6087, %v6085, %v6059
      %v6095 = vsel %vm6087, %v6086, %v6061
      %v6096 = vld [vmem:[%s6] sm:$0xff]
      %v6097 = vld [vmem:[%s6 + $0x8] sm:$0xff]
      %v6098 = vld [vmem:[%s6 + $0x10] sm:$0xff]
      %v6099 = vld [vmem:[%s6 + $0x18] sm:$0xff]
      %v6100 = vld [vmem:[%s7] sm:$0x1]
      %v6102 = vlaneseq
      %v6103 = vshrl.u32 %v6102, 7
      %v6104 = vsub.s32 0, %v6103
      %v6105 = vrot.slane %v6100, %v6104
      %v6108 = vsel %vm407, %v6088, 0
      %v6111 = vsel %vm407, %v6089, 0
      %v6114 = vsel %vm407, %v6090, 0
      %v6117 = vsel %vm407, %v6091, 0
      %v6120 = vsel %vm407, %v6092, 0
      %v6123 = vsel %vm407, %v6093, 0
      %v6126 = vsel %vm407, %v6094, 0
      %v6129 = vsel %vm407, %v6095, 0
      %6131 = vmatprep.subr.mxu0 0.0
      %6132 = vmatpush1.msra.mxu0 %v6096
      %6133 = vmatprep.subr.mxu0 0.0
      %6134 = vmatpush1.msra.mxu0 %v6097
      %6135 = vmatprep.subr.mxu0 0.0
      %6136 = vmatpush1.msra.mxu0 %v6098
      %6137 = vmatprep.subr.mxu0 0.0
      %6138 = vmatpush1.msra.mxu0 %v6099
      %6139 = vmatprep.subr.mxu0 0.0
      %6140 = vmatpush1.msra.mxu0 0.0
      %6141 = vmatprep.subr.mxu0 0.0
      %6142 = vmatpush1.msra.mxu0 0.0
      %6143 = vmatprep.subr.mxu0 0.0
      %6144 = vmatpush1.msra.mxu0 0.0
      %6145 = vmatprep.subr.mxu0 0.0
      %6146 = vmatpush1.msra.mxu0 0.0
      %6147 = vmatprep.subr.mxu0 0.0
      %6148 = vmatpush1.msra.mxu0 0.0
      %6149 = vmatprep.subr.mxu0 0.0
      %6150 = vmatpush1.msra.mxu0 0.0
      %6151 = vmatprep.subr.mxu0 0.0
      %6152 = vmatpush1.msra.mxu0 0.0
      %6153 = vmatprep.subr.mxu0 0.0
      %6154 = vmatpush1.msra.mxu0 0.0
      %6155 = vmatprep.subr.mxu0 0.0
      %6156 = vmatpush1.msra.mxu0 0.0
      %6157 = vmatprep.subr.mxu0 0.0
      %6158 = vmatpush1.msra.mxu0 0.0
      %6159 = vmatprep.subr.mxu0 0.0
      %6160 = vmatpush1.msra.mxu0 0.0
      %6161 = vmatprep.subr.mxu0 0.0
      %6162 = vmatpush1.msra.mxu0 0.0
      %6163 = vmatprep.subr.mxu0 0.0
      %6164 = vmatpush1.msra.mxu0 0.0
      %6165 = vmatprep.subr.mxu0 0.0
      %6166 = vmatpush1.msra.mxu0 0.0
      %6167 = vmatprep.subr.mxu0 0.0
      %6168 = vmatpush1.msra.mxu0 0.0
      %6169 = vmatprep.subr.mxu0 0.0
      %6170 = vmatpush1.msra.mxu0 0.0
      %6171 = vmatprep.subr.mxu0 0.0
      %6172 = vmatpush1.msra.mxu0 0.0
      %6173 = vmatprep.subr.mxu0 0.0
      %6174 = vmatpush1.msra.mxu0 0.0
      %6175 = vmatprep.subr.mxu0 0.0
      %6176 = vmatpush1.msra.mxu0 0.0
      %6177 = vmatprep.subr.mxu0 0.0
      %6178 = vmatpush1.msra.mxu0 0.0
      %6179 = vmatprep.subr.mxu0 0.0
      %6180 = vmatpush1.msra.mxu0 0.0
      %6181 = vmatprep.subr.mxu0 0.0
      %6182 = vmatpush1.msra.mxu0 0.0
      %6183 = vmatprep.subr.mxu0 0.0
      %6184 = vmatpush1.msra.mxu0 0.0
      %6185 = vmatprep.subr.mxu0 0.0
      %6186 = vmatpush1.msra.mxu0 0.0
      %6187 = vmatprep.subr.mxu0 0.0
      %6188 = vmatpush1.msra.mxu0 0.0
      %6189 = vmatprep.subr.mxu0 0.0
      %6190 = vmatpush1.msra.mxu0 0.0
      %6191 = vmatprep.subr.mxu0 0.0
      %6192 = vmatpush1.msra.mxu0 0.0
      %6193 = vmatprep.subr.mxu0 0.0
      %6194 = vmatpush1.msra.mxu0 0.0
      %6195 = vmatprep.mubr.f32.mxu0 0.0
      %6196 = vmatmul.mubr.f32.gmra.mrb[0].mxu0 %v6108
      %v6197 = vpop.f32.mrb[0].mxu0
      %v6198 = vadd.f32 %v6105, %v6197
      %v6199 = vpop.f32.mrb[0].mxu0
      %6200 = vmatprep.mubr.f32.mxu0 0.0
      %6201 = vmatmul.mubr.f32.gmra.mrb[0].mxu0 %v6111
      %v6202 = vpop.f32.mrb[0].mxu0
      %v6203 = vadd.f32 %v6105, %v6202
      %v6204 = vpop.f32.mrb[0].mxu0
      %6205 = vmatprep.mubr.f32.mxu0 0.0
      %6206 = vmatmul.mubr.f32.gmra.mrb[0].mxu0 %v6114
      %v6207 = vpop.f32.mrb[0].mxu0
      %v6208 = vadd.f32 %v6105, %v6207
      %v6209 = vpop.f32.mrb[0].mxu0
      %6210 = vmatprep.mubr.f32.mxu0 0.0
      %6211 = vmatmul.mubr.f32.gmra.mrb[0].mxu0 %v6117
      %v6212 = vpop.f32.mrb[0].mxu0
      %v6213 = vadd.f32 %v6105, %v6212
      %v6214 = vpop.f32.mrb[0].mxu0
      %6215 = vmatprep.mubr.f32.mxu0 0.0
      %6216 = vmatmul.mubr.f32.gmra.mrb[0].mxu0 %v6120
      %v6217 = vpop.f32.mrb[0].mxu0
      %v6218 = vadd.f32 %v6105, %v6217
      %v6219 = vpop.f32.mrb[0].mxu0
      %6220 = vmatprep.mubr.f32.mxu0 0.0
      %6221 = vmatmul.mubr.f32.gmra.mrb[0].mxu0 %v6123
      %v6222 = vpop.f32.mrb[0].mxu0
      %v6223 = vadd.f32 %v6105, %v6222
      %v6224 = vpop.f32.mrb[0].mxu0
      %6225 = vmatprep.mubr.f32.mxu0 0.0
      %6226 = vmatmul.mubr.f32.gmra.mrb[0].mxu0 %v6126
      %v6227 = vpop.f32.mrb[0].mxu0
      %v6228 = vadd.f32 %v6105, %v6227
      %v6229 = vpop.f32.mrb[0].mxu0
      %6230 = vmatprep.mubr.f32.mxu0 0.0
      %6231 = vmatmul.mubr.f32.gmra.mrb[0].mxu0 %v6129
      %v6232 = vpop.f32.mrb[0].mxu0
      %v6233 = vadd.f32 %v6105, %v6232
      %v6234 = vpop.f32.mrb[0].mxu0
      %6235 = vdwg.mxu0
      %v6236 = vadd.f32 %v6198, %v380
      %v6237 = vadd.f32 %v6203, %v381
      %v6238 = vadd.f32 %v6208, %v382
      %v6239 = vadd.f32 %v6213, %v383
      %v6240 = vadd.f32 %v6218, %v384
      %v6241 = vadd.f32 %v6223, %v385
      %v6242 = vadd.f32 %v6228, %v386
      %v6243 = vadd.f32 %v6233, %v387
      %v6244 = vld [vmem:[%s8] sm:$0x1]
      %v6245 = vld [vmem:[%s9] sm:$0x1]
      %v6246 = vsel %vm407, %v6236, 0.0
      %6247 = vadd.xlane.f32.xlu0 %v6246
      %v6248 = vpop.xlane.xlu0 %6247
      %v6249 = vsel %vm407, %v6237, 0.0
      %6250 = vadd.xlane.f32.xlu0 %v6249
      %v6251 = vpop.xlane.xlu0 %6250
      %v6252 = vsel %vm407, %v6238, 0.0
      %6253 = vadd.xlane.f32.xlu0 %v6252
      %v6254 = vpop.xlane.xlu0 %6253
      %v6255 = vsel %vm407, %v6239, 0.0
      %6256 = vadd.xlane.f32.xlu0 %v6255
      %v6257 = vpop.xlane.xlu0 %6256
      %v6258 = vsel %vm407, %v6240, 0.0
      %6259 = vadd.xlane.f32.xlu0 %v6258
      %v6260 = vpop.xlane.xlu0 %6259
      %v6261 = vsel %vm407, %v6241, 0.0
      %6262 = vadd.xlane.f32.xlu0 %v6261
      %v6263 = vpop.xlane.xlu0 %6262
      %v6264 = vsel %vm407, %v6242, 0.0
      %6265 = vadd.xlane.f32.xlu0 %v6264
      %v6266 = vpop.xlane.xlu0 %6265
      %v6267 = vsel %vm407, %v6243, 0.0
      %6268 = vadd.xlane.f32.xlu0 %v6267
      %v6269 = vpop.xlane.xlu0 %6268
      %v6270 = vrcp.pop 32.0
      %v6271 = vmul.f32 %v6248, %v6270
      %v6272 = vmul.f32 %v6251, %v6270
      %v6273 = vmul.f32 %v6254, %v6270
      %v6274 = vmul.f32 %v6257, %v6270
      %v6275 = vmul.f32 %v6260, %v6270
      %v6276 = vmul.f32 %v6263, %v6270
      %v6277 = vmul.f32 %v6266, %v6270
      %v6278 = vmul.f32 %v6269, %v6270
      %v6279 = vsub.f32 %v6236, %v6271
      %v6280 = vsub.f32 %v6237, %v6272
      %v6281 = vsub.f32 %v6238, %v6273
      %v6282 = vsub.f32 %v6239, %v6274
      %v6283 = vsub.f32 %v6240, %v6275
      %v6284 = vsub.f32 %v6241, %v6276
      %v6285 = vsub.f32 %v6242, %v6277
      %v6286 = vsub.f32 %v6243, %v6278
      %v6287 = vmul.f32 %v6279, %v6279
      %v6288 = vmul.f32 %v6280, %v6280
      %v6289 = vmul.f32 %v6281, %v6281
      %v6290 = vmul.f32 %v6282, %v6282
      %v6291 = vmul.f32 %v6283, %v6283
      %v6292 = vmul.f32 %v6284, %v6284
      %v6293 = vmul.f32 %v6285, %v6285
      %v6294 = vmul.f32 %v6286, %v6286
      %v6295 = vsel %vm407, %v6287, 0.0
      %6296 = vadd.xlane.f32.xlu0 %v6295
      %v6297 = vpop.xlane.xlu0 %6296
      %v6298 = vsel %vm407, %v6288, 0.0
      %6299 = vadd.xlane.f32.xlu0 %v6298
      %v6300 = vpop.xlane.xlu0 %6299
      %v6301 = vsel %vm407, %v6289, 0.0
      %6302 = vadd.xlane.f32.xlu0 %v6301
      %v6303 = vpop.xlane.xlu0 %6302
      %v6304 = vsel %vm407, %v6290, 0.0
      %6305 = vadd.xlane.f32.xlu0 %v6304
      %v6306 = vpop.xlane.xlu0 %6305
      %v6307 = vsel %vm407, %v6291, 0.0
      %6308 = vadd.xlane.f32.xlu0 %v6307
      %v6309 = vpop.xlane.xlu0 %6308
      %v6310 = vsel %vm407, %v6292, 0.0
      %6311 = vadd.xlane.f32.xlu0 %v6310
      %v6312 = vpop.xlane.xlu0 %6311
      %v6313 = vsel %vm407, %v6293, 0.0
      %6314 = vadd.xlane.f32.xlu0 %v6313
      %v6315 = vpop.xlane.xlu0 %6314
      %v6316 = vsel %vm407, %v6294, 0.0
      %6317 = vadd.xlane.f32.xlu0 %v6316
      %v6318 = vpop.xlane.xlu0 %6317
      %v6319 = vmul.f32 %v6297, %v6270
      %v6320 = vmul.f32 %v6300, %v6270
      %v6321 = vmul.f32 %v6303, %v6270
      %v6322 = vmul.f32 %v6306, %v6270
      %v6323 = vmul.f32 %v6309, %v6270
      %v6324 = vmul.f32 %v6312, %v6270
      %v6325 = vmul.f32 %v6315, %v6270
      %v6326 = vmul.f32 %v6318, %v6270
      %v6327 = vadd.f32 %v6319, 1e-05
      %v6328 = vadd.f32 %v6320, 1e-05
      %v6329 = vadd.f32 %v6321, 1e-05
      %v6330 = vadd.f32 %v6322, 1e-05
      %v6331 = vadd.f32 %v6323, 1e-05
      %v6332 = vadd.f32 %v6324, 1e-05
      %v6333 = vadd.f32 %v6325, 1e-05
      %v6334 = vadd.f32 %v6326, 1e-05
      %v6335 = vrsqrt.pop %v6327
      %v6336 = vrsqrt.pop %v6328
      %v6337 = vrsqrt.pop %v6329
      %v6338 = vrsqrt.pop %v6330
      %v6339 = vrsqrt.pop %v6331
      %v6340 = vrsqrt.pop %v6332
      %v6341 = vrsqrt.pop %v6333
      %v6342 = vrsqrt.pop %v6334
      %v6343 = vmul.f32 %v6279, %v6335
      %v6344 = vmul.f32 %v6280, %v6336
      %v6345 = vmul.f32 %v6281, %v6337
      %v6346 = vmul.f32 %v6282, %v6338
      %v6347 = vmul.f32 %v6283, %v6339
      %v6348 = vmul.f32 %v6284, %v6340
      %v6349 = vmul.f32 %v6285, %v6341
      %v6350 = vmul.f32 %v6286, %v6342
      %v6352 = vlaneseq
      %v6353 = vshrl.u32 %v6352, 7
      %v6354 = vsub.s32 0, %v6353
      %v6355 = vrot.slane %v6244, %v6354
      %v6357 = vmul.f32 %v6343, %v6355
      %v6358 = vmul.f32 %v6344, %v6355
      %v6359 = vmul.f32 %v6345, %v6355
      %v6360 = vmul.f32 %v6346, %v6355
      %v6361 = vmul.f32 %v6347, %v6355
      %v6362 = vmul.f32 %v6348, %v6355
      %v6363 = vmul.f32 %v6349, %v6355
      %v6364 = vmul.f32 %v6350, %v6355
      %v6366 = vlaneseq
      %v6367 = vshrl.u32 %v6366, 7
      %v6368 = vsub.s32 0, %v6367
      %v6369 = vrot.slane %v6245, %v6368
      %v6371 = vadd.f32 %v6357, %v6369
      %v6372 = vadd.f32 %v6358, %v6369
      %v6373 = vadd.f32 %v6359, %v6369
      %v6374 = vadd.f32 %v6360, %v6369
      %v6375 = vadd.f32 %v6361, %v6369
      %v6376 = vadd.f32 %v6362, %v6369
      %v6377 = vadd.f32 %v6363, %v6369
      %v6378 = vadd.f32 %v6364, %v6369
      %6379 = vst.msk [vmem:[%s379] sm:$0xff] %vm407, %v6371
      %6380 = vst.msk [vmem:[%s379 + $0x8] sm:$0xff] %vm407, %v6372
      %6381 = vst.msk [vmem:[%s379 + $0x10] sm:$0xff] %vm407, %v6373
      %6382 = vst.msk [vmem:[%s379 + $0x18] sm:$0xff] %vm407, %v6374
      %6383 = vst.msk [vmem:[%s379 + $0x20] sm:$0xff] %vm407, %v6375
      %6384 = vst.msk [vmem:[%s379 + $0x28] sm:$0xff] %vm407, %v6376
      %6385 = vst.msk [vmem:[%s379 + $0x30] sm:$0xff] %vm407, %v6377
      %6386 = vst.msk [vmem:[%s379 + $0x38] sm:$0xff] %vm407, %v6378
      %p6387 = scmp.lt.s32.totalorder %s21, 1
      %s6388 = scalar_select %p6387, %s21, 1
      %s6389 = smul.addr %s6388, 8
      %s6390 = smul.addr %s6389, 8
      %s6391 = scalar_lea.vmem %s10, %s6390
      // Predicated region
      $region61: #{st_model_forward.15} parent=59 // pred_check
        %p6392 = pneg %p259
      $region62: #{st_model_forward.15} parent=59 // pred_check_branch
        %6394 = sbr.rel (%p6392) target = $region64
      $region63: #{st_model_forward.15} parent=59 // pred_region
        _
      $region64: #{st_model_forward.15} parent=59 // pred_fallthru
        _
    $region60: #{st_model_forward.15} parent=5 // pred_fallthru
      _
    %p6395 = scmp.le.s32.totalorder 2, %s16
    // Predicated region
    $region65: #{st_model_forward.15} parent=5 // pred_check
      %p6396 = pneg %p6395
    $region66: #{st_model_forward.15} parent=5 // pred_check_branch
      %6398 = sbr.rel (%p6396) target = $region68
    $region67: #{st_model_forward.15} parent=5 // pred_region
      %s6399 = ssub.s32 %s16, 2
      // Predicated region
      $region69: #{st_model_forward.15} parent=67 // pred_check
        %p6400 = pneg %p265
      $region70: #{st_model_forward.15} parent=67 // pred_check_branch
        %6402 = sbr.rel (%p6400) target = $region72
      $region71: #{st_model_forward.15} parent=67 // pred_region
        %p6403 = scmp.lt.s32.totalorder %s22, 1
        %s6404 = scalar_select %p6403, %s22, 1
        %s6405 = smul.addr %s6404, 8
        %s6406 = smul.addr %s6405, 8
        %s6407 = scalar_lea.vmem %s10, %s6406
      $region72: #{st_model_forward.15} parent=67 // pred_fallthru
        _
    $region68: #{st_model_forward.15} parent=5 // pred_fallthru
      _
  $region6: #{st_model_forward.15} parent=0 // loop_footer
    %s20 = sadd.s32 1, %s16
  $region7: #{st_model_forward.15} parent=0 // loop_footer_branch
    %15 = sbr.rel target = $region3
  $region8: #{st_model_forward.15} parent=0 // loop_exit
    _

</llo_original>
